<compile_context>
chip_gen: v7x
topology: tpu7x:2x2x1
jax: 0.10.0
libtpu: 0.0.40
codegen_flags: <defaults>
</compile_context>

<pallas_src>
import functools
import math

import numpy as np
import jax
import jax.numpy as jnp
from jax.experimental import pallas as pl
from jax.experimental.pallas import tpu as pltpu


# ----------------------------- in-kernel helpers ----------------------------

def _layernorm(x, g, b, eps):
    mu = jnp.mean(x, axis=-1, keepdims=True)
    xc = x - mu
    var = jnp.mean(xc * xc, axis=-1, keepdims=True)
    return xc * jax.lax.rsqrt(var + eps) * g + b


def _erf(x):
    # Abramowitz-Stegun 7.1.26 polynomial (|err| < 1.5e-7): Mosaic has no erf
    # primitive, this keeps nn.GELU (exact, erf-based) semantics in-kernel.
    a1, a2, a3, a4, a5 = 0.254829592, -0.284496736, 1.421413741, -1.453152027, 1.061405429
    p = 0.3275911
    ax = jnp.abs(x)
    t = 1.0 / (1.0 + p * ax)
    poly = ((((a5 * t + a4) * t + a3) * t + a2) * t + a1) * t
    y = 1.0 - poly * jnp.exp(-ax * ax)
    return jnp.where(x >= 0.0, y, -y)


def _gelu(x):
    return 0.5 * x * (1.0 + _erf(x * 0.7071067811865476))


# ----------------------------- Pallas kernels ------------------------------

def _patch_embed_kernel(a_ref, w_ref, b_ref, o_ref):
    # Conv2d(kernel=stride=patch) lowered to one matmul over flattened patches.
    o_ref[...] = jnp.dot(a_ref[...].astype(jnp.bfloat16), w_ref[...],
                         preferred_element_type=jnp.float32) + b_ref[...]


def _vit_block_kernel(x_ref, mask_ref,
                      n1g_ref, n1b_ref, qkvw_ref, qkvb_ref, projw_ref, projb_ref,
                      ls1_ref, n2g_ref, n2b_ref, fc1w_ref, fc1b_ref,
                      fc2w_ref, fc2b_ref, ls2_ref, o_ref,
                      *, D, heads, eps):
    """One fully fused pre-norm ViT block for one batch item; tokens stay in VMEM."""
    Dh = D // heads
    scale = Dh ** -0.5
    x = x_ref[0]                                                 # (Sp, D) f32

    # ---- attention branch ----
    h = _layernorm(x, n1g_ref[...], n1b_ref[...], eps)
    qkv = jnp.dot(h.astype(jnp.bfloat16), qkvw_ref[...],
                  preferred_element_type=jnp.float32) + qkvb_ref[...]   # (Sp, 3D)
    mask = mask_ref[...]                                         # (1, Sp) additive key mask
    attn = None
    for hd in range(heads):                                      # heads tiny: unroll
        c0 = hd * Dh
        q = qkv[:, c0:c0 + Dh]
        k = qkv[:, D + c0:D + c0 + Dh]
        v = qkv[:, 2 * D + c0:2 * D + c0 + Dh]
        # q @ k^T via trans_b dot_general (no explicit transpose op)
        s = jax.lax.dot_general(q, k, (((1,), (1,)), ((), ())),
                                preferred_element_type=jnp.float32) * scale + mask
        s = s - jnp.max(s, axis=-1, keepdims=True)
        p = jnp.exp(s)
        p = p * pl.reciprocal(jnp.sum(p, axis=-1, keepdims=True), approx=True)
        o = jnp.dot(p, v, preferred_element_type=jnp.float32)            # (Sp, Dh)
        # fold this head's slice of the output projection in directly
        contrib = jnp.dot(o.astype(jnp.bfloat16), projw_ref[c0:c0 + Dh, :],
                          preferred_element_type=jnp.float32)            # (Sp, D)
        attn = contrib if attn is None else attn + contrib
    x = x + ls1_ref[...] * (attn + projb_ref[...])                       # LayerScale

    # ---- MLP branch ----
    h = _layernorm(x, n2g_ref[...], n2b_ref[...], eps)
    h = jnp.dot(h.astype(jnp.bfloat16), fc1w_ref[...],
                preferred_element_type=jnp.float32) + fc1b_ref[...]
    h = _gelu(h)
    h = jnp.dot(h.astype(jnp.bfloat16), fc2w_ref[...],
                preferred_element_type=jnp.float32) + fc2b_ref[...]
    o_ref[0] = x + ls2_ref[...] * h


def _seg_head_kernel(tok_ref, ng_ref, nb_ref, sh_ref,
                     w1_ref, s1_ref, t1_ref,
                     w2_ref, s2_ref, t2_ref,
                     w3_ref, s3_ref, t3_ref,
                     w4t_ref, b4_ref, upT_ref, o_ref, *, eps):
    """Fused: final LayerNorm -> 3x(conv3x3+BN(eval)+ReLU) -> conv1x1 -> bilinear resize.

    Produces a lane-dense (num_labels, H*W) tile per batch item (unmasked stores)."""
    x = _layernorm(tok_ref[0], ng_ref[...], nb_ref[...], eps)    # (HWp, D) patch tokens

    def conv3x3_bn_relu(h, w_ref, s_ref, t_ref):
        # in-VMEM halo gather: 9 constant 0/1 shift matmuls produce the zero-padded
        # 3x3 neighbor k; its contribution is accumulated straight into the conv
        # output (weight rows ordered (kh, kw, cin)), avoiding an im2col concat.
        cin = h.shape[-1]
        acc = None
        for k in range(9):
            shifted = jnp.dot(sh_ref[k], h, preferred_element_type=jnp.float32)
            part = jnp.dot(shifted.astype(jnp.bfloat16),
                           w_ref[k * cin:(k + 1) * cin, :],
                           preferred_element_type=jnp.float32)
            acc = part if acc is None else acc + part
        return jnp.maximum(acc * s_ref[...] + t_ref[...], 0.0)   # folded BN + ReLU

    h = conv3x3_bn_relu(x, w1_ref, s1_ref, t1_ref)
    h = conv3x3_bn_relu(h, w2_ref, s2_ref, t2_ref)
    h = conv3x3_bn_relu(h, w3_ref, s3_ref, t3_ref)
    # 1x1 conv computed transposed: (L, HWp) = W4 @ h^T  (trans_b dot_general)
    y_t = jax.lax.dot_general(w4t_ref[...], h.astype(jnp.bfloat16),
                              (((1,), (1,)), ((), ())),
                              preferred_element_type=jnp.float32) + b4_ref[...]
    # bilinear upsample (align_corners=False) as one kron-matrix matmul -> (L, H*W)
    o_ref[0] = jnp.dot(y_t, upT_ref[...], preferred_element_type=jnp.float32)


# --------------------------- host-side constants ----------------------------

def _bilinear_matrix(out_size, in_size):
    """F.interpolate(mode='bilinear', align_corners=False) as a dense matrix."""
    scale = in_size / out_size
    w = np.zeros((out_size, in_size), np.float32)
    for o in range(out_size):
        src = (o + 0.5) * scale - 0.5
        src = max(src, 0.0)
        i0 = min(int(np.floor(src)), in_size - 1)
        i1 = min(i0 + 1, in_size - 1)
        lam = src - i0
        w[o, i0] += 1.0 - lam
        w[o, i1] += lam
    return w


def _shift_matrices(ps):
    """(9, ps*ps, ps*ps) 0/1 matrices: G_k @ X gathers the (zero-padded) 3x3 neighbor k."""
    mats = np.zeros((9, ps * ps, ps * ps), np.float32)
    k = 0
    for di in (-1, 0, 1):
        for dj in (-1, 0, 1):
            for h in range(ps):
                for w in range(ps):
                    hs, ws = h + di, w + dj
                    if 0 <= hs < ps and 0 <= ws < ps:
                        mats[k, h * ps + w, hs * ps + ws] = 1.0
            k += 1
    return mats


def _bcast(a):
    """Full-array block, constant index map over the (B,) grid: fetched once."""
    n = a.ndim
    return pl.BlockSpec(a.shape, lambda b, _n=n: (0,) * _n)


# ----------------------------- forward (jitted) ------------------------------

def forward(prep, pixel_values, cfg):
    B = pixel_values.shape[0]
    C, H, W = cfg['in_chans'], pixel_values.shape[2], pixel_values.shape[3]
    D, P, heads, n_reg = cfg['embed'], cfg['patch'], cfg['heads'], cfg['n_reg']
    L = cfg['num_labels']
    nh, nw = H // P, W // P
    n_patches = nh * nw
    S = 1 + n_reg + n_patches
    Sp = ((S + 7) // 8) * 8                   # pad seq to a multiple of 8 sublanes
    vmem = pl.BlockSpec(memory_space=pltpu.MemorySpace.VMEM)

    # ---- patch embedding (Conv2d stride=patch as one matmul kernel) ----
    xp = pixel_values.reshape(B, C, nh, P, nw, P)
    xp = jnp.transpose(xp, (0, 2, 4, 1, 3, 5)).reshape(B * n_patches, C * P * P)
    tok = pl.pallas_call(
        _patch_embed_kernel,
        out_shape=jax.ShapeDtypeStruct((B * n_patches, D), jnp.float32),
        in_specs=[vmem] * 3, out_specs=vmem,
    )(xp, prep['patch_w'], prep['patch_b']).reshape(B, n_patches, D)

    # ---- assemble cls + pos-embed + register tokens, pad S -> Sp ----
    cls = jnp.broadcast_to(prep['cls_token'], (B, 1, D))
    x = jnp.concatenate([cls, tok], axis=1) + prep['pos_embed']
    reg = jnp.broadcast_to(prep['reg_tokens'], (B, n_reg, D))
    x = jnp.concatenate([x[:, :1], reg, x[:, 1:]], axis=1)      # (B, S, D)
    x = jnp.pad(x, ((0, 0), (0, Sp - S), (0, 0)))               # (B, Sp, D)

    # ---- fused transformer blocks (one pallas_call each, batch on megacore) ----
    blk_kernel = functools.partial(_vit_block_kernel, D=D, heads=heads, eps=1e-6)
    x_spec = pl.BlockSpec((1, Sp, D), lambda b: (b, 0, 0))
    for bp in prep['blocks']:
        weights = (prep['attn_mask'], bp['n1g'], bp['n1b'], bp['qkv_w'], bp['qkv_b'],
                   bp['proj_w'], bp['proj_b'], bp['ls1'], bp['n2g'], bp['n2b'],
                   bp['fc1_w'], bp['fc1_b'], bp['fc2_w'], bp['fc2_b'], bp['ls2'])
        x = pl.pallas_call(
            blk_kernel,
            grid=(B,),
            out_shape=jax.ShapeDtypeStruct((B, Sp, D), jnp.float32),
            in_specs=[x_spec] + [_bcast(a) for a in weights],
            out_specs=x_spec,
            compiler_params=pltpu.CompilerParams(dimension_semantics=("parallel",)),
        )(x, *weights)

    # ---- x_norm_patchtokens -> fused segmentation head + bilinear resize ----
    patch_tok = x[:, 1 + n_reg:1 + n_reg + n_patches, :]        # (B, n_patches, D)
    head_args = (patch_tok, prep['norm_g'], prep['norm_b'], prep['shift_mats'],
                 prep['w1'], prep['s1'], prep['t1'],
                 prep['w2'], prep['s2'], prep['t2'],
                 prep['w3'], prep['s3'], prep['t3'],
                 prep['w4t'], prep['b4'], prep['upT'])
    out = pl.pallas_call(
        functools.partial(_seg_head_kernel, eps=1e-6),
        grid=(B,),
        in_specs=[pl.BlockSpec((1, n_patches, D), lambda b: (b, 0, 0))]
                 + [_bcast(a) for a in head_args[1:]],
        out_specs=pl.BlockSpec((1, L, H * W), lambda b: (b, 0, 0)),
        out_shape=jax.ShapeDtypeStruct((B, L, H * W), jnp.float32),
        compiler_params=pltpu.CompilerParams(dimension_semantics=("parallel",)),
    )(*head_args)

    # output is already channel-major per pixel: just reshape to NCHW
    return out.reshape(B, L, H, W)


# --------------------------- parameter init / prep --------------------------

def init_params(key, cfg):
    D, P, C = cfg['embed'], cfg['patch'], cfg['in_chans']
    hidden = D * cfg['mlp_ratio']
    n_patches = (cfg['img'] // P) ** 2
    keys = iter(jax.random.split(key, 64))

    def nrm(shape, std=0.02):
        return std * jax.random.normal(next(keys), shape, jnp.float32)

    params = {
        'patch_w': nrm((D, C, P, P)),
        'patch_b': jnp.zeros((D,), jnp.float32),
        'cls_token': nrm((1, 1, D)),
        'reg_tokens': nrm((1, cfg['n_reg'], D)),
        'pos_embed': nrm((1, 1 + n_patches, D)),
        'norm_g': jnp.ones((D,), jnp.float32),
        'norm_b': jnp.zeros((D,), jnp.float32),
        'blocks': [],
    }
    for _ in range(cfg['depth']):
        params['blocks'].append({
            'norm1_g': jnp.ones((D,), jnp.float32), 'norm1_b': jnp.zeros((D,), jnp.float32),
            'qkv_w': nrm((3 * D, D)), 'qkv_b': jnp.zeros((3 * D,), jnp.float32),
            'proj_w': nrm((D, D)), 'proj_b': jnp.zeros((D,), jnp.float32),
            'ls1': jnp.full((D,), cfg['init_values'], jnp.float32),
            'norm2_g': jnp.ones((D,), jnp.float32), 'norm2_b': jnp.zeros((D,), jnp.float32),
            'fc1_w': nrm((hidden, D)), 'fc1_b': jnp.zeros((hidden,), jnp.float32),
            'fc2_w': nrm((D, hidden)), 'fc2_b': jnp.zeros((D,), jnp.float32),
            'ls2': jnp.full((D,), cfg['init_values'], jnp.float32),
        })
    chans = [D] + cfg['head_channels']                           # [D, 256, 128, 64]
    for i in range(3):
        cin, cout = chans[i], chans[i + 1]
        params[f'conv{i+1}_w'] = nrm((cout, cin, 3, 3))
        params[f'conv{i+1}_b'] = jnp.zeros((cout,), jnp.float32)
        params[f'bn{i+1}_g'] = jnp.ones((cout,), jnp.float32)
        params[f'bn{i+1}_b'] = jnp.zeros((cout,), jnp.float32)
        params[f'bn{i+1}_mean'] = jnp.zeros((cout,), jnp.float32)
        params[f'bn{i+1}_var'] = jnp.ones((cout,), jnp.float32)
    params['conv4_w'] = nrm((cfg['num_labels'], chans[-1], 1, 1))
    params['conv4_b'] = jnp.zeros((cfg['num_labels'],), jnp.float32)
    return params


def prepare_params(params, cfg):
    """One-time layout folding: weights transposed to matmul form and cast to bf16,
    BatchNorm(eval) folded into per-channel affines, im2col shift matrices, the
    (transposed) bilinear kron matrix and the additive attention padding mask
    precomputed."""
    D, P, C = cfg['embed'], cfg['patch'], cfg['in_chans']
    n_patches = (cfg['img'] // P) ** 2
    ps = int(math.sqrt(n_patches))
    S = 1 + cfg['n_reg'] + n_patches
    Sp = ((S + 7) // 8) * 8
    bf16, f32 = jnp.bfloat16, jnp.float32
    row = lambda v: jnp.asarray(v, f32).reshape(1, -1)

    prep = {
        'patch_w': params['patch_w'].reshape(D, C * P * P).T.astype(bf16),
        'patch_b': row(params['patch_b']),
        'cls_token': params['cls_token'].astype(f32),
        'reg_tokens': params['reg_tokens'].astype(f32),
        'pos_embed': params['pos_embed'].astype(f32),
        'norm_g': row(params['norm_g']),
        'norm_b': row(params['norm_b']),
        'attn_mask': jnp.where(jnp.arange(Sp) < S, 0.0, -1e30).astype(f32).reshape(1, Sp),
        'blocks': [],
    }
    for p in params['blocks']:
        prep['blocks'].append({
            'n1g': row(p['norm1_g']), 'n1b': row(p['norm1_b']),
            'qkv_w': p['qkv_w'].T.astype(bf16), 'qkv_b': row(p['qkv_b']),
            'proj_w': p['proj_w'].T.astype(bf16), 'proj_b': row(p['proj_b']),
            'ls1': row(p['ls1']),
            'n2g': row(p['norm2_g']), 'n2b': row(p['norm2_b']),
            'fc1_w': p['fc1_w'].T.astype(bf16), 'fc1_b': row(p['fc1_b']),
            'fc2_w': p['fc2_w'].T.astype(bf16), 'fc2_b': row(p['fc2_b']),
            'ls2': row(p['ls2']),
        })
    for i in range(1, 4):
        w = params[f'conv{i}_w']                        # (Cout, Cin, 3, 3)
        cout, cin = w.shape[0], w.shape[1]
        # HWIO-flattened weight so per-k rows ordered (kh, kw, cin) match the
        # shift-matrix gather order in the kernel.
        prep[f'w{i}'] = jnp.transpose(w, (2, 3, 1, 0)).reshape(9 * cin, cout).astype(bf16)
        scale = params[f'bn{i}_g'] / jnp.sqrt(params[f'bn{i}_var'] + 1e-5)
        prep[f's{i}'] = row(scale)
        prep[f't{i}'] = row((params[f'conv{i}_b'] - params[f'bn{i}_mean']) * scale
                            + params[f'bn{i}_b'])
    w4 = params['conv4_w']
    prep['w4t'] = w4.reshape(w4.shape[0], w4.shape[1]).astype(bf16)       # (L, 64)
    prep['b4'] = jnp.asarray(params['conv4_b'], f32).reshape(-1, 1)       # (L, 1)
    prep['shift_mats'] = jnp.asarray(_shift_matrices(ps))
    up = np.kron(_bilinear_matrix(cfg['img'], ps), _bilinear_matrix(cfg['img'], ps))
    prep['upT'] = jnp.asarray(up.T, jnp.float32)                          # (ps*ps, H*W)
    return prep


# --------------------------------- main -------------------------------------

if __name__ == "__main__":
    cfg = dict(in_chans=3, img=32, patch=8, embed=64, heads=4, depth=2,
               mlp_ratio=4, n_reg=4, init_values=1.0, num_labels=2,
               head_channels=[256, 128, 64])
    key = jax.random.PRNGKey(0)
    pkey, xkey = jax.random.split(key)
    params = init_params(pkey, cfg)
    prep = prepare_params(params, cfg)
    pixel_values = jax.random.normal(
        xkey, (2, cfg['in_chans'], cfg['img'], cfg['img']), jnp.float32)

    fwd = jax.jit(functools.partial(forward, cfg=cfg))
    out = jax.block_until_ready(fwd(prep, pixel_values))
    assert out.shape == (2, cfg['num_labels'], cfg['img'], cfg['img']), out.shape
    assert out.dtype == jnp.float32
    assert bool(jnp.all(jnp.isfinite(out)))
    print("KERNEL_OK")
</pallas_src>

<mosaic_0001>
module attributes {stable_mosaic.version = 11 : i64} {
  func.func @_patch_embed_kernel(%arg0: memref<32x192xf32, #tpu.memory_space<vmem>>, %arg1: memref<192x64xbf16, #tpu.memory_space<vmem>>, %arg2: memref<1x64xf32, #tpu.memory_space<vmem>>, %arg3: memref<32x64xf32, #tpu.memory_space<vmem>>) attributes {dimension_semantics = [], scalar_prefetch = 0 : i64, scratch_operands = 0 : i64, tpu.core_type = #tpu.core_type<tc>} {
    %c0 = arith.constant 0 : index
    %c0_0 = arith.constant 0 : index
    %0 = vector.load %arg0[%c0, %c0_0] : memref<32x192xf32, #tpu.memory_space<vmem>>, vector<32x192xf32>
    %1 = arith.truncf %0 : vector<32x192xf32> to vector<32x192xbf16>
    %c0_1 = arith.constant 0 : index
    %c0_2 = arith.constant 0 : index
    %2 = vector.load %arg1[%c0_1, %c0_2] : memref<192x64xbf16, #tpu.memory_space<vmem>>, vector<192x64xbf16>
    %cst = arith.constant dense<0.000000e+00> : vector<32x64xf32>
    %3 = tpu.matmul %1, %2, %cst {dimension_numbers = #tpu.dot_dimension_numbers<[1], [0], [0], [1], [0, 0, 1, 1], [], []>} : vector<32x192xbf16>, vector<192x64xbf16>, vector<32x64xf32> -> vector<32x64xf32>
    %c0_3 = arith.constant 0 : index
    %c0_4 = arith.constant 0 : index
    %4 = vector.load %arg2[%c0_3, %c0_4] : memref<1x64xf32, #tpu.memory_space<vmem>>, vector<1x64xf32>
    %5 = vector.broadcast %4 : vector<1x64xf32> to vector<32x64xf32>
    %6 = arith.addf %3, %5 : vector<32x64xf32>
    %c0_5 = arith.constant 0 : index
    %c0_6 = arith.constant 0 : index
    %7 = vector.load %arg3[%c0_5, %c0_6] : memref<32x64xf32, #tpu.memory_space<vmem>>, vector<32x64xf32>
    tpu.vector_store %arg3[%c0_5, %c0_6], %6 {strides = array<i32>} : memref<32x64xf32, #tpu.memory_space<vmem>>, vector<32x64xf32>,
    return
  }
}

module attributes {stable_mosaic.version = 11 : i64} {
  func.func @_vit_block_kernel(%arg0: i32, %arg1: memref<1x24x64xf32, #tpu.memory_space<vmem>>, %arg2: memref<1x24xf32, #tpu.memory_space<vmem>>, %arg3: memref<1x64xf32, #tpu.memory_space<vmem>>, %arg4: memref<1x64xf32, #tpu.memory_space<vmem>>, %arg5: memref<64x192xbf16, #tpu.memory_space<vmem>>, %arg6: memref<1x192xf32, #tpu.memory_space<vmem>>, %arg7: memref<64x64xbf16, #tpu.memory_space<vmem>>, %arg8: memref<1x64xf32, #tpu.memory_space<vmem>>, %arg9: memref<1x64xf32, #tpu.memory_space<vmem>>, %arg10: memref<1x64xf32, #tpu.memory_space<vmem>>, %arg11: memref<1x64xf32, #tpu.memory_space<vmem>>, %arg12: memref<64x256xbf16, #tpu.memory_space<vmem>>, %arg13: memref<1x256xf32, #tpu.memory_space<vmem>>, %arg14: memref<256x64xbf16, #tpu.memory_space<vmem>>, %arg15: memref<1x64xf32, #tpu.memory_space<vmem>>, %arg16: memref<1x64xf32, #tpu.memory_space<vmem>>, %arg17: memref<1x24x64xf32, #tpu.memory_space<vmem>>) attributes {dimension_semantics = [#tpu.dimension_semantics<parallel>], iteration_bounds = array<i64: 2>, scalar_prefetch = 0 : i64, scratch_operands = 0 : i64, tpu.core_type = #tpu.core_type<tc>, window_params = [{transform_indices = @transform_0, window_bounds = array<i64: 1, 24, 64>}, {pipeline_mode = #tpu.pipeline_mode<synchronous>, transform_indices = @transform_1, window_bounds = array<i64: 1, 24>}, {pipeline_mode = #tpu.pipeline_mode<synchronous>, transform_indices = @transform_2, window_bounds = array<i64: 1, 64>}, {pipeline_mode = #tpu.pipeline_mode<synchronous>, transform_indices = @transform_3, window_bounds = array<i64: 1, 64>}, {pipeline_mode = #tpu.pipeline_mode<synchronous>, transform_indices = @transform_4, window_bounds = array<i64: 64, 192>}, {pipeline_mode = #tpu.pipeline_mode<synchronous>, transform_indices = @transform_5, window_bounds = array<i64: 1, 192>}, {pipeline_mode = #tpu.pipeline_mode<synchronous>, transform_indices = @transform_6, window_bounds = array<i64: 64, 64>}, {pipeline_mode = #tpu.pipeline_mode<synchronous>, transform_indices = @transform_7, window_bounds = array<i64: 1, 64>}, {pipeline_mode = #tpu.pipeline_mode<synchronous>, transform_indices = @transform_8, window_bounds = array<i64: 1, 64>}, {pipeline_mode = #tpu.pipeline_mode<synchronous>, transform_indices = @transform_9, window_bounds = array<i64: 1, 64>}, {pipeline_mode = #tpu.pipeline_mode<synchronous>, transform_indices = @transform_10, window_bounds = array<i64: 1, 64>}, {pipeline_mode = #tpu.pipeline_mode<synchronous>, transform_indices = @transform_11, window_bounds = array<i64: 64, 256>}, {pipeline_mode = #tpu.pipeline_mode<synchronous>, transform_indices = @transform_12, window_bounds = array<i64: 1, 256>}, {pipeline_mode = #tpu.pipeline_mode<synchronous>, transform_indices = @transform_13, window_bounds = array<i64: 256, 64>}, {pipeline_mode = #tpu.pipeline_mode<synchronous>, transform_indices = @transform_14, window_bounds = array<i64: 1, 64>}, {pipeline_mode = #tpu.pipeline_mode<synchronous>, transform_indices = @transform_15, window_bounds = array<i64: 1, 64>}, {transform_indices = @transform_16, window_bounds = array<i64: 1, 24, 64>}]} {
    %c0 = arith.constant 0 : index
    %c0_0 = arith.constant 0 : index
    %c0_1 = arith.constant 0 : index
    %0 = vector.load %arg1[%c0, %c0_0, %c0_1] : memref<1x24x64xf32, #tpu.memory_space<vmem>>, vector<1x24x64xf32>
    %1 = vector.shape_cast %0 : vector<1x24x64xf32> to vector<24x64xf32>
    %c0_2 = arith.constant 0 : index
    %c0_3 = arith.constant 0 : index
    %2 = vector.load %arg3[%c0_2, %c0_3] : memref<1x64xf32, #tpu.memory_space<vmem>>, vector<1x64xf32>
    %c0_4 = arith.constant 0 : index
    %c0_5 = arith.constant 0 : index
    %3 = vector.load %arg4[%c0_4, %c0_5] : memref<1x64xf32, #tpu.memory_space<vmem>>, vector<1x64xf32>
    %cst = arith.constant dense<0.000000e+00> : vector<24xf32>
    %4 = vector.multi_reduction <add>, %1, %cst [1] : vector<24x64xf32> to vector<24xf32>
    %5 = vector.shape_cast %4 : vector<24xf32> to vector<24x1xf32>
    %cst_6 = arith.constant 6.400000e+01 : f32
    %6 = vector.broadcast %cst_6 : f32 to vector<24x1xf32>
    %7 = arith.divf %5, %6 : vector<24x1xf32>
    %8 = vector.broadcast %7 : vector<24x1xf32> to vector<24x64xf32>
    %9 = arith.subf %1, %8 : vector<24x64xf32>
    %10 = arith.mulf %9, %9 : vector<24x64xf32>
    %cst_7 = arith.constant dense<0.000000e+00> : vector<24xf32>
    %11 = vector.multi_reduction <add>, %10, %cst_7 [1] : vector<24x64xf32> to vector<24xf32>
    %12 = vector.shape_cast %11 : vector<24xf32> to vector<24x1xf32>
    %cst_8 = arith.constant 6.400000e+01 : f32
    %13 = vector.broadcast %cst_8 : f32 to vector<24x1xf32>
    %14 = arith.divf %12, %13 : vector<24x1xf32>
    %cst_9 = arith.constant 9.99999997E-7 : f32
    %15 = vector.broadcast %cst_9 : f32 to vector<24x1xf32>
    %16 = arith.addf %14, %15 : vector<24x1xf32>
    %17 = math.rsqrt %16 : vector<24x1xf32>
    %18 = vector.broadcast %17 : vector<24x1xf32> to vector<24x64xf32>
    %19 = arith.mulf %9, %18 : vector<24x64xf32>
    %20 = vector.broadcast %2 : vector<1x64xf32> to vector<24x64xf32>
    %21 = arith.mulf %19, %20 : vector<24x64xf32>
    %22 = vector.broadcast %3 : vector<1x64xf32> to vector<24x64xf32>
    %23 = arith.addf %21, %22 : vector<24x64xf32>
    %24 = arith.truncf %23 : vector<24x64xf32> to vector<24x64xbf16>
    %c0_10 = arith.constant 0 : index
    %c0_11 = arith.constant 0 : index
    %25 = vector.load %arg5[%c0_10, %c0_11] : memref<64x192xbf16, #tpu.memory_space<vmem>>, vector<64x192xbf16>
    %cst_12 = arith.constant dense<0.000000e+00> : vector<24x192xf32>
    %26 = tpu.matmul %24, %25, %cst_12 {dimension_numbers = #tpu.dot_dimension_numbers<[1], [0], [0], [1], [0, 0, 1, 1], [], []>} : vector<24x64xbf16>, vector<64x192xbf16>, vector<24x192xf32> -> vector<24x192xf32>
    %c0_13 = arith.constant 0 : index
    %c0_14 = arith.constant 0 : index
    %27 = vector.load %arg6[%c0_13, %c0_14] : memref<1x192xf32, #tpu.memory_space<vmem>>, vector<1x192xf32>
    %28 = vector.broadcast %27 : vector<1x192xf32> to vector<24x192xf32>
    %29 = arith.addf %26, %28 : vector<24x192xf32>
    %c0_15 = arith.constant 0 : index
    %c0_16 = arith.constant 0 : index
    %30 = vector.load %arg2[%c0_15, %c0_16] : memref<1x24xf32, #tpu.memory_space<vmem>>, vector<1x24xf32>
    %31 = vector.extract_strided_slice %29 {offsets = [0, 0], sizes = [24, 16], strides = [1, 1]} : vector<24x192xf32> to vector<24x16xf32>
    %32 = vector.extract_strided_slice %29 {offsets = [0, 64], sizes = [24, 16], strides = [1, 1]} : vector<24x192xf32> to vector<24x16xf32>
    %33 = vector.extract_strided_slice %29 {offsets = [0, 128], sizes = [24, 16], strides = [1, 1]} : vector<24x192xf32> to vector<24x16xf32>
    %cst_17 = arith.constant dense<0.000000e+00> : vector<24x24xf32>
    %34 = tpu.matmul %31, %32, %cst_17 {dimension_numbers = #tpu.dot_dimension_numbers<[1], [1], [0], [0], [0, 0, 1, 0], [], []>} : vector<24x16xf32>, vector<24x16xf32>, vector<24x24xf32> -> vector<24x24xf32>
    %cst_18 = arith.constant 2.500000e-01 : f32
    %35 = vector.broadcast %cst_18 : f32 to vector<24x24xf32>
    %36 = arith.mulf %34, %35 : vector<24x24xf32>
    %37 = vector.broadcast %30 : vector<1x24xf32> to vector<24x24xf32>
    %38 = arith.addf %36, %37 : vector<24x24xf32>
    %cst_19 = arith.constant dense<0xFF800000> : vector<24xf32>
    %39 = vector.multi_reduction <maximumf>, %38, %cst_19 [1] : vector<24x24xf32> to vector<24xf32>
    %40 = vector.shape_cast %39 : vector<24xf32> to vector<24x1xf32>
    %41 = vector.broadcast %40 : vector<24x1xf32> to vector<24x24xf32>
    %42 = arith.subf %38, %41 : vector<24x24xf32>
    %43 = math.exp %42 : vector<24x24xf32>
    %cst_20 = arith.constant dense<0.000000e+00> : vector<24xf32>
    %44 = vector.multi_reduction <add>, %43, %cst_20 [1] : vector<24x24xf32> to vector<24xf32>
    %45 = vector.shape_cast %44 : vector<24xf32> to vector<24x1xf32>
    %46 = tpu.reciprocal %45 {approx = true} : vector<24x1xf32> -> vector<24x1xf32>
    %47 = vector.broadcast %46 : vector<24x1xf32> to vector<24x24xf32>
    %48 = arith.mulf %43, %47 : vector<24x24xf32>
    %cst_21 = arith.constant dense<0.000000e+00> : vector<24x16xf32>
    %49 = tpu.matmul %48, %33, %cst_21 {dimension_numbers = #tpu.dot_dimension_numbers<[1], [0], [0], [1], [0, 0, 1, 1], [], []>} : vector<24x24xf32>, vector<24x16xf32>, vector<24x16xf32> -> vector<24x16xf32>
    %50 = arith.truncf %49 : vector<24x16xf32> to vector<24x16xbf16>
    %c0_22 = arith.constant 0 : index
    %c0_23 = arith.constant 0 : index
    %51 = vector.load %arg7[%c0_22, %c0_23] : memref<64x64xbf16, #tpu.memory_space<vmem>>, vector<16x64xbf16>
    %cst_24 = arith.constant dense<0.000000e+00> : vector<24x64xf32>
    %52 = tpu.matmul %50, %51, %cst_24 {dimension_numbers = #tpu.dot_dimension_numbers<[1], [0], [0], [1], [0, 0, 1, 1], [], []>} : vector<24x16xbf16>, vector<16x64xbf16>, vector<24x64xf32> -> vector<24x64xf32>
    %53 = vector.extract_strided_slice %29 {offsets = [0, 16], sizes = [24, 16], strides = [1, 1]} : vector<24x192xf32> to vector<24x16xf32>
    %54 = vector.extract_strided_slice %29 {offsets = [0, 80], sizes = [24, 16], strides = [1, 1]} : vector<24x192xf32> to vector<24x16xf32>
    %55 = vector.extract_strided_slice %29 {offsets = [0, 144], sizes = [24, 16], strides = [1, 1]} : vector<24x192xf32> to vector<24x16xf32>
    %cst_25 = arith.constant dense<0.000000e+00> : vector<24x24xf32>
    %56 = tpu.matmul %53, %54, %cst_25 {dimension_numbers = #tpu.dot_dimension_numbers<[1], [1], [0], [0], [0, 0, 1, 0], [], []>} : vector<24x16xf32>, vector<24x16xf32>, vector<24x24xf32> -> vector<24x24xf32>
    %cst_26 = arith.constant 2.500000e-01 : f32
    %57 = vector.broadcast %cst_26 : f32 to vector<24x24xf32>
    %58 = arith.mulf %56, %57 : vector<24x24xf32>
    %59 = vector.broadcast %30 : vector<1x24xf32> to vector<24x24xf32>
    %60 = arith.addf %58, %59 : vector<24x24xf32>
    %cst_27 = arith.constant dense<0xFF800000> : vector<24xf32>
    %61 = vector.multi_reduction <maximumf>, %60, %cst_27 [1] : vector<24x24xf32> to vector<24xf32>
    %62 = vector.shape_cast %61 : vector<24xf32> to vector<24x1xf32>
    %63 = vector.broadcast %62 : vector<24x1xf32> to vector<24x24xf32>
    %64 = arith.subf %60, %63 : vector<24x24xf32>
    %65 = math.exp %64 : vector<24x24xf32>
    %cst_28 = arith.constant dense<0.000000e+00> : vector<24xf32>
    %66 = vector.multi_reduction <add>, %65, %cst_28 [1] : vector<24x24xf32> to vector<24xf32>
    %67 = vector.shape_cast %66 : vector<24xf32> to vector<24x1xf32>
    %68 = tpu.reciprocal %67 {approx = true} : vector<24x1xf32> -> vector<24x1xf32>
    %69 = vector.broadcast %68 : vector<24x1xf32> to vector<24x24xf32>
    %70 = arith.mulf %65, %69 : vector<24x24xf32>
    %cst_29 = arith.constant dense<0.000000e+00> : vector<24x16xf32>
    %71 = tpu.matmul %70, %55, %cst_29 {dimension_numbers = #tpu.dot_dimension_numbers<[1], [0], [0], [1], [0, 0, 1, 1], [], []>} : vector<24x24xf32>, vector<24x16xf32>, vector<24x16xf32> -> vector<24x16xf32>
    %72 = arith.truncf %71 : vector<24x16xf32> to vector<24x16xbf16>
    %c16 = arith.constant 16 : index
    %c0_30 = arith.constant 0 : index
    %73 = vector.load %arg7[%c16, %c0_30] : memref<64x64xbf16, #tpu.memory_space<vmem>>, vector<16x64xbf16>
    %cst_31 = arith.constant dense<0.000000e+00> : vector<24x64xf32>
    %74 = tpu.matmul %72, %73, %cst_31 {dimension_numbers = #tpu.dot_dimension_numbers<[1], [0], [0], [1], [0, 0, 1, 1], [], []>} : vector<24x16xbf16>, vector<16x64xbf16>, vector<24x64xf32> -> vector<24x64xf32>
    %75 = arith.addf %52, %74 : vector<24x64xf32>
    %76 = vector.extract_strided_slice %29 {offsets = [0, 32], sizes = [24, 16], strides = [1, 1]} : vector<24x192xf32> to vector<24x16xf32>
    %77 = vector.extract_strided_slice %29 {offsets = [0, 96], sizes = [24, 16], strides = [1, 1]} : vector<24x192xf32> to vector<24x16xf32>
    %78 = vector.extract_strided_slice %29 {offsets = [0, 160], sizes = [24, 16], strides = [1, 1]} : vector<24x192xf32> to vector<24x16xf32>
    %cst_32 = arith.constant dense<0.000000e+00> : vector<24x24xf32>
    %79 = tpu.matmul %76, %77, %cst_32 {dimension_numbers = #tpu.dot_dimension_numbers<[1], [1], [0], [0], [0, 0, 1, 0], [], []>} : vector<24x16xf32>, vector<24x16xf32>, vector<24x24xf32> -> vector<24x24xf32>
    %cst_33 = arith.constant 2.500000e-01 : f32
    %80 = vector.broadcast %cst_33 : f32 to vector<24x24xf32>
    %81 = arith.mulf %79, %80 : vector<24x24xf32>
    %82 = vector.broadcast %30 : vector<1x24xf32> to vector<24x24xf32>
    %83 = arith.addf %81, %82 : vector<24x24xf32>
    %cst_34 = arith.constant dense<0xFF800000> : vector<24xf32>
    %84 = vector.multi_reduction <maximumf>, %83, %cst_34 [1] : vector<24x24xf32> to vector<24xf32>
    %85 = vector.shape_cast %84 : vector<24xf32> to vector<24x1xf32>
    %86 = vector.broadcast %85 : vector<24x1xf32> to vector<24x24xf32>
    %87 = arith.subf %83, %86 : vector<24x24xf32>
    %88 = math.exp %87 : vector<24x24xf32>
    %cst_35 = arith.constant dense<0.000000e+00> : vector<24xf32>
    %89 = vector.multi_reduction <add>, %88, %cst_35 [1] : vector<24x24xf32> to vector<24xf32>
    %90 = vector.shape_cast %89 : vector<24xf32> to vector<24x1xf32>
    %91 = tpu.reciprocal %90 {approx = true} : vector<24x1xf32> -> vector<24x1xf32>
    %92 = vector.broadcast %91 : vector<24x1xf32> to vector<24x24xf32>
    %93 = arith.mulf %88, %92 : vector<24x24xf32>
    %cst_36 = arith.constant dense<0.000000e+00> : vector<24x16xf32>
    %94 = tpu.matmul %93, %78, %cst_36 {dimension_numbers = #tpu.dot_dimension_numbers<[1], [0], [0], [1], [0, 0, 1, 1], [], []>} : vector<24x24xf32>, vector<24x16xf32>, vector<24x16xf32> -> vector<24x16xf32>
    %95 = arith.truncf %94 : vector<24x16xf32> to vector<24x16xbf16>
    %c32 = arith.constant 32 : index
    %c0_37 = arith.constant 0 : index
    %96 = vector.load %arg7[%c32, %c0_37] : memref<64x64xbf16, #tpu.memory_space<vmem>>, vector<16x64xbf16>
    %cst_38 = arith.constant dense<0.000000e+00> : vector<24x64xf32>
    %97 = tpu.matmul %95, %96, %cst_38 {dimension_numbers = #tpu.dot_dimension_numbers<[1], [0], [0], [1], [0, 0, 1, 1], [], []>} : vector<24x16xbf16>, vector<16x64xbf16>, vector<24x64xf32> -> vector<24x64xf32>
    %98 = arith.addf %75, %97 : vector<24x64xf32>
    %99 = vector.extract_strided_slice %29 {offsets = [0, 48], sizes = [24, 16], strides = [1, 1]} : vector<24x192xf32> to vector<24x16xf32>
    %100 = vector.extract_strided_slice %29 {offsets = [0, 112], sizes = [24, 16], strides = [1, 1]} : vector<24x192xf32> to vector<24x16xf32>
    %101 = vector.extract_strided_slice %29 {offsets = [0, 176], sizes = [24, 16], strides = [1, 1]} : vector<24x192xf32> to vector<24x16xf32>
    %cst_39 = arith.constant dense<0.000000e+00> : vector<24x24xf32>
    %102 = tpu.matmul %99, %100, %cst_39 {dimension_numbers = #tpu.dot_dimension_numbers<[1], [1], [0], [0], [0, 0, 1, 0], [], []>} : vector<24x16xf32>, vector<24x16xf32>, vector<24x24xf32> -> vector<24x24xf32>
    %cst_40 = arith.constant 2.500000e-01 : f32
    %103 = vector.broadcast %cst_40 : f32 to vector<24x24xf32>
    %104 = arith.mulf %102, %103 : vector<24x24xf32>
    %105 = vector.broadcast %30 : vector<1x24xf32> to vector<24x24xf32>
    %106 = arith.addf %104, %105 : vector<24x24xf32>
    %cst_41 = arith.constant dense<0xFF800000> : vector<24xf32>
    %107 = vector.multi_reduction <maximumf>, %106, %cst_41 [1] : vector<24x24xf32> to vector<24xf32>
    %108 = vector.shape_cast %107 : vector<24xf32> to vector<24x1xf32>
    %109 = vector.broadcast %108 : vector<24x1xf32> to vector<24x24xf32>
    %110 = arith.subf %106, %109 : vector<24x24xf32>
    %111 = math.exp %110 : vector<24x24xf32>
    %cst_42 = arith.constant dense<0.000000e+00> : vector<24xf32>
    %112 = vector.multi_reduction <add>, %111, %cst_42 [1] : vector<24x24xf32> to vector<24xf32>
    %113 = vector.shape_cast %112 : vector<24xf32> to vector<24x1xf32>
    %114 = tpu.reciprocal %113 {approx = true} : vector<24x1xf32> -> vector<24x1xf32>
    %115 = vector.broadcast %114 : vector<24x1xf32> to vector<24x24xf32>
    %116 = arith.mulf %111, %115 : vector<24x24xf32>
    %cst_43 = arith.constant dense<0.000000e+00> : vector<24x16xf32>
    %117 = tpu.matmul %116, %101, %cst_43 {dimension_numbers = #tpu.dot_dimension_numbers<[1], [0], [0], [1], [0, 0, 1, 1], [], []>} : vector<24x24xf32>, vector<24x16xf32>, vector<24x16xf32> -> vector<24x16xf32>
    %118 = arith.truncf %117 : vector<24x16xf32> to vector<24x16xbf16>
    %c48 = arith.constant 48 : index
    %c0_44 = arith.constant 0 : index
    %119 = vector.load %arg7[%c48, %c0_44] : memref<64x64xbf16, #tpu.memory_space<vmem>>, vector<16x64xbf16>
    %cst_45 = arith.constant dense<0.000000e+00> : vector<24x64xf32>
    %120 = tpu.matmul %118, %119, %cst_45 {dimension_numbers = #tpu.dot_dimension_numbers<[1], [0], [0], [1], [0, 0, 1, 1], [], []>} : vector<24x16xbf16>, vector<16x64xbf16>, vector<24x64xf32> -> vector<24x64xf32>
    %121 = arith.addf %98, %120 : vector<24x64xf32>
    %c0_46 = arith.constant 0 : index
    %c0_47 = arith.constant 0 : index
    %122 = vector.load %arg9[%c0_46, %c0_47] : memref<1x64xf32, #tpu.memory_space<vmem>>, vector<1x64xf32>
    %c0_48 = arith.constant 0 : index
    %c0_49 = arith.constant 0 : index
    %123 = vector.load %arg8[%c0_48, %c0_49] : memref<1x64xf32, #tpu.memory_space<vmem>>, vector<1x64xf32>
    %124 = vector.broadcast %123 : vector<1x64xf32> to vector<24x64xf32>
    %125 = arith.addf %121, %124 : vector<24x64xf32>
    %126 = vector.broadcast %122 : vector<1x64xf32> to vector<24x64xf32>
    %127 = arith.mulf %126, %125 : vector<24x64xf32>
    %128 = arith.addf %1, %127 : vector<24x64xf32>
    %c0_50 = arith.constant 0 : index
    %c0_51 = arith.constant 0 : index
    %129 = vector.load %arg10[%c0_50, %c0_51] : memref<1x64xf32, #tpu.memory_space<vmem>>, vector<1x64xf32>
    %c0_52 = arith.constant 0 : index
    %c0_53 = arith.constant 0 : index
    %130 = vector.load %arg11[%c0_52, %c0_53] : memref<1x64xf32, #tpu.memory_space<vmem>>, vector<1x64xf32>
    %cst_54 = arith.constant dense<0.000000e+00> : vector<24xf32>
    %131 = vector.multi_reduction <add>, %128, %cst_54 [1] : vector<24x64xf32> to vector<24xf32>
    %132 = vector.shape_cast %131 : vector<24xf32> to vector<24x1xf32>
    %cst_55 = arith.constant 6.400000e+01 : f32
    %133 = vector.broadcast %cst_55 : f32 to vector<24x1xf32>
    %134 = arith.divf %132, %133 : vector<24x1xf32>
    %135 = vector.broadcast %134 : vector<24x1xf32> to vector<24x64xf32>
    %136 = arith.subf %128, %135 : vector<24x64xf32>
    %137 = arith.mulf %136, %136 : vector<24x64xf32>
    %cst_56 = arith.constant dense<0.000000e+00> : vector<24xf32>
    %138 = vector.multi_reduction <add>, %137, %cst_56 [1] : vector<24x64xf32> to vector<24xf32>
    %139 = vector.shape_cast %138 : vector<24xf32> to vector<24x1xf32>
    %cst_57 = arith.constant 6.400000e+01 : f32
    %140 = vector.broadcast %cst_57 : f32 to vector<24x1xf32>
    %141 = arith.divf %139, %140 : vector<24x1xf32>
    %cst_58 = arith.constant 9.99999997E-7 : f32
    %142 = vector.broadcast %cst_58 : f32 to vector<24x1xf32>
    %143 = arith.addf %141, %142 : vector<24x1xf32>
    %144 = math.rsqrt %143 : vector<24x1xf32>
    %145 = vector.broadcast %144 : vector<24x1xf32> to vector<24x64xf32>
    %146 = arith.mulf %136, %145 : vector<24x64xf32>
    %147 = vector.broadcast %129 : vector<1x64xf32> to vector<24x64xf32>
    %148 = arith.mulf %146, %147 : vector<24x64xf32>
    %149 = vector.broadcast %130 : vector<1x64xf32> to vector<24x64xf32>
    %150 = arith.addf %148, %149 : vector<24x64xf32>
    %151 = arith.truncf %150 : vector<24x64xf32> to vector<24x64xbf16>
    %c0_59 = arith.constant 0 : index
    %c0_60 = arith.constant 0 : index
    %152 = vector.load %arg12[%c0_59, %c0_60] : memref<64x256xbf16, #tpu.memory_space<vmem>>, vector<64x256xbf16>
    %cst_61 = arith.constant dense<0.000000e+00> : vector<24x256xf32>
    %153 = tpu.matmul %151, %152, %cst_61 {dimension_numbers = #tpu.dot_dimension_numbers<[1], [0], [0], [1], [0, 0, 1, 1], [], []>} : vector<24x64xbf16>, vector<64x256xbf16>, vector<24x256xf32> -> vector<24x256xf32>
    %c0_62 = arith.constant 0 : index
    %c0_63 = arith.constant 0 : index
    %154 = vector.load %arg13[%c0_62, %c0_63] : memref<1x256xf32, #tpu.memory_space<vmem>>, vector<1x256xf32>
    %155 = vector.broadcast %154 : vector<1x256xf32> to vector<24x256xf32>
    %156 = arith.addf %153, %155 : vector<24x256xf32>
    %cst_64 = arith.constant 5.000000e-01 : f32
    %157 = vector.broadcast %cst_64 : f32 to vector<24x256xf32>
    %158 = arith.mulf %157, %156 : vector<24x256xf32>
    %cst_65 = arith.constant 0.707106769 : f32
    %159 = vector.broadcast %cst_65 : f32 to vector<24x256xf32>
    %160 = arith.mulf %156, %159 : vector<24x256xf32>
    %161 = math.absf %160 : vector<24x256xf32>
    %cst_66 = arith.constant 0.327591091 : f32
    %162 = vector.broadcast %cst_66 : f32 to vector<24x256xf32>
    %163 = arith.mulf %162, %161 : vector<24x256xf32>
    %cst_67 = arith.constant 1.000000e+00 : f32
    %164 = vector.broadcast %cst_67 : f32 to vector<24x256xf32>
    %165 = arith.addf %164, %163 : vector<24x256xf32>
    %cst_68 = arith.constant 1.000000e+00 : f32
    %166 = vector.broadcast %cst_68 : f32 to vector<24x256xf32>
    %167 = arith.divf %166, %165 : vector<24x256xf32>
    %cst_69 = arith.constant 1.06140542 : f32
    %168 = vector.broadcast %cst_69 : f32 to vector<24x256xf32>
    %169 = arith.mulf %168, %167 : vector<24x256xf32>
    %cst_70 = arith.constant -1.45315206 : f32
    %170 = vector.broadcast %cst_70 : f32 to vector<24x256xf32>
    %171 = arith.addf %169, %170 : vector<24x256xf32>
    %172 = arith.mulf %171, %167 : vector<24x256xf32>
    %cst_71 = arith.constant 1.42141378 : f32
    %173 = vector.broadcast %cst_71 : f32 to vector<24x256xf32>
    %174 = arith.addf %172, %173 : vector<24x256xf32>
    %175 = arith.mulf %174, %167 : vector<24x256xf32>
    %cst_72 = arith.constant -0.284496725 : f32
    %176 = vector.broadcast %cst_72 : f32 to vector<24x256xf32>
    %177 = arith.addf %175, %176 : vector<24x256xf32>
    %178 = arith.mulf %177, %167 : vector<24x256xf32>
    %cst_73 = arith.constant 0.254829586 : f32
    %179 = vector.broadcast %cst_73 : f32 to vector<24x256xf32>
    %180 = arith.addf %178, %179 : vector<24x256xf32>
    %181 = arith.mulf %180, %167 : vector<24x256xf32>
    %cst_74 = arith.constant 0.000000e+00 : f32
    %182 = vector.broadcast %cst_74 : f32 to vector<24x256xf32>
    %183 = arith.subf %182, %161 : vector<24x256xf32>
    %184 = arith.mulf %183, %161 : vector<24x256xf32>
    %185 = math.exp %184 : vector<24x256xf32>
    %186 = arith.mulf %181, %185 : vector<24x256xf32>
    %cst_75 = arith.constant 1.000000e+00 : f32
    %187 = vector.broadcast %cst_75 : f32 to vector<24x256xf32>
    %188 = arith.subf %187, %186 : vector<24x256xf32>
    %cst_76 = arith.constant 0.000000e+00 : f32
    %189 = vector.broadcast %cst_76 : f32 to vector<24x256xf32>
    %190 = arith.cmpf oge, %160, %189 : vector<24x256xf32>
    %cst_77 = arith.constant 0.000000e+00 : f32
    %191 = vector.broadcast %cst_77 : f32 to vector<24x256xf32>
    %192 = arith.subf %191, %188 : vector<24x256xf32>
    %193 = arith.select %190, %188, %192 : vector<24x256xi1>, vector<24x256xf32>
    %cst_78 = arith.constant 1.000000e+00 : f32
    %194 = vector.broadcast %cst_78 : f32 to vector<24x256xf32>
    %195 = arith.addf %194, %193 : vector<24x256xf32>
    %196 = arith.mulf %158, %195 : vector<24x256xf32>
    %197 = arith.truncf %196 : vector<24x256xf32> to vector<24x256xbf16>
    %c0_79 = arith.constant 0 : index
    %c0_80 = arith.constant 0 : index
    %198 = vector.load %arg14[%c0_79, %c0_80] : memref<256x64xbf16, #tpu.memory_space<vmem>>, vector<256x64xbf16>
    %cst_81 = arith.constant dense<0.000000e+00> : vector<24x64xf32>
    %199 = tpu.matmul %197, %198, %cst_81 {dimension_numbers = #tpu.dot_dimension_numbers<[1], [0], [0], [1], [0, 0, 1, 1], [], []>} : vector<24x256xbf16>, vector<256x64xbf16>, vector<24x64xf32> -> vector<24x64xf32>
    %c0_82 = arith.constant 0 : index
    %c0_83 = arith.constant 0 : index
    %200 = vector.load %arg15[%c0_82, %c0_83] : memref<1x64xf32, #tpu.memory_space<vmem>>, vector<1x64xf32>
    %201 = vector.broadcast %200 : vector<1x64xf32> to vector<24x64xf32>
    %202 = arith.addf %199, %201 : vector<24x64xf32>
    %c0_84 = arith.constant 0 : index
    %c0_85 = arith.constant 0 : index
    %203 = vector.load %arg16[%c0_84, %c0_85] : memref<1x64xf32, #tpu.memory_space<vmem>>, vector<1x64xf32>
    %204 = vector.broadcast %203 : vector<1x64xf32> to vector<24x64xf32>
    %205 = arith.mulf %204, %202 : vector<24x64xf32>
    %206 = arith.addf %128, %205 : vector<24x64xf32>
    %c0_86 = arith.constant 0 : index
    %c0_87 = arith.constant 0 : index
    %c0_88 = arith.constant 0 : index
    %207 = vector.load %arg17[%c0_86, %c0_87, %c0_88] : memref<1x24x64xf32, #tpu.memory_space<vmem>>, vector<1x24x64xf32>
    %208 = vector.shape_cast %207 : vector<1x24x64xf32> to vector<24x64xf32>
    %209 = vector.shape_cast %206 : vector<24x64xf32> to vector<1x24x64xf32>
    tpu.vector_store %arg17[%c0_86, %c0_87, %c0_88], %209 {strides = array<i32>} : memref<1x24x64xf32, #tpu.memory_space<vmem>>, vector<1x24x64xf32>,
    return
  }
  func.func @transform_0(%arg0: i32) -> (i32, i32, i32) {
    %c0_i32 = arith.constant 0 : i32
    %c0_i32_0 = arith.constant 0 : i32
    %c0_i32_1 = arith.constant 0 : i32
    return %arg0, %c0_i32, %c0_i32_0 : i32, i32, i32
  }
  func.func @transform_1(%arg0: i32) -> (i32, i32) {
    %c0_i32 = arith.constant 0 : i32
    %c0_i32_0 = arith.constant 0 : i32
    %c0_i32_1 = arith.constant 0 : i32
    return %c0_i32, %c0_i32_0 : i32, i32
  }
  func.func @transform_2(%arg0: i32) -> (i32, i32) {
    %c0_i32 = arith.constant 0 : i32
    %c0_i32_0 = arith.constant 0 : i32
    %c0_i32_1 = arith.constant 0 : i32
    return %c0_i32, %c0_i32_0 : i32, i32
  }
  func.func @transform_3(%arg0: i32) -> (i32, i32) {
    %c0_i32 = arith.constant 0 : i32
    %c0_i32_0 = arith.constant 0 : i32
    %c0_i32_1 = arith.constant 0 : i32
    return %c0_i32, %c0_i32_0 : i32, i32
  }
  func.func @transform_4(%arg0: i32) -> (i32, i32) {
    %c0_i32 = arith.constant 0 : i32
    %c0_i32_0 = arith.constant 0 : i32
    %c0_i32_1 = arith.constant 0 : i32
    return %c0_i32, %c0_i32_0 : i32, i32
  }
  func.func @transform_5(%arg0: i32) -> (i32, i32) {
    %c0_i32 = arith.constant 0 : i32
    %c0_i32_0 = arith.constant 0 : i32
    %c0_i32_1 = arith.constant 0 : i32
    return %c0_i32, %c0_i32_0 : i32, i32
  }
  func.func @transform_6(%arg0: i32) -> (i32, i32) {
    %c0_i32 = arith.constant 0 : i32
    %c0_i32_0 = arith.constant 0 : i32
    %c0_i32_1 = arith.constant 0 : i32
    return %c0_i32, %c0_i32_0 : i32, i32
  }
  func.func @transform_7(%arg0: i32) -> (i32, i32) {
    %c0_i32 = arith.constant 0 : i32
    %c0_i32_0 = arith.constant 0 : i32
    %c0_i32_1 = arith.constant 0 : i32
    return %c0_i32, %c0_i32_0 : i32, i32
  }
  func.func @transform_8(%arg0: i32) -> (i32, i32) {
    %c0_i32 = arith.constant 0 : i32
    %c0_i32_0 = arith.constant 0 : i32
    %c0_i32_1 = arith.constant 0 : i32
    return %c0_i32, %c0_i32_0 : i32, i32
  }
  func.func @transform_9(%arg0: i32) -> (i32, i32) {
    %c0_i32 = arith.constant 0 : i32
    %c0_i32_0 = arith.constant 0 : i32
    %c0_i32_1 = arith.constant 0 : i32
    return %c0_i32, %c0_i32_0 : i32, i32
  }
  func.func @transform_10(%arg0: i32) -> (i32, i32) {
    %c0_i32 = arith.constant 0 : i32
    %c0_i32_0 = arith.constant 0 : i32
    %c0_i32_1 = arith.constant 0 : i32
    return %c0_i32, %c0_i32_0 : i32, i32
  }
  func.func @transform_11(%arg0: i32) -> (i32, i32) {
    %c0_i32 = arith.constant 0 : i32
    %c0_i32_0 = arith.constant 0 : i32
    %c0_i32_1 = arith.constant 0 : i32
    return %c0_i32, %c0_i32_0 : i32, i32
  }
  func.func @transform_12(%arg0: i32) -> (i32, i32) {
    %c0_i32 = arith.constant 0 : i32
    %c0_i32_0 = arith.constant 0 : i32
    %c0_i32_1 = arith.constant 0 : i32
    return %c0_i32, %c0_i32_0 : i32, i32
  }
  func.func @transform_13(%arg0: i32) -> (i32, i32) {
    %c0_i32 = arith.constant 0 : i32
    %c0_i32_0 = arith.constant 0 : i32
    %c0_i32_1 = arith.constant 0 : i32
    return %c0_i32, %c0_i32_0 : i32, i32
  }
  func.func @transform_14(%arg0: i32) -> (i32, i32) {
    %c0_i32 = arith.constant 0 : i32
    %c0_i32_0 = arith.constant 0 : i32
    %c0_i32_1 = arith.constant 0 : i32
    return %c0_i32, %c0_i32_0 : i32, i32
  }
  func.func @transform_15(%arg0: i32) -> (i32, i32) {
    %c0_i32 = arith.constant 0 : i32
    %c0_i32_0 = arith.constant 0 : i32
    %c0_i32_1 = arith.constant 0 : i32
    return %c0_i32, %c0_i32_0 : i32, i32
  }
  func.func @transform_16(%arg0: i32) -> (i32, i32, i32) {
    %c0_i32 = arith.constant 0 : i32
    %c0_i32_0 = arith.constant 0 : i32
    %c0_i32_1 = arith.constant 0 : i32
    return %arg0, %c0_i32, %c0_i32_0 : i32, i32, i32
  }
}

module attributes {stable_mosaic.version = 11 : i64} {
  func.func @_seg_head_kernel(%arg0: i32, %arg1: memref<1x16x64xf32, #tpu.memory_space<vmem>>, %arg2: memref<1x64xf32, #tpu.memory_space<vmem>>, %arg3: memref<1x64xf32, #tpu.memory_space<vmem>>, %arg4: memref<9x16x16xf32, #tpu.memory_space<vmem>>, %arg5: memref<576x256xbf16, #tpu.memory_space<vmem>>, %arg6: memref<1x256xf32, #tpu.memory_space<vmem>>, %arg7: memref<1x256xf32, #tpu.memory_space<vmem>>, %arg8: memref<2304x128xbf16, #tpu.memory_space<vmem>>, %arg9: memref<1x128xf32, #tpu.memory_space<vmem>>, %arg10: memref<1x128xf32, #tpu.memory_space<vmem>>, %arg11: memref<1152x64xbf16, #tpu.memory_space<vmem>>, %arg12: memref<1x64xf32, #tpu.memory_space<vmem>>, %arg13: memref<1x64xf32, #tpu.memory_space<vmem>>, %arg14: memref<2x64xbf16, #tpu.memory_space<vmem>>, %arg15: memref<2x1xf32, #tpu.memory_space<vmem>>, %arg16: memref<16x1024xf32, #tpu.memory_space<vmem>>, %arg17: memref<1x2x1024xf32, #tpu.memory_space<vmem>>) attributes {dimension_semantics = [#tpu.dimension_semantics<parallel>], iteration_bounds = array<i64: 2>, scalar_prefetch = 0 : i64, scratch_operands = 0 : i64, tpu.core_type = #tpu.core_type<tc>, window_params = [{transform_indices = @transform_0, window_bounds = array<i64: 1, 16, 64>}, {pipeline_mode = #tpu.pipeline_mode<synchronous>, transform_indices = @transform_1, window_bounds = array<i64: 1, 64>}, {pipeline_mode = #tpu.pipeline_mode<synchronous>, transform_indices = @transform_2, window_bounds = array<i64: 1, 64>}, {pipeline_mode = #tpu.pipeline_mode<synchronous>, transform_indices = @transform_3, window_bounds = array<i64: 9, 16, 16>}, {pipeline_mode = #tpu.pipeline_mode<synchronous>, transform_indices = @transform_4, window_bounds = array<i64: 576, 256>}, {pipeline_mode = #tpu.pipeline_mode<synchronous>, transform_indices = @transform_5, window_bounds = array<i64: 1, 256>}, {pipeline_mode = #tpu.pipeline_mode<synchronous>, transform_indices = @transform_6, window_bounds = array<i64: 1, 256>}, {pipeline_mode = #tpu.pipeline_mode<synchronous>, transform_indices = @transform_7, window_bounds = array<i64: 2304, 128>}, {pipeline_mode = #tpu.pipeline_mode<synchronous>, transform_indices = @transform_8, window_bounds = array<i64: 1, 128>}, {pipeline_mode = #tpu.pipeline_mode<synchronous>, transform_indices = @transform_9, window_bounds = array<i64: 1, 128>}, {pipeline_mode = #tpu.pipeline_mode<synchronous>, transform_indices = @transform_10, window_bounds = array<i64: 1152, 64>}, {pipeline_mode = #tpu.pipeline_mode<synchronous>, transform_indices = @transform_11, window_bounds = array<i64: 1, 64>}, {pipeline_mode = #tpu.pipeline_mode<synchronous>, transform_indices = @transform_12, window_bounds = array<i64: 1, 64>}, {pipeline_mode = #tpu.pipeline_mode<synchronous>, transform_indices = @transform_13, window_bounds = array<i64: 2, 64>}, {pipeline_mode = #tpu.pipeline_mode<synchronous>, transform_indices = @transform_14, window_bounds = array<i64: 2, 1>}, {pipeline_mode = #tpu.pipeline_mode<synchronous>, transform_indices = @transform_15, window_bounds = array<i64: 16, 1024>}, {transform_indices = @transform_16, window_bounds = array<i64: 1, 2, 1024>}]} {
    %c0 = arith.constant 0 : index
    %c0_0 = arith.constant 0 : index
    %c0_1 = arith.constant 0 : index
    %0 = vector.load %arg1[%c0, %c0_0, %c0_1] : memref<1x16x64xf32, #tpu.memory_space<vmem>>, vector<1x16x64xf32>
    %1 = vector.shape_cast %0 : vector<1x16x64xf32> to vector<16x64xf32>
    %c0_2 = arith.constant 0 : index
    %c0_3 = arith.constant 0 : index
    %2 = vector.load %arg2[%c0_2, %c0_3] : memref<1x64xf32, #tpu.memory_space<vmem>>, vector<1x64xf32>
    %c0_4 = arith.constant 0 : index
    %c0_5 = arith.constant 0 : index
    %3 = vector.load %arg3[%c0_4, %c0_5] : memref<1x64xf32, #tpu.memory_space<vmem>>, vector<1x64xf32>
    %cst = arith.constant dense<0.000000e+00> : vector<16xf32>
    %4 = vector.multi_reduction <add>, %1, %cst [1] : vector<16x64xf32> to vector<16xf32>
    %5 = vector.shape_cast %4 : vector<16xf32> to vector<16x1xf32>
    %cst_6 = arith.constant 6.400000e+01 : f32
    %6 = vector.broadcast %cst_6 : f32 to vector<16x1xf32>
    %7 = arith.divf %5, %6 : vector<16x1xf32>
    %8 = vector.broadcast %7 : vector<16x1xf32> to vector<16x64xf32>
    %9 = arith.subf %1, %8 : vector<16x64xf32>
    %10 = arith.mulf %9, %9 : vector<16x64xf32>
    %cst_7 = arith.constant dense<0.000000e+00> : vector<16xf32>
    %11 = vector.multi_reduction <add>, %10, %cst_7 [1] : vector<16x64xf32> to vector<16xf32>
    %12 = vector.shape_cast %11 : vector<16xf32> to vector<16x1xf32>
    %cst_8 = arith.constant 6.400000e+01 : f32
    %13 = vector.broadcast %cst_8 : f32 to vector<16x1xf32>
    %14 = arith.divf %12, %13 : vector<16x1xf32>
    %cst_9 = arith.constant 9.99999997E-7 : f32
    %15 = vector.broadcast %cst_9 : f32 to vector<16x1xf32>
    %16 = arith.addf %14, %15 : vector<16x1xf32>
    %17 = math.rsqrt %16 : vector<16x1xf32>
    %18 = vector.broadcast %17 : vector<16x1xf32> to vector<16x64xf32>
    %19 = arith.mulf %9, %18 : vector<16x64xf32>
    %20 = vector.broadcast %2 : vector<1x64xf32> to vector<16x64xf32>
    %21 = arith.mulf %19, %20 : vector<16x64xf32>
    %22 = vector.broadcast %3 : vector<1x64xf32> to vector<16x64xf32>
    %23 = arith.addf %21, %22 : vector<16x64xf32>
    %c0_10 = arith.constant 0 : index
    %c0_11 = arith.constant 0 : index
    %c0_12 = arith.constant 0 : index
    %24 = vector.load %arg4[%c0_10, %c0_11, %c0_12] : memref<9x16x16xf32, #tpu.memory_space<vmem>>, vector<1x16x16xf32>
    %25 = vector.shape_cast %24 : vector<1x16x16xf32> to vector<16x16xf32>
    %cst_13 = arith.constant dense<0.000000e+00> : vector<16x64xf32>
    %26 = tpu.matmul %25, %23, %cst_13 {dimension_numbers = #tpu.dot_dimension_numbers<[1], [0], [0], [1], [0, 0, 1, 1], [], []>} : vector<16x16xf32>, vector<16x64xf32>, vector<16x64xf32> -> vector<16x64xf32>
    %27 = arith.truncf %26 : vector<16x64xf32> to vector<16x64xbf16>
    %c0_14 = arith.constant 0 : index
    %c0_15 = arith.constant 0 : index
    %28 = vector.load %arg5[%c0_14, %c0_15] : memref<576x256xbf16, #tpu.memory_space<vmem>>, vector<64x256xbf16>
    %cst_16 = arith.constant dense<0.000000e+00> : vector<16x256xf32>
    %29 = tpu.matmul %27, %28, %cst_16 {dimension_numbers = #tpu.dot_dimension_numbers<[1], [0], [0], [1], [0, 0, 1, 1], [], []>} : vector<16x64xbf16>, vector<64x256xbf16>, vector<16x256xf32> -> vector<16x256xf32>
    %c1 = arith.constant 1 : index
    %c0_17 = arith.constant 0 : index
    %c0_18 = arith.constant 0 : index
    %30 = vector.load %arg4[%c1, %c0_17, %c0_18] : memref<9x16x16xf32, #tpu.memory_space<vmem>>, vector<1x16x16xf32>
    %31 = vector.shape_cast %30 : vector<1x16x16xf32> to vector<16x16xf32>
    %cst_19 = arith.constant dense<0.000000e+00> : vector<16x64xf32>
    %32 = tpu.matmul %31, %23, %cst_19 {dimension_numbers = #tpu.dot_dimension_numbers<[1], [0], [0], [1], [0, 0, 1, 1], [], []>} : vector<16x16xf32>, vector<16x64xf32>, vector<16x64xf32> -> vector<16x64xf32>
    %33 = arith.truncf %32 : vector<16x64xf32> to vector<16x64xbf16>
    %c64 = arith.constant 64 : index
    %c0_20 = arith.constant 0 : index
    %34 = vector.load %arg5[%c64, %c0_20] : memref<576x256xbf16, #tpu.memory_space<vmem>>, vector<64x256xbf16>
    %cst_21 = arith.constant dense<0.000000e+00> : vector<16x256xf32>
    %35 = tpu.matmul %33, %34, %cst_21 {dimension_numbers = #tpu.dot_dimension_numbers<[1], [0], [0], [1], [0, 0, 1, 1], [], []>} : vector<16x64xbf16>, vector<64x256xbf16>, vector<16x256xf32> -> vector<16x256xf32>
    %36 = arith.addf %29, %35 : vector<16x256xf32>
    %c2 = arith.constant 2 : index
    %c0_22 = arith.constant 0 : index
    %c0_23 = arith.constant 0 : index
    %37 = vector.load %arg4[%c2, %c0_22, %c0_23] : memref<9x16x16xf32, #tpu.memory_space<vmem>>, vector<1x16x16xf32>
    %38 = vector.shape_cast %37 : vector<1x16x16xf32> to vector<16x16xf32>
    %cst_24 = arith.constant dense<0.000000e+00> : vector<16x64xf32>
    %39 = tpu.matmul %38, %23, %cst_24 {dimension_numbers = #tpu.dot_dimension_numbers<[1], [0], [0], [1], [0, 0, 1, 1], [], []>} : vector<16x16xf32>, vector<16x64xf32>, vector<16x64xf32> -> vector<16x64xf32>
    %40 = arith.truncf %39 : vector<16x64xf32> to vector<16x64xbf16>
    %c128 = arith.constant 128 : index
    %c0_25 = arith.constant 0 : index
    %41 = vector.load %arg5[%c128, %c0_25] : memref<576x256xbf16, #tpu.memory_space<vmem>>, vector<64x256xbf16>
    %cst_26 = arith.constant dense<0.000000e+00> : vector<16x256xf32>
    %42 = tpu.matmul %40, %41, %cst_26 {dimension_numbers = #tpu.dot_dimension_numbers<[1], [0], [0], [1], [0, 0, 1, 1], [], []>} : vector<16x64xbf16>, vector<64x256xbf16>, vector<16x256xf32> -> vector<16x256xf32>
    %43 = arith.addf %36, %42 : vector<16x256xf32>
    %c3 = arith.constant 3 : index
    %c0_27 = arith.constant 0 : index
    %c0_28 = arith.constant 0 : index
    %44 = vector.load %arg4[%c3, %c0_27, %c0_28] : memref<9x16x16xf32, #tpu.memory_space<vmem>>, vector<1x16x16xf32>
    %45 = vector.shape_cast %44 : vector<1x16x16xf32> to vector<16x16xf32>
    %cst_29 = arith.constant dense<0.000000e+00> : vector<16x64xf32>
    %46 = tpu.matmul %45, %23, %cst_29 {dimension_numbers = #tpu.dot_dimension_numbers<[1], [0], [0], [1], [0, 0, 1, 1], [], []>} : vector<16x16xf32>, vector<16x64xf32>, vector<16x64xf32> -> vector<16x64xf32>
    %47 = arith.truncf %46 : vector<16x64xf32> to vector<16x64xbf16>
    %c192 = arith.constant 192 : index
    %c0_30 = arith.constant 0 : index
    %48 = vector.load %arg5[%c192, %c0_30] : memref<576x256xbf16, #tpu.memory_space<vmem>>, vector<64x256xbf16>
    %cst_31 = arith.constant dense<0.000000e+00> : vector<16x256xf32>
    %49 = tpu.matmul %47, %48, %cst_31 {dimension_numbers = #tpu.dot_dimension_numbers<[1], [0], [0], [1], [0, 0, 1, 1], [], []>} : vector<16x64xbf16>, vector<64x256xbf16>, vector<16x256xf32> -> vector<16x256xf32>
    %50 = arith.addf %43, %49 : vector<16x256xf32>
    %c4 = arith.constant 4 : index
    %c0_32 = arith.constant 0 : index
    %c0_33 = arith.constant 0 : index
    %51 = vector.load %arg4[%c4, %c0_32, %c0_33] : memref<9x16x16xf32, #tpu.memory_space<vmem>>, vector<1x16x16xf32>
    %52 = vector.shape_cast %51 : vector<1x16x16xf32> to vector<16x16xf32>
    %cst_34 = arith.constant dense<0.000000e+00> : vector<16x64xf32>
    %53 = tpu.matmul %52, %23, %cst_34 {dimension_numbers = #tpu.dot_dimension_numbers<[1], [0], [0], [1], [0, 0, 1, 1], [], []>} : vector<16x16xf32>, vector<16x64xf32>, vector<16x64xf32> -> vector<16x64xf32>
    %54 = arith.truncf %53 : vector<16x64xf32> to vector<16x64xbf16>
    %c256 = arith.constant 256 : index
    %c0_35 = arith.constant 0 : index
    %55 = vector.load %arg5[%c256, %c0_35] : memref<576x256xbf16, #tpu.memory_space<vmem>>, vector<64x256xbf16>
    %cst_36 = arith.constant dense<0.000000e+00> : vector<16x256xf32>
    %56 = tpu.matmul %54, %55, %cst_36 {dimension_numbers = #tpu.dot_dimension_numbers<[1], [0], [0], [1], [0, 0, 1, 1], [], []>} : vector<16x64xbf16>, vector<64x256xbf16>, vector<16x256xf32> -> vector<16x256xf32>
    %57 = arith.addf %50, %56 : vector<16x256xf32>
    %c5 = arith.constant 5 : index
    %c0_37 = arith.constant 0 : index
    %c0_38 = arith.constant 0 : index
    %58 = vector.load %arg4[%c5, %c0_37, %c0_38] : memref<9x16x16xf32, #tpu.memory_space<vmem>>, vector<1x16x16xf32>
    %59 = vector.shape_cast %58 : vector<1x16x16xf32> to vector<16x16xf32>
    %cst_39 = arith.constant dense<0.000000e+00> : vector<16x64xf32>
    %60 = tpu.matmul %59, %23, %cst_39 {dimension_numbers = #tpu.dot_dimension_numbers<[1], [0], [0], [1], [0, 0, 1, 1], [], []>} : vector<16x16xf32>, vector<16x64xf32>, vector<16x64xf32> -> vector<16x64xf32>
    %61 = arith.truncf %60 : vector<16x64xf32> to vector<16x64xbf16>
    %c320 = arith.constant 320 : index
    %c0_40 = arith.constant 0 : index
    %62 = vector.load %arg5[%c320, %c0_40] : memref<576x256xbf16, #tpu.memory_space<vmem>>, vector<64x256xbf16>
    %cst_41 = arith.constant dense<0.000000e+00> : vector<16x256xf32>
    %63 = tpu.matmul %61, %62, %cst_41 {dimension_numbers = #tpu.dot_dimension_numbers<[1], [0], [0], [1], [0, 0, 1, 1], [], []>} : vector<16x64xbf16>, vector<64x256xbf16>, vector<16x256xf32> -> vector<16x256xf32>
    %64 = arith.addf %57, %63 : vector<16x256xf32>
    %c6 = arith.constant 6 : index
    %c0_42 = arith.constant 0 : index
    %c0_43 = arith.constant 0 : index
    %65 = vector.load %arg4[%c6, %c0_42, %c0_43] : memref<9x16x16xf32, #tpu.memory_space<vmem>>, vector<1x16x16xf32>
    %66 = vector.shape_cast %65 : vector<1x16x16xf32> to vector<16x16xf32>
    %cst_44 = arith.constant dense<0.000000e+00> : vector<16x64xf32>
    %67 = tpu.matmul %66, %23, %cst_44 {dimension_numbers = #tpu.dot_dimension_numbers<[1], [0], [0], [1], [0, 0, 1, 1], [], []>} : vector<16x16xf32>, vector<16x64xf32>, vector<16x64xf32> -> vector<16x64xf32>
    %68 = arith.truncf %67 : vector<16x64xf32> to vector<16x64xbf16>
    %c384 = arith.constant 384 : index
    %c0_45 = arith.constant 0 : index
    %69 = vector.load %arg5[%c384, %c0_45] : memref<576x256xbf16, #tpu.memory_space<vmem>>, vector<64x256xbf16>
    %cst_46 = arith.constant dense<0.000000e+00> : vector<16x256xf32>
    %70 = tpu.matmul %68, %69, %cst_46 {dimension_numbers = #tpu.dot_dimension_numbers<[1], [0], [0], [1], [0, 0, 1, 1], [], []>} : vector<16x64xbf16>, vector<64x256xbf16>, vector<16x256xf32> -> vector<16x256xf32>
    %71 = arith.addf %64, %70 : vector<16x256xf32>
    %c7 = arith.constant 7 : index
    %c0_47 = arith.constant 0 : index
    %c0_48 = arith.constant 0 : index
    %72 = vector.load %arg4[%c7, %c0_47, %c0_48] : memref<9x16x16xf32, #tpu.memory_space<vmem>>, vector<1x16x16xf32>
    %73 = vector.shape_cast %72 : vector<1x16x16xf32> to vector<16x16xf32>
    %cst_49 = arith.constant dense<0.000000e+00> : vector<16x64xf32>
    %74 = tpu.matmul %73, %23, %cst_49 {dimension_numbers = #tpu.dot_dimension_numbers<[1], [0], [0], [1], [0, 0, 1, 1], [], []>} : vector<16x16xf32>, vector<16x64xf32>, vector<16x64xf32> -> vector<16x64xf32>
    %75 = arith.truncf %74 : vector<16x64xf32> to vector<16x64xbf16>
    %c448 = arith.constant 448 : index
    %c0_50 = arith.constant 0 : index
    %76 = vector.load %arg5[%c448, %c0_50] : memref<576x256xbf16, #tpu.memory_space<vmem>>, vector<64x256xbf16>
    %cst_51 = arith.constant dense<0.000000e+00> : vector<16x256xf32>
    %77 = tpu.matmul %75, %76, %cst_51 {dimension_numbers = #tpu.dot_dimension_numbers<[1], [0], [0], [1], [0, 0, 1, 1], [], []>} : vector<16x64xbf16>, vector<64x256xbf16>, vector<16x256xf32> -> vector<16x256xf32>
    %78 = arith.addf %71, %77 : vector<16x256xf32>
    %c8 = arith.constant 8 : index
    %c0_52 = arith.constant 0 : index
    %c0_53 = arith.constant 0 : index
    %79 = vector.load %arg4[%c8, %c0_52, %c0_53] : memref<9x16x16xf32, #tpu.memory_space<vmem>>, vector<1x16x16xf32>
    %80 = vector.shape_cast %79 : vector<1x16x16xf32> to vector<16x16xf32>
    %cst_54 = arith.constant dense<0.000000e+00> : vector<16x64xf32>
    %81 = tpu.matmul %80, %23, %cst_54 {dimension_numbers = #tpu.dot_dimension_numbers<[1], [0], [0], [1], [0, 0, 1, 1], [], []>} : vector<16x16xf32>, vector<16x64xf32>, vector<16x64xf32> -> vector<16x64xf32>
    %82 = arith.truncf %81 : vector<16x64xf32> to vector<16x64xbf16>
    %c512 = arith.constant 512 : index
    %c0_55 = arith.constant 0 : index
    %83 = vector.load %arg5[%c512, %c0_55] : memref<576x256xbf16, #tpu.memory_space<vmem>>, vector<64x256xbf16>
    %cst_56 = arith.constant dense<0.000000e+00> : vector<16x256xf32>
    %84 = tpu.matmul %82, %83, %cst_56 {dimension_numbers = #tpu.dot_dimension_numbers<[1], [0], [0], [1], [0, 0, 1, 1], [], []>} : vector<16x64xbf16>, vector<64x256xbf16>, vector<16x256xf32> -> vector<16x256xf32>
    %85 = arith.addf %78, %84 : vector<16x256xf32>
    %c0_57 = arith.constant 0 : index
    %c0_58 = arith.constant 0 : index
    %86 = vector.load %arg6[%c0_57, %c0_58] : memref<1x256xf32, #tpu.memory_space<vmem>>, vector<1x256xf32>
    %87 = vector.broadcast %86 : vector<1x256xf32> to vector<16x256xf32>
    %88 = arith.mulf %85, %87 : vector<16x256xf32>
    %c0_59 = arith.constant 0 : index
    %c0_60 = arith.constant 0 : index
    %89 = vector.load %arg7[%c0_59, %c0_60] : memref<1x256xf32, #tpu.memory_space<vmem>>, vector<1x256xf32>
    %90 = vector.broadcast %89 : vector<1x256xf32> to vector<16x256xf32>
    %91 = arith.addf %88, %90 : vector<16x256xf32>
    %cst_61 = arith.constant 0.000000e+00 : f32
    %92 = vector.broadcast %cst_61 : f32 to vector<16x256xf32>
    %93 = arith.maximumf %91, %92 : vector<16x256xf32>
    %c0_62 = arith.constant 0 : index
    %c0_63 = arith.constant 0 : index
    %c0_64 = arith.constant 0 : index
    %94 = vector.load %arg4[%c0_62, %c0_63, %c0_64] : memref<9x16x16xf32, #tpu.memory_space<vmem>>, vector<1x16x16xf32>
    %95 = vector.shape_cast %94 : vector<1x16x16xf32> to vector<16x16xf32>
    %cst_65 = arith.constant dense<0.000000e+00> : vector<16x256xf32>
    %96 = tpu.matmul %95, %93, %cst_65 {dimension_numbers = #tpu.dot_dimension_numbers<[1], [0], [0], [1], [0, 0, 1, 1], [], []>} : vector<16x16xf32>, vector<16x256xf32>, vector<16x256xf32> -> vector<16x256xf32>
    %97 = arith.truncf %96 : vector<16x256xf32> to vector<16x256xbf16>
    %c0_66 = arith.constant 0 : index
    %c0_67 = arith.constant 0 : index
    %98 = vector.load %arg8[%c0_66, %c0_67] : memref<2304x128xbf16, #tpu.memory_space<vmem>>, vector<256x128xbf16>
    %cst_68 = arith.constant dense<0.000000e+00> : vector<16x128xf32>
    %99 = tpu.matmul %97, %98, %cst_68 {dimension_numbers = #tpu.dot_dimension_numbers<[1], [0], [0], [1], [0, 0, 1, 1], [], []>} : vector<16x256xbf16>, vector<256x128xbf16>, vector<16x128xf32> -> vector<16x128xf32>
    %c1_69 = arith.constant 1 : index
    %c0_70 = arith.constant 0 : index
    %c0_71 = arith.constant 0 : index
    %100 = vector.load %arg4[%c1_69, %c0_70, %c0_71] : memref<9x16x16xf32, #tpu.memory_space<vmem>>, vector<1x16x16xf32>
    %101 = vector.shape_cast %100 : vector<1x16x16xf32> to vector<16x16xf32>
    %cst_72 = arith.constant dense<0.000000e+00> : vector<16x256xf32>
    %102 = tpu.matmul %101, %93, %cst_72 {dimension_numbers = #tpu.dot_dimension_numbers<[1], [0], [0], [1], [0, 0, 1, 1], [], []>} : vector<16x16xf32>, vector<16x256xf32>, vector<16x256xf32> -> vector<16x256xf32>
    %103 = arith.truncf %102 : vector<16x256xf32> to vector<16x256xbf16>
    %c256_73 = arith.constant 256 : index
    %c0_74 = arith.constant 0 : index
    %104 = vector.load %arg8[%c256_73, %c0_74] : memref<2304x128xbf16, #tpu.memory_space<vmem>>, vector<256x128xbf16>
    %cst_75 = arith.constant dense<0.000000e+00> : vector<16x128xf32>
    %105 = tpu.matmul %103, %104, %cst_75 {dimension_numbers = #tpu.dot_dimension_numbers<[1], [0], [0], [1], [0, 0, 1, 1], [], []>} : vector<16x256xbf16>, vector<256x128xbf16>, vector<16x128xf32> -> vector<16x128xf32>
    %106 = arith.addf %99, %105 : vector<16x128xf32>
    %c2_76 = arith.constant 2 : index
    %c0_77 = arith.constant 0 : index
    %c0_78 = arith.constant 0 : index
    %107 = vector.load %arg4[%c2_76, %c0_77, %c0_78] : memref<9x16x16xf32, #tpu.memory_space<vmem>>, vector<1x16x16xf32>
    %108 = vector.shape_cast %107 : vector<1x16x16xf32> to vector<16x16xf32>
    %cst_79 = arith.constant dense<0.000000e+00> : vector<16x256xf32>
    %109 = tpu.matmul %108, %93, %cst_79 {dimension_numbers = #tpu.dot_dimension_numbers<[1], [0], [0], [1], [0, 0, 1, 1], [], []>} : vector<16x16xf32>, vector<16x256xf32>, vector<16x256xf32> -> vector<16x256xf32>
    %110 = arith.truncf %109 : vector<16x256xf32> to vector<16x256xbf16>
    %c512_80 = arith.constant 512 : index
    %c0_81 = arith.constant 0 : index
    %111 = vector.load %arg8[%c512_80, %c0_81] : memref<2304x128xbf16, #tpu.memory_space<vmem>>, vector<256x128xbf16>
    %cst_82 = arith.constant dense<0.000000e+00> : vector<16x128xf32>
    %112 = tpu.matmul %110, %111, %cst_82 {dimension_numbers = #tpu.dot_dimension_numbers<[1], [0], [0], [1], [0, 0, 1, 1], [], []>} : vector<16x256xbf16>, vector<256x128xbf16>, vector<16x128xf32> -> vector<16x128xf32>
    %113 = arith.addf %106, %112 : vector<16x128xf32>
    %c3_83 = arith.constant 3 : index
    %c0_84 = arith.constant 0 : index
    %c0_85 = arith.constant 0 : index
    %114 = vector.load %arg4[%c3_83, %c0_84, %c0_85] : memref<9x16x16xf32, #tpu.memory_space<vmem>>, vector<1x16x16xf32>
    %115 = vector.shape_cast %114 : vector<1x16x16xf32> to vector<16x16xf32>
    %cst_86 = arith.constant dense<0.000000e+00> : vector<16x256xf32>
    %116 = tpu.matmul %115, %93, %cst_86 {dimension_numbers = #tpu.dot_dimension_numbers<[1], [0], [0], [1], [0, 0, 1, 1], [], []>} : vector<16x16xf32>, vector<16x256xf32>, vector<16x256xf32> -> vector<16x256xf32>
    %117 = arith.truncf %116 : vector<16x256xf32> to vector<16x256xbf16>
    %c768 = arith.constant 768 : index
    %c0_87 = arith.constant 0 : index
    %118 = vector.load %arg8[%c768, %c0_87] : memref<2304x128xbf16, #tpu.memory_space<vmem>>, vector<256x128xbf16>
    %cst_88 = arith.constant dense<0.000000e+00> : vector<16x128xf32>
    %119 = tpu.matmul %117, %118, %cst_88 {dimension_numbers = #tpu.dot_dimension_numbers<[1], [0], [0], [1], [0, 0, 1, 1], [], []>} : vector<16x256xbf16>, vector<256x128xbf16>, vector<16x128xf32> -> vector<16x128xf32>
    %120 = arith.addf %113, %119 : vector<16x128xf32>
    %c4_89 = arith.constant 4 : index
    %c0_90 = arith.constant 0 : index
    %c0_91 = arith.constant 0 : index
    %121 = vector.load %arg4[%c4_89, %c0_90, %c0_91] : memref<9x16x16xf32, #tpu.memory_space<vmem>>, vector<1x16x16xf32>
    %122 = vector.shape_cast %121 : vector<1x16x16xf32> to vector<16x16xf32>
    %cst_92 = arith.constant dense<0.000000e+00> : vector<16x256xf32>
    %123 = tpu.matmul %122, %93, %cst_92 {dimension_numbers = #tpu.dot_dimension_numbers<[1], [0], [0], [1], [0, 0, 1, 1], [], []>} : vector<16x16xf32>, vector<16x256xf32>, vector<16x256xf32> -> vector<16x256xf32>
    %124 = arith.truncf %123 : vector<16x256xf32> to vector<16x256xbf16>
    %c1024 = arith.constant 1024 : index
    %c0_93 = arith.constant 0 : index
    %125 = vector.load %arg8[%c1024, %c0_93] : memref<2304x128xbf16, #tpu.memory_space<vmem>>, vector<256x128xbf16>
    %cst_94 = arith.constant dense<0.000000e+00> : vector<16x128xf32>
    %126 = tpu.matmul %124, %125, %cst_94 {dimension_numbers = #tpu.dot_dimension_numbers<[1], [0], [0], [1], [0, 0, 1, 1], [], []>} : vector<16x256xbf16>, vector<256x128xbf16>, vector<16x128xf32> -> vector<16x128xf32>
    %127 = arith.addf %120, %126 : vector<16x128xf32>
    %c5_95 = arith.constant 5 : index
    %c0_96 = arith.constant 0 : index
    %c0_97 = arith.constant 0 : index
    %128 = vector.load %arg4[%c5_95, %c0_96, %c0_97] : memref<9x16x16xf32, #tpu.memory_space<vmem>>, vector<1x16x16xf32>
    %129 = vector.shape_cast %128 : vector<1x16x16xf32> to vector<16x16xf32>
    %cst_98 = arith.constant dense<0.000000e+00> : vector<16x256xf32>
    %130 = tpu.matmul %129, %93, %cst_98 {dimension_numbers = #tpu.dot_dimension_numbers<[1], [0], [0], [1], [0, 0, 1, 1], [], []>} : vector<16x16xf32>, vector<16x256xf32>, vector<16x256xf32> -> vector<16x256xf32>
    %131 = arith.truncf %130 : vector<16x256xf32> to vector<16x256xbf16>
    %c1280 = arith.constant 1280 : index
    %c0_99 = arith.constant 0 : index
    %132 = vector.load %arg8[%c1280, %c0_99] : memref<2304x128xbf16, #tpu.memory_space<vmem>>, vector<256x128xbf16>
    %cst_100 = arith.constant dense<0.000000e+00> : vector<16x128xf32>
    %133 = tpu.matmul %131, %132, %cst_100 {dimension_numbers = #tpu.dot_dimension_numbers<[1], [0], [0], [1], [0, 0, 1, 1], [], []>} : vector<16x256xbf16>, vector<256x128xbf16>, vector<16x128xf32> -> vector<16x128xf32>
    %134 = arith.addf %127, %133 : vector<16x128xf32>
    %c6_101 = arith.constant 6 : index
    %c0_102 = arith.constant 0 : index
    %c0_103 = arith.constant 0 : index
    %135 = vector.load %arg4[%c6_101, %c0_102, %c0_103] : memref<9x16x16xf32, #tpu.memory_space<vmem>>, vector<1x16x16xf32>
    %136 = vector.shape_cast %135 : vector<1x16x16xf32> to vector<16x16xf32>
    %cst_104 = arith.constant dense<0.000000e+00> : vector<16x256xf32>
    %137 = tpu.matmul %136, %93, %cst_104 {dimension_numbers = #tpu.dot_dimension_numbers<[1], [0], [0], [1], [0, 0, 1, 1], [], []>} : vector<16x16xf32>, vector<16x256xf32>, vector<16x256xf32> -> vector<16x256xf32>
    %138 = arith.truncf %137 : vector<16x256xf32> to vector<16x256xbf16>
    %c1536 = arith.constant 1536 : index
    %c0_105 = arith.constant 0 : index
    %139 = vector.load %arg8[%c1536, %c0_105] : memref<2304x128xbf16, #tpu.memory_space<vmem>>, vector<256x128xbf16>
    %cst_106 = arith.constant dense<0.000000e+00> : vector<16x128xf32>
    %140 = tpu.matmul %138, %139, %cst_106 {dimension_numbers = #tpu.dot_dimension_numbers<[1], [0], [0], [1], [0, 0, 1, 1], [], []>} : vector<16x256xbf16>, vector<256x128xbf16>, vector<16x128xf32> -> vector<16x128xf32>
    %141 = arith.addf %134, %140 : vector<16x128xf32>
    %c7_107 = arith.constant 7 : index
    %c0_108 = arith.constant 0 : index
    %c0_109 = arith.constant 0 : index
    %142 = vector.load %arg4[%c7_107, %c0_108, %c0_109] : memref<9x16x16xf32, #tpu.memory_space<vmem>>, vector<1x16x16xf32>
    %143 = vector.shape_cast %142 : vector<1x16x16xf32> to vector<16x16xf32>
    %cst_110 = arith.constant dense<0.000000e+00> : vector<16x256xf32>
    %144 = tpu.matmul %143, %93, %cst_110 {dimension_numbers = #tpu.dot_dimension_numbers<[1], [0], [0], [1], [0, 0, 1, 1], [], []>} : vector<16x16xf32>, vector<16x256xf32>, vector<16x256xf32> -> vector<16x256xf32>
    %145 = arith.truncf %144 : vector<16x256xf32> to vector<16x256xbf16>
    %c1792 = arith.constant 1792 : index
    %c0_111 = arith.constant 0 : index
    %146 = vector.load %arg8[%c1792, %c0_111] : memref<2304x128xbf16, #tpu.memory_space<vmem>>, vector<256x128xbf16>
    %cst_112 = arith.constant dense<0.000000e+00> : vector<16x128xf32>
    %147 = tpu.matmul %145, %146, %cst_112 {dimension_numbers = #tpu.dot_dimension_numbers<[1], [0], [0], [1], [0, 0, 1, 1], [], []>} : vector<16x256xbf16>, vector<256x128xbf16>, vector<16x128xf32> -> vector<16x128xf32>
    %148 = arith.addf %141, %147 : vector<16x128xf32>
    %c8_113 = arith.constant 8 : index
    %c0_114 = arith.constant 0 : index
    %c0_115 = arith.constant 0 : index
    %149 = vector.load %arg4[%c8_113, %c0_114, %c0_115] : memref<9x16x16xf32, #tpu.memory_space<vmem>>, vector<1x16x16xf32>
    %150 = vector.shape_cast %149 : vector<1x16x16xf32> to vector<16x16xf32>
    %cst_116 = arith.constant dense<0.000000e+00> : vector<16x256xf32>
    %151 = tpu.matmul %150, %93, %cst_116 {dimension_numbers = #tpu.dot_dimension_numbers<[1], [0], [0], [1], [0, 0, 1, 1], [], []>} : vector<16x16xf32>, vector<16x256xf32>, vector<16x256xf32> -> vector<16x256xf32>
    %152 = arith.truncf %151 : vector<16x256xf32> to vector<16x256xbf16>
    %c2048 = arith.constant 2048 : index
    %c0_117 = arith.constant 0 : index
    %153 = vector.load %arg8[%c2048, %c0_117] : memref<2304x128xbf16, #tpu.memory_space<vmem>>, vector<256x128xbf16>
    %cst_118 = arith.constant dense<0.000000e+00> : vector<16x128xf32>
    %154 = tpu.matmul %152, %153, %cst_118 {dimension_numbers = #tpu.dot_dimension_numbers<[1], [0], [0], [1], [0, 0, 1, 1], [], []>} : vector<16x256xbf16>, vector<256x128xbf16>, vector<16x128xf32> -> vector<16x128xf32>
    %155 = arith.addf %148, %154 : vector<16x128xf32>
    %c0_119 = arith.constant 0 : index
    %c0_120 = arith.constant 0 : index
    %156 = vector.load %arg9[%c0_119, %c0_120] : memref<1x128xf32, #tpu.memory_space<vmem>>, vector<1x128xf32>
    %157 = vector.broadcast %156 : vector<1x128xf32> to vector<16x128xf32>
    %158 = arith.mulf %155, %157 : vector<16x128xf32>
    %c0_121 = arith.constant 0 : index
    %c0_122 = arith.constant 0 : index
    %159 = vector.load %arg10[%c0_121, %c0_122] : memref<1x128xf32, #tpu.memory_space<vmem>>, vector<1x128xf32>
    %160 = vector.broadcast %159 : vector<1x128xf32> to vector<16x128xf32>
    %161 = arith.addf %158, %160 : vector<16x128xf32>
    %cst_123 = arith.constant 0.000000e+00 : f32
    %162 = vector.broadcast %cst_123 : f32 to vector<16x128xf32>
    %163 = arith.maximumf %161, %162 : vector<16x128xf32>
    %c0_124 = arith.constant 0 : index
    %c0_125 = arith.constant 0 : index
    %c0_126 = arith.constant 0 : index
    %164 = vector.load %arg4[%c0_124, %c0_125, %c0_126] : memref<9x16x16xf32, #tpu.memory_space<vmem>>, vector<1x16x16xf32>
    %165 = vector.shape_cast %164 : vector<1x16x16xf32> to vector<16x16xf32>
    %cst_127 = arith.constant dense<0.000000e+00> : vector<16x128xf32>
    %166 = tpu.matmul %165, %163, %cst_127 {dimension_numbers = #tpu.dot_dimension_numbers<[1], [0], [0], [1], [0, 0, 1, 1], [], []>} : vector<16x16xf32>, vector<16x128xf32>, vector<16x128xf32> -> vector<16x128xf32>
    %167 = arith.truncf %166 : vector<16x128xf32> to vector<16x128xbf16>
    %c0_128 = arith.constant 0 : index
    %c0_129 = arith.constant 0 : index
    %168 = vector.load %arg11[%c0_128, %c0_129] : memref<1152x64xbf16, #tpu.memory_space<vmem>>, vector<128x64xbf16>
    %cst_130 = arith.constant dense<0.000000e+00> : vector<16x64xf32>
    %169 = tpu.matmul %167, %168, %cst_130 {dimension_numbers = #tpu.dot_dimension_numbers<[1], [0], [0], [1], [0, 0, 1, 1], [], []>} : vector<16x128xbf16>, vector<128x64xbf16>, vector<16x64xf32> -> vector<16x64xf32>
    %c1_131 = arith.constant 1 : index
    %c0_132 = arith.constant 0 : index
    %c0_133 = arith.constant 0 : index
    %170 = vector.load %arg4[%c1_131, %c0_132, %c0_133] : memref<9x16x16xf32, #tpu.memory_space<vmem>>, vector<1x16x16xf32>
    %171 = vector.shape_cast %170 : vector<1x16x16xf32> to vector<16x16xf32>
    %cst_134 = arith.constant dense<0.000000e+00> : vector<16x128xf32>
    %172 = tpu.matmul %171, %163, %cst_134 {dimension_numbers = #tpu.dot_dimension_numbers<[1], [0], [0], [1], [0, 0, 1, 1], [], []>} : vector<16x16xf32>, vector<16x128xf32>, vector<16x128xf32> -> vector<16x128xf32>
    %173 = arith.truncf %172 : vector<16x128xf32> to vector<16x128xbf16>
    %c128_135 = arith.constant 128 : index
    %c0_136 = arith.constant 0 : index
    %174 = vector.load %arg11[%c128_135, %c0_136] : memref<1152x64xbf16, #tpu.memory_space<vmem>>, vector<128x64xbf16>
    %cst_137 = arith.constant dense<0.000000e+00> : vector<16x64xf32>
    %175 = tpu.matmul %173, %174, %cst_137 {dimension_numbers = #tpu.dot_dimension_numbers<[1], [0], [0], [1], [0, 0, 1, 1], [], []>} : vector<16x128xbf16>, vector<128x64xbf16>, vector<16x64xf32> -> vector<16x64xf32>
    %176 = arith.addf %169, %175 : vector<16x64xf32>
    %c2_138 = arith.constant 2 : index
    %c0_139 = arith.constant 0 : index
    %c0_140 = arith.constant 0 : index
    %177 = vector.load %arg4[%c2_138, %c0_139, %c0_140] : memref<9x16x16xf32, #tpu.memory_space<vmem>>, vector<1x16x16xf32>
    %178 = vector.shape_cast %177 : vector<1x16x16xf32> to vector<16x16xf32>
    %cst_141 = arith.constant dense<0.000000e+00> : vector<16x128xf32>
    %179 = tpu.matmul %178, %163, %cst_141 {dimension_numbers = #tpu.dot_dimension_numbers<[1], [0], [0], [1], [0, 0, 1, 1], [], []>} : vector<16x16xf32>, vector<16x128xf32>, vector<16x128xf32> -> vector<16x128xf32>
    %180 = arith.truncf %179 : vector<16x128xf32> to vector<16x128xbf16>
    %c256_142 = arith.constant 256 : index
    %c0_143 = arith.constant 0 : index
    %181 = vector.load %arg11[%c256_142, %c0_143] : memref<1152x64xbf16, #tpu.memory_space<vmem>>, vector<128x64xbf16>
    %cst_144 = arith.constant dense<0.000000e+00> : vector<16x64xf32>
    %182 = tpu.matmul %180, %181, %cst_144 {dimension_numbers = #tpu.dot_dimension_numbers<[1], [0], [0], [1], [0, 0, 1, 1], [], []>} : vector<16x128xbf16>, vector<128x64xbf16>, vector<16x64xf32> -> vector<16x64xf32>
    %183 = arith.addf %176, %182 : vector<16x64xf32>
    %c3_145 = arith.constant 3 : index
    %c0_146 = arith.constant 0 : index
    %c0_147 = arith.constant 0 : index
    %184 = vector.load %arg4[%c3_145, %c0_146, %c0_147] : memref<9x16x16xf32, #tpu.memory_space<vmem>>, vector<1x16x16xf32>
    %185 = vector.shape_cast %184 : vector<1x16x16xf32> to vector<16x16xf32>
    %cst_148 = arith.constant dense<0.000000e+00> : vector<16x128xf32>
    %186 = tpu.matmul %185, %163, %cst_148 {dimension_numbers = #tpu.dot_dimension_numbers<[1], [0], [0], [1], [0, 0, 1, 1], [], []>} : vector<16x16xf32>, vector<16x128xf32>, vector<16x128xf32> -> vector<16x128xf32>
    %187 = arith.truncf %186 : vector<16x128xf32> to vector<16x128xbf16>
    %c384_149 = arith.constant 384 : index
    %c0_150 = arith.constant 0 : index
    %188 = vector.load %arg11[%c384_149, %c0_150] : memref<1152x64xbf16, #tpu.memory_space<vmem>>, vector<128x64xbf16>
    %cst_151 = arith.constant dense<0.000000e+00> : vector<16x64xf32>
    %189 = tpu.matmul %187, %188, %cst_151 {dimension_numbers = #tpu.dot_dimension_numbers<[1], [0], [0], [1], [0, 0, 1, 1], [], []>} : vector<16x128xbf16>, vector<128x64xbf16>, vector<16x64xf32> -> vector<16x64xf32>
    %190 = arith.addf %183, %189 : vector<16x64xf32>
    %c4_152 = arith.constant 4 : index
    %c0_153 = arith.constant 0 : index
    %c0_154 = arith.constant 0 : index
    %191 = vector.load %arg4[%c4_152, %c0_153, %c0_154] : memref<9x16x16xf32, #tpu.memory_space<vmem>>, vector<1x16x16xf32>
    %192 = vector.shape_cast %191 : vector<1x16x16xf32> to vector<16x16xf32>
    %cst_155 = arith.constant dense<0.000000e+00> : vector<16x128xf32>
    %193 = tpu.matmul %192, %163, %cst_155 {dimension_numbers = #tpu.dot_dimension_numbers<[1], [0], [0], [1], [0, 0, 1, 1], [], []>} : vector<16x16xf32>, vector<16x128xf32>, vector<16x128xf32> -> vector<16x128xf32>
    %194 = arith.truncf %193 : vector<16x128xf32> to vector<16x128xbf16>
    %c512_156 = arith.constant 512 : index
    %c0_157 = arith.constant 0 : index
    %195 = vector.load %arg11[%c512_156, %c0_157] : memref<1152x64xbf16, #tpu.memory_space<vmem>>, vector<128x64xbf16>
    %cst_158 = arith.constant dense<0.000000e+00> : vector<16x64xf32>
    %196 = tpu.matmul %194, %195, %cst_158 {dimension_numbers = #tpu.dot_dimension_numbers<[1], [0], [0], [1], [0, 0, 1, 1], [], []>} : vector<16x128xbf16>, vector<128x64xbf16>, vector<16x64xf32> -> vector<16x64xf32>
    %197 = arith.addf %190, %196 : vector<16x64xf32>
    %c5_159 = arith.constant 5 : index
    %c0_160 = arith.constant 0 : index
    %c0_161 = arith.constant 0 : index
    %198 = vector.load %arg4[%c5_159, %c0_160, %c0_161] : memref<9x16x16xf32, #tpu.memory_space<vmem>>, vector<1x16x16xf32>
    %199 = vector.shape_cast %198 : vector<1x16x16xf32> to vector<16x16xf32>
    %cst_162 = arith.constant dense<0.000000e+00> : vector<16x128xf32>
    %200 = tpu.matmul %199, %163, %cst_162 {dimension_numbers = #tpu.dot_dimension_numbers<[1], [0], [0], [1], [0, 0, 1, 1], [], []>} : vector<16x16xf32>, vector<16x128xf32>, vector<16x128xf32> -> vector<16x128xf32>
    %201 = arith.truncf %200 : vector<16x128xf32> to vector<16x128xbf16>
    %c640 = arith.constant 640 : index
    %c0_163 = arith.constant 0 : index
    %202 = vector.load %arg11[%c640, %c0_163] : memref<1152x64xbf16, #tpu.memory_space<vmem>>, vector<128x64xbf16>
    %cst_164 = arith.constant dense<0.000000e+00> : vector<16x64xf32>
    %203 = tpu.matmul %201, %202, %cst_164 {dimension_numbers = #tpu.dot_dimension_numbers<[1], [0], [0], [1], [0, 0, 1, 1], [], []>} : vector<16x128xbf16>, vector<128x64xbf16>, vector<16x64xf32> -> vector<16x64xf32>
    %204 = arith.addf %197, %203 : vector<16x64xf32>
    %c6_165 = arith.constant 6 : index
    %c0_166 = arith.constant 0 : index
    %c0_167 = arith.constant 0 : index
    %205 = vector.load %arg4[%c6_165, %c0_166, %c0_167] : memref<9x16x16xf32, #tpu.memory_space<vmem>>, vector<1x16x16xf32>
    %206 = vector.shape_cast %205 : vector<1x16x16xf32> to vector<16x16xf32>
    %cst_168 = arith.constant dense<0.000000e+00> : vector<16x128xf32>
    %207 = tpu.matmul %206, %163, %cst_168 {dimension_numbers = #tpu.dot_dimension_numbers<[1], [0], [0], [1], [0, 0, 1, 1], [], []>} : vector<16x16xf32>, vector<16x128xf32>, vector<16x128xf32> -> vector<16x128xf32>
    %208 = arith.truncf %207 : vector<16x128xf32> to vector<16x128xbf16>
    %c768_169 = arith.constant 768 : index
    %c0_170 = arith.constant 0 : index
    %209 = vector.load %arg11[%c768_169, %c0_170] : memref<1152x64xbf16, #tpu.memory_space<vmem>>, vector<128x64xbf16>
    %cst_171 = arith.constant dense<0.000000e+00> : vector<16x64xf32>
    %210 = tpu.matmul %208, %209, %cst_171 {dimension_numbers = #tpu.dot_dimension_numbers<[1], [0], [0], [1], [0, 0, 1, 1], [], []>} : vector<16x128xbf16>, vector<128x64xbf16>, vector<16x64xf32> -> vector<16x64xf32>
    %211 = arith.addf %204, %210 : vector<16x64xf32>
    %c7_172 = arith.constant 7 : index
    %c0_173 = arith.constant 0 : index
    %c0_174 = arith.constant 0 : index
    %212 = vector.load %arg4[%c7_172, %c0_173, %c0_174] : memref<9x16x16xf32, #tpu.memory_space<vmem>>, vector<1x16x16xf32>
    %213 = vector.shape_cast %212 : vector<1x16x16xf32> to vector<16x16xf32>
    %cst_175 = arith.constant dense<0.000000e+00> : vector<16x128xf32>
    %214 = tpu.matmul %213, %163, %cst_175 {dimension_numbers = #tpu.dot_dimension_numbers<[1], [0], [0], [1], [0, 0, 1, 1], [], []>} : vector<16x16xf32>, vector<16x128xf32>, vector<16x128xf32> -> vector<16x128xf32>
    %215 = arith.truncf %214 : vector<16x128xf32> to vector<16x128xbf16>
    %c896 = arith.constant 896 : index
    %c0_176 = arith.constant 0 : index
    %216 = vector.load %arg11[%c896, %c0_176] : memref<1152x64xbf16, #tpu.memory_space<vmem>>, vector<128x64xbf16>
    %cst_177 = arith.constant dense<0.000000e+00> : vector<16x64xf32>
    %217 = tpu.matmul %215, %216, %cst_177 {dimension_numbers = #tpu.dot_dimension_numbers<[1], [0], [0], [1], [0, 0, 1, 1], [], []>} : vector<16x128xbf16>, vector<128x64xbf16>, vector<16x64xf32> -> vector<16x64xf32>
    %218 = arith.addf %211, %217 : vector<16x64xf32>
    %c8_178 = arith.constant 8 : index
    %c0_179 = arith.constant 0 : index
    %c0_180 = arith.constant 0 : index
    %219 = vector.load %arg4[%c8_178, %c0_179, %c0_180] : memref<9x16x16xf32, #tpu.memory_space<vmem>>, vector<1x16x16xf32>
    %220 = vector.shape_cast %219 : vector<1x16x16xf32> to vector<16x16xf32>
    %cst_181 = arith.constant dense<0.000000e+00> : vector<16x128xf32>
    %221 = tpu.matmul %220, %163, %cst_181 {dimension_numbers = #tpu.dot_dimension_numbers<[1], [0], [0], [1], [0, 0, 1, 1], [], []>} : vector<16x16xf32>, vector<16x128xf32>, vector<16x128xf32> -> vector<16x128xf32>
    %222 = arith.truncf %221 : vector<16x128xf32> to vector<16x128xbf16>
    %c1024_182 = arith.constant 1024 : index
    %c0_183 = arith.constant 0 : index
    %223 = vector.load %arg11[%c1024_182, %c0_183] : memref<1152x64xbf16, #tpu.memory_space<vmem>>, vector<128x64xbf16>
    %cst_184 = arith.constant dense<0.000000e+00> : vector<16x64xf32>
    %224 = tpu.matmul %222, %223, %cst_184 {dimension_numbers = #tpu.dot_dimension_numbers<[1], [0], [0], [1], [0, 0, 1, 1], [], []>} : vector<16x128xbf16>, vector<128x64xbf16>, vector<16x64xf32> -> vector<16x64xf32>
    %225 = arith.addf %218, %224 : vector<16x64xf32>
    %c0_185 = arith.constant 0 : index
    %c0_186 = arith.constant 0 : index
    %226 = vector.load %arg12[%c0_185, %c0_186] : memref<1x64xf32, #tpu.memory_space<vmem>>, vector<1x64xf32>
    %227 = vector.broadcast %226 : vector<1x64xf32> to vector<16x64xf32>
    %228 = arith.mulf %225, %227 : vector<16x64xf32>
    %c0_187 = arith.constant 0 : index
    %c0_188 = arith.constant 0 : index
    %229 = vector.load %arg13[%c0_187, %c0_188] : memref<1x64xf32, #tpu.memory_space<vmem>>, vector<1x64xf32>
    %230 = vector.broadcast %229 : vector<1x64xf32> to vector<16x64xf32>
    %231 = arith.addf %228, %230 : vector<16x64xf32>
    %cst_189 = arith.constant 0.000000e+00 : f32
    %232 = vector.broadcast %cst_189 : f32 to vector<16x64xf32>
    %233 = arith.maximumf %231, %232 : vector<16x64xf32>
    %c0_190 = arith.constant 0 : index
    %c0_191 = arith.constant 0 : index
    %234 = vector.load %arg14[%c0_190, %c0_191] : memref<2x64xbf16, #tpu.memory_space<vmem>>, vector<2x64xbf16>
    %235 = arith.truncf %233 : vector<16x64xf32> to vector<16x64xbf16>
    %cst_192 = arith.constant dense<0.000000e+00> : vector<2x16xf32>
    %236 = tpu.matmul %234, %235, %cst_192 {dimension_numbers = #tpu.dot_dimension_numbers<[1], [1], [0], [0], [0, 0, 1, 0], [], []>} : vector<2x64xbf16>, vector<16x64xbf16>, vector<2x16xf32> -> vector<2x16xf32>
    %c0_193 = arith.constant 0 : index
    %c0_194 = arith.constant 0 : index
    %237 = vector.load %arg15[%c0_193, %c0_194] : memref<2x1xf32, #tpu.memory_space<vmem>>, vector<2x1xf32>
    %238 = vector.broadcast %237 : vector<2x1xf32> to vector<2x16xf32>
    %239 = arith.addf %236, %238 : vector<2x16xf32>
    %c0_195 = arith.constant 0 : index
    %c0_196 = arith.constant 0 : index
    %240 = vector.load %arg16[%c0_195, %c0_196] : memref<16x1024xf32, #tpu.memory_space<vmem>>, vector<16x1024xf32>
    %cst_197 = arith.constant dense<0.000000e+00> : vector<2x1024xf32>
    %241 = tpu.matmul %239, %240, %cst_197 {dimension_numbers = #tpu.dot_dimension_numbers<[1], [0], [0], [1], [0, 0, 1, 1], [], []>} : vector<2x16xf32>, vector<16x1024xf32>, vector<2x1024xf32> -> vector<2x1024xf32>
    %c0_198 = arith.constant 0 : index
    %c0_199 = arith.constant 0 : index
    %c0_200 = arith.constant 0 : index
    %242 = vector.load %arg17[%c0_198, %c0_199, %c0_200] : memref<1x2x1024xf32, #tpu.memory_space<vmem>>, vector<1x2x1024xf32>
    %243 = vector.shape_cast %242 : vector<1x2x1024xf32> to vector<2x1024xf32>
    %244 = vector.shape_cast %241 : vector<2x1024xf32> to vector<1x2x1024xf32>
    tpu.vector_store %arg17[%c0_198, %c0_199, %c0_200], %244 {strides = array<i32>} : memref<1x2x1024xf32, #tpu.memory_space<vmem>>, vector<1x2x1024xf32>,
    return
  }
  func.func @transform_0(%arg0: i32) -> (i32, i32, i32) {
    %c0_i32 = arith.constant 0 : i32
    %c0_i32_0 = arith.constant 0 : i32
    %c0_i32_1 = arith.constant 0 : i32
    return %arg0, %c0_i32, %c0_i32_0 : i32, i32, i32
  }
  func.func @transform_1(%arg0: i32) -> (i32, i32) {
    %c0_i32 = arith.constant 0 : i32
    %c0_i32_0 = arith.constant 0 : i32
    %c0_i32_1 = arith.constant 0 : i32
    return %c0_i32, %c0_i32_0 : i32, i32
  }
  func.func @transform_2(%arg0: i32) -> (i32, i32) {
    %c0_i32 = arith.constant 0 : i32
    %c0_i32_0 = arith.constant 0 : i32
    %c0_i32_1 = arith.constant 0 : i32
    return %c0_i32, %c0_i32_0 : i32, i32
  }
  func.func @transform_3(%arg0: i32) -> (i32, i32, i32) {
    %c0_i32 = arith.constant 0 : i32
    %c0_i32_0 = arith.constant 0 : i32
    %c0_i32_1 = arith.constant 0 : i32
    %c0_i32_2 = arith.constant 0 : i32
    return %c0_i32, %c0_i32_0, %c0_i32_1 : i32, i32, i32
  }
  func.func @transform_4(%arg0: i32) -> (i32, i32) {
    %c0_i32 = arith.constant 0 : i32
    %c0_i32_0 = arith.constant 0 : i32
    %c0_i32_1 = arith.constant 0 : i32
    return %c0_i32, %c0_i32_0 : i32, i32
  }
  func.func @transform_5(%arg0: i32) -> (i32, i32) {
    %c0_i32 = arith.constant 0 : i32
    %c0_i32_0 = arith.constant 0 : i32
    %c0_i32_1 = arith.constant 0 : i32
    return %c0_i32, %c0_i32_0 : i32, i32
  }
  func.func @transform_6(%arg0: i32) -> (i32, i32) {
    %c0_i32 = arith.constant 0 : i32
    %c0_i32_0 = arith.constant 0 : i32
    %c0_i32_1 = arith.constant 0 : i32
    return %c0_i32, %c0_i32_0 : i32, i32
  }
  func.func @transform_7(%arg0: i32) -> (i32, i32) {
    %c0_i32 = arith.constant 0 : i32
    %c0_i32_0 = arith.constant 0 : i32
    %c0_i32_1 = arith.constant 0 : i32
    return %c0_i32, %c0_i32_0 : i32, i32
  }
  func.func @transform_8(%arg0: i32) -> (i32, i32) {
    %c0_i32 = arith.constant 0 : i32
    %c0_i32_0 = arith.constant 0 : i32
    %c0_i32_1 = arith.constant 0 : i32
    return %c0_i32, %c0_i32_0 : i32, i32
  }
  func.func @transform_9(%arg0: i32) -> (i32, i32) {
    %c0_i32 = arith.constant 0 : i32
    %c0_i32_0 = arith.constant 0 : i32
    %c0_i32_1 = arith.constant 0 : i32
    return %c0_i32, %c0_i32_0 : i32, i32
  }
  func.func @transform_10(%arg0: i32) -> (i32, i32) {
    %c0_i32 = arith.constant 0 : i32
    %c0_i32_0 = arith.constant 0 : i32
    %c0_i32_1 = arith.constant 0 : i32
    return %c0_i32, %c0_i32_0 : i32, i32
  }
  func.func @transform_11(%arg0: i32) -> (i32, i32) {
    %c0_i32 = arith.constant 0 : i32
    %c0_i32_0 = arith.constant 0 : i32
    %c0_i32_1 = arith.constant 0 : i32
    return %c0_i32, %c0_i32_0 : i32, i32
  }
  func.func @transform_12(%arg0: i32) -> (i32, i32) {
    %c0_i32 = arith.constant 0 : i32
    %c0_i32_0 = arith.constant 0 : i32
    %c0_i32_1 = arith.constant 0 : i32
    return %c0_i32, %c0_i32_0 : i32, i32
  }
  func.func @transform_13(%arg0: i32) -> (i32, i32) {
    %c0_i32 = arith.constant 0 : i32
    %c0_i32_0 = arith.constant 0 : i32
    %c0_i32_1 = arith.constant 0 : i32
    return %c0_i32, %c0_i32_0 : i32, i32
  }
  func.func @transform_14(%arg0: i32) -> (i32, i32) {
    %c0_i32 = arith.constant 0 : i32
    %c0_i32_0 = arith.constant 0 : i32
    %c0_i32_1 = arith.constant 0 : i32
    return %c0_i32, %c0_i32_0 : i32, i32
  }
  func.func @transform_15(%arg0: i32) -> (i32, i32) {
    %c0_i32 = arith.constant 0 : i32
    %c0_i32_0 = arith.constant 0 : i32
    %c0_i32_1 = arith.constant 0 : i32
    return %c0_i32, %c0_i32_0 : i32, i32
  }
  func.func @transform_16(%arg0: i32) -> (i32, i32, i32) {
    %c0_i32 = arith.constant 0 : i32
    %c0_i32_0 = arith.constant 0 : i32
    %c0_i32_1 = arith.constant 0 : i32
    return %arg0, %c0_i32, %c0_i32_0 : i32, i32, i32
  }
}

</mosaic_0001>

<llo_original>
// kernel: forward.4
$region0: #{forward.4}
  #allocation0 [shape = 'u32[]', space=smem, size = 0x4, offset = 0x4, fixed_abs, tag = 'smem constant byte address 0x4 - core index']
  #allocation1 [shape = 'u32[144,128]{1,0:T(1,128)}', space=vmem, size = 0x12000, scoped, tag = 'internal scratch']
  %s0 = inlined_call_operand.vmem [shape: f32[32,192], index: 0, kind: input, shape index: {}]
  %s1 = inlined_call_operand.vmem [shape: bf16[192,64], index: 1, kind: input, shape index: {}]
  %s2 = inlined_call_operand.vmem [shape: f32[1,64], index: 2, kind: input, shape index: {}]
  %s3 = inlined_call_operand.vmem [shape: f32[32,64], index: 3, kind: output, shape index: {}]
  %s4 = sld [smem:[#allocation0]]
  $region22: #{forward.4} parent=0
    _
  %s6 = ssub.s32 1, %s4
  %s7 = scalar_select 0, %s6, %s4
  // Predicated region
  $region2: #{forward.4} parent=0 // pred_check
    _
  $region3: #{forward.4} parent=0 // pred_check_branch
    %9 = sbr.rel (0) target = $region5
  $region4: #{forward.4} parent=0 // pred_region
    _
  $region5: #{forward.4} parent=0 // pred_fallthru
    _
  // Predicated region
  $region6: #{forward.4} parent=0 // pred_check
    _
  $region7: #{forward.4} parent=0 // pred_check_branch
    %11 = sbr.rel (0) target = $region9
  $region8: #{forward.4} parent=0 // pred_region
    _
  $region9: #{forward.4} parent=0 // pred_fallthru
    _
  // Predicated region
  $region10: #{forward.4} parent=0 // pred_check
    _
  $region11: #{forward.4} parent=0 // pred_check_branch
    %13 = sbr.rel (0) target = $region13
  $region12: #{forward.4} parent=0 // pred_region
    _
  $region13: #{forward.4} parent=0 // pred_fallthru
    _
  %v15 = vld [vmem:[%s0] sm:$0xff]
  %v16 = vld [vmem:[%s0 + $0x8] sm:$0xff]
  %v17 = vld [vmem:[%s0 + $0x10] sm:$0xff]
  %v18 = vld [vmem:[%s0 + $0x18] sm:$0xff]
  %v19 = vld [vmem:[%s0 + $0x20] sm:$0xff]
  %v20 = vld [vmem:[%s0 + $0x28] sm:$0xff]
  %v21 = vld [vmem:[%s0 + $0x30] sm:$0xff]
  %v22 = vld [vmem:[%s0 + $0x38] sm:$0xff]
  %v23 = vpack.c.bf16 %v17, %v15
  %v24 = vpack.c.bf16 %v18, %v16
  %v25 = vpack.c.bf16 %v21, %v19
  %v26 = vpack.c.bf16 %v22, %v20
  %v27 = vld [vmem:[%s1] sm:$0xf]
  %v28 = vld [vmem:[%s1 + $0x4] sm:$0xf]
  %v29 = vld [vmem:[%s1 + $0x8] sm:$0xf]
  %v30 = vld [vmem:[%s1 + $0xc] sm:$0xf]
  %v31 = vld [vmem:[%s1 + $0x10] sm:$0xf]
  %v32 = vld [vmem:[%s1 + $0x14] sm:$0xf]
  %v33 = vld [vmem:[%s1 + $0x18] sm:$0xf]
  %v34 = vld [vmem:[%s1 + $0x1c] sm:$0xf]
  %v35 = vld [vmem:[%s1 + $0x20] sm:$0xf]
  %v36 = vld [vmem:[%s1 + $0x24] sm:$0xf]
  %v37 = vld [vmem:[%s1 + $0x28] sm:$0xf]
  %v38 = vld [vmem:[%s1 + $0x2c] sm:$0xf]
  %v39 = vld [vmem:[%s1 + $0x30] sm:$0xf]
  %v40 = vld [vmem:[%s1 + $0x34] sm:$0xf]
  %v41 = vld [vmem:[%s1 + $0x38] sm:$0xf]
  %v42 = vld [vmem:[%s1 + $0x3c] sm:$0xf]
  %v43 = vld [vmem:[%s1 + $0x40] sm:$0xf]
  %v44 = vld [vmem:[%s1 + $0x44] sm:$0xf]
  %v45 = vld [vmem:[%s1 + $0x48] sm:$0xf]
  %v46 = vld [vmem:[%s1 + $0x4c] sm:$0xf]
  %v47 = vld [vmem:[%s1 + $0x50] sm:$0xf]
  %v48 = vld [vmem:[%s1 + $0x54] sm:$0xf]
  %v49 = vld [vmem:[%s1 + $0x58] sm:$0xf]
  %v50 = vld [vmem:[%s1 + $0x5c] sm:$0xf]
  %v51 = vld [vmem:[%s2] sm:$0x1]
  %v53 = vlaneseq
  %v54 = vshrl.u32 %v53, 7
  %v55 = vsub.s32 0, %v54
  %v56 = vrot.slane %v51, %v55
  %v82 = vunpack.c.l.b16 %v27
  %v83 = vunpack.c.l.b16 %v28
  %v84 = vunpack.c.l.b16 %v29
  %v85 = vunpack.c.l.b16 %v30
  %v86 = vunpack.c.l.b16 %v31
  %v87 = vunpack.c.l.b16 %v32
  %v88 = vunpack.c.l.b16 %v33
  %v89 = vunpack.c.l.b16 %v34
  %v90 = vunpack.c.l.b16 %v35
  %v91 = vunpack.c.l.b16 %v36
  %v92 = vunpack.c.l.b16 %v37
  %v93 = vunpack.c.l.b16 %v38
  %v94 = vunpack.c.l.b16 %v39
  %v95 = vunpack.c.l.b16 %v40
  %v96 = vunpack.c.l.b16 %v41
  %v97 = vunpack.c.l.b16 %v42
  %v98 = vunpack.c.l.b16 %v43
  %v99 = vunpack.c.l.b16 %v44
  %v100 = vunpack.c.l.b16 %v45
  %v101 = vunpack.c.l.b16 %v46
  %v102 = vunpack.c.l.b16 %v47
  %v103 = vunpack.c.l.b16 %v48
  %v104 = vunpack.c.l.b16 %v49
  %v105 = vunpack.c.l.b16 %v50
  %v106 = vpack.c.b16 %v83, %v82
  %v107 = vpack.c.b16 %v85, %v84
  %v108 = vpack.c.b16 %v87, %v86
  %v109 = vpack.c.b16 %v89, %v88
  %v110 = vpack.c.b16 %v91, %v90
  %v111 = vpack.c.b16 %v93, %v92
  %v112 = vpack.c.b16 %v95, %v94
  %v113 = vpack.c.b16 %v97, %v96
  %v114 = vpack.c.b16 %v99, %v98
  %v115 = vpack.c.b16 %v101, %v100
  %v116 = vpack.c.b16 %v103, %v102
  %v117 = vpack.c.b16 %v105, %v104
  %vm130 = vcmask 523264
  %v132 = vsel %vm130, %v24, 0
  %v135 = vsel %vm130, %v26, 0
  %137 = vmatprep.subr.bf16.mxu0 0
  %138 = vmatpush1.bf16.msra.mxu0 %v106
  %139 = vmatprep.subr.bf16.mxu0 0
  %140 = vmatpush1.bf16.msra.mxu0 %v107
  %141 = vmatprep.subr.bf16.mxu0 0
  %142 = vmatpush1.bf16.msra.mxu0 %v108
  %143 = vmatprep.subr.bf16.mxu0 0
  %144 = vmatpush1.bf16.msra.mxu0 %v109
  %145 = vmatprep.subr.bf16.mxu0 0
  %146 = vmatpush1.bf16.msra.mxu0 %v110
  %147 = vmatprep.subr.bf16.mxu0 0
  %148 = vmatpush1.bf16.msra.mxu0 %v111
  %149 = vmatprep.subr.bf16.mxu0 0
  %150 = vmatpush1.bf16.msra.mxu0 %v112
  %151 = vmatprep.subr.bf16.mxu0 0
  %152 = vmatpush1.bf16.msra.mxu0 %v113
  %153 = vmatprep.subr.bf16.mxu0 0
  %154 = vmatpush1.bf16.msra.mxu0 %v114
  %155 = vmatprep.subr.bf16.mxu0 0
  %156 = vmatpush1.bf16.msra.mxu0 %v115
  %157 = vmatprep.subr.bf16.mxu0 0
  %158 = vmatpush1.bf16.msra.mxu0 %v116
  %159 = vmatprep.subr.bf16.mxu0 0
  %160 = vmatpush1.bf16.msra.mxu0 %v117
  %161 = vmatprep.subr.bf16.mxu0 0
  %162 = vmatpush1.bf16.msra.mxu0 0
  %163 = vmatprep.subr.bf16.mxu0 0
  %164 = vmatpush1.bf16.msra.mxu0 0
  %165 = vmatprep.subr.bf16.mxu0 0
  %166 = vmatpush1.bf16.msra.mxu0 0
  %167 = vmatprep.subr.bf16.mxu0 0
  %168 = vmatpush1.bf16.msra.mxu0 0
  %169 = vmatprep.mubr.bf16.mxu0 %v132
  %170 = vmatmul.mubr.bf16.gmra.mrb[0].mxu0 %v23
  %v171 = vpop.f32.mrb[0].mxu0
  %v172 = vadd.f32 %v56, %v171
  %v173 = vpop.f32.mrb[0].mxu0
  %v174 = vpop.f32.mrb[0].mxu0
  %v175 = vadd.f32 %v56, %v174
  %v176 = vpop.f32.mrb[0].mxu0
  %177 = vmatprep.mubr.bf16.mxu0 %v135
  %178 = vmatmul.mubr.bf16.gmra.mrb[0].mxu0 %v25
  %v179 = vpop.f32.mrb[0].mxu0
  %v180 = vadd.f32 %v56, %v179
  %v181 = vpop.f32.mrb[0].mxu0
  %v182 = vpop.f32.mrb[0].mxu0
  %v183 = vadd.f32 %v56, %v182
  %v184 = vpop.f32.mrb[0].mxu0
  %185 = vdwg.mxu0
  %186 = vst.msk [vmem:[%s3] sm:$0xff] %vm130, %v172
  %187 = vst.msk [vmem:[%s3 + $0x8] sm:$0xff] %vm130, %v175
  %188 = vst.msk [vmem:[%s3 + $0x10] sm:$0xff] %vm130, %v180
  %189 = vst.msk [vmem:[%s3 + $0x18] sm:$0xff] %vm130, %v183
  // Predicated region
  $region14: #{forward.4} parent=0 // pred_check
    _
  $region15: #{forward.4} parent=0 // pred_check_branch
    %191 = sbr.rel (0) target = $region17
  $region16: #{forward.4} parent=0 // pred_region
    _
  $region17: #{forward.4} parent=0 // pred_fallthru
    _
  // Predicated region
  $region18: #{forward.4} parent=0 // pred_check
    _
  $region19: #{forward.4} parent=0 // pred_check_branch
    %193 = sbr.rel (0) target = $region21
  $region20: #{forward.4} parent=0 // pred_region
    _
  $region21: #{forward.4} parent=0 // pred_fallthru
    _

// kernel: forward.5
$region0: #{forward.5}
  #allocation0 [shape = 'u32[]', space=smem, size = 0x4, offset = 0x4, fixed_abs, tag = 'smem constant byte address 0x4 - core index']
  #allocation1 [shape = 'u32[144,128]{1,0:T(1,128)}', space=vmem, size = 0x12000, scoped, tag = 'internal scratch']
  %s0 = inlined_call_operand.vmem [shape: f32[2,24,64], index: 0, kind: input, shape index: {}]
  %s1 = inlined_call_operand.vmem [shape: f32[1,24], index: 1, kind: input, shape index: {}]
  %s2 = inlined_call_operand.vmem [shape: f32[1,64], index: 2, kind: input, shape index: {}]
  %s3 = inlined_call_operand.vmem [shape: f32[1,64], index: 3, kind: input, shape index: {}]
  %s4 = inlined_call_operand.vmem [shape: bf16[64,192], index: 4, kind: input, shape index: {}]
  %s5 = inlined_call_operand.vmem [shape: f32[1,192], index: 5, kind: input, shape index: {}]
  %s6 = inlined_call_operand.vmem [shape: bf16[64,64], index: 6, kind: input, shape index: {}]
  %s7 = inlined_call_operand.vmem [shape: f32[1,64], index: 7, kind: input, shape index: {}]
  %s8 = inlined_call_operand.vmem [shape: f32[1,64], index: 8, kind: input, shape index: {}]
  %s9 = inlined_call_operand.vmem [shape: f32[1,64], index: 9, kind: input, shape index: {}]
  %s10 = inlined_call_operand.vmem [shape: f32[1,64], index: 10, kind: input, shape index: {}]
  %s11 = inlined_call_operand.vmem [shape: bf16[64,256], index: 11, kind: input, shape index: {}]
  %s12 = inlined_call_operand.vmem [shape: f32[1,256], index: 12, kind: input, shape index: {}]
  %s13 = inlined_call_operand.vmem [shape: bf16[256,64], index: 13, kind: input, shape index: {}]
  %s14 = inlined_call_operand.vmem [shape: f32[1,64], index: 14, kind: input, shape index: {}]
  %s15 = inlined_call_operand.vmem [shape: f32[1,64], index: 15, kind: input, shape index: {}]
  %s16 = inlined_call_operand.vmem [shape: f32[2,24,64], index: 16, kind: output, shape index: {}]
  %s17 = sld [smem:[#allocation0]]
  $region97: #{forward.5} parent=0
    _
  %s19 = ssub.s32 1, %s17
  %s20 = scalar_select 0, %s19, %s17
  loop: start=0, step=1, limit=4
  $region2: #{forward.5} parent=0 // loop_pre_header
    _
  $region3: #{forward.5} parent=0 // loop_header
    %s22 = sphi 0, %s26
    %p23 = scmp.ge.s32.totalorder %s22, 4
    %s32 = sphi 0, %s34
    %s35 = sphi 0, %s32
    %s36 = sphi 0, %s35
    %s52 = sphi 0, %s36
    %s56 = sphi 0, %s56
    %s58 = sphi 0, %s56
    %s59 = sphi 0, %s58
    %s73 = sphi 0, %s59
    %s77 = sphi 0, %s77
    %s79 = sphi 0, %s77
    %s80 = sphi 0, %s79
    %s94 = sphi 0, %s80
    %s98 = sphi 0, %s98
    %s100 = sphi 0, %s98
    %s101 = sphi 0, %s100
    %s115 = sphi 0, %s101
    %s119 = sphi 0, %s119
    %s121 = sphi 0, %s119
    %s122 = sphi 0, %s121
    %s136 = sphi 0, %s122
    %s140 = sphi 0, %s140
    %s142 = sphi 0, %s140
    %s143 = sphi 0, %s142
    %s157 = sphi 0, %s143
    %s161 = sphi 0, %s161
    %s163 = sphi 0, %s161
    %s164 = sphi 0, %s163
    %s178 = sphi 0, %s164
    %s182 = sphi 0, %s182
    %s184 = sphi 0, %s182
    %s185 = sphi 0, %s184
    %s199 = sphi 0, %s185
    %s203 = sphi 0, %s203
    %s205 = sphi 0, %s203
    %s206 = sphi 0, %s205
    %s220 = sphi 0, %s206
    %s224 = sphi 0, %s224
    %s226 = sphi 0, %s224
    %s227 = sphi 0, %s226
    %s241 = sphi 0, %s227
    %s245 = sphi 0, %s245
    %s247 = sphi 0, %s245
    %s248 = sphi 0, %s247
    %s262 = sphi 0, %s248
    %s266 = sphi 0, %s266
    %s268 = sphi 0, %s266
    %s269 = sphi 0, %s268
    %s283 = sphi 0, %s269
    %s287 = sphi 0, %s287
    %s289 = sphi 0, %s287
    %s290 = sphi 0, %s289
    %s304 = sphi 0, %s290
    %s308 = sphi 0, %s308
    %s310 = sphi 0, %s308
    %s311 = sphi 0, %s310
    %s325 = sphi 0, %s311
    %s329 = sphi 0, %s329
    %s331 = sphi 0, %s329
    %s332 = sphi 0, %s331
    %s346 = sphi 0, %s332
    %s350 = sphi 0, %s350
    %s352 = sphi 0, %s350
    %s353 = sphi 0, %s352
    %s367 = sphi 0, %s353
    %s373 = sphi 0, %s375
    %s376 = sphi 0, %s373
    %s377 = sphi 0, %s376
    %s393 = sphi 0, %s377
  $region4: #{forward.5} parent=0 // loop_header_branch
    %25 = sbr.rel (%p23) target = $region8
  $region5: #{forward.5} parent=0 // loop_body
    %s27 = ssub.s32 %s22, 1
    %s28 = ssub.s32 %s22, 2
    %s29 = sadd.s32 %s22, 1
    %s30 = ssub.s32 %s22, %s29
    %p31 = scmp.eq.s32.totalorder %s30, 0
    %s33 = sadd.s32 %s32, 1
    %s34 = scalar_select %p31, %s32, %s33
    %p37 = pneg %p31
    %p38 = scmp.eq.s32.totalorder %s22, 1
    %p39 = por %p37, %p38
    %p40 = scmp.ne.s32.totalorder %s32, %s35
    %p41 = scmp.eq.s32.totalorder %s22, 0
    %p42 = por %p40, %p41
    %p43 = scmp.ne.s32.totalorder %s32, %s35
    %p44 = scmp.eq.s32.totalorder %s27, 1
    %p45 = por %p43, %p44
    %p46 = scmp.ne.s32.totalorder %s35, %s36
    %p47 = scmp.eq.s32.totalorder %s27, 0
    %p48 = por %p46, %p47
    %p49 = scmp.ne.s32.totalorder %s35, %s36
    %p50 = scmp.eq.s32.totalorder %s28, 1
    %p51 = por %p49, %p50
    %p53 = scmp.ne.s32.totalorder %s36, %s52
    %p54 = scmp.eq.s32.totalorder %s28, 0
    %p55 = por %p53, %p54
    %s57 = sadd.s32 %s56, 1
    %p60 = scmp.eq.s32.totalorder %s22, 1
    %p61 = scmp.ne.s32.totalorder %s56, %s58
    %p62 = scmp.eq.s32.totalorder %s22, 0
    %p63 = por %p61, %p62
    %p64 = scmp.ne.s32.totalorder %s56, %s58
    %p65 = scmp.eq.s32.totalorder %s27, 1
    %p66 = por %p64, %p65
    %p67 = scmp.ne.s32.totalorder %s58, %s59
    %p68 = scmp.eq.s32.totalorder %s27, 0
    %p69 = por %p67, %p68
    %p70 = scmp.ne.s32.totalorder %s58, %s59
    %p71 = scmp.eq.s32.totalorder %s28, 1
    %p72 = por %p70, %p71
    %p74 = scmp.ne.s32.totalorder %s59, %s73
    %p75 = scmp.eq.s32.totalorder %s28, 0
    %p76 = por %p74, %p75
    %s78 = sadd.s32 %s77, 1
    %p81 = scmp.eq.s32.totalorder %s22, 1
    %p82 = scmp.ne.s32.totalorder %s77, %s79
    %p83 = scmp.eq.s32.totalorder %s22, 0
    %p84 = por %p82, %p83
    %p85 = scmp.ne.s32.totalorder %s77, %s79
    %p86 = scmp.eq.s32.totalorder %s27, 1
    %p87 = por %p85, %p86
    %p88 = scmp.ne.s32.totalorder %s79, %s80
    %p89 = scmp.eq.s32.totalorder %s27, 0
    %p90 = por %p88, %p89
    %p91 = scmp.ne.s32.totalorder %s79, %s80
    %p92 = scmp.eq.s32.totalorder %s28, 1
    %p93 = por %p91, %p92
    %p95 = scmp.ne.s32.totalorder %s80, %s94
    %p96 = scmp.eq.s32.totalorder %s28, 0
    %p97 = por %p95, %p96
    %s99 = sadd.s32 %s98, 1
    %p102 = scmp.eq.s32.totalorder %s22, 1
    %p103 = scmp.ne.s32.totalorder %s98, %s100
    %p104 = scmp.eq.s32.totalorder %s22, 0
    %p105 = por %p103, %p104
    %p106 = scmp.ne.s32.totalorder %s98, %s100
    %p107 = scmp.eq.s32.totalorder %s27, 1
    %p108 = por %p106, %p107
    %p109 = scmp.ne.s32.totalorder %s100, %s101
    %p110 = scmp.eq.s32.totalorder %s27, 0
    %p111 = por %p109, %p110
    %p112 = scmp.ne.s32.totalorder %s100, %s101
    %p113 = scmp.eq.s32.totalorder %s28, 1
    %p114 = por %p112, %p113
    %p116 = scmp.ne.s32.totalorder %s101, %s115
    %p117 = scmp.eq.s32.totalorder %s28, 0
    %p118 = por %p116, %p117
    %s120 = sadd.s32 %s119, 1
    %p123 = scmp.eq.s32.totalorder %s22, 1
    %p124 = scmp.ne.s32.totalorder %s119, %s121
    %p125 = scmp.eq.s32.totalorder %s22, 0
    %p126 = por %p124, %p125
    %p127 = scmp.ne.s32.totalorder %s119, %s121
    %p128 = scmp.eq.s32.totalorder %s27, 1
    %p129 = por %p127, %p128
    %p130 = scmp.ne.s32.totalorder %s121, %s122
    %p131 = scmp.eq.s32.totalorder %s27, 0
    %p132 = por %p130, %p131
    %p133 = scmp.ne.s32.totalorder %s121, %s122
    %p134 = scmp.eq.s32.totalorder %s28, 1
    %p135 = por %p133, %p134
    %p137 = scmp.ne.s32.totalorder %s122, %s136
    %p138 = scmp.eq.s32.totalorder %s28, 0
    %p139 = por %p137, %p138
    %s141 = sadd.s32 %s140, 1
    %p144 = scmp.eq.s32.totalorder %s22, 1
    %p145 = scmp.ne.s32.totalorder %s140, %s142
    %p146 = scmp.eq.s32.totalorder %s22, 0
    %p147 = por %p145, %p146
    %p148 = scmp.ne.s32.totalorder %s140, %s142
    %p149 = scmp.eq.s32.totalorder %s27, 1
    %p150 = por %p148, %p149
    %p151 = scmp.ne.s32.totalorder %s142, %s143
    %p152 = scmp.eq.s32.totalorder %s27, 0
    %p153 = por %p151, %p152
    %p154 = scmp.ne.s32.totalorder %s142, %s143
    %p155 = scmp.eq.s32.totalorder %s28, 1
    %p156 = por %p154, %p155
    %p158 = scmp.ne.s32.totalorder %s143, %s157
    %p159 = scmp.eq.s32.totalorder %s28, 0
    %p160 = por %p158, %p159
    %s162 = sadd.s32 %s161, 1
    %p165 = scmp.eq.s32.totalorder %s22, 1
    %p166 = scmp.ne.s32.totalorder %s161, %s163
    %p167 = scmp.eq.s32.totalorder %s22, 0
    %p168 = por %p166, %p167
    %p169 = scmp.ne.s32.totalorder %s161, %s163
    %p170 = scmp.eq.s32.totalorder %s27, 1
    %p171 = por %p169, %p170
    %p172 = scmp.ne.s32.totalorder %s163, %s164
    %p173 = scmp.eq.s32.totalorder %s27, 0
    %p174 = por %p172, %p173
    %p175 = scmp.ne.s32.totalorder %s163, %s164
    %p176 = scmp.eq.s32.totalorder %s28, 1
    %p177 = por %p175, %p176
    %p179 = scmp.ne.s32.totalorder %s164, %s178
    %p180 = scmp.eq.s32.totalorder %s28, 0
    %p181 = por %p179, %p180
    %s183 = sadd.s32 %s182, 1
    %p186 = scmp.eq.s32.totalorder %s22, 1
    %p187 = scmp.ne.s32.totalorder %s182, %s184
    %p188 = scmp.eq.s32.totalorder %s22, 0
    %p189 = por %p187, %p188
    %p190 = scmp.ne.s32.totalorder %s182, %s184
    %p191 = scmp.eq.s32.totalorder %s27, 1
    %p192 = por %p190, %p191
    %p193 = scmp.ne.s32.totalorder %s184, %s185
    %p194 = scmp.eq.s32.totalorder %s27, 0
    %p195 = por %p193, %p194
    %p196 = scmp.ne.s32.totalorder %s184, %s185
    %p197 = scmp.eq.s32.totalorder %s28, 1
    %p198 = por %p196, %p197
    %p200 = scmp.ne.s32.totalorder %s185, %s199
    %p201 = scmp.eq.s32.totalorder %s28, 0
    %p202 = por %p200, %p201
    %s204 = sadd.s32 %s203, 1
    %p207 = scmp.eq.s32.totalorder %s22, 1
    %p208 = scmp.ne.s32.totalorder %s203, %s205
    %p209 = scmp.eq.s32.totalorder %s22, 0
    %p210 = por %p208, %p209
    %p211 = scmp.ne.s32.totalorder %s203, %s205
    %p212 = scmp.eq.s32.totalorder %s27, 1
    %p213 = por %p211, %p212
    %p214 = scmp.ne.s32.totalorder %s205, %s206
    %p215 = scmp.eq.s32.totalorder %s27, 0
    %p216 = por %p214, %p215
    %p217 = scmp.ne.s32.totalorder %s205, %s206
    %p218 = scmp.eq.s32.totalorder %s28, 1
    %p219 = por %p217, %p218
    %p221 = scmp.ne.s32.totalorder %s206, %s220
    %p222 = scmp.eq.s32.totalorder %s28, 0
    %p223 = por %p221, %p222
    %s225 = sadd.s32 %s224, 1
    %p228 = scmp.eq.s32.totalorder %s22, 1
    %p229 = scmp.ne.s32.totalorder %s224, %s226
    %p230 = scmp.eq.s32.totalorder %s22, 0
    %p231 = por %p229, %p230
    %p232 = scmp.ne.s32.totalorder %s224, %s226
    %p233 = scmp.eq.s32.totalorder %s27, 1
    %p234 = por %p232, %p233
    %p235 = scmp.ne.s32.totalorder %s226, %s227
    %p236 = scmp.eq.s32.totalorder %s27, 0
    %p237 = por %p235, %p236
    %p238 = scmp.ne.s32.totalorder %s226, %s227
    %p239 = scmp.eq.s32.totalorder %s28, 1
    %p240 = por %p238, %p239
    %p242 = scmp.ne.s32.totalorder %s227, %s241
    %p243 = scmp.eq.s32.totalorder %s28, 0
    %p244 = por %p242, %p243
    %s246 = sadd.s32 %s245, 1
    %p249 = scmp.eq.s32.totalorder %s22, 1
    %p250 = scmp.ne.s32.totalorder %s245, %s247
    %p251 = scmp.eq.s32.totalorder %s22, 0
    %p252 = por %p250, %p251
    %p253 = scmp.ne.s32.totalorder %s245, %s247
    %p254 = scmp.eq.s32.totalorder %s27, 1
    %p255 = por %p253, %p254
    %p256 = scmp.ne.s32.totalorder %s247, %s248
    %p257 = scmp.eq.s32.totalorder %s27, 0
    %p258 = por %p256, %p257
    %p259 = scmp.ne.s32.totalorder %s247, %s248
    %p260 = scmp.eq.s32.totalorder %s28, 1
    %p261 = por %p259, %p260
    %p263 = scmp.ne.s32.totalorder %s248, %s262
    %p264 = scmp.eq.s32.totalorder %s28, 0
    %p265 = por %p263, %p264
    %s267 = sadd.s32 %s266, 1
    %p270 = scmp.eq.s32.totalorder %s22, 1
    %p271 = scmp.ne.s32.totalorder %s266, %s268
    %p272 = scmp.eq.s32.totalorder %s22, 0
    %p273 = por %p271, %p272
    %p274 = scmp.ne.s32.totalorder %s266, %s268
    %p275 = scmp.eq.s32.totalorder %s27, 1
    %p276 = por %p274, %p275
    %p277 = scmp.ne.s32.totalorder %s268, %s269
    %p278 = scmp.eq.s32.totalorder %s27, 0
    %p279 = por %p277, %p278
    %p280 = scmp.ne.s32.totalorder %s268, %s269
    %p281 = scmp.eq.s32.totalorder %s28, 1
    %p282 = por %p280, %p281
    %p284 = scmp.ne.s32.totalorder %s269, %s283
    %p285 = scmp.eq.s32.totalorder %s28, 0
    %p286 = por %p284, %p285
    %s288 = sadd.s32 %s287, 1
    %p291 = scmp.eq.s32.totalorder %s22, 1
    %p292 = scmp.ne.s32.totalorder %s287, %s289
    %p293 = scmp.eq.s32.totalorder %s22, 0
    %p294 = por %p292, %p293
    %p295 = scmp.ne.s32.totalorder %s287, %s289
    %p296 = scmp.eq.s32.totalorder %s27, 1
    %p297 = por %p295, %p296
    %p298 = scmp.ne.s32.totalorder %s289, %s290
    %p299 = scmp.eq.s32.totalorder %s27, 0
    %p300 = por %p298, %p299
    %p301 = scmp.ne.s32.totalorder %s289, %s290
    %p302 = scmp.eq.s32.totalorder %s28, 1
    %p303 = por %p301, %p302
    %p305 = scmp.ne.s32.totalorder %s290, %s304
    %p306 = scmp.eq.s32.totalorder %s28, 0
    %p307 = por %p305, %p306
    %s309 = sadd.s32 %s308, 1
    %p312 = scmp.eq.s32.totalorder %s22, 1
    %p313 = scmp.ne.s32.totalorder %s308, %s310
    %p314 = scmp.eq.s32.totalorder %s22, 0
    %p315 = por %p313, %p314
    %p316 = scmp.ne.s32.totalorder %s308, %s310
    %p317 = scmp.eq.s32.totalorder %s27, 1
    %p318 = por %p316, %p317
    %p319 = scmp.ne.s32.totalorder %s310, %s311
    %p320 = scmp.eq.s32.totalorder %s27, 0
    %p321 = por %p319, %p320
    %p322 = scmp.ne.s32.totalorder %s310, %s311
    %p323 = scmp.eq.s32.totalorder %s28, 1
    %p324 = por %p322, %p323
    %p326 = scmp.ne.s32.totalorder %s311, %s325
    %p327 = scmp.eq.s32.totalorder %s28, 0
    %p328 = por %p326, %p327
    %s330 = sadd.s32 %s329, 1
    %p333 = scmp.eq.s32.totalorder %s22, 1
    %p334 = scmp.ne.s32.totalorder %s329, %s331
    %p335 = scmp.eq.s32.totalorder %s22, 0
    %p336 = por %p334, %p335
    %p337 = scmp.ne.s32.totalorder %s329, %s331
    %p338 = scmp.eq.s32.totalorder %s27, 1
    %p339 = por %p337, %p338
    %p340 = scmp.ne.s32.totalorder %s331, %s332
    %p341 = scmp.eq.s32.totalorder %s27, 0
    %p342 = por %p340, %p341
    %p343 = scmp.ne.s32.totalorder %s331, %s332
    %p344 = scmp.eq.s32.totalorder %s28, 1
    %p345 = por %p343, %p344
    %p347 = scmp.ne.s32.totalorder %s332, %s346
    %p348 = scmp.eq.s32.totalorder %s28, 0
    %p349 = por %p347, %p348
    %s351 = sadd.s32 %s350, 1
    %p354 = scmp.eq.s32.totalorder %s22, 1
    %p355 = scmp.ne.s32.totalorder %s350, %s352
    %p356 = scmp.eq.s32.totalorder %s22, 0
    %p357 = por %p355, %p356
    %p358 = scmp.ne.s32.totalorder %s350, %s352
    %p359 = scmp.eq.s32.totalorder %s27, 1
    %p360 = por %p358, %p359
    %p361 = scmp.ne.s32.totalorder %s352, %s353
    %p362 = scmp.eq.s32.totalorder %s27, 0
    %p363 = por %p361, %p362
    %p364 = scmp.ne.s32.totalorder %s352, %s353
    %p365 = scmp.eq.s32.totalorder %s28, 1
    %p366 = por %p364, %p365
    %p368 = scmp.ne.s32.totalorder %s353, %s367
    %p369 = scmp.eq.s32.totalorder %s28, 0
    %p370 = por %p368, %p369
    %s371 = ssub.s32 %s22, %s29
    %p372 = scmp.eq.s32.totalorder %s371, 0
    %s374 = sadd.s32 %s373, 1
    %s375 = scalar_select %p372, %s373, %s374
    %p378 = pneg %p372
    %p379 = scmp.eq.s32.totalorder %s22, 1
    %p380 = por %p378, %p379
    %p381 = scmp.ne.s32.totalorder %s373, %s376
    %p382 = scmp.eq.s32.totalorder %s22, 0
    %p383 = por %p381, %p382
    %p384 = scmp.ne.s32.totalorder %s373, %s376
    %p385 = scmp.eq.s32.totalorder %s27, 1
    %p386 = por %p384, %p385
    %p387 = scmp.ne.s32.totalorder %s376, %s377
    %p388 = scmp.eq.s32.totalorder %s27, 0
    %p389 = por %p387, %p388
    %p390 = scmp.ne.s32.totalorder %s376, %s377
    %p391 = scmp.eq.s32.totalorder %s28, 1
    %p392 = por %p390, %p391
    %p394 = scmp.ne.s32.totalorder %s377, %s393
    %p395 = scmp.eq.s32.totalorder %s28, 0
    %p396 = por %p394, %p395
    %p397 = scmp.le.s32.totalorder 1, %s22
    %p398 = scmp.lt.s32.totalorder %s22, 3
    %p399 = pnand %p397, %p398
    %p400 = pneg %p399
    // Predicated region
    $region9: #{forward.5} parent=5 // pred_check
      _
    $region10: #{forward.5} parent=5 // pred_check_branch
      %402 = sbr.rel (%p399) target = $region12
    $region11: #{forward.5} parent=5 // pred_region
      %s403 = ssub.s32 %s22, 1
      // Predicated region
      $region13: #{forward.5} parent=11 // pred_check
        %p404 = pneg %p69
      $region14: #{forward.5} parent=11 // pred_check_branch
        %406 = sbr.rel (%p404) target = $region16
      $region15: #{forward.5} parent=11 // pred_region
        _
      $region16: #{forward.5} parent=11 // pred_fallthru
        _
      // Predicated region
      $region17: #{forward.5} parent=11 // pred_check
        %p407 = pneg %p90
      $region18: #{forward.5} parent=11 // pred_check_branch
        %409 = sbr.rel (%p407) target = $region20
      $region19: #{forward.5} parent=11 // pred_region
        _
      $region20: #{forward.5} parent=11 // pred_fallthru
        _
      // Predicated region
      $region21: #{forward.5} parent=11 // pred_check
        %p410 = pneg %p111
      $region22: #{forward.5} parent=11 // pred_check_branch
        %412 = sbr.rel (%p410) target = $region24
      $region23: #{forward.5} parent=11 // pred_region
        _
      $region24: #{forward.5} parent=11 // pred_fallthru
        _
      // Predicated region
      $region25: #{forward.5} parent=11 // pred_check
        %p413 = pneg %p132
      $region26: #{forward.5} parent=11 // pred_check_branch
        %415 = sbr.rel (%p413) target = $region28
      $region27: #{forward.5} parent=11 // pred_region
        _
      $region28: #{forward.5} parent=11 // pred_fallthru
        _
      // Predicated region
      $region29: #{forward.5} parent=11 // pred_check
        %p416 = pneg %p153
      $region30: #{forward.5} parent=11 // pred_check_branch
        %418 = sbr.rel (%p416) target = $region32
      $region31: #{forward.5} parent=11 // pred_region
        _
      $region32: #{forward.5} parent=11 // pred_fallthru
        _
      // Predicated region
      $region33: #{forward.5} parent=11 // pred_check
        %p419 = pneg %p174
      $region34: #{forward.5} parent=11 // pred_check_branch
        %421 = sbr.rel (%p419) target = $region36
      $region35: #{forward.5} parent=11 // pred_region
        _
      $region36: #{forward.5} parent=11 // pred_fallthru
        _
      // Predicated region
      $region37: #{forward.5} parent=11 // pred_check
        %p422 = pneg %p195
      $region38: #{forward.5} parent=11 // pred_check_branch
        %424 = sbr.rel (%p422) target = $region40
      $region39: #{forward.5} parent=11 // pred_region
        _
      $region40: #{forward.5} parent=11 // pred_fallthru
        _
      // Predicated region
      $region41: #{forward.5} parent=11 // pred_check
        %p425 = pneg %p216
      $region42: #{forward.5} parent=11 // pred_check_branch
        %427 = sbr.rel (%p425) target = $region44
      $region43: #{forward.5} parent=11 // pred_region
        _
      $region44: #{forward.5} parent=11 // pred_fallthru
        _
      // Predicated region
      $region45: #{forward.5} parent=11 // pred_check
        %p428 = pneg %p237
      $region46: #{forward.5} parent=11 // pred_check_branch
        %430 = sbr.rel (%p428) target = $region48
      $region47: #{forward.5} parent=11 // pred_region
        _
      $region48: #{forward.5} parent=11 // pred_fallthru
        _
      // Predicated region
      $region49: #{forward.5} parent=11 // pred_check
        %p431 = pneg %p258
      $region50: #{forward.5} parent=11 // pred_check_branch
        %433 = sbr.rel (%p431) target = $region52
      $region51: #{forward.5} parent=11 // pred_region
        _
      $region52: #{forward.5} parent=11 // pred_fallthru
        _
      // Predicated region
      $region53: #{forward.5} parent=11 // pred_check
        %p434 = pneg %p279
      $region54: #{forward.5} parent=11 // pred_check_branch
        %436 = sbr.rel (%p434) target = $region56
      $region55: #{forward.5} parent=11 // pred_region
        _
      $region56: #{forward.5} parent=11 // pred_fallthru
        _
      // Predicated region
      $region57: #{forward.5} parent=11 // pred_check
        %p437 = pneg %p300
      $region58: #{forward.5} parent=11 // pred_check_branch
        %439 = sbr.rel (%p437) target = $region60
      $region59: #{forward.5} parent=11 // pred_region
        _
      $region60: #{forward.5} parent=11 // pred_fallthru
        _
      // Predicated region
      $region61: #{forward.5} parent=11 // pred_check
        %p440 = pneg %p321
      $region62: #{forward.5} parent=11 // pred_check_branch
        %442 = sbr.rel (%p440) target = $region64
      $region63: #{forward.5} parent=11 // pred_region
        _
      $region64: #{forward.5} parent=11 // pred_fallthru
        _
      // Predicated region
      $region65: #{forward.5} parent=11 // pred_check
        %p443 = pneg %p342
      $region66: #{forward.5} parent=11 // pred_check_branch
        %445 = sbr.rel (%p443) target = $region68
      $region67: #{forward.5} parent=11 // pred_region
        _
      $region68: #{forward.5} parent=11 // pred_fallthru
        _
      // Predicated region
      $region69: #{forward.5} parent=11 // pred_check
        %p446 = pneg %p363
      $region70: #{forward.5} parent=11 // pred_check_branch
        %448 = sbr.rel (%p446) target = $region72
      $region71: #{forward.5} parent=11 // pred_region
        _
      $region72: #{forward.5} parent=11 // pred_fallthru
        _
    $region12: #{forward.5} parent=5 // pred_fallthru
      _
    %p449 = scmp.lt.s32.totalorder %s22, 2
    // Predicated region
    $region73: #{forward.5} parent=5 // pred_check
      %p450 = pneg %p449
    $region74: #{forward.5} parent=5 // pred_check_branch
      %452 = sbr.rel (%p450) target = $region76
    $region75: #{forward.5} parent=5 // pred_region
      // Predicated region
      $region77: #{forward.5} parent=75 // pred_check
        %p453 = pneg %p42
      $region78: #{forward.5} parent=75 // pred_check_branch
        %455 = sbr.rel (%p453) target = $region80
      $region79: #{forward.5} parent=75 // pred_region
        %p456 = scmp.lt.s32.totalorder %s22, 1
        %s457 = scalar_select %p456, %s22, 1
        %s458 = smul.addr %s457, 3
        %s459 = smul.addr %s458, 8
        %s460 = scalar_lea.vmem %s0, %s459
      $region80: #{forward.5} parent=75 // pred_fallthru
        _
    $region76: #{forward.5} parent=5 // pred_fallthru
      _
    %p461 = scmp.le.s32.totalorder 1, %s22
    %p462 = scmp.lt.s32.totalorder %s22, 3
    %p463 = pnand %p461, %p462
    %p464 = pneg %p463
    // Predicated region
    $region81: #{forward.5} parent=5 // pred_check
      _
    $region82: #{forward.5} parent=5 // pred_check_branch
      %466 = sbr.rel (%p463) target = $region84
    $region83: #{forward.5} parent=5 // pred_region
      %s467 = ssub.s32 %s22, 1
      %p468 = scmp.lt.s32.totalorder %s27, 1
      %s469 = scalar_select %p468, %s27, 1
      %s470 = smul.addr %s469, 3
      %s471 = smul.addr %s470, 8
      %s472 = scalar_lea.vmem %s0, %s471
      %p473 = pneg %p48
      %p474 = pneg %p45
      %p475 = pneg %p69
      %p476 = pneg %p66
      %p477 = pneg %p90
      %p478 = pneg %p87
      %p479 = pneg %p111
      %p480 = pneg %p108
      %p481 = pneg %p132
      %p482 = pneg %p129
      %p483 = pneg %p153
      %p484 = pneg %p150
      %p485 = pneg %p174
      %p486 = pneg %p171
      %p487 = pneg %p195
      %p488 = pneg %p192
      %p489 = pneg %p216
      %p490 = pneg %p213
      %p491 = pneg %p237
      %p492 = pneg %p234
      %p493 = pneg %p258
      %p494 = pneg %p255
      %p495 = pneg %p279
      %p496 = pneg %p276
      %p497 = pneg %p300
      %p498 = pneg %p297
      %p499 = pneg %p321
      %p500 = pneg %p318
      %p501 = pneg %p342
      %p502 = pneg %p339
      %p503 = pneg %p363
      %p504 = pneg %p360
      %p505 = pneg %p389
      %p506 = pneg %p386
      %p507 = scmp.lt.s32.totalorder %s27, 1
      %s508 = scalar_select %p507, %s27, 1
      %s509 = smul.addr %s508, 3
      %s510 = smul.addr %s509, 8
      %s511 = scalar_lea.vmem %s16, %s510
      %p512 = scmp.lt.s32.totalorder %s27, 1
      %s513 = scalar_select %p512, %s27, 1
      %s514 = smul.addr %s513, 3
      %s515 = smul.addr %s514, 8
      %s516 = scalar_lea.vmem %s0, %s515
      %p517 = scmp.lt.s32.totalorder %s27, 1
      %s518 = scalar_select %p517, %s27, 1
      %s519 = smul.addr %s518, 3
      %s520 = smul.addr %s519, 8
      %s521 = scalar_lea.vmem %s16, %s520
      %v523 = vld [vmem:[%s516] sm:$0xff]
      %v524 = vld [vmem:[%s516 + $0x8] sm:$0xff]
      %v525 = vld [vmem:[%s516 + $0x10] sm:$0xff]
      %v526 = vld [vmem:[%s2] sm:$0x1]
      %v527 = vld [vmem:[%s3] sm:$0x1]
      %vm528 = vcmask 523264
      %v529 = vsel %vm528, %v523, 0.0
      %530 = vadd.xlane.f32.xlu0 %v529
      %v531 = vpop.xlane.xlu0 %530
      %v532 = vsel %vm528, %v524, 0.0
      %533 = vadd.xlane.f32.xlu0 %v532
      %v534 = vpop.xlane.xlu0 %533
      %v535 = vsel %vm528, %v525, 0.0
      %536 = vadd.xlane.f32.xlu0 %v535
      %v537 = vpop.xlane.xlu0 %536
      %v538 = vrcp.pop 64.0
      %v539 = vmul.f32 %v531, %v538
      %v540 = vmul.f32 %v534, %v538
      %v541 = vmul.f32 %v537, %v538
      %v542 = vsub.f32 %v523, %v539
      %v543 = vsub.f32 %v524, %v540
      %v544 = vsub.f32 %v525, %v541
      %v545 = vmul.f32 %v542, %v542
      %v546 = vmul.f32 %v543, %v543
      %v547 = vmul.f32 %v544, %v544
      %v548 = vsel %vm528, %v545, 0.0
      %549 = vadd.xlane.f32.xlu0 %v548
      %v550 = vpop.xlane.xlu0 %549
      %v551 = vsel %vm528, %v546, 0.0
      %552 = vadd.xlane.f32.xlu0 %v551
      %v553 = vpop.xlane.xlu0 %552
      %v554 = vsel %vm528, %v547, 0.0
      %555 = vadd.xlane.f32.xlu0 %v554
      %v556 = vpop.xlane.xlu0 %555
      %v557 = vmul.f32 %v550, %v538
      %v558 = vmul.f32 %v553, %v538
      %v559 = vmul.f32 %v556, %v538
      %v560 = vadd.f32 %v557, 1e-06
      %v561 = vadd.f32 %v558, 1e-06
      %v562 = vadd.f32 %v559, 1e-06
      %v563 = vrsqrt.pop %v560
      %v564 = vrsqrt.pop %v561
      %v565 = vrsqrt.pop %v562
      %v566 = vmul.f32 %v542, %v563
      %v567 = vmul.f32 %v543, %v564
      %v568 = vmul.f32 %v544, %v565
      %v570 = vlaneseq
      %v571 = vshrl.u32 %v570, 7
      %v572 = vsub.s32 0, %v571
      %v573 = vrot.slane %v526, %v572
      %v575 = vmul.f32 %v566, %v573
      %v576 = vmul.f32 %v567, %v573
      %v577 = vmul.f32 %v568, %v573
      %v579 = vlaneseq
      %v580 = vshrl.u32 %v579, 7
      %v581 = vsub.s32 0, %v580
      %v582 = vrot.slane %v527, %v581
      %v584 = vadd.f32 %v575, %v582
      %v585 = vadd.f32 %v576, %v582
      %v586 = vadd.f32 %v577, %v582
      %v587 = vpack.c.bf16 %v585, %v584
      %v588 = vpack.c.bf16 %v586, %v586
      %v589 = vld [vmem:[%s4] sm:$0xff]
      %v590 = vld [vmem:[%s4 + $0x8] sm:$0xff]
      %v591 = vld [vmem:[%s4 + $0x10] sm:$0xff]
      %v592 = vld [vmem:[%s4 + $0x18] sm:$0xff]
      %v593 = vld [vmem:[%s4 + $0x20] sm:$0xff]
      %v594 = vld [vmem:[%s4 + $0x28] sm:$0xff]
      %v595 = vld [vmem:[%s4 + $0x30] sm:$0xff]
      %v596 = vld [vmem:[%s4 + $0x38] sm:$0xff]
      %v597 = vld [vmem:[%s5] sm:$0x3]
      %v599 = vlaneseq
      %v600 = vshrl.u32 %v599, 7
      %v601 = vsub.s32 0, %v600
      %v602 = vrot.slane %v597, %v601
      %v603 = vlaneseq
      %v604 = vshrl.u32 %v603, 7
      %v605 = vsub.s32 1, %v604
      %v606 = vrot.slane %v597, %v605
      %v617 = vunpack.c.l.b16 %v589
      %v618 = vunpack.c.h.b16 %v589
      %v619 = vunpack.c.l.b16 %v590
      %v620 = vunpack.c.h.b16 %v590
      %v621 = vunpack.c.l.b16 %v591
      %v622 = vunpack.c.h.b16 %v591
      %v623 = vunpack.c.l.b16 %v592
      %v624 = vunpack.c.h.b16 %v592
      %v625 = vunpack.c.l.b16 %v593
      %v626 = vunpack.c.h.b16 %v593
      %v627 = vunpack.c.l.b16 %v594
      %v628 = vunpack.c.h.b16 %v594
      %v629 = vunpack.c.l.b16 %v595
      %v630 = vunpack.c.h.b16 %v595
      %v631 = vunpack.c.l.b16 %v596
      %v632 = vunpack.c.h.b16 %v596
      %v633 = vpack.c.b16 %v619, %v617
      %v634 = vpack.c.b16 %v620, %v618
      %v635 = vpack.c.b16 %v623, %v621
      %v636 = vpack.c.b16 %v624, %v622
      %v637 = vpack.c.b16 %v627, %v625
      %v638 = vpack.c.b16 %v628, %v626
      %v639 = vpack.c.b16 %v631, %v629
      %v640 = vpack.c.b16 %v632, %v630
      %v650 = vsel %vm528, %v587, 0
      %v653 = vsel %vm528, %v588, 0
      %655 = vmatprep.subr.bf16.mxu0 %v634
      %656 = vmatpush1.bf16.msra.mxu0 %v633
      %657 = vmatprep.subr.bf16.mxu0 %v636
      %658 = vmatpush1.bf16.msra.mxu0 %v635
      %659 = vmatprep.subr.bf16.mxu0 %v638
      %660 = vmatpush1.bf16.msra.mxu0 %v637
      %661 = vmatprep.subr.bf16.mxu0 %v640
      %662 = vmatpush1.bf16.msra.mxu0 %v639
      %663 = vmatprep.subr.bf16.mxu0 0
      %664 = vmatpush1.bf16.msra.mxu0 0
      %665 = vmatprep.subr.bf16.mxu0 0
      %666 = vmatpush1.bf16.msra.mxu0 0
      %667 = vmatprep.subr.bf16.mxu0 0
      %668 = vmatpush1.bf16.msra.mxu0 0
      %669 = vmatprep.subr.bf16.mxu0 0
      %670 = vmatpush1.bf16.msra.mxu0 0
      %671 = vmatprep.subr.bf16.mxu0 0
      %672 = vmatpush1.bf16.msra.mxu0 0
      %673 = vmatprep.subr.bf16.mxu0 0
      %674 = vmatpush1.bf16.msra.mxu0 0
      %675 = vmatprep.subr.bf16.mxu0 0
      %676 = vmatpush1.bf16.msra.mxu0 0
      %677 = vmatprep.subr.bf16.mxu0 0
      %678 = vmatpush1.bf16.msra.mxu0 0
      %679 = vmatprep.subr.bf16.mxu0 0
      %680 = vmatpush1.bf16.msra.mxu0 0
      %681 = vmatprep.subr.bf16.mxu0 0
      %682 = vmatpush1.bf16.msra.mxu0 0
      %683 = vmatprep.subr.bf16.mxu0 0
      %684 = vmatpush1.bf16.msra.mxu0 0
      %685 = vmatprep.subr.bf16.mxu0 0
      %686 = vmatpush1.bf16.msra.mxu0 0
      %687 = vmatprep.mubr.bf16.mxu0 0
      %688 = vmatmul.mubr.bf16.gmra.mrb[0].mxu0 %v650
      %v689 = vpop.f32.mrb[0].mxu0
      %v690 = vadd.f32 %v602, %v689
      %v691 = vpop.f32.mrb[0].mxu0
      %v692 = vadd.f32 %v606, %v691
      %v693 = vpop.f32.mrb[0].mxu0
      %v694 = vadd.f32 %v602, %v693
      %v695 = vpop.f32.mrb[0].mxu0
      %v696 = vadd.f32 %v606, %v695
      %697 = vmatprep.mubr.bf16.mxu0 0
      %698 = vmatmul.mubr.bf16.gmra.mrb[0].mxu0 %v653
      %v699 = vpop.f32.mrb[0].mxu0
      %v700 = vadd.f32 %v602, %v699
      %v701 = vpop.f32.mrb[0].mxu0
      %v702 = vadd.f32 %v606, %v701
      %v703 = vpop.f32.mrb[0].mxu0
      %v704 = vpop.f32.mrb[0].mxu0
      %705 = vdwg.mxu0
      %v706 = vld [vmem:[%s1] sm:$0x1]
      %710 = vrot.lane.b32.xlu0 %v690, 64
      %v711 = vpop.permute.xlu0 %710
      %712 = vrot.lane.b32.xlu0 %v694, 64
      %v713 = vpop.permute.xlu0 %712
      %714 = vrot.lane.b32.xlu0 %v700, 64
      %v715 = vpop.permute.xlu0 %714
      %vm716 = vcmask 130048
      %v717 = vsel %vm716, %v690, 0
      %v719 = vsel %vm716, %v694, 0
      %v721 = vsel %vm716, %v700, 0
      %v723 = vsel %vm716, %v711, 0
      %v725 = vsel %vm716, %v713, 0
      %v727 = vsel %vm716, %v715, 0
      %729 = vmatprep.subr.mxu0 0.0
      %730 = vmatpush1.xpose.msra.mxu0 %v723
      %731 = vmatprep.subr.mxu0 0.0
      %732 = vmatpush1.xpose.msra.mxu0 %v725
      %733 = vmatprep.subr.mxu0 0.0
      %734 = vmatpush1.xpose.msra.mxu0 %v727
      %735 = vmatprep.subr.mxu0 0.0
      %736 = vmatpush1.xpose.msra.mxu0 0.0
      %737 = vmatprep.subr.mxu0 0.0
      %738 = vmatpush1.xpose.msra.mxu0 0.0
      %739 = vmatprep.subr.mxu0 0.0
      %740 = vmatpush1.xpose.msra.mxu0 0.0
      %741 = vmatprep.subr.mxu0 0.0
      %742 = vmatpush1.xpose.msra.mxu0 0.0
      %743 = vmatprep.subr.mxu0 0.0
      %744 = vmatpush1.xpose.msra.mxu0 0.0
      %745 = vmatprep.subr.mxu0 0.0
      %746 = vmatpush1.xpose.msra.mxu0 0.0
      %747 = vmatprep.subr.mxu0 0.0
      %748 = vmatpush1.xpose.msra.mxu0 0.0
      %749 = vmatprep.subr.mxu0 0.0
      %750 = vmatpush1.xpose.msra.mxu0 0.0
      %751 = vmatprep.subr.mxu0 0.0
      %752 = vmatpush1.xpose.msra.mxu0 0.0
      %753 = vmatprep.subr.mxu0 0.0
      %754 = vmatpush1.xpose.msra.mxu0 0.0
      %755 = vmatprep.subr.mxu0 0.0
      %756 = vmatpush1.xpose.msra.mxu0 0.0
      %757 = vmatprep.subr.mxu0 0.0
      %758 = vmatpush1.xpose.msra.mxu0 0.0
      %759 = vmatprep.subr.mxu0 0.0
      %760 = vmatpush1.xpose.msra.mxu0 0.0
      %761 = vmatprep.subr.mxu0 0.0
      %762 = vmatpush1.xpose.msra.mxu0 0.0
      %763 = vmatprep.subr.mxu0 0.0
      %764 = vmatpush1.xpose.msra.mxu0 0.0
      %765 = vmatprep.subr.mxu0 0.0
      %766 = vmatpush1.xpose.msra.mxu0 0.0
      %767 = vmatprep.subr.mxu0 0.0
      %768 = vmatpush1.xpose.msra.mxu0 0.0
      %769 = vmatprep.subr.mxu0 0.0
      %770 = vmatpush1.xpose.msra.mxu0 0.0
      %771 = vmatprep.subr.mxu0 0.0
      %772 = vmatpush1.xpose.msra.mxu0 0.0
      %773 = vmatprep.subr.mxu0 0.0
      %774 = vmatpush1.xpose.msra.mxu0 0.0
      %775 = vmatprep.subr.mxu0 0.0
      %776 = vmatpush1.xpose.msra.mxu0 0.0
      %777 = vmatprep.subr.mxu0 0.0
      %778 = vmatpush1.xpose.msra.mxu0 0.0
      %779 = vmatprep.subr.mxu0 0.0
      %780 = vmatpush1.xpose.msra.mxu0 0.0
      %781 = vmatprep.subr.mxu0 0.0
      %782 = vmatpush1.xpose.msra.mxu0 0.0
      %783 = vmatprep.subr.mxu0 0.0
      %784 = vmatpush1.xpose.msra.mxu0 0.0
      %785 = vmatprep.subr.mxu0 0.0
      %786 = vmatpush1.xpose.msra.mxu0 0.0
      %787 = vmatprep.subr.mxu0 0.0
      %788 = vmatpush1.xpose.msra.mxu0 0.0
      %789 = vmatprep.subr.mxu0 0.0
      %790 = vmatpush1.xpose.msra.mxu0 0.0
      %791 = vmatprep.subr.mxu0 0.0
      %792 = vmatpush1.xpose.msra.mxu0 0.0
      %793 = vmatprep.mubr.f32.mxu0 0.0
      %794 = vmatmul.mubr.f32.gmra.mrb[0].mxu0 %v717
      %v795 = vpop.f32.mrb[0].mxu0
      %v796 = vadd.f32 0.0, %v795
      %v797 = vpop.f32.mrb[0].mxu0
      %798 = vmatprep.mubr.f32.mxu0 0.0
      %799 = vmatmul.mubr.f32.gmra.mrb[0].mxu0 %v719
      %v800 = vpop.f32.mrb[0].mxu0
      %v801 = vadd.f32 0.0, %v800
      %v802 = vpop.f32.mrb[0].mxu0
      %803 = vmatprep.mubr.f32.mxu0 0.0
      %804 = vmatmul.mubr.f32.gmra.mrb[0].mxu0 %v721
      %v805 = vpop.f32.mrb[0].mxu0
      %v806 = vadd.f32 0.0, %v805
      %v807 = vpop.f32.mrb[0].mxu0
      %808 = vdwg.mxu0
      %v809 = vmul.f32 %v796, 0.25
      %v810 = vmul.f32 %v801, 0.25
      %v811 = vmul.f32 %v806, 0.25
      %v813 = vlaneseq
      %v814 = vshrl.u32 %v813, 7
      %v815 = vsub.s32 0, %v814
      %v816 = vrot.slane %v706, %v815
      %v818 = vadd.f32 %v809, %v816
      %v819 = vadd.f32 %v810, %v816
      %v820 = vadd.f32 %v811, %v816
      %vm821 = vcmask 195584
      %v822 = vsel %vm821, %v818, -inf
      %823 = vmax.xlane.f32.xlu0 %v822
      %v824 = vpop.xlane.xlu0 %823
      %v825 = vsel %vm821, %v819, -inf
      %826 = vmax.xlane.f32.xlu0 %v825
      %v827 = vpop.xlane.xlu0 %826
      %v828 = vsel %vm821, %v820, -inf
      %829 = vmax.xlane.f32.xlu0 %v828
      %v830 = vpop.xlane.xlu0 %829
      %v831 = vsub.f32 %v818, %v824
      %v832 = vsub.f32 %v819, %v827
      %v833 = vsub.f32 %v820, %v830
      %v834 = vmul.f32 %v831, 1.442695
      %v835 = vpow.pop %v834
      %v836 = vmul.f32 %v832, 1.442695
      %v837 = vpow.pop %v836
      %v838 = vmul.f32 %v833, 1.442695
      %v839 = vpow.pop %v838
      %v840 = vsel %vm821, %v835, 0.0
      %841 = vadd.xlane.f32.xlu0 %v840
      %v842 = vpop.xlane.xlu0 %841
      %v843 = vsel %vm821, %v837, 0.0
      %844 = vadd.xlane.f32.xlu0 %v843
      %v845 = vpop.xlane.xlu0 %844
      %v846 = vsel %vm821, %v839, 0.0
      %847 = vadd.xlane.f32.xlu0 %v846
      %v848 = vpop.xlane.xlu0 %847
      %v849 = vrcp.pop %v842
      %v850 = vrcp.pop %v845
      %v851 = vrcp.pop %v848
      %v852 = vmul.f32 %v835, %v849
      %v853 = vmul.f32 %v837, %v850
      %v854 = vmul.f32 %v839, %v851
      %v856 = vsel %vm821, %v852, 0
      %v859 = vsel %vm821, %v853, 0
      %v862 = vsel %vm821, %v854, 0
      %864 = vmatprep.subr.mxu0 0.0
      %865 = vmatpush1.msra.mxu0 %v692
      %866 = vmatprep.subr.mxu0 0.0
      %867 = vmatpush1.msra.mxu0 %v696
      %868 = vmatprep.subr.mxu0 0.0
      %869 = vmatpush1.msra.mxu0 %v702
      %870 = vmatprep.subr.mxu0 0.0
      %871 = vmatpush1.msra.mxu0 0.0
      %872 = vmatprep.subr.mxu0 0.0
      %873 = vmatpush1.msra.mxu0 0.0
      %874 = vmatprep.subr.mxu0 0.0
      %875 = vmatpush1.msra.mxu0 0.0
      %876 = vmatprep.subr.mxu0 0.0
      %877 = vmatpush1.msra.mxu0 0.0
      %878 = vmatprep.subr.mxu0 0.0
      %879 = vmatpush1.msra.mxu0 0.0
      %880 = vmatprep.subr.mxu0 0.0
      %881 = vmatpush1.msra.mxu0 0.0
      %882 = vmatprep.subr.mxu0 0.0
      %883 = vmatpush1.msra.mxu0 0.0
      %884 = vmatprep.subr.mxu0 0.0
      %885 = vmatpush1.msra.mxu0 0.0
      %886 = vmatprep.subr.mxu0 0.0
      %887 = vmatpush1.msra.mxu0 0.0
      %888 = vmatprep.subr.mxu0 0.0
      %889 = vmatpush1.msra.mxu0 0.0
      %890 = vmatprep.subr.mxu0 0.0
      %891 = vmatpush1.msra.mxu0 0.0
      %892 = vmatprep.subr.mxu0 0.0
      %893 = vmatpush1.msra.mxu0 0.0
      %894 = vmatprep.subr.mxu0 0.0
      %895 = vmatpush1.msra.mxu0 0.0
      %896 = vmatprep.subr.mxu0 0.0
      %897 = vmatpush1.msra.mxu0 0.0
      %898 = vmatprep.subr.mxu0 0.0
      %899 = vmatpush1.msra.mxu0 0.0
      %900 = vmatprep.subr.mxu0 0.0
      %901 = vmatpush1.msra.mxu0 0.0
      %902 = vmatprep.subr.mxu0 0.0
      %903 = vmatpush1.msra.mxu0 0.0
      %904 = vmatprep.subr.mxu0 0.0
      %905 = vmatpush1.msra.mxu0 0.0
      %906 = vmatprep.subr.mxu0 0.0
      %907 = vmatpush1.msra.mxu0 0.0
      %908 = vmatprep.subr.mxu0 0.0
      %909 = vmatpush1.msra.mxu0 0.0
      %910 = vmatprep.subr.mxu0 0.0
      %911 = vmatpush1.msra.mxu0 0.0
      %912 = vmatprep.subr.mxu0 0.0
      %913 = vmatpush1.msra.mxu0 0.0
      %914 = vmatprep.subr.mxu0 0.0
      %915 = vmatpush1.msra.mxu0 0.0
      %916 = vmatprep.subr.mxu0 0.0
      %917 = vmatpush1.msra.mxu0 0.0
      %918 = vmatprep.subr.mxu0 0.0
      %919 = vmatpush1.msra.mxu0 0.0
      %920 = vmatprep.subr.mxu0 0.0
      %921 = vmatpush1.msra.mxu0 0.0
      %922 = vmatprep.subr.mxu0 0.0
      %923 = vmatpush1.msra.mxu0 0.0
      %924 = vmatprep.subr.mxu0 0.0
      %925 = vmatpush1.msra.mxu0 0.0
      %926 = vmatprep.subr.mxu0 0.0
      %927 = vmatpush1.msra.mxu0 0.0
      %928 = vmatprep.mubr.f32.mxu0 0.0
      %929 = vmatmul.mubr.f32.gmra.mrb[0].mxu0 %v856
      %v930 = vpop.f32.mrb[0].mxu0
      %v931 = vadd.f32 0.0, %v930
      %v932 = vpop.f32.mrb[0].mxu0
      %933 = vmatprep.mubr.f32.mxu0 0.0
      %934 = vmatmul.mubr.f32.gmra.mrb[0].mxu0 %v859
      %v935 = vpop.f32.mrb[0].mxu0
      %v936 = vadd.f32 0.0, %v935
      %v937 = vpop.f32.mrb[0].mxu0
      %938 = vmatprep.mubr.f32.mxu0 0.0
      %939 = vmatmul.mubr.f32.gmra.mrb[0].mxu0 %v862
      %v940 = vpop.f32.mrb[0].mxu0
      %v941 = vadd.f32 0.0, %v940
      %v942 = vpop.f32.mrb[0].mxu0
      %943 = vdwg.mxu0
      %v944 = vpack.c.bf16 %v936, %v931
      %v945 = vpack.c.bf16 %v941, %v941
      %v946 = vld [vmem:[%s6] sm:$0xf]
      %v947 = vld [vmem:[%s6 + $0x4] sm:$0xf]
      %948 = vrot.lane.b32.xlu0 %v690, 112
      %v949 = vpop.permute.xlu0 %948
      %950 = vrot.lane.b32.xlu0 %v694, 112
      %v951 = vpop.permute.xlu0 %950
      %952 = vrot.lane.b32.xlu0 %v700, 112
      %v953 = vpop.permute.xlu0 %952
      %954 = vrot.lane.b32.xlu0 %v690, 48
      %v955 = vpop.permute.xlu0 %954
      %956 = vrot.lane.b32.xlu0 %v694, 48
      %v957 = vpop.permute.xlu0 %956
      %958 = vrot.lane.b32.xlu0 %v700, 48
      %v959 = vpop.permute.xlu0 %958
      %v960 = vsel %vm716, %v949, 0
      %v962 = vsel %vm716, %v951, 0
      %v964 = vsel %vm716, %v953, 0
      %v966 = vsel %vm716, %v955, 0
      %v968 = vsel %vm716, %v957, 0
      %v970 = vsel %vm716, %v959, 0
      %972 = vmatprep.subr.mxu0 0.0
      %973 = vmatpush1.xpose.msra.mxu0 %v966
      %974 = vmatprep.subr.mxu0 0.0
      %975 = vmatpush1.xpose.msra.mxu0 %v968
      %976 = vmatprep.subr.mxu0 0.0
      %977 = vmatpush1.xpose.msra.mxu0 %v970
      %978 = vmatprep.subr.mxu0 0.0
      %979 = vmatpush1.xpose.msra.mxu0 0.0
      %980 = vmatprep.subr.mxu0 0.0
      %981 = vmatpush1.xpose.msra.mxu0 0.0
      %982 = vmatprep.subr.mxu0 0.0
      %983 = vmatpush1.xpose.msra.mxu0 0.0
      %984 = vmatprep.subr.mxu0 0.0
      %985 = vmatpush1.xpose.msra.mxu0 0.0
      %986 = vmatprep.subr.mxu0 0.0
      %987 = vmatpush1.xpose.msra.mxu0 0.0
      %988 = vmatprep.subr.mxu0 0.0
      %989 = vmatpush1.xpose.msra.mxu0 0.0
      %990 = vmatprep.subr.mxu0 0.0
      %991 = vmatpush1.xpose.msra.mxu0 0.0
      %992 = vmatprep.subr.mxu0 0.0
      %993 = vmatpush1.xpose.msra.mxu0 0.0
      %994 = vmatprep.subr.mxu0 0.0
      %995 = vmatpush1.xpose.msra.mxu0 0.0
      %996 = vmatprep.subr.mxu0 0.0
      %997 = vmatpush1.xpose.msra.mxu0 0.0
      %998 = vmatprep.subr.mxu0 0.0
      %999 = vmatpush1.xpose.msra.mxu0 0.0
      %1000 = vmatprep.subr.mxu0 0.0
      %1001 = vmatpush1.xpose.msra.mxu0 0.0
      %1002 = vmatprep.subr.mxu0 0.0
      %1003 = vmatpush1.xpose.msra.mxu0 0.0
      %1004 = vmatprep.subr.mxu0 0.0
      %1005 = vmatpush1.xpose.msra.mxu0 0.0
      %1006 = vmatprep.subr.mxu0 0.0
      %1007 = vmatpush1.xpose.msra.mxu0 0.0
      %1008 = vmatprep.subr.mxu0 0.0
      %1009 = vmatpush1.xpose.msra.mxu0 0.0
      %1010 = vmatprep.subr.mxu0 0.0
      %1011 = vmatpush1.xpose.msra.mxu0 0.0
      %1012 = vmatprep.subr.mxu0 0.0
      %1013 = vmatpush1.xpose.msra.mxu0 0.0
      %1014 = vmatprep.subr.mxu0 0.0
      %1015 = vmatpush1.xpose.msra.mxu0 0.0
      %1016 = vmatprep.subr.mxu0 0.0
      %1017 = vmatpush1.xpose.msra.mxu0 0.0
      %1018 = vmatprep.subr.mxu0 0.0
      %1019 = vmatpush1.xpose.msra.mxu0 0.0
      %1020 = vmatprep.subr.mxu0 0.0
      %1021 = vmatpush1.xpose.msra.mxu0 0.0
      %1022 = vmatprep.subr.mxu0 0.0
      %1023 = vmatpush1.xpose.msra.mxu0 0.0
      %1024 = vmatprep.subr.mxu0 0.0
      %1025 = vmatpush1.xpose.msra.mxu0 0.0
      %1026 = vmatprep.subr.mxu0 0.0
      %1027 = vmatpush1.xpose.msra.mxu0 0.0
      %1028 = vmatprep.subr.mxu0 0.0
      %1029 = vmatpush1.xpose.msra.mxu0 0.0
      %1030 = vmatprep.subr.mxu0 0.0
      %1031 = vmatpush1.xpose.msra.mxu0 0.0
      %1032 = vmatprep.subr.mxu0 0.0
      %1033 = vmatpush1.xpose.msra.mxu0 0.0
      %1034 = vmatprep.subr.mxu0 0.0
      %1035 = vmatpush1.xpose.msra.mxu0 0.0
      %1036 = vmatprep.mubr.f32.mxu0 0.0
      %1037 = vmatmul.mubr.f32.gmra.mrb[0].mxu0 %v960
      %v1038 = vpop.f32.mrb[0].mxu0
      %v1039 = vadd.f32 0.0, %v1038
      %v1040 = vpop.f32.mrb[0].mxu0
      %1041 = vmatprep.mubr.f32.mxu0 0.0
      %1042 = vmatmul.mubr.f32.gmra.mrb[0].mxu0 %v962
      %v1043 = vpop.f32.mrb[0].mxu0
      %v1044 = vadd.f32 0.0, %v1043
      %v1045 = vpop.f32.mrb[0].mxu0
      %1046 = vmatprep.mubr.f32.mxu0 0.0
      %1047 = vmatmul.mubr.f32.gmra.mrb[0].mxu0 %v964
      %v1048 = vpop.f32.mrb[0].mxu0
      %v1049 = vadd.f32 0.0, %v1048
      %v1050 = vpop.f32.mrb[0].mxu0
      %1051 = vdwg.mxu0
      %v1052 = vmul.f32 %v1039, 0.25
      %v1053 = vmul.f32 %v1044, 0.25
      %v1054 = vmul.f32 %v1049, 0.25
      %v1055 = vadd.f32 %v1052, %v816
      %v1056 = vadd.f32 %v1053, %v816
      %v1057 = vadd.f32 %v1054, %v816
      %v1058 = vsel %vm821, %v1055, -inf
      %1059 = vmax.xlane.f32.xlu0 %v1058
      %v1060 = vpop.xlane.xlu0 %1059
      %v1061 = vsel %vm821, %v1056, -inf
      %1062 = vmax.xlane.f32.xlu0 %v1061
      %v1063 = vpop.xlane.xlu0 %1062
      %v1064 = vsel %vm821, %v1057, -inf
      %1065 = vmax.xlane.f32.xlu0 %v1064
      %v1066 = vpop.xlane.xlu0 %1065
      %v1067 = vsub.f32 %v1055, %v1060
      %v1068 = vsub.f32 %v1056, %v1063
      %v1069 = vsub.f32 %v1057, %v1066
      %v1070 = vmul.f32 %v1067, 1.442695
      %v1071 = vpow.pop %v1070
      %v1072 = vmul.f32 %v1068, 1.442695
      %v1073 = vpow.pop %v1072
      %v1074 = vmul.f32 %v1069, 1.442695
      %v1075 = vpow.pop %v1074
      %v1076 = vsel %vm821, %v1071, 0.0
      %1077 = vadd.xlane.f32.xlu0 %v1076
      %v1078 = vpop.xlane.xlu0 %1077
      %v1079 = vsel %vm821, %v1073, 0.0
      %1080 = vadd.xlane.f32.xlu0 %v1079
      %v1081 = vpop.xlane.xlu0 %1080
      %v1082 = vsel %vm821, %v1075, 0.0
      %1083 = vadd.xlane.f32.xlu0 %v1082
      %v1084 = vpop.xlane.xlu0 %1083
      %v1085 = vrcp.pop %v1078
      %v1086 = vrcp.pop %v1081
      %v1087 = vrcp.pop %v1084
      %v1088 = vmul.f32 %v1071, %v1085
      %v1089 = vmul.f32 %v1073, %v1086
      %v1090 = vmul.f32 %v1075, %v1087
      %1094 = vrot.lane.b32.xlu0 %v692, 112
      %v1095 = vpop.permute.xlu0 %1094
      %1096 = vrot.lane.b32.xlu0 %v696, 112
      %v1097 = vpop.permute.xlu0 %1096
      %1098 = vrot.lane.b32.xlu0 %v702, 112
      %v1099 = vpop.permute.xlu0 %1098
      %v1104 = vsel %vm821, %v1088, 0
      %v1107 = vsel %vm821, %v1089, 0
      %v1110 = vsel %vm821, %v1090, 0
      %1112 = vmatprep.subr.mxu0 0.0
      %1113 = vmatpush1.msra.mxu0 %v1095
      %1114 = vmatprep.subr.mxu0 0.0
      %1115 = vmatpush1.msra.mxu0 %v1097
      %1116 = vmatprep.subr.mxu0 0.0
      %1117 = vmatpush1.msra.mxu0 %v1099
      %1118 = vmatprep.subr.mxu0 0.0
      %1119 = vmatpush1.msra.mxu0 0.0
      %1120 = vmatprep.subr.mxu0 0.0
      %1121 = vmatpush1.msra.mxu0 0.0
      %1122 = vmatprep.subr.mxu0 0.0
      %1123 = vmatpush1.msra.mxu0 0.0
      %1124 = vmatprep.subr.mxu0 0.0
      %1125 = vmatpush1.msra.mxu0 0.0
      %1126 = vmatprep.subr.mxu0 0.0
      %1127 = vmatpush1.msra.mxu0 0.0
      %1128 = vmatprep.subr.mxu0 0.0
      %1129 = vmatpush1.msra.mxu0 0.0
      %1130 = vmatprep.subr.mxu0 0.0
      %1131 = vmatpush1.msra.mxu0 0.0
      %1132 = vmatprep.subr.mxu0 0.0
      %1133 = vmatpush1.msra.mxu0 0.0
      %1134 = vmatprep.subr.mxu0 0.0
      %1135 = vmatpush1.msra.mxu0 0.0
      %1136 = vmatprep.subr.mxu0 0.0
      %1137 = vmatpush1.msra.mxu0 0.0
      %1138 = vmatprep.subr.mxu0 0.0
      %1139 = vmatpush1.msra.mxu0 0.0
      %1140 = vmatprep.subr.mxu0 0.0
      %1141 = vmatpush1.msra.mxu0 0.0
      %1142 = vmatprep.subr.mxu0 0.0
      %1143 = vmatpush1.msra.mxu0 0.0
      %1144 = vmatprep.subr.mxu0 0.0
      %1145 = vmatpush1.msra.mxu0 0.0
      %1146 = vmatprep.subr.mxu0 0.0
      %1147 = vmatpush1.msra.mxu0 0.0
      %1148 = vmatprep.subr.mxu0 0.0
      %1149 = vmatpush1.msra.mxu0 0.0
      %1150 = vmatprep.subr.mxu0 0.0
      %1151 = vmatpush1.msra.mxu0 0.0
      %1152 = vmatprep.subr.mxu0 0.0
      %1153 = vmatpush1.msra.mxu0 0.0
      %1154 = vmatprep.subr.mxu0 0.0
      %1155 = vmatpush1.msra.mxu0 0.0
      %1156 = vmatprep.subr.mxu0 0.0
      %1157 = vmatpush1.msra.mxu0 0.0
      %1158 = vmatprep.subr.mxu0 0.0
      %1159 = vmatpush1.msra.mxu0 0.0
      %1160 = vmatprep.subr.mxu0 0.0
      %1161 = vmatpush1.msra.mxu0 0.0
      %1162 = vmatprep.subr.mxu0 0.0
      %1163 = vmatpush1.msra.mxu0 0.0
      %1164 = vmatprep.subr.mxu0 0.0
      %1165 = vmatpush1.msra.mxu0 0.0
      %1166 = vmatprep.subr.mxu0 0.0
      %1167 = vmatpush1.msra.mxu0 0.0
      %1168 = vmatprep.subr.mxu0 0.0
      %1169 = vmatpush1.msra.mxu0 0.0
      %1170 = vmatprep.subr.mxu0 0.0
      %1171 = vmatpush1.msra.mxu0 0.0
      %1172 = vmatprep.subr.mxu0 0.0
      %1173 = vmatpush1.msra.mxu0 0.0
      %1174 = vmatprep.subr.mxu0 0.0
      %1175 = vmatpush1.msra.mxu0 0.0
      %1176 = vmatprep.mubr.f32.mxu0 0.0
      %1177 = vmatmul.mubr.f32.gmra.mrb[0].mxu0 %v1104
      %v1178 = vpop.f32.mrb[0].mxu0
      %v1179 = vadd.f32 0.0, %v1178
      %v1180 = vpop.f32.mrb[0].mxu0
      %1181 = vmatprep.mubr.f32.mxu0 0.0
      %1182 = vmatmul.mubr.f32.gmra.mrb[0].mxu0 %v1107
      %v1183 = vpop.f32.mrb[0].mxu0
      %v1184 = vadd.f32 0.0, %v1183
      %v1185 = vpop.f32.mrb[0].mxu0
      %1186 = vmatprep.mubr.f32.mxu0 0.0
      %1187 = vmatmul.mubr.f32.gmra.mrb[0].mxu0 %v1110
      %v1188 = vpop.f32.mrb[0].mxu0
      %v1189 = vadd.f32 0.0, %v1188
      %v1190 = vpop.f32.mrb[0].mxu0
      %1191 = vdwg.mxu0
      %v1192 = vpack.c.bf16 %v1184, %v1179
      %v1193 = vpack.c.bf16 %v1189, %v1189
      %v1194 = vld [vmem:[%s6 + $0x8] sm:$0xf]
      %v1195 = vld [vmem:[%s6 + $0xc] sm:$0xf]
      %v1198 = vunpack.c.l.b16 %v1194
      %v1199 = vunpack.c.l.b16 %v1195
      %v1200 = vpack.c.b16 %v1199, %v1198
      %v1203 = vsel %vm716, %v1192, 0
      %v1206 = vsel %vm716, %v1193, 0
      %1208 = vmatprep.subr.bf16.mxu0 0
      %1209 = vmatpush1.bf16.msra.mxu0 %v1200
      %1210 = vmatprep.subr.bf16.mxu0 0
      %1211 = vmatpush1.bf16.msra.mxu0 0
      %1212 = vmatprep.subr.bf16.mxu0 0
      %1213 = vmatpush1.bf16.msra.mxu0 0
      %1214 = vmatprep.subr.bf16.mxu0 0
      %1215 = vmatpush1.bf16.msra.mxu0 0
      %1216 = vmatprep.subr.bf16.mxu0 0
      %1217 = vmatpush1.bf16.msra.mxu0 0
      %1218 = vmatprep.subr.bf16.mxu0 0
      %1219 = vmatpush1.bf16.msra.mxu0 0
      %1220 = vmatprep.subr.bf16.mxu0 0
      %1221 = vmatpush1.bf16.msra.mxu0 0
      %1222 = vmatprep.subr.bf16.mxu0 0
      %1223 = vmatpush1.bf16.msra.mxu0 0
      %1224 = vmatprep.subr.bf16.mxu0 0
      %1225 = vmatpush1.bf16.msra.mxu0 0
      %1226 = vmatprep.subr.bf16.mxu0 0
      %1227 = vmatpush1.bf16.msra.mxu0 0
      %1228 = vmatprep.subr.bf16.mxu0 0
      %1229 = vmatpush1.bf16.msra.mxu0 0
      %1230 = vmatprep.subr.bf16.mxu0 0
      %1231 = vmatpush1.bf16.msra.mxu0 0
      %1232 = vmatprep.subr.bf16.mxu0 0
      %1233 = vmatpush1.bf16.msra.mxu0 0
      %1234 = vmatprep.subr.bf16.mxu0 0
      %1235 = vmatpush1.bf16.msra.mxu0 0
      %1236 = vmatprep.subr.bf16.mxu0 0
      %1237 = vmatpush1.bf16.msra.mxu0 0
      %1238 = vmatprep.subr.bf16.mxu0 0
      %1239 = vmatpush1.bf16.msra.mxu0 0
      %1240 = vmatprep.mubr.bf16.mxu0 0
      %1241 = vmatmul.mubr.bf16.gmra.mrb[0].mxu0 %v1203
      %v1242 = vpop.f32.mrb[0].mxu0
      %v1243 = vadd.f32 0.0, %v1242
      %v1244 = vpop.f32.mrb[0].mxu0
      %v1245 = vpop.f32.mrb[0].mxu0
      %v1246 = vadd.f32 0.0, %v1245
      %v1247 = vpop.f32.mrb[0].mxu0
      %1248 = vmatprep.mubr.bf16.mxu0 0
      %1249 = vmatmul.mubr.bf16.gmra.mrb[0].mxu0 %v1206
      %v1250 = vpop.f32.mrb[0].mxu0
      %v1251 = vadd.f32 0.0, %v1250
      %v1252 = vpop.f32.mrb[0].mxu0
      %v1253 = vpop.f32.mrb[0].mxu0
      %v1254 = vpop.f32.mrb[0].mxu0
      %1255 = vdwg.mxu0
      %v1258 = vunpack.c.l.b16 %v946
      %v1259 = vunpack.c.l.b16 %v947
      %v1260 = vpack.c.b16 %v1259, %v1258
      %v1263 = vsel %vm716, %v944, 0
      %v1266 = vsel %vm716, %v945, 0
      %1268 = vmatprep.subr.bf16.mxu0 0
      %1269 = vmatpush1.bf16.msra.mxu0 %v1260
      %1270 = vmatprep.subr.bf16.mxu0 0
      %1271 = vmatpush1.bf16.msra.mxu0 0
      %1272 = vmatprep.subr.bf16.mxu0 0
      %1273 = vmatpush1.bf16.msra.mxu0 0
      %1274 = vmatprep.subr.bf16.mxu0 0
      %1275 = vmatpush1.bf16.msra.mxu0 0
      %1276 = vmatprep.subr.bf16.mxu0 0
      %1277 = vmatpush1.bf16.msra.mxu0 0
      %1278 = vmatprep.subr.bf16.mxu0 0
      %1279 = vmatpush1.bf16.msra.mxu0 0
      %1280 = vmatprep.subr.bf16.mxu0 0
      %1281 = vmatpush1.bf16.msra.mxu0 0
      %1282 = vmatprep.subr.bf16.mxu0 0
      %1283 = vmatpush1.bf16.msra.mxu0 0
      %1284 = vmatprep.subr.bf16.mxu0 0
      %1285 = vmatpush1.bf16.msra.mxu0 0
      %1286 = vmatprep.subr.bf16.mxu0 0
      %1287 = vmatpush1.bf16.msra.mxu0 0
      %1288 = vmatprep.subr.bf16.mxu0 0
      %1289 = vmatpush1.bf16.msra.mxu0 0
      %1290 = vmatprep.subr.bf16.mxu0 0
      %1291 = vmatpush1.bf16.msra.mxu0 0
      %1292 = vmatprep.subr.bf16.mxu0 0
      %1293 = vmatpush1.bf16.msra.mxu0 0
      %1294 = vmatprep.subr.bf16.mxu0 0
      %1295 = vmatpush1.bf16.msra.mxu0 0
      %1296 = vmatprep.subr.bf16.mxu0 0
      %1297 = vmatpush1.bf16.msra.mxu0 0
      %1298 = vmatprep.subr.bf16.mxu0 0
      %1299 = vmatpush1.bf16.msra.mxu0 0
      %1300 = vmatprep.mubr.bf16.mxu0 0
      %1301 = vmatmul.mubr.bf16.gmra.mrb[0].mxu0 %v1263
      %v1302 = vpop.f32.mrb[0].mxu0
      %v1303 = vadd.f32 %v1243, %v1302
      %v1304 = vpop.f32.mrb[0].mxu0
      %v1305 = vpop.f32.mrb[0].mxu0
      %v1306 = vadd.f32 %v1246, %v1305
      %v1307 = vpop.f32.mrb[0].mxu0
      %1308 = vmatprep.mubr.bf16.mxu0 0
      %1309 = vmatmul.mubr.bf16.gmra.mrb[0].mxu0 %v1266
      %v1310 = vpop.f32.mrb[0].mxu0
      %v1311 = vadd.f32 %v1251, %v1310
      %v1312 = vpop.f32.mrb[0].mxu0
      %v1313 = vpop.f32.mrb[0].mxu0
      %v1314 = vpop.f32.mrb[0].mxu0
      %1315 = vdwg.mxu0
      %1316 = vrot.lane.b32.xlu0 %v690, 96
      %v1317 = vpop.permute.xlu0 %1316
      %1318 = vrot.lane.b32.xlu0 %v694, 96
      %v1319 = vpop.permute.xlu0 %1318
      %1320 = vrot.lane.b32.xlu0 %v700, 96
      %v1321 = vpop.permute.xlu0 %1320
      %1322 = vrot.lane.b32.xlu0 %v690, 32
      %v1323 = vpop.permute.xlu0 %1322
      %1324 = vrot.lane.b32.xlu0 %v694, 32
      %v1325 = vpop.permute.xlu0 %1324
      %1326 = vrot.lane.b32.xlu0 %v700, 32
      %v1327 = vpop.permute.xlu0 %1326
      %v1328 = vsel %vm716, %v1317, 0
      %v1330 = vsel %vm716, %v1319, 0
      %v1332 = vsel %vm716, %v1321, 0
      %v1334 = vsel %vm716, %v1323, 0
      %v1336 = vsel %vm716, %v1325, 0
      %v1338 = vsel %vm716, %v1327, 0
      %1340 = vmatprep.subr.mxu0 0.0
      %1341 = vmatpush1.xpose.msra.mxu0 %v1334
      %1342 = vmatprep.subr.mxu0 0.0
      %1343 = vmatpush1.xpose.msra.mxu0 %v1336
      %1344 = vmatprep.subr.mxu0 0.0
      %1345 = vmatpush1.xpose.msra.mxu0 %v1338
      %1346 = vmatprep.subr.mxu0 0.0
      %1347 = vmatpush1.xpose.msra.mxu0 0.0
      %1348 = vmatprep.subr.mxu0 0.0
      %1349 = vmatpush1.xpose.msra.mxu0 0.0
      %1350 = vmatprep.subr.mxu0 0.0
      %1351 = vmatpush1.xpose.msra.mxu0 0.0
      %1352 = vmatprep.subr.mxu0 0.0
      %1353 = vmatpush1.xpose.msra.mxu0 0.0
      %1354 = vmatprep.subr.mxu0 0.0
      %1355 = vmatpush1.xpose.msra.mxu0 0.0
      %1356 = vmatprep.subr.mxu0 0.0
      %1357 = vmatpush1.xpose.msra.mxu0 0.0
      %1358 = vmatprep.subr.mxu0 0.0
      %1359 = vmatpush1.xpose.msra.mxu0 0.0
      %1360 = vmatprep.subr.mxu0 0.0
      %1361 = vmatpush1.xpose.msra.mxu0 0.0
      %1362 = vmatprep.subr.mxu0 0.0
      %1363 = vmatpush1.xpose.msra.mxu0 0.0
      %1364 = vmatprep.subr.mxu0 0.0
      %1365 = vmatpush1.xpose.msra.mxu0 0.0
      %1366 = vmatprep.subr.mxu0 0.0
      %1367 = vmatpush1.xpose.msra.mxu0 0.0
      %1368 = vmatprep.subr.mxu0 0.0
      %1369 = vmatpush1.xpose.msra.mxu0 0.0
      %1370 = vmatprep.subr.mxu0 0.0
      %1371 = vmatpush1.xpose.msra.mxu0 0.0
      %1372 = vmatprep.subr.mxu0 0.0
      %1373 = vmatpush1.xpose.msra.mxu0 0.0
      %1374 = vmatprep.subr.mxu0 0.0
      %1375 = vmatpush1.xpose.msra.mxu0 0.0
      %1376 = vmatprep.subr.mxu0 0.0
      %1377 = vmatpush1.xpose.msra.mxu0 0.0
      %1378 = vmatprep.subr.mxu0 0.0
      %1379 = vmatpush1.xpose.msra.mxu0 0.0
      %1380 = vmatprep.subr.mxu0 0.0
      %1381 = vmatpush1.xpose.msra.mxu0 0.0
      %1382 = vmatprep.subr.mxu0 0.0
      %1383 = vmatpush1.xpose.msra.mxu0 0.0
      %1384 = vmatprep.subr.mxu0 0.0
      %1385 = vmatpush1.xpose.msra.mxu0 0.0
      %1386 = vmatprep.subr.mxu0 0.0
      %1387 = vmatpush1.xpose.msra.mxu0 0.0
      %1388 = vmatprep.subr.mxu0 0.0
      %1389 = vmatpush1.xpose.msra.mxu0 0.0
      %1390 = vmatprep.subr.mxu0 0.0
      %1391 = vmatpush1.xpose.msra.mxu0 0.0
      %1392 = vmatprep.subr.mxu0 0.0
      %1393 = vmatpush1.xpose.msra.mxu0 0.0
      %1394 = vmatprep.subr.mxu0 0.0
      %1395 = vmatpush1.xpose.msra.mxu0 0.0
      %1396 = vmatprep.subr.mxu0 0.0
      %1397 = vmatpush1.xpose.msra.mxu0 0.0
      %1398 = vmatprep.subr.mxu0 0.0
      %1399 = vmatpush1.xpose.msra.mxu0 0.0
      %1400 = vmatprep.subr.mxu0 0.0
      %1401 = vmatpush1.xpose.msra.mxu0 0.0
      %1402 = vmatprep.subr.mxu0 0.0
      %1403 = vmatpush1.xpose.msra.mxu0 0.0
      %1404 = vmatprep.mubr.f32.mxu0 0.0
      %1405 = vmatmul.mubr.f32.gmra.mrb[0].mxu0 %v1328
      %v1406 = vpop.f32.mrb[0].mxu0
      %v1407 = vadd.f32 0.0, %v1406
      %v1408 = vpop.f32.mrb[0].mxu0
      %1409 = vmatprep.mubr.f32.mxu0 0.0
      %1410 = vmatmul.mubr.f32.gmra.mrb[0].mxu0 %v1330
      %v1411 = vpop.f32.mrb[0].mxu0
      %v1412 = vadd.f32 0.0, %v1411
      %v1413 = vpop.f32.mrb[0].mxu0
      %1414 = vmatprep.mubr.f32.mxu0 0.0
      %1415 = vmatmul.mubr.f32.gmra.mrb[0].mxu0 %v1332
      %v1416 = vpop.f32.mrb[0].mxu0
      %v1417 = vadd.f32 0.0, %v1416
      %v1418 = vpop.f32.mrb[0].mxu0
      %1419 = vdwg.mxu0
      %v1420 = vmul.f32 %v1407, 0.25
      %v1421 = vmul.f32 %v1412, 0.25
      %v1422 = vmul.f32 %v1417, 0.25
      %v1423 = vadd.f32 %v1420, %v816
      %v1424 = vadd.f32 %v1421, %v816
      %v1425 = vadd.f32 %v1422, %v816
      %v1426 = vsel %vm821, %v1423, -inf
      %1427 = vmax.xlane.f32.xlu0 %v1426
      %v1428 = vpop.xlane.xlu0 %1427
      %v1429 = vsel %vm821, %v1424, -inf
      %1430 = vmax.xlane.f32.xlu0 %v1429
      %v1431 = vpop.xlane.xlu0 %1430
      %v1432 = vsel %vm821, %v1425, -inf
      %1433 = vmax.xlane.f32.xlu0 %v1432
      %v1434 = vpop.xlane.xlu0 %1433
      %v1435 = vsub.f32 %v1423, %v1428
      %v1436 = vsub.f32 %v1424, %v1431
      %v1437 = vsub.f32 %v1425, %v1434
      %v1438 = vmul.f32 %v1435, 1.442695
      %v1439 = vpow.pop %v1438
      %v1440 = vmul.f32 %v1436, 1.442695
      %v1441 = vpow.pop %v1440
      %v1442 = vmul.f32 %v1437, 1.442695
      %v1443 = vpow.pop %v1442
      %v1444 = vsel %vm821, %v1439, 0.0
      %1445 = vadd.xlane.f32.xlu0 %v1444
      %v1446 = vpop.xlane.xlu0 %1445
      %v1447 = vsel %vm821, %v1441, 0.0
      %1448 = vadd.xlane.f32.xlu0 %v1447
      %v1449 = vpop.xlane.xlu0 %1448
      %v1450 = vsel %vm821, %v1443, 0.0
      %1451 = vadd.xlane.f32.xlu0 %v1450
      %v1452 = vpop.xlane.xlu0 %1451
      %v1453 = vrcp.pop %v1446
      %v1454 = vrcp.pop %v1449
      %v1455 = vrcp.pop %v1452
      %v1456 = vmul.f32 %v1439, %v1453
      %v1457 = vmul.f32 %v1441, %v1454
      %v1458 = vmul.f32 %v1443, %v1455
      %1459 = vrot.lane.b32.xlu0 %v692, 96
      %v1460 = vpop.permute.xlu0 %1459
      %1461 = vrot.lane.b32.xlu0 %v696, 96
      %v1462 = vpop.permute.xlu0 %1461
      %1463 = vrot.lane.b32.xlu0 %v702, 96
      %v1464 = vpop.permute.xlu0 %1463
      %v1469 = vsel %vm821, %v1456, 0
      %v1472 = vsel %vm821, %v1457, 0
      %v1475 = vsel %vm821, %v1458, 0
      %1477 = vmatprep.subr.mxu0 0.0
      %1478 = vmatpush1.msra.mxu0 %v1460
      %1479 = vmatprep.subr.mxu0 0.0
      %1480 = vmatpush1.msra.mxu0 %v1462
      %1481 = vmatprep.subr.mxu0 0.0
      %1482 = vmatpush1.msra.mxu0 %v1464
      %1483 = vmatprep.subr.mxu0 0.0
      %1484 = vmatpush1.msra.mxu0 0.0
      %1485 = vmatprep.subr.mxu0 0.0
      %1486 = vmatpush1.msra.mxu0 0.0
      %1487 = vmatprep.subr.mxu0 0.0
      %1488 = vmatpush1.msra.mxu0 0.0
      %1489 = vmatprep.subr.mxu0 0.0
      %1490 = vmatpush1.msra.mxu0 0.0
      %1491 = vmatprep.subr.mxu0 0.0
      %1492 = vmatpush1.msra.mxu0 0.0
      %1493 = vmatprep.subr.mxu0 0.0
      %1494 = vmatpush1.msra.mxu0 0.0
      %1495 = vmatprep.subr.mxu0 0.0
      %1496 = vmatpush1.msra.mxu0 0.0
      %1497 = vmatprep.subr.mxu0 0.0
      %1498 = vmatpush1.msra.mxu0 0.0
      %1499 = vmatprep.subr.mxu0 0.0
      %1500 = vmatpush1.msra.mxu0 0.0
      %1501 = vmatprep.subr.mxu0 0.0
      %1502 = vmatpush1.msra.mxu0 0.0
      %1503 = vmatprep.subr.mxu0 0.0
      %1504 = vmatpush1.msra.mxu0 0.0
      %1505 = vmatprep.subr.mxu0 0.0
      %1506 = vmatpush1.msra.mxu0 0.0
      %1507 = vmatprep.subr.mxu0 0.0
      %1508 = vmatpush1.msra.mxu0 0.0
      %1509 = vmatprep.subr.mxu0 0.0
      %1510 = vmatpush1.msra.mxu0 0.0
      %1511 = vmatprep.subr.mxu0 0.0
      %1512 = vmatpush1.msra.mxu0 0.0
      %1513 = vmatprep.subr.mxu0 0.0
      %1514 = vmatpush1.msra.mxu0 0.0
      %1515 = vmatprep.subr.mxu0 0.0
      %1516 = vmatpush1.msra.mxu0 0.0
      %1517 = vmatprep.subr.mxu0 0.0
      %1518 = vmatpush1.msra.mxu0 0.0
      %1519 = vmatprep.subr.mxu0 0.0
      %1520 = vmatpush1.msra.mxu0 0.0
      %1521 = vmatprep.subr.mxu0 0.0
      %1522 = vmatpush1.msra.mxu0 0.0
      %1523 = vmatprep.subr.mxu0 0.0
      %1524 = vmatpush1.msra.mxu0 0.0
      %1525 = vmatprep.subr.mxu0 0.0
      %1526 = vmatpush1.msra.mxu0 0.0
      %1527 = vmatprep.subr.mxu0 0.0
      %1528 = vmatpush1.msra.mxu0 0.0
      %1529 = vmatprep.subr.mxu0 0.0
      %1530 = vmatpush1.msra.mxu0 0.0
      %1531 = vmatprep.subr.mxu0 0.0
      %1532 = vmatpush1.msra.mxu0 0.0
      %1533 = vmatprep.subr.mxu0 0.0
      %1534 = vmatpush1.msra.mxu0 0.0
      %1535 = vmatprep.subr.mxu0 0.0
      %1536 = vmatpush1.msra.mxu0 0.0
      %1537 = vmatprep.subr.mxu0 0.0
      %1538 = vmatpush1.msra.mxu0 0.0
      %1539 = vmatprep.subr.mxu0 0.0
      %1540 = vmatpush1.msra.mxu0 0.0
      %1541 = vmatprep.mubr.f32.mxu0 0.0
      %1542 = vmatmul.mubr.f32.gmra.mrb[0].mxu0 %v1469
      %v1543 = vpop.f32.mrb[0].mxu0
      %v1544 = vadd.f32 0.0, %v1543
      %v1545 = vpop.f32.mrb[0].mxu0
      %1546 = vmatprep.mubr.f32.mxu0 0.0
      %1547 = vmatmul.mubr.f32.gmra.mrb[0].mxu0 %v1472
      %v1548 = vpop.f32.mrb[0].mxu0
      %v1549 = vadd.f32 0.0, %v1548
      %v1550 = vpop.f32.mrb[0].mxu0
      %1551 = vmatprep.mubr.f32.mxu0 0.0
      %1552 = vmatmul.mubr.f32.gmra.mrb[0].mxu0 %v1475
      %v1553 = vpop.f32.mrb[0].mxu0
      %v1554 = vadd.f32 0.0, %v1553
      %v1555 = vpop.f32.mrb[0].mxu0
      %1556 = vdwg.mxu0
      %v1557 = vpack.c.bf16 %v1549, %v1544
      %v1558 = vpack.c.bf16 %v1554, %v1554
      %v1559 = vld [vmem:[%s6 + $0x10] sm:$0xf]
      %v1560 = vld [vmem:[%s6 + $0x14] sm:$0xf]
      %v1563 = vunpack.c.l.b16 %v1559
      %v1564 = vunpack.c.l.b16 %v1560
      %v1565 = vpack.c.b16 %v1564, %v1563
      %v1568 = vsel %vm716, %v1557, 0
      %v1571 = vsel %vm716, %v1558, 0
      %1573 = vmatprep.subr.bf16.mxu0 0
      %1574 = vmatpush1.bf16.msra.mxu0 %v1565
      %1575 = vmatprep.subr.bf16.mxu0 0
      %1576 = vmatpush1.bf16.msra.mxu0 0
      %1577 = vmatprep.subr.bf16.mxu0 0
      %1578 = vmatpush1.bf16.msra.mxu0 0
      %1579 = vmatprep.subr.bf16.mxu0 0
      %1580 = vmatpush1.bf16.msra.mxu0 0
      %1581 = vmatprep.subr.bf16.mxu0 0
      %1582 = vmatpush1.bf16.msra.mxu0 0
      %1583 = vmatprep.subr.bf16.mxu0 0
      %1584 = vmatpush1.bf16.msra.mxu0 0
      %1585 = vmatprep.subr.bf16.mxu0 0
      %1586 = vmatpush1.bf16.msra.mxu0 0
      %1587 = vmatprep.subr.bf16.mxu0 0
      %1588 = vmatpush1.bf16.msra.mxu0 0
      %1589 = vmatprep.subr.bf16.mxu0 0
      %1590 = vmatpush1.bf16.msra.mxu0 0
      %1591 = vmatprep.subr.bf16.mxu0 0
      %1592 = vmatpush1.bf16.msra.mxu0 0
      %1593 = vmatprep.subr.bf16.mxu0 0
      %1594 = vmatpush1.bf16.msra.mxu0 0
      %1595 = vmatprep.subr.bf16.mxu0 0
      %1596 = vmatpush1.bf16.msra.mxu0 0
      %1597 = vmatprep.subr.bf16.mxu0 0
      %1598 = vmatpush1.bf16.msra.mxu0 0
      %1599 = vmatprep.subr.bf16.mxu0 0
      %1600 = vmatpush1.bf16.msra.mxu0 0
      %1601 = vmatprep.subr.bf16.mxu0 0
      %1602 = vmatpush1.bf16.msra.mxu0 0
      %1603 = vmatprep.subr.bf16.mxu0 0
      %1604 = vmatpush1.bf16.msra.mxu0 0
      %1605 = vmatprep.mubr.bf16.mxu0 0
      %1606 = vmatmul.mubr.bf16.gmra.mrb[0].mxu0 %v1568
      %v1607 = vpop.f32.mrb[0].mxu0
      %v1608 = vadd.f32 0.0, %v1607
      %v1609 = vpop.f32.mrb[0].mxu0
      %v1610 = vpop.f32.mrb[0].mxu0
      %v1611 = vadd.f32 0.0, %v1610
      %v1612 = vpop.f32.mrb[0].mxu0
      %1613 = vmatprep.mubr.bf16.mxu0 0
      %1614 = vmatmul.mubr.bf16.gmra.mrb[0].mxu0 %v1571
      %v1615 = vpop.f32.mrb[0].mxu0
      %v1616 = vadd.f32 0.0, %v1615
      %v1617 = vpop.f32.mrb[0].mxu0
      %v1618 = vpop.f32.mrb[0].mxu0
      %v1619 = vpop.f32.mrb[0].mxu0
      %1620 = vdwg.mxu0
      %v1621 = vadd.f32 %v1303, %v1608
      %v1622 = vadd.f32 %v1306, %v1611
      %v1623 = vadd.f32 %v1311, %v1616
      %1624 = vrot.lane.b32.xlu0 %v690, 80
      %v1625 = vpop.permute.xlu0 %1624
      %1626 = vrot.lane.b32.xlu0 %v694, 80
      %v1627 = vpop.permute.xlu0 %1626
      %1628 = vrot.lane.b32.xlu0 %v700, 80
      %v1629 = vpop.permute.xlu0 %1628
      %1630 = vrot.lane.b32.xlu0 %v690, 16
      %v1631 = vpop.permute.xlu0 %1630
      %1632 = vrot.lane.b32.xlu0 %v694, 16
      %v1633 = vpop.permute.xlu0 %1632
      %1634 = vrot.lane.b32.xlu0 %v700, 16
      %v1635 = vpop.permute.xlu0 %1634
      %v1636 = vsel %vm716, %v1625, 0
      %v1638 = vsel %vm716, %v1627, 0
      %v1640 = vsel %vm716, %v1629, 0
      %v1642 = vsel %vm716, %v1631, 0
      %v1644 = vsel %vm716, %v1633, 0
      %v1646 = vsel %vm716, %v1635, 0
      %1648 = vmatprep.subr.mxu0 0.0
      %1649 = vmatpush1.xpose.msra.mxu0 %v1642
      %1650 = vmatprep.subr.mxu0 0.0
      %1651 = vmatpush1.xpose.msra.mxu0 %v1644
      %1652 = vmatprep.subr.mxu0 0.0
      %1653 = vmatpush1.xpose.msra.mxu0 %v1646
      %1654 = vmatprep.subr.mxu0 0.0
      %1655 = vmatpush1.xpose.msra.mxu0 0.0
      %1656 = vmatprep.subr.mxu0 0.0
      %1657 = vmatpush1.xpose.msra.mxu0 0.0
      %1658 = vmatprep.subr.mxu0 0.0
      %1659 = vmatpush1.xpose.msra.mxu0 0.0
      %1660 = vmatprep.subr.mxu0 0.0
      %1661 = vmatpush1.xpose.msra.mxu0 0.0
      %1662 = vmatprep.subr.mxu0 0.0
      %1663 = vmatpush1.xpose.msra.mxu0 0.0
      %1664 = vmatprep.subr.mxu0 0.0
      %1665 = vmatpush1.xpose.msra.mxu0 0.0
      %1666 = vmatprep.subr.mxu0 0.0
      %1667 = vmatpush1.xpose.msra.mxu0 0.0
      %1668 = vmatprep.subr.mxu0 0.0
      %1669 = vmatpush1.xpose.msra.mxu0 0.0
      %1670 = vmatprep.subr.mxu0 0.0
      %1671 = vmatpush1.xpose.msra.mxu0 0.0
      %1672 = vmatprep.subr.mxu0 0.0
      %1673 = vmatpush1.xpose.msra.mxu0 0.0
      %1674 = vmatprep.subr.mxu0 0.0
      %1675 = vmatpush1.xpose.msra.mxu0 0.0
      %1676 = vmatprep.subr.mxu0 0.0
      %1677 = vmatpush1.xpose.msra.mxu0 0.0
      %1678 = vmatprep.subr.mxu0 0.0
      %1679 = vmatpush1.xpose.msra.mxu0 0.0
      %1680 = vmatprep.subr.mxu0 0.0
      %1681 = vmatpush1.xpose.msra.mxu0 0.0
      %1682 = vmatprep.subr.mxu0 0.0
      %1683 = vmatpush1.xpose.msra.mxu0 0.0
      %1684 = vmatprep.subr.mxu0 0.0
      %1685 = vmatpush1.xpose.msra.mxu0 0.0
      %1686 = vmatprep.subr.mxu0 0.0
      %1687 = vmatpush1.xpose.msra.mxu0 0.0
      %1688 = vmatprep.subr.mxu0 0.0
      %1689 = vmatpush1.xpose.msra.mxu0 0.0
      %1690 = vmatprep.subr.mxu0 0.0
      %1691 = vmatpush1.xpose.msra.mxu0 0.0
      %1692 = vmatprep.subr.mxu0 0.0
      %1693 = vmatpush1.xpose.msra.mxu0 0.0
      %1694 = vmatprep.subr.mxu0 0.0
      %1695 = vmatpush1.xpose.msra.mxu0 0.0
      %1696 = vmatprep.subr.mxu0 0.0
      %1697 = vmatpush1.xpose.msra.mxu0 0.0
      %1698 = vmatprep.subr.mxu0 0.0
      %1699 = vmatpush1.xpose.msra.mxu0 0.0
      %1700 = vmatprep.subr.mxu0 0.0
      %1701 = vmatpush1.xpose.msra.mxu0 0.0
      %1702 = vmatprep.subr.mxu0 0.0
      %1703 = vmatpush1.xpose.msra.mxu0 0.0
      %1704 = vmatprep.subr.mxu0 0.0
      %1705 = vmatpush1.xpose.msra.mxu0 0.0
      %1706 = vmatprep.subr.mxu0 0.0
      %1707 = vmatpush1.xpose.msra.mxu0 0.0
      %1708 = vmatprep.subr.mxu0 0.0
      %1709 = vmatpush1.xpose.msra.mxu0 0.0
      %1710 = vmatprep.subr.mxu0 0.0
      %1711 = vmatpush1.xpose.msra.mxu0 0.0
      %1712 = vmatprep.mubr.f32.mxu0 0.0
      %1713 = vmatmul.mubr.f32.gmra.mrb[0].mxu0 %v1636
      %v1714 = vpop.f32.mrb[0].mxu0
      %v1715 = vadd.f32 0.0, %v1714
      %v1716 = vpop.f32.mrb[0].mxu0
      %1717 = vmatprep.mubr.f32.mxu0 0.0
      %1718 = vmatmul.mubr.f32.gmra.mrb[0].mxu0 %v1638
      %v1719 = vpop.f32.mrb[0].mxu0
      %v1720 = vadd.f32 0.0, %v1719
      %v1721 = vpop.f32.mrb[0].mxu0
      %1722 = vmatprep.mubr.f32.mxu0 0.0
      %1723 = vmatmul.mubr.f32.gmra.mrb[0].mxu0 %v1640
      %v1724 = vpop.f32.mrb[0].mxu0
      %v1725 = vadd.f32 0.0, %v1724
      %v1726 = vpop.f32.mrb[0].mxu0
      %1727 = vdwg.mxu0
      %v1728 = vmul.f32 %v1715, 0.25
      %v1729 = vmul.f32 %v1720, 0.25
      %v1730 = vmul.f32 %v1725, 0.25
      %v1731 = vadd.f32 %v1728, %v816
      %v1732 = vadd.f32 %v1729, %v816
      %v1733 = vadd.f32 %v1730, %v816
      %v1734 = vsel %vm821, %v1731, -inf
      %1735 = vmax.xlane.f32.xlu0 %v1734
      %v1736 = vpop.xlane.xlu0 %1735
      %v1737 = vsel %vm821, %v1732, -inf
      %1738 = vmax.xlane.f32.xlu0 %v1737
      %v1739 = vpop.xlane.xlu0 %1738
      %v1740 = vsel %vm821, %v1733, -inf
      %1741 = vmax.xlane.f32.xlu0 %v1740
      %v1742 = vpop.xlane.xlu0 %1741
      %v1743 = vsub.f32 %v1731, %v1736
      %v1744 = vsub.f32 %v1732, %v1739
      %v1745 = vsub.f32 %v1733, %v1742
      %v1746 = vmul.f32 %v1743, 1.442695
      %v1747 = vpow.pop %v1746
      %v1748 = vmul.f32 %v1744, 1.442695
      %v1749 = vpow.pop %v1748
      %v1750 = vmul.f32 %v1745, 1.442695
      %v1751 = vpow.pop %v1750
      %v1752 = vsel %vm821, %v1747, 0.0
      %1753 = vadd.xlane.f32.xlu0 %v1752
      %v1754 = vpop.xlane.xlu0 %1753
      %v1755 = vsel %vm821, %v1749, 0.0
      %1756 = vadd.xlane.f32.xlu0 %v1755
      %v1757 = vpop.xlane.xlu0 %1756
      %v1758 = vsel %vm821, %v1751, 0.0
      %1759 = vadd.xlane.f32.xlu0 %v1758
      %v1760 = vpop.xlane.xlu0 %1759
      %v1761 = vrcp.pop %v1754
      %v1762 = vrcp.pop %v1757
      %v1763 = vrcp.pop %v1760
      %v1764 = vmul.f32 %v1747, %v1761
      %v1765 = vmul.f32 %v1749, %v1762
      %v1766 = vmul.f32 %v1751, %v1763
      %1767 = vrot.lane.b32.xlu0 %v692, 80
      %v1768 = vpop.permute.xlu0 %1767
      %1769 = vrot.lane.b32.xlu0 %v696, 80
      %v1770 = vpop.permute.xlu0 %1769
      %1771 = vrot.lane.b32.xlu0 %v702, 80
      %v1772 = vpop.permute.xlu0 %1771
      %v1777 = vsel %vm821, %v1764, 0
      %v1780 = vsel %vm821, %v1765, 0
      %v1783 = vsel %vm821, %v1766, 0
      %1785 = vmatprep.subr.mxu0 0.0
      %1786 = vmatpush1.msra.mxu0 %v1768
      %1787 = vmatprep.subr.mxu0 0.0
      %1788 = vmatpush1.msra.mxu0 %v1770
      %1789 = vmatprep.subr.mxu0 0.0
      %1790 = vmatpush1.msra.mxu0 %v1772
      %1791 = vmatprep.subr.mxu0 0.0
      %1792 = vmatpush1.msra.mxu0 0.0
      %1793 = vmatprep.subr.mxu0 0.0
      %1794 = vmatpush1.msra.mxu0 0.0
      %1795 = vmatprep.subr.mxu0 0.0
      %1796 = vmatpush1.msra.mxu0 0.0
      %1797 = vmatprep.subr.mxu0 0.0
      %1798 = vmatpush1.msra.mxu0 0.0
      %1799 = vmatprep.subr.mxu0 0.0
      %1800 = vmatpush1.msra.mxu0 0.0
      %1801 = vmatprep.subr.mxu0 0.0
      %1802 = vmatpush1.msra.mxu0 0.0
      %1803 = vmatprep.subr.mxu0 0.0
      %1804 = vmatpush1.msra.mxu0 0.0
      %1805 = vmatprep.subr.mxu0 0.0
      %1806 = vmatpush1.msra.mxu0 0.0
      %1807 = vmatprep.subr.mxu0 0.0
      %1808 = vmatpush1.msra.mxu0 0.0
      %1809 = vmatprep.subr.mxu0 0.0
      %1810 = vmatpush1.msra.mxu0 0.0
      %1811 = vmatprep.subr.mxu0 0.0
      %1812 = vmatpush1.msra.mxu0 0.0
      %1813 = vmatprep.subr.mxu0 0.0
      %1814 = vmatpush1.msra.mxu0 0.0
      %1815 = vmatprep.subr.mxu0 0.0
      %1816 = vmatpush1.msra.mxu0 0.0
      %1817 = vmatprep.subr.mxu0 0.0
      %1818 = vmatpush1.msra.mxu0 0.0
      %1819 = vmatprep.subr.mxu0 0.0
      %1820 = vmatpush1.msra.mxu0 0.0
      %1821 = vmatprep.subr.mxu0 0.0
      %1822 = vmatpush1.msra.mxu0 0.0
      %1823 = vmatprep.subr.mxu0 0.0
      %1824 = vmatpush1.msra.mxu0 0.0
      %1825 = vmatprep.subr.mxu0 0.0
      %1826 = vmatpush1.msra.mxu0 0.0
      %1827 = vmatprep.subr.mxu0 0.0
      %1828 = vmatpush1.msra.mxu0 0.0
      %1829 = vmatprep.subr.mxu0 0.0
      %1830 = vmatpush1.msra.mxu0 0.0
      %1831 = vmatprep.subr.mxu0 0.0
      %1832 = vmatpush1.msra.mxu0 0.0
      %1833 = vmatprep.subr.mxu0 0.0
      %1834 = vmatpush1.msra.mxu0 0.0
      %1835 = vmatprep.subr.mxu0 0.0
      %1836 = vmatpush1.msra.mxu0 0.0
      %1837 = vmatprep.subr.mxu0 0.0
      %1838 = vmatpush1.msra.mxu0 0.0
      %1839 = vmatprep.subr.mxu0 0.0
      %1840 = vmatpush1.msra.mxu0 0.0
      %1841 = vmatprep.subr.mxu0 0.0
      %1842 = vmatpush1.msra.mxu0 0.0
      %1843 = vmatprep.subr.mxu0 0.0
      %1844 = vmatpush1.msra.mxu0 0.0
      %1845 = vmatprep.subr.mxu0 0.0
      %1846 = vmatpush1.msra.mxu0 0.0
      %1847 = vmatprep.subr.mxu0 0.0
      %1848 = vmatpush1.msra.mxu0 0.0
      %1849 = vmatprep.mubr.f32.mxu0 0.0
      %1850 = vmatmul.mubr.f32.gmra.mrb[0].mxu0 %v1777
      %v1851 = vpop.f32.mrb[0].mxu0
      %v1852 = vadd.f32 0.0, %v1851
      %v1853 = vpop.f32.mrb[0].mxu0
      %1854 = vmatprep.mubr.f32.mxu0 0.0
      %1855 = vmatmul.mubr.f32.gmra.mrb[0].mxu0 %v1780
      %v1856 = vpop.f32.mrb[0].mxu0
      %v1857 = vadd.f32 0.0, %v1856
      %v1858 = vpop.f32.mrb[0].mxu0
      %1859 = vmatprep.mubr.f32.mxu0 0.0
      %1860 = vmatmul.mubr.f32.gmra.mrb[0].mxu0 %v1783
      %v1861 = vpop.f32.mrb[0].mxu0
      %v1862 = vadd.f32 0.0, %v1861
      %v1863 = vpop.f32.mrb[0].mxu0
      %1864 = vdwg.mxu0
      %v1865 = vpack.c.bf16 %v1857, %v1852
      %v1866 = vpack.c.bf16 %v1862, %v1862
      %v1867 = vld [vmem:[%s6 + $0x18] sm:$0xf]
      %v1868 = vld [vmem:[%s6 + $0x1c] sm:$0xf]
      %v1871 = vunpack.c.l.b16 %v1867
      %v1872 = vunpack.c.l.b16 %v1868
      %v1873 = vpack.c.b16 %v1872, %v1871
      %v1876 = vsel %vm716, %v1865, 0
      %v1879 = vsel %vm716, %v1866, 0
      %1881 = vmatprep.subr.bf16.mxu0 0
      %1882 = vmatpush1.bf16.msra.mxu0 %v1873
      %1883 = vmatprep.subr.bf16.mxu0 0
      %1884 = vmatpush1.bf16.msra.mxu0 0
      %1885 = vmatprep.subr.bf16.mxu0 0
      %1886 = vmatpush1.bf16.msra.mxu0 0
      %1887 = vmatprep.subr.bf16.mxu0 0
      %1888 = vmatpush1.bf16.msra.mxu0 0
      %1889 = vmatprep.subr.bf16.mxu0 0
      %1890 = vmatpush1.bf16.msra.mxu0 0
      %1891 = vmatprep.subr.bf16.mxu0 0
      %1892 = vmatpush1.bf16.msra.mxu0 0
      %1893 = vmatprep.subr.bf16.mxu0 0
      %1894 = vmatpush1.bf16.msra.mxu0 0
      %1895 = vmatprep.subr.bf16.mxu0 0
      %1896 = vmatpush1.bf16.msra.mxu0 0
      %1897 = vmatprep.subr.bf16.mxu0 0
      %1898 = vmatpush1.bf16.msra.mxu0 0
      %1899 = vmatprep.subr.bf16.mxu0 0
      %1900 = vmatpush1.bf16.msra.mxu0 0
      %1901 = vmatprep.subr.bf16.mxu0 0
      %1902 = vmatpush1.bf16.msra.mxu0 0
      %1903 = vmatprep.subr.bf16.mxu0 0
      %1904 = vmatpush1.bf16.msra.mxu0 0
      %1905 = vmatprep.subr.bf16.mxu0 0
      %1906 = vmatpush1.bf16.msra.mxu0 0
      %1907 = vmatprep.subr.bf16.mxu0 0
      %1908 = vmatpush1.bf16.msra.mxu0 0
      %1909 = vmatprep.subr.bf16.mxu0 0
      %1910 = vmatpush1.bf16.msra.mxu0 0
      %1911 = vmatprep.subr.bf16.mxu0 0
      %1912 = vmatpush1.bf16.msra.mxu0 0
      %1913 = vmatprep.mubr.bf16.mxu0 0
      %1914 = vmatmul.mubr.bf16.gmra.mrb[0].mxu0 %v1876
      %v1915 = vpop.f32.mrb[0].mxu0
      %v1916 = vadd.f32 0.0, %v1915
      %v1917 = vpop.f32.mrb[0].mxu0
      %v1918 = vpop.f32.mrb[0].mxu0
      %v1919 = vadd.f32 0.0, %v1918
      %v1920 = vpop.f32.mrb[0].mxu0
      %1921 = vmatprep.mubr.bf16.mxu0 0
      %1922 = vmatmul.mubr.bf16.gmra.mrb[0].mxu0 %v1879
      %v1923 = vpop.f32.mrb[0].mxu0
      %v1924 = vadd.f32 0.0, %v1923
      %v1925 = vpop.f32.mrb[0].mxu0
      %v1926 = vpop.f32.mrb[0].mxu0
      %v1927 = vpop.f32.mrb[0].mxu0
      %1928 = vdwg.mxu0
      %v1929 = vadd.f32 %v1621, %v1916
      %v1930 = vadd.f32 %v1622, %v1919
      %v1931 = vadd.f32 %v1623, %v1924
      %v1932 = vld [vmem:[%s8] sm:$0x1]
      %v1933 = vld [vmem:[%s7] sm:$0x1]
      %v1935 = vlaneseq
      %v1936 = vshrl.u32 %v1935, 7
      %v1937 = vsub.s32 0, %v1936
      %v1938 = vrot.slane %v1933, %v1937
      %v1940 = vadd.f32 %v1929, %v1938
      %v1941 = vadd.f32 %v1930, %v1938
      %v1942 = vadd.f32 %v1931, %v1938
      %v1944 = vlaneseq
      %v1945 = vshrl.u32 %v1944, 7
      %v1946 = vsub.s32 0, %v1945
      %v1947 = vrot.slane %v1932, %v1946
      %v1949 = vmul.f32 %v1947, %v1940
      %v1950 = vmul.f32 %v1947, %v1941
      %v1951 = vmul.f32 %v1947, %v1942
      %v1952 = vadd.f32 %v523, %v1949
      %v1953 = vadd.f32 %v524, %v1950
      %v1954 = vadd.f32 %v525, %v1951
      %v1955 = vld [vmem:[%s9] sm:$0x1]
      %v1956 = vld [vmem:[%s10] sm:$0x1]
      %v1957 = vsel %vm528, %v1952, 0.0
      %1958 = vadd.xlane.f32.xlu0 %v1957
      %v1959 = vpop.xlane.xlu0 %1958
      %v1960 = vsel %vm528, %v1953, 0.0
      %1961 = vadd.xlane.f32.xlu0 %v1960
      %v1962 = vpop.xlane.xlu0 %1961
      %v1963 = vsel %vm528, %v1954, 0.0
      %1964 = vadd.xlane.f32.xlu0 %v1963
      %v1965 = vpop.xlane.xlu0 %1964
      %v1966 = vmul.f32 %v1959, %v538
      %v1967 = vmul.f32 %v1962, %v538
      %v1968 = vmul.f32 %v1965, %v538
      %v1969 = vsub.f32 %v1952, %v1966
      %v1970 = vsub.f32 %v1953, %v1967
      %v1971 = vsub.f32 %v1954, %v1968
      %v1972 = vmul.f32 %v1969, %v1969
      %v1973 = vmul.f32 %v1970, %v1970
      %v1974 = vmul.f32 %v1971, %v1971
      %v1975 = vsel %vm528, %v1972, 0.0
      %1976 = vadd.xlane.f32.xlu0 %v1975
      %v1977 = vpop.xlane.xlu0 %1976
      %v1978 = vsel %vm528, %v1973, 0.0
      %1979 = vadd.xlane.f32.xlu0 %v1978
      %v1980 = vpop.xlane.xlu0 %1979
      %v1981 = vsel %vm528, %v1974, 0.0
      %1982 = vadd.xlane.f32.xlu0 %v1981
      %v1983 = vpop.xlane.xlu0 %1982
      %v1984 = vmul.f32 %v1977, %v538
      %v1985 = vmul.f32 %v1980, %v538
      %v1986 = vmul.f32 %v1983, %v538
      %v1987 = vadd.f32 %v1984, 1e-06
      %v1988 = vadd.f32 %v1985, 1e-06
      %v1989 = vadd.f32 %v1986, 1e-06
      %v1990 = vrsqrt.pop %v1987
      %v1991 = vrsqrt.pop %v1988
      %v1992 = vrsqrt.pop %v1989
      %v1993 = vmul.f32 %v1969, %v1990
      %v1994 = vmul.f32 %v1970, %v1991
      %v1995 = vmul.f32 %v1971, %v1992
      %v1997 = vlaneseq
      %v1998 = vshrl.u32 %v1997, 7
      %v1999 = vsub.s32 0, %v1998
      %v2000 = vrot.slane %v1955, %v1999
      %v2002 = vmul.f32 %v1993, %v2000
      %v2003 = vmul.f32 %v1994, %v2000
      %v2004 = vmul.f32 %v1995, %v2000
      %v2006 = vlaneseq
      %v2007 = vshrl.u32 %v2006, 7
      %v2008 = vsub.s32 0, %v2007
      %v2009 = vrot.slane %v1956, %v2008
      %v2011 = vadd.f32 %v2002, %v2009
      %v2012 = vadd.f32 %v2003, %v2009
      %v2013 = vadd.f32 %v2004, %v2009
      %v2014 = vpack.c.bf16 %v2012, %v2011
      %v2015 = vpack.c.bf16 %v2013, %v2013
      %v2016 = vld [vmem:[%s11] sm:$0xff]
      %v2017 = vld [vmem:[%s11 + $0x8] sm:$0xff]
      %v2018 = vld [vmem:[%s11 + $0x10] sm:$0xff]
      %v2019 = vld [vmem:[%s11 + $0x18] sm:$0xff]
      %v2020 = vld [vmem:[%s11 + $0x20] sm:$0xff]
      %v2021 = vld [vmem:[%s11 + $0x28] sm:$0xff]
      %v2022 = vld [vmem:[%s11 + $0x30] sm:$0xff]
      %v2023 = vld [vmem:[%s11 + $0x38] sm:$0xff]
      %v2024 = vld [vmem:[%s12] sm:$0x3]
      %v2026 = vlaneseq
      %v2027 = vshrl.u32 %v2026, 7
      %v2028 = vsub.s32 0, %v2027
      %v2029 = vrot.slane %v2024, %v2028
      %v2030 = vlaneseq
      %v2031 = vshrl.u32 %v2030, 7
      %v2032 = vsub.s32 1, %v2031
      %v2033 = vrot.slane %v2024, %v2032
      %v2044 = vunpack.c.l.b16 %v2016
      %v2045 = vunpack.c.h.b16 %v2016
      %v2046 = vunpack.c.l.b16 %v2017
      %v2047 = vunpack.c.h.b16 %v2017
      %v2048 = vunpack.c.l.b16 %v2018
      %v2049 = vunpack.c.h.b16 %v2018
      %v2050 = vunpack.c.l.b16 %v2019
      %v2051 = vunpack.c.h.b16 %v2019
      %v2052 = vunpack.c.l.b16 %v2020
      %v2053 = vunpack.c.h.b16 %v2020
      %v2054 = vunpack.c.l.b16 %v2021
      %v2055 = vunpack.c.h.b16 %v2021
      %v2056 = vunpack.c.l.b16 %v2022
      %v2057 = vunpack.c.h.b16 %v2022
      %v2058 = vunpack.c.l.b16 %v2023
      %v2059 = vunpack.c.h.b16 %v2023
      %v2060 = vpack.c.b16 %v2046, %v2044
      %v2061 = vpack.c.b16 %v2047, %v2045
      %v2062 = vpack.c.b16 %v2050, %v2048
      %v2063 = vpack.c.b16 %v2051, %v2049
      %v2064 = vpack.c.b16 %v2054, %v2052
      %v2065 = vpack.c.b16 %v2055, %v2053
      %v2066 = vpack.c.b16 %v2058, %v2056
      %v2067 = vpack.c.b16 %v2059, %v2057
      %v2077 = vsel %vm528, %v2014, 0
      %v2080 = vsel %vm528, %v2015, 0
      %2082 = vmatprep.subr.bf16.mxu0 %v2061
      %2083 = vmatpush1.bf16.msra.mxu0 %v2060
      %2084 = vmatprep.subr.bf16.mxu0 %v2063
      %2085 = vmatpush1.bf16.msra.mxu0 %v2062
      %2086 = vmatprep.subr.bf16.mxu0 %v2065
      %2087 = vmatpush1.bf16.msra.mxu0 %v2064
      %2088 = vmatprep.subr.bf16.mxu0 %v2067
      %2089 = vmatpush1.bf16.msra.mxu0 %v2066
      %2090 = vmatprep.subr.bf16.mxu0 0
      %2091 = vmatpush1.bf16.msra.mxu0 0
      %2092 = vmatprep.subr.bf16.mxu0 0
      %2093 = vmatpush1.bf16.msra.mxu0 0
      %2094 = vmatprep.subr.bf16.mxu0 0
      %2095 = vmatpush1.bf16.msra.mxu0 0
      %2096 = vmatprep.subr.bf16.mxu0 0
      %2097 = vmatpush1.bf16.msra.mxu0 0
      %2098 = vmatprep.subr.bf16.mxu0 0
      %2099 = vmatpush1.bf16.msra.mxu0 0
      %2100 = vmatprep.subr.bf16.mxu0 0
      %2101 = vmatpush1.bf16.msra.mxu0 0
      %2102 = vmatprep.subr.bf16.mxu0 0
      %2103 = vmatpush1.bf16.msra.mxu0 0
      %2104 = vmatprep.subr.bf16.mxu0 0
      %2105 = vmatpush1.bf16.msra.mxu0 0
      %2106 = vmatprep.subr.bf16.mxu0 0
      %2107 = vmatpush1.bf16.msra.mxu0 0
      %2108 = vmatprep.subr.bf16.mxu0 0
      %2109 = vmatpush1.bf16.msra.mxu0 0
      %2110 = vmatprep.subr.bf16.mxu0 0
      %2111 = vmatpush1.bf16.msra.mxu0 0
      %2112 = vmatprep.subr.bf16.mxu0 0
      %2113 = vmatpush1.bf16.msra.mxu0 0
      %2114 = vmatprep.mubr.bf16.mxu0 0
      %2115 = vmatmul.mubr.bf16.gmra.mrb[0].mxu0 %v2077
      %v2116 = vpop.f32.mrb[0].mxu0
      %v2117 = vadd.f32 %v2029, %v2116
      %v2118 = vpop.f32.mrb[0].mxu0
      %v2119 = vadd.f32 %v2033, %v2118
      %v2120 = vpop.f32.mrb[0].mxu0
      %v2121 = vadd.f32 %v2029, %v2120
      %v2122 = vpop.f32.mrb[0].mxu0
      %v2123 = vadd.f32 %v2033, %v2122
      %2124 = vmatprep.mubr.bf16.mxu0 0
      %2125 = vmatmul.mubr.bf16.gmra.mrb[0].mxu0 %v2080
      %v2126 = vpop.f32.mrb[0].mxu0
      %v2127 = vadd.f32 %v2029, %v2126
      %v2128 = vpop.f32.mrb[0].mxu0
      %v2129 = vadd.f32 %v2033, %v2128
      %v2130 = vpop.f32.mrb[0].mxu0
      %v2131 = vpop.f32.mrb[0].mxu0
      %2132 = vdwg.mxu0
      %v2133 = vmul.f32 %v2117, 0.5
      %v2134 = vmul.f32 %v2119, 0.5
      %v2135 = vmul.f32 %v2121, 0.5
      %v2136 = vmul.f32 %v2123, 0.5
      %v2137 = vmul.f32 %v2127, 0.5
      %v2138 = vmul.f32 %v2129, 0.5
      %v2139 = vmul.f32 %v2117, 0.70710677
      %v2140 = vmul.f32 %v2119, 0.70710677
      %v2141 = vmul.f32 %v2121, 0.70710677
      %v2142 = vmul.f32 %v2123, 0.70710677
      %v2143 = vmul.f32 %v2127, 0.70710677
      %v2144 = vmul.f32 %v2129, 0.70710677
      %v2145 = vand.u32 2147483647, %v2139
      %v2146 = vand.u32 2147483647, %v2140
      %v2147 = vand.u32 2147483647, %v2141
      %v2148 = vand.u32 2147483647, %v2142
      %v2149 = vand.u32 2147483647, %v2143
      %v2150 = vand.u32 2147483647, %v2144
      %v2151 = vmul.f32 %v2145, 0.3275911
      %v2152 = vmul.f32 %v2146, 0.3275911
      %v2153 = vmul.f32 %v2147, 0.3275911
      %v2154 = vmul.f32 %v2148, 0.3275911
      %v2155 = vmul.f32 %v2149, 0.3275911
      %v2156 = vmul.f32 %v2150, 0.3275911
      %v2157 = vadd.f32 %v2151, 1.0
      %v2158 = vadd.f32 %v2152, 1.0
      %v2159 = vadd.f32 %v2153, 1.0
      %v2160 = vadd.f32 %v2154, 1.0
      %v2161 = vadd.f32 %v2155, 1.0
      %v2162 = vadd.f32 %v2156, 1.0
      %v2163 = vrcp.pop %v2157
      %v2164 = vmul.f32 1.0, %v2163
      %v2165 = vrcp.pop %v2158
      %v2166 = vmul.f32 1.0, %v2165
      %v2167 = vrcp.pop %v2159
      %v2168 = vmul.f32 1.0, %v2167
      %v2169 = vrcp.pop %v2160
      %v2170 = vmul.f32 1.0, %v2169
      %v2171 = vrcp.pop %v2161
      %v2172 = vmul.f32 1.0, %v2171
      %v2173 = vrcp.pop %v2162
      %v2174 = vmul.f32 1.0, %v2173
      %v2175 = vmul.f32 %v2164, 1.0614054
      %v2176 = vmul.f32 %v2166, 1.0614054
      %v2177 = vmul.f32 %v2168, 1.0614054
      %v2178 = vmul.f32 %v2170, 1.0614054
      %v2179 = vmul.f32 %v2172, 1.0614054
      %v2180 = vmul.f32 %v2174, 1.0614054
      %v2181 = vadd.f32 %v2175, -1.4531521
      %v2182 = vadd.f32 %v2176, -1.4531521
      %v2183 = vadd.f32 %v2177, -1.4531521
      %v2184 = vadd.f32 %v2178, -1.4531521
      %v2185 = vadd.f32 %v2179, -1.4531521
      %v2186 = vadd.f32 %v2180, -1.4531521
      %v2187 = vmul.f32 %v2181, %v2164
      %v2188 = vmul.f32 %v2182, %v2166
      %v2189 = vmul.f32 %v2183, %v2168
      %v2190 = vmul.f32 %v2184, %v2170
      %v2191 = vmul.f32 %v2185, %v2172
      %v2192 = vmul.f32 %v2186, %v2174
      %v2193 = vadd.f32 %v2187, 1.4214138
      %v2194 = vadd.f32 %v2188, 1.4214138
      %v2195 = vadd.f32 %v2189, 1.4214138
      %v2196 = vadd.f32 %v2190, 1.4214138
      %v2197 = vadd.f32 %v2191, 1.4214138
      %v2198 = vadd.f32 %v2192, 1.4214138
      %v2199 = vmul.f32 %v2193, %v2164
      %v2200 = vmul.f32 %v2194, %v2166
      %v2201 = vmul.f32 %v2195, %v2168
      %v2202 = vmul.f32 %v2196, %v2170
      %v2203 = vmul.f32 %v2197, %v2172
      %v2204 = vmul.f32 %v2198, %v2174
      %v2205 = vadd.f32 %v2199, -0.28449672
      %v2206 = vadd.f32 %v2200, -0.28449672
      %v2207 = vadd.f32 %v2201, -0.28449672
      %v2208 = vadd.f32 %v2202, -0.28449672
      %v2209 = vadd.f32 %v2203, -0.28449672
      %v2210 = vadd.f32 %v2204, -0.28449672
      %v2211 = vmul.f32 %v2205, %v2164
      %v2212 = vmul.f32 %v2206, %v2166
      %v2213 = vmul.f32 %v2207, %v2168
      %v2214 = vmul.f32 %v2208, %v2170
      %v2215 = vmul.f32 %v2209, %v2172
      %v2216 = vmul.f32 %v2210, %v2174
      %v2217 = vadd.f32 %v2211, 0.2548296
      %v2218 = vadd.f32 %v2212, 0.2548296
      %v2219 = vadd.f32 %v2213, 0.2548296
      %v2220 = vadd.f32 %v2214, 0.2548296
      %v2221 = vadd.f32 %v2215, 0.2548296
      %v2222 = vadd.f32 %v2216, 0.2548296
      %v2223 = vmul.f32 %v2217, %v2164
      %v2224 = vmul.f32 %v2218, %v2166
      %v2225 = vmul.f32 %v2219, %v2168
      %v2226 = vmul.f32 %v2220, %v2170
      %v2227 = vmul.f32 %v2221, %v2172
      %v2228 = vmul.f32 %v2222, %v2174
      %v2229 = vsub.f32 0.0, %v2145
      %v2230 = vsub.f32 0.0, %v2146
      %v2231 = vsub.f32 0.0, %v2147
      %v2232 = vsub.f32 0.0, %v2148
      %v2233 = vsub.f32 0.0, %v2149
      %v2234 = vsub.f32 0.0, %v2150
      %v2235 = vmul.f32 %v2229, %v2145
      %v2236 = vmul.f32 %v2230, %v2146
      %v2237 = vmul.f32 %v2231, %v2147
      %v2238 = vmul.f32 %v2232, %v2148
      %v2239 = vmul.f32 %v2233, %v2149
      %v2240 = vmul.f32 %v2234, %v2150
      %v2241 = vmul.f32 %v2235, 1.442695
      %v2242 = vpow.pop %v2241
      %v2243 = vmul.f32 %v2236, 1.442695
      %v2244 = vpow.pop %v2243
      %v2245 = vmul.f32 %v2237, 1.442695
      %v2246 = vpow.pop %v2245
      %v2247 = vmul.f32 %v2238, 1.442695
      %v2248 = vpow.pop %v2247
      %v2249 = vmul.f32 %v2239, 1.442695
      %v2250 = vpow.pop %v2249
      %v2251 = vmul.f32 %v2240, 1.442695
      %v2252 = vpow.pop %v2251
      %v2253 = vmul.f32 %v2223, %v2242
      %v2254 = vmul.f32 %v2224, %v2244
      %v2255 = vmul.f32 %v2225, %v2246
      %v2256 = vmul.f32 %v2226, %v2248
      %v2257 = vmul.f32 %v2227, %v2250
      %v2258 = vmul.f32 %v2228, %v2252
      %v2259 = vsub.f32 1.0, %v2253
      %v2260 = vsub.f32 1.0, %v2254
      %v2261 = vsub.f32 1.0, %v2255
      %v2262 = vsub.f32 1.0, %v2256
      %v2263 = vsub.f32 1.0, %v2257
      %v2264 = vsub.f32 1.0, %v2258
      %vm2265 = vcmp.ge.f32.partialorder %v2139, 0.0
      %vm2266 = vcmp.ge.f32.partialorder %v2140, 0.0
      %vm2267 = vcmp.ge.f32.partialorder %v2141, 0.0
      %vm2268 = vcmp.ge.f32.partialorder %v2142, 0.0
      %vm2269 = vcmp.ge.f32.partialorder %v2143, 0.0
      %vm2270 = vcmp.ge.f32.partialorder %v2144, 0.0
      %v2271 = vsub.f32 0.0, %v2259
      %v2272 = vsub.f32 0.0, %v2260
      %v2273 = vsub.f32 0.0, %v2261
      %v2274 = vsub.f32 0.0, %v2262
      %v2275 = vsub.f32 0.0, %v2263
      %v2276 = vsub.f32 0.0, %v2264
      %v2277 = vsel %vm2265, %v2259, %v2271
      %v2278 = vsel %vm2266, %v2260, %v2272
      %v2279 = vsel %vm2267, %v2261, %v2273
      %v2280 = vsel %vm2268, %v2262, %v2274
      %v2281 = vsel %vm2269, %v2263, %v2275
      %v2282 = vsel %vm2270, %v2264, %v2276
      %v2283 = vadd.f32 %v2277, 1.0
      %v2284 = vadd.f32 %v2278, 1.0
      %v2285 = vadd.f32 %v2279, 1.0
      %v2286 = vadd.f32 %v2280, 1.0
      %v2287 = vadd.f32 %v2281, 1.0
      %v2288 = vadd.f32 %v2282, 1.0
      %v2289 = vmul.f32 %v2133, %v2283
      %v2290 = vmul.f32 %v2134, %v2284
      %v2291 = vmul.f32 %v2135, %v2285
      %v2292 = vmul.f32 %v2136, %v2286
      %v2293 = vmul.f32 %v2137, %v2287
      %v2294 = vmul.f32 %v2138, %v2288
      %v2295 = vpack.c.bf16 %v2291, %v2289
      %v2296 = vpack.c.bf16 %v2292, %v2290
      %v2297 = vpack.c.bf16 %v2293, %v2293
      %v2298 = vpack.c.bf16 %v2294, %v2294
      %v2299 = vld [vmem:[%s13] sm:$0xf]
      %v2300 = vld [vmem:[%s13 + $0x4] sm:$0xf]
      %v2301 = vld [vmem:[%s13 + $0x8] sm:$0xf]
      %v2302 = vld [vmem:[%s13 + $0xc] sm:$0xf]
      %v2303 = vld [vmem:[%s13 + $0x10] sm:$0xf]
      %v2304 = vld [vmem:[%s13 + $0x14] sm:$0xf]
      %v2305 = vld [vmem:[%s13 + $0x18] sm:$0xf]
      %v2306 = vld [vmem:[%s13 + $0x1c] sm:$0xf]
      %v2307 = vld [vmem:[%s13 + $0x20] sm:$0xf]
      %v2308 = vld [vmem:[%s13 + $0x24] sm:$0xf]
      %v2309 = vld [vmem:[%s13 + $0x28] sm:$0xf]
      %v2310 = vld [vmem:[%s13 + $0x2c] sm:$0xf]
      %v2311 = vld [vmem:[%s13 + $0x30] sm:$0xf]
      %v2312 = vld [vmem:[%s13 + $0x34] sm:$0xf]
      %v2313 = vld [vmem:[%s13 + $0x38] sm:$0xf]
      %v2314 = vld [vmem:[%s13 + $0x3c] sm:$0xf]
      %v2315 = vld [vmem:[%s13 + $0x40] sm:$0xf]
      %v2316 = vld [vmem:[%s13 + $0x44] sm:$0xf]
      %v2317 = vld [vmem:[%s13 + $0x48] sm:$0xf]
      %v2318 = vld [vmem:[%s13 + $0x4c] sm:$0xf]
      %v2319 = vld [vmem:[%s13 + $0x50] sm:$0xf]
      %v2320 = vld [vmem:[%s13 + $0x54] sm:$0xf]
      %v2321 = vld [vmem:[%s13 + $0x58] sm:$0xf]
      %v2322 = vld [vmem:[%s13 + $0x5c] sm:$0xf]
      %v2323 = vld [vmem:[%s13 + $0x60] sm:$0xf]
      %v2324 = vld [vmem:[%s13 + $0x64] sm:$0xf]
      %v2325 = vld [vmem:[%s13 + $0x68] sm:$0xf]
      %v2326 = vld [vmem:[%s13 + $0x6c] sm:$0xf]
      %v2327 = vld [vmem:[%s13 + $0x70] sm:$0xf]
      %v2328 = vld [vmem:[%s13 + $0x74] sm:$0xf]
      %v2329 = vld [vmem:[%s13 + $0x78] sm:$0xf]
      %v2330 = vld [vmem:[%s13 + $0x7c] sm:$0xf]
      %v2331 = vld [vmem:[%s14] sm:$0x1]
      %v2333 = vlaneseq
      %v2334 = vshrl.u32 %v2333, 7
      %v2335 = vsub.s32 0, %v2334
      %v2336 = vrot.slane %v2331, %v2335
      %v2370 = vunpack.c.l.b16 %v2299
      %v2371 = vunpack.c.l.b16 %v2300
      %v2372 = vunpack.c.l.b16 %v2301
      %v2373 = vunpack.c.l.b16 %v2302
      %v2374 = vunpack.c.l.b16 %v2303
      %v2375 = vunpack.c.l.b16 %v2304
      %v2376 = vunpack.c.l.b16 %v2305
      %v2377 = vunpack.c.l.b16 %v2306
      %v2378 = vunpack.c.l.b16 %v2307
      %v2379 = vunpack.c.l.b16 %v2308
      %v2380 = vunpack.c.l.b16 %v2309
      %v2381 = vunpack.c.l.b16 %v2310
      %v2382 = vunpack.c.l.b16 %v2311
      %v2383 = vunpack.c.l.b16 %v2312
      %v2384 = vunpack.c.l.b16 %v2313
      %v2385 = vunpack.c.l.b16 %v2314
      %v2386 = vunpack.c.l.b16 %v2315
      %v2387 = vunpack.c.l.b16 %v2316
      %v2388 = vunpack.c.l.b16 %v2317
      %v2389 = vunpack.c.l.b16 %v2318
      %v2390 = vunpack.c.l.b16 %v2319
      %v2391 = vunpack.c.l.b16 %v2320
      %v2392 = vunpack.c.l.b16 %v2321
      %v2393 = vunpack.c.l.b16 %v2322
      %v2394 = vunpack.c.l.b16 %v2323
      %v2395 = vunpack.c.l.b16 %v2324
      %v2396 = vunpack.c.l.b16 %v2325
      %v2397 = vunpack.c.l.b16 %v2326
      %v2398 = vunpack.c.l.b16 %v2327
      %v2399 = vunpack.c.l.b16 %v2328
      %v2400 = vunpack.c.l.b16 %v2329
      %v2401 = vunpack.c.l.b16 %v2330
      %v2402 = vpack.c.b16 %v2371, %v2370
      %v2403 = vpack.c.b16 %v2373, %v2372
      %v2404 = vpack.c.b16 %v2375, %v2374
      %v2405 = vpack.c.b16 %v2377, %v2376
      %v2406 = vpack.c.b16 %v2379, %v2378
      %v2407 = vpack.c.b16 %v2381, %v2380
      %v2408 = vpack.c.b16 %v2383, %v2382
      %v2409 = vpack.c.b16 %v2385, %v2384
      %v2410 = vpack.c.b16 %v2387, %v2386
      %v2411 = vpack.c.b16 %v2389, %v2388
      %v2412 = vpack.c.b16 %v2391, %v2390
      %v2413 = vpack.c.b16 %v2393, %v2392
      %v2414 = vpack.c.b16 %v2395, %v2394
      %v2415 = vpack.c.b16 %v2397, %v2396
      %v2416 = vpack.c.b16 %v2399, %v2398
      %v2417 = vpack.c.b16 %v2401, %v2400
      %2434 = vmatprep.subr.bf16.mxu0 0
      %2435 = vmatpush1.bf16.msra.mxu0 %v2402
      %2436 = vmatprep.subr.bf16.mxu0 0
      %2437 = vmatpush1.bf16.msra.mxu0 %v2403
      %2438 = vmatprep.subr.bf16.mxu0 0
      %2439 = vmatpush1.bf16.msra.mxu0 %v2404
      %2440 = vmatprep.subr.bf16.mxu0 0
      %2441 = vmatpush1.bf16.msra.mxu0 %v2405
      %2442 = vmatprep.subr.bf16.mxu0 0
      %2443 = vmatpush1.bf16.msra.mxu0 %v2406
      %2444 = vmatprep.subr.bf16.mxu0 0
      %2445 = vmatpush1.bf16.msra.mxu0 %v2407
      %2446 = vmatprep.subr.bf16.mxu0 0
      %2447 = vmatpush1.bf16.msra.mxu0 %v2408
      %2448 = vmatprep.subr.bf16.mxu0 0
      %2449 = vmatpush1.bf16.msra.mxu0 %v2409
      %2450 = vmatprep.subr.bf16.mxu0 0
      %2451 = vmatpush1.bf16.msra.mxu0 %v2410
      %2452 = vmatprep.subr.bf16.mxu0 0
      %2453 = vmatpush1.bf16.msra.mxu0 %v2411
      %2454 = vmatprep.subr.bf16.mxu0 0
      %2455 = vmatpush1.bf16.msra.mxu0 %v2412
      %2456 = vmatprep.subr.bf16.mxu0 0
      %2457 = vmatpush1.bf16.msra.mxu0 %v2413
      %2458 = vmatprep.subr.bf16.mxu0 0
      %2459 = vmatpush1.bf16.msra.mxu0 %v2414
      %2460 = vmatprep.subr.bf16.mxu0 0
      %2461 = vmatpush1.bf16.msra.mxu0 %v2415
      %2462 = vmatprep.subr.bf16.mxu0 0
      %2463 = vmatpush1.bf16.msra.mxu0 %v2416
      %2464 = vmatprep.subr.bf16.mxu0 0
      %2465 = vmatpush1.bf16.msra.mxu0 %v2417
      %2466 = vmatprep.mubr.bf16.mxu0 %v2296
      %2467 = vmatmul.mubr.bf16.gmra.mrb[0].mxu0 %v2295
      %v2468 = vpop.f32.mrb[0].mxu0
      %v2469 = vadd.f32 %v2336, %v2468
      %v2470 = vpop.f32.mrb[0].mxu0
      %v2471 = vpop.f32.mrb[0].mxu0
      %v2472 = vadd.f32 %v2336, %v2471
      %v2473 = vpop.f32.mrb[0].mxu0
      %2474 = vmatprep.mubr.bf16.mxu0 %v2298
      %2475 = vmatmul.mubr.bf16.gmra.mrb[0].mxu0 %v2297
      %v2476 = vpop.f32.mrb[0].mxu0
      %v2477 = vadd.f32 %v2336, %v2476
      %v2478 = vpop.f32.mrb[0].mxu0
      %v2479 = vpop.f32.mrb[0].mxu0
      %v2480 = vpop.f32.mrb[0].mxu0
      %2481 = vdwg.mxu0
      %v2482 = vld [vmem:[%s15] sm:$0x1]
      %v2484 = vlaneseq
      %v2485 = vshrl.u32 %v2484, 7
      %v2486 = vsub.s32 0, %v2485
      %v2487 = vrot.slane %v2482, %v2486
      %v2489 = vmul.f32 %v2487, %v2469
      %v2490 = vmul.f32 %v2487, %v2472
      %v2491 = vmul.f32 %v2487, %v2477
      %v2492 = vadd.f32 %v1952, %v2489
      %v2493 = vadd.f32 %v1953, %v2490
      %v2494 = vadd.f32 %v1954, %v2491
      %2495 = vst.msk [vmem:[%s521] sm:$0xff] %vm528, %v2492
      %2496 = vst.msk [vmem:[%s521 + $0x8] sm:$0xff] %vm528, %v2493
      %2497 = vst.msk [vmem:[%s521 + $0x10] sm:$0xff] %vm528, %v2494
      %p2498 = scmp.lt.s32.totalorder %s27, 1
      %s2499 = scalar_select %p2498, %s27, 1
      %s2500 = smul.addr %s2499, 3
      %s2501 = smul.addr %s2500, 8
      %s2502 = scalar_lea.vmem %s16, %s2501
      // Predicated region
      $region85: #{forward.5} parent=83 // pred_check
        %p2503 = pneg %p386
      $region86: #{forward.5} parent=83 // pred_check_branch
        %2505 = sbr.rel (%p2503) target = $region88
      $region87: #{forward.5} parent=83 // pred_region
        _
      $region88: #{forward.5} parent=83 // pred_fallthru
        _
    $region84: #{forward.5} parent=5 // pred_fallthru
      _
    %p2506 = scmp.le.s32.totalorder 2, %s22
    // Predicated region
    $region89: #{forward.5} parent=5 // pred_check
      %p2507 = pneg %p2506
    $region90: #{forward.5} parent=5 // pred_check_branch
      %2509 = sbr.rel (%p2507) target = $region92
    $region91: #{forward.5} parent=5 // pred_region
      %s2510 = ssub.s32 %s22, 2
      // Predicated region
      $region93: #{forward.5} parent=91 // pred_check
        %p2511 = pneg %p392
      $region94: #{forward.5} parent=91 // pred_check_branch
        %2513 = sbr.rel (%p2511) target = $region96
      $region95: #{forward.5} parent=91 // pred_region
        %p2514 = scmp.lt.s32.totalorder %s28, 1
        %s2515 = scalar_select %p2514, %s28, 1
        %s2516 = smul.addr %s2515, 3
        %s2517 = smul.addr %s2516, 8
        %s2518 = scalar_lea.vmem %s16, %s2517
      $region96: #{forward.5} parent=91 // pred_fallthru
        _
    $region92: #{forward.5} parent=5 // pred_fallthru
      _
  $region6: #{forward.5} parent=0 // loop_footer
    %s26 = sadd.s32 1, %s22
  $region7: #{forward.5} parent=0 // loop_footer_branch
    %21 = sbr.rel target = $region3
  $region8: #{forward.5} parent=0 // loop_exit
    _

// kernel: forward.7
$region0: #{forward.7}
  #allocation0 [shape = 'u32[]', space=smem, size = 0x4, offset = 0x4, fixed_abs, tag = 'smem constant byte address 0x4 - core index']
  #allocation1 [shape = 'u32[144,128]{1,0:T(1,128)}', space=vmem, size = 0x12000, scoped, tag = 'internal scratch']
  %s0 = inlined_call_operand.vmem [shape: f32[2,16,64], index: 0, kind: input, shape index: {}]
  %s1 = inlined_call_operand.vmem [shape: f32[1,64], index: 1, kind: input, shape index: {}]
  %s2 = inlined_call_operand.vmem [shape: f32[1,64], index: 2, kind: input, shape index: {}]
  %s3 = inlined_call_operand.vmem [shape: f32[9,16,16], index: 3, kind: input, shape index: {}]
  %s4 = inlined_call_operand.vmem [shape: bf16[576,256], index: 4, kind: input, shape index: {}]
  %s5 = inlined_call_operand.vmem [shape: f32[1,256], index: 5, kind: input, shape index: {}]
  %s6 = inlined_call_operand.vmem [shape: f32[1,256], index: 6, kind: input, shape index: {}]
  %s7 = inlined_call_operand.vmem [shape: bf16[2304,128], index: 7, kind: input, shape index: {}]
  %s8 = inlined_call_operand.vmem [shape: f32[1,128], index: 8, kind: input, shape index: {}]
  %s9 = inlined_call_operand.vmem [shape: f32[1,128], index: 9, kind: input, shape index: {}]
  %s10 = inlined_call_operand.vmem [shape: bf16[1152,64], index: 10, kind: input, shape index: {}]
  %s11 = inlined_call_operand.vmem [shape: f32[1,64], index: 11, kind: input, shape index: {}]
  %s12 = inlined_call_operand.vmem [shape: f32[1,64], index: 12, kind: input, shape index: {}]
  %s13 = inlined_call_operand.vmem [shape: bf16[2,64], index: 13, kind: input, shape index: {}]
  %s14 = inlined_call_operand.vmem [shape: f32[2,1], index: 14, kind: input, shape index: {}]
  %s15 = inlined_call_operand.vmem [shape: f32[16,1024], index: 15, kind: input, shape index: {}]
  %s16 = inlined_call_operand.vmem [shape: f32[2,2,1024], index: 16, kind: output, shape index: {}]
  %s17 = sld [smem:[#allocation0]]
  $region97: #{forward.7} parent=0
    _
  %s19 = ssub.s32 1, %s17
  %s20 = scalar_select 0, %s19, %s17
  loop: start=0, step=1, limit=4
  $region2: #{forward.7} parent=0 // loop_pre_header
    _
  $region3: #{forward.7} parent=0 // loop_header
    %s22 = sphi 0, %s26
    %p23 = scmp.ge.s32.totalorder %s22, 4
    %s32 = sphi 0, %s34
    %s35 = sphi 0, %s32
    %s36 = sphi 0, %s35
    %s52 = sphi 0, %s36
    %s56 = sphi 0, %s56
    %s58 = sphi 0, %s56
    %s59 = sphi 0, %s58
    %s73 = sphi 0, %s59
    %s77 = sphi 0, %s77
    %s79 = sphi 0, %s77
    %s80 = sphi 0, %s79
    %s94 = sphi 0, %s80
    %s98 = sphi 0, %s98
    %s100 = sphi 0, %s98
    %s101 = sphi 0, %s100
    %s115 = sphi 0, %s101
    %s119 = sphi 0, %s119
    %s121 = sphi 0, %s119
    %s122 = sphi 0, %s121
    %s136 = sphi 0, %s122
    %s140 = sphi 0, %s140
    %s142 = sphi 0, %s140
    %s143 = sphi 0, %s142
    %s157 = sphi 0, %s143
    %s161 = sphi 0, %s161
    %s163 = sphi 0, %s161
    %s164 = sphi 0, %s163
    %s178 = sphi 0, %s164
    %s182 = sphi 0, %s182
    %s184 = sphi 0, %s182
    %s185 = sphi 0, %s184
    %s199 = sphi 0, %s185
    %s203 = sphi 0, %s203
    %s205 = sphi 0, %s203
    %s206 = sphi 0, %s205
    %s220 = sphi 0, %s206
    %s224 = sphi 0, %s224
    %s226 = sphi 0, %s224
    %s227 = sphi 0, %s226
    %s241 = sphi 0, %s227
    %s245 = sphi 0, %s245
    %s247 = sphi 0, %s245
    %s248 = sphi 0, %s247
    %s262 = sphi 0, %s248
    %s266 = sphi 0, %s266
    %s268 = sphi 0, %s266
    %s269 = sphi 0, %s268
    %s283 = sphi 0, %s269
    %s287 = sphi 0, %s287
    %s289 = sphi 0, %s287
    %s290 = sphi 0, %s289
    %s304 = sphi 0, %s290
    %s308 = sphi 0, %s308
    %s310 = sphi 0, %s308
    %s311 = sphi 0, %s310
    %s325 = sphi 0, %s311
    %s329 = sphi 0, %s329
    %s331 = sphi 0, %s329
    %s332 = sphi 0, %s331
    %s346 = sphi 0, %s332
    %s350 = sphi 0, %s350
    %s352 = sphi 0, %s350
    %s353 = sphi 0, %s352
    %s367 = sphi 0, %s353
    %s373 = sphi 0, %s375
    %s376 = sphi 0, %s373
    %s377 = sphi 0, %s376
    %s393 = sphi 0, %s377
  $region4: #{forward.7} parent=0 // loop_header_branch
    %25 = sbr.rel (%p23) target = $region8
  $region5: #{forward.7} parent=0 // loop_body
    %s27 = ssub.s32 %s22, 1
    %s28 = ssub.s32 %s22, 2
    %s29 = sadd.s32 %s22, 1
    %s30 = ssub.s32 %s22, %s29
    %p31 = scmp.eq.s32.totalorder %s30, 0
    %s33 = sadd.s32 %s32, 1
    %s34 = scalar_select %p31, %s32, %s33
    %p37 = pneg %p31
    %p38 = scmp.eq.s32.totalorder %s22, 1
    %p39 = por %p37, %p38
    %p40 = scmp.ne.s32.totalorder %s32, %s35
    %p41 = scmp.eq.s32.totalorder %s22, 0
    %p42 = por %p40, %p41
    %p43 = scmp.ne.s32.totalorder %s32, %s35
    %p44 = scmp.eq.s32.totalorder %s27, 1
    %p45 = por %p43, %p44
    %p46 = scmp.ne.s32.totalorder %s35, %s36
    %p47 = scmp.eq.s32.totalorder %s27, 0
    %p48 = por %p46, %p47
    %p49 = scmp.ne.s32.totalorder %s35, %s36
    %p50 = scmp.eq.s32.totalorder %s28, 1
    %p51 = por %p49, %p50
    %p53 = scmp.ne.s32.totalorder %s36, %s52
    %p54 = scmp.eq.s32.totalorder %s28, 0
    %p55 = por %p53, %p54
    %s57 = sadd.s32 %s56, 1
    %p60 = scmp.eq.s32.totalorder %s22, 1
    %p61 = scmp.ne.s32.totalorder %s56, %s58
    %p62 = scmp.eq.s32.totalorder %s22, 0
    %p63 = por %p61, %p62
    %p64 = scmp.ne.s32.totalorder %s56, %s58
    %p65 = scmp.eq.s32.totalorder %s27, 1
    %p66 = por %p64, %p65
    %p67 = scmp.ne.s32.totalorder %s58, %s59
    %p68 = scmp.eq.s32.totalorder %s27, 0
    %p69 = por %p67, %p68
    %p70 = scmp.ne.s32.totalorder %s58, %s59
    %p71 = scmp.eq.s32.totalorder %s28, 1
    %p72 = por %p70, %p71
    %p74 = scmp.ne.s32.totalorder %s59, %s73
    %p75 = scmp.eq.s32.totalorder %s28, 0
    %p76 = por %p74, %p75
    %s78 = sadd.s32 %s77, 1
    %p81 = scmp.eq.s32.totalorder %s22, 1
    %p82 = scmp.ne.s32.totalorder %s77, %s79
    %p83 = scmp.eq.s32.totalorder %s22, 0
    %p84 = por %p82, %p83
    %p85 = scmp.ne.s32.totalorder %s77, %s79
    %p86 = scmp.eq.s32.totalorder %s27, 1
    %p87 = por %p85, %p86
    %p88 = scmp.ne.s32.totalorder %s79, %s80
    %p89 = scmp.eq.s32.totalorder %s27, 0
    %p90 = por %p88, %p89
    %p91 = scmp.ne.s32.totalorder %s79, %s80
    %p92 = scmp.eq.s32.totalorder %s28, 1
    %p93 = por %p91, %p92
    %p95 = scmp.ne.s32.totalorder %s80, %s94
    %p96 = scmp.eq.s32.totalorder %s28, 0
    %p97 = por %p95, %p96
    %s99 = sadd.s32 %s98, 1
    %p102 = scmp.eq.s32.totalorder %s22, 1
    %p103 = scmp.ne.s32.totalorder %s98, %s100
    %p104 = scmp.eq.s32.totalorder %s22, 0
    %p105 = por %p103, %p104
    %p106 = scmp.ne.s32.totalorder %s98, %s100
    %p107 = scmp.eq.s32.totalorder %s27, 1
    %p108 = por %p106, %p107
    %p109 = scmp.ne.s32.totalorder %s100, %s101
    %p110 = scmp.eq.s32.totalorder %s27, 0
    %p111 = por %p109, %p110
    %p112 = scmp.ne.s32.totalorder %s100, %s101
    %p113 = scmp.eq.s32.totalorder %s28, 1
    %p114 = por %p112, %p113
    %p116 = scmp.ne.s32.totalorder %s101, %s115
    %p117 = scmp.eq.s32.totalorder %s28, 0
    %p118 = por %p116, %p117
    %s120 = sadd.s32 %s119, 1
    %p123 = scmp.eq.s32.totalorder %s22, 1
    %p124 = scmp.ne.s32.totalorder %s119, %s121
    %p125 = scmp.eq.s32.totalorder %s22, 0
    %p126 = por %p124, %p125
    %p127 = scmp.ne.s32.totalorder %s119, %s121
    %p128 = scmp.eq.s32.totalorder %s27, 1
    %p129 = por %p127, %p128
    %p130 = scmp.ne.s32.totalorder %s121, %s122
    %p131 = scmp.eq.s32.totalorder %s27, 0
    %p132 = por %p130, %p131
    %p133 = scmp.ne.s32.totalorder %s121, %s122
    %p134 = scmp.eq.s32.totalorder %s28, 1
    %p135 = por %p133, %p134
    %p137 = scmp.ne.s32.totalorder %s122, %s136
    %p138 = scmp.eq.s32.totalorder %s28, 0
    %p139 = por %p137, %p138
    %s141 = sadd.s32 %s140, 1
    %p144 = scmp.eq.s32.totalorder %s22, 1
    %p145 = scmp.ne.s32.totalorder %s140, %s142
    %p146 = scmp.eq.s32.totalorder %s22, 0
    %p147 = por %p145, %p146
    %p148 = scmp.ne.s32.totalorder %s140, %s142
    %p149 = scmp.eq.s32.totalorder %s27, 1
    %p150 = por %p148, %p149
    %p151 = scmp.ne.s32.totalorder %s142, %s143
    %p152 = scmp.eq.s32.totalorder %s27, 0
    %p153 = por %p151, %p152
    %p154 = scmp.ne.s32.totalorder %s142, %s143
    %p155 = scmp.eq.s32.totalorder %s28, 1
    %p156 = por %p154, %p155
    %p158 = scmp.ne.s32.totalorder %s143, %s157
    %p159 = scmp.eq.s32.totalorder %s28, 0
    %p160 = por %p158, %p159
    %s162 = sadd.s32 %s161, 1
    %p165 = scmp.eq.s32.totalorder %s22, 1
    %p166 = scmp.ne.s32.totalorder %s161, %s163
    %p167 = scmp.eq.s32.totalorder %s22, 0
    %p168 = por %p166, %p167
    %p169 = scmp.ne.s32.totalorder %s161, %s163
    %p170 = scmp.eq.s32.totalorder %s27, 1
    %p171 = por %p169, %p170
    %p172 = scmp.ne.s32.totalorder %s163, %s164
    %p173 = scmp.eq.s32.totalorder %s27, 0
    %p174 = por %p172, %p173
    %p175 = scmp.ne.s32.totalorder %s163, %s164
    %p176 = scmp.eq.s32.totalorder %s28, 1
    %p177 = por %p175, %p176
    %p179 = scmp.ne.s32.totalorder %s164, %s178
    %p180 = scmp.eq.s32.totalorder %s28, 0
    %p181 = por %p179, %p180
    %s183 = sadd.s32 %s182, 1
    %p186 = scmp.eq.s32.totalorder %s22, 1
    %p187 = scmp.ne.s32.totalorder %s182, %s184
    %p188 = scmp.eq.s32.totalorder %s22, 0
    %p189 = por %p187, %p188
    %p190 = scmp.ne.s32.totalorder %s182, %s184
    %p191 = scmp.eq.s32.totalorder %s27, 1
    %p192 = por %p190, %p191
    %p193 = scmp.ne.s32.totalorder %s184, %s185
    %p194 = scmp.eq.s32.totalorder %s27, 0
    %p195 = por %p193, %p194
    %p196 = scmp.ne.s32.totalorder %s184, %s185
    %p197 = scmp.eq.s32.totalorder %s28, 1
    %p198 = por %p196, %p197
    %p200 = scmp.ne.s32.totalorder %s185, %s199
    %p201 = scmp.eq.s32.totalorder %s28, 0
    %p202 = por %p200, %p201
    %s204 = sadd.s32 %s203, 1
    %p207 = scmp.eq.s32.totalorder %s22, 1
    %p208 = scmp.ne.s32.totalorder %s203, %s205
    %p209 = scmp.eq.s32.totalorder %s22, 0
    %p210 = por %p208, %p209
    %p211 = scmp.ne.s32.totalorder %s203, %s205
    %p212 = scmp.eq.s32.totalorder %s27, 1
    %p213 = por %p211, %p212
    %p214 = scmp.ne.s32.totalorder %s205, %s206
    %p215 = scmp.eq.s32.totalorder %s27, 0
    %p216 = por %p214, %p215
    %p217 = scmp.ne.s32.totalorder %s205, %s206
    %p218 = scmp.eq.s32.totalorder %s28, 1
    %p219 = por %p217, %p218
    %p221 = scmp.ne.s32.totalorder %s206, %s220
    %p222 = scmp.eq.s32.totalorder %s28, 0
    %p223 = por %p221, %p222
    %s225 = sadd.s32 %s224, 1
    %p228 = scmp.eq.s32.totalorder %s22, 1
    %p229 = scmp.ne.s32.totalorder %s224, %s226
    %p230 = scmp.eq.s32.totalorder %s22, 0
    %p231 = por %p229, %p230
    %p232 = scmp.ne.s32.totalorder %s224, %s226
    %p233 = scmp.eq.s32.totalorder %s27, 1
    %p234 = por %p232, %p233
    %p235 = scmp.ne.s32.totalorder %s226, %s227
    %p236 = scmp.eq.s32.totalorder %s27, 0
    %p237 = por %p235, %p236
    %p238 = scmp.ne.s32.totalorder %s226, %s227
    %p239 = scmp.eq.s32.totalorder %s28, 1
    %p240 = por %p238, %p239
    %p242 = scmp.ne.s32.totalorder %s227, %s241
    %p243 = scmp.eq.s32.totalorder %s28, 0
    %p244 = por %p242, %p243
    %s246 = sadd.s32 %s245, 1
    %p249 = scmp.eq.s32.totalorder %s22, 1
    %p250 = scmp.ne.s32.totalorder %s245, %s247
    %p251 = scmp.eq.s32.totalorder %s22, 0
    %p252 = por %p250, %p251
    %p253 = scmp.ne.s32.totalorder %s245, %s247
    %p254 = scmp.eq.s32.totalorder %s27, 1
    %p255 = por %p253, %p254
    %p256 = scmp.ne.s32.totalorder %s247, %s248
    %p257 = scmp.eq.s32.totalorder %s27, 0
    %p258 = por %p256, %p257
    %p259 = scmp.ne.s32.totalorder %s247, %s248
    %p260 = scmp.eq.s32.totalorder %s28, 1
    %p261 = por %p259, %p260
    %p263 = scmp.ne.s32.totalorder %s248, %s262
    %p264 = scmp.eq.s32.totalorder %s28, 0
    %p265 = por %p263, %p264
    %s267 = sadd.s32 %s266, 1
    %p270 = scmp.eq.s32.totalorder %s22, 1
    %p271 = scmp.ne.s32.totalorder %s266, %s268
    %p272 = scmp.eq.s32.totalorder %s22, 0
    %p273 = por %p271, %p272
    %p274 = scmp.ne.s32.totalorder %s266, %s268
    %p275 = scmp.eq.s32.totalorder %s27, 1
    %p276 = por %p274, %p275
    %p277 = scmp.ne.s32.totalorder %s268, %s269
    %p278 = scmp.eq.s32.totalorder %s27, 0
    %p279 = por %p277, %p278
    %p280 = scmp.ne.s32.totalorder %s268, %s269
    %p281 = scmp.eq.s32.totalorder %s28, 1
    %p282 = por %p280, %p281
    %p284 = scmp.ne.s32.totalorder %s269, %s283
    %p285 = scmp.eq.s32.totalorder %s28, 0
    %p286 = por %p284, %p285
    %s288 = sadd.s32 %s287, 1
    %p291 = scmp.eq.s32.totalorder %s22, 1
    %p292 = scmp.ne.s32.totalorder %s287, %s289
    %p293 = scmp.eq.s32.totalorder %s22, 0
    %p294 = por %p292, %p293
    %p295 = scmp.ne.s32.totalorder %s287, %s289
    %p296 = scmp.eq.s32.totalorder %s27, 1
    %p297 = por %p295, %p296
    %p298 = scmp.ne.s32.totalorder %s289, %s290
    %p299 = scmp.eq.s32.totalorder %s27, 0
    %p300 = por %p298, %p299
    %p301 = scmp.ne.s32.totalorder %s289, %s290
    %p302 = scmp.eq.s32.totalorder %s28, 1
    %p303 = por %p301, %p302
    %p305 = scmp.ne.s32.totalorder %s290, %s304
    %p306 = scmp.eq.s32.totalorder %s28, 0
    %p307 = por %p305, %p306
    %s309 = sadd.s32 %s308, 1
    %p312 = scmp.eq.s32.totalorder %s22, 1
    %p313 = scmp.ne.s32.totalorder %s308, %s310
    %p314 = scmp.eq.s32.totalorder %s22, 0
    %p315 = por %p313, %p314
    %p316 = scmp.ne.s32.totalorder %s308, %s310
    %p317 = scmp.eq.s32.totalorder %s27, 1
    %p318 = por %p316, %p317
    %p319 = scmp.ne.s32.totalorder %s310, %s311
    %p320 = scmp.eq.s32.totalorder %s27, 0
    %p321 = por %p319, %p320
    %p322 = scmp.ne.s32.totalorder %s310, %s311
    %p323 = scmp.eq.s32.totalorder %s28, 1
    %p324 = por %p322, %p323
    %p326 = scmp.ne.s32.totalorder %s311, %s325
    %p327 = scmp.eq.s32.totalorder %s28, 0
    %p328 = por %p326, %p327
    %s330 = sadd.s32 %s329, 1
    %p333 = scmp.eq.s32.totalorder %s22, 1
    %p334 = scmp.ne.s32.totalorder %s329, %s331
    %p335 = scmp.eq.s32.totalorder %s22, 0
    %p336 = por %p334, %p335
    %p337 = scmp.ne.s32.totalorder %s329, %s331
    %p338 = scmp.eq.s32.totalorder %s27, 1
    %p339 = por %p337, %p338
    %p340 = scmp.ne.s32.totalorder %s331, %s332
    %p341 = scmp.eq.s32.totalorder %s27, 0
    %p342 = por %p340, %p341
    %p343 = scmp.ne.s32.totalorder %s331, %s332
    %p344 = scmp.eq.s32.totalorder %s28, 1
    %p345 = por %p343, %p344
    %p347 = scmp.ne.s32.totalorder %s332, %s346
    %p348 = scmp.eq.s32.totalorder %s28, 0
    %p349 = por %p347, %p348
    %s351 = sadd.s32 %s350, 1
    %p354 = scmp.eq.s32.totalorder %s22, 1
    %p355 = scmp.ne.s32.totalorder %s350, %s352
    %p356 = scmp.eq.s32.totalorder %s22, 0
    %p357 = por %p355, %p356
    %p358 = scmp.ne.s32.totalorder %s350, %s352
    %p359 = scmp.eq.s32.totalorder %s27, 1
    %p360 = por %p358, %p359
    %p361 = scmp.ne.s32.totalorder %s352, %s353
    %p362 = scmp.eq.s32.totalorder %s27, 0
    %p363 = por %p361, %p362
    %p364 = scmp.ne.s32.totalorder %s352, %s353
    %p365 = scmp.eq.s32.totalorder %s28, 1
    %p366 = por %p364, %p365
    %p368 = scmp.ne.s32.totalorder %s353, %s367
    %p369 = scmp.eq.s32.totalorder %s28, 0
    %p370 = por %p368, %p369
    %s371 = ssub.s32 %s22, %s29
    %p372 = scmp.eq.s32.totalorder %s371, 0
    %s374 = sadd.s32 %s373, 1
    %s375 = scalar_select %p372, %s373, %s374
    %p378 = pneg %p372
    %p379 = scmp.eq.s32.totalorder %s22, 1
    %p380 = por %p378, %p379
    %p381 = scmp.ne.s32.totalorder %s373, %s376
    %p382 = scmp.eq.s32.totalorder %s22, 0
    %p383 = por %p381, %p382
    %p384 = scmp.ne.s32.totalorder %s373, %s376
    %p385 = scmp.eq.s32.totalorder %s27, 1
    %p386 = por %p384, %p385
    %p387 = scmp.ne.s32.totalorder %s376, %s377
    %p388 = scmp.eq.s32.totalorder %s27, 0
    %p389 = por %p387, %p388
    %p390 = scmp.ne.s32.totalorder %s376, %s377
    %p391 = scmp.eq.s32.totalorder %s28, 1
    %p392 = por %p390, %p391
    %p394 = scmp.ne.s32.totalorder %s377, %s393
    %p395 = scmp.eq.s32.totalorder %s28, 0
    %p396 = por %p394, %p395
    %p397 = scmp.le.s32.totalorder 1, %s22
    %p398 = scmp.lt.s32.totalorder %s22, 3
    %p399 = pnand %p397, %p398
    %p400 = pneg %p399
    // Predicated region
    $region9: #{forward.7} parent=5 // pred_check
      _
    $region10: #{forward.7} parent=5 // pred_check_branch
      %402 = sbr.rel (%p399) target = $region12
    $region11: #{forward.7} parent=5 // pred_region
      %s403 = ssub.s32 %s22, 1
      // Predicated region
      $region13: #{forward.7} parent=11 // pred_check
        %p404 = pneg %p69
      $region14: #{forward.7} parent=11 // pred_check_branch
        %406 = sbr.rel (%p404) target = $region16
      $region15: #{forward.7} parent=11 // pred_region
        _
      $region16: #{forward.7} parent=11 // pred_fallthru
        _
      // Predicated region
      $region17: #{forward.7} parent=11 // pred_check
        %p407 = pneg %p90
      $region18: #{forward.7} parent=11 // pred_check_branch
        %409 = sbr.rel (%p407) target = $region20
      $region19: #{forward.7} parent=11 // pred_region
        _
      $region20: #{forward.7} parent=11 // pred_fallthru
        _
      // Predicated region
      $region21: #{forward.7} parent=11 // pred_check
        %p410 = pneg %p111
      $region22: #{forward.7} parent=11 // pred_check_branch
        %412 = sbr.rel (%p410) target = $region24
      $region23: #{forward.7} parent=11 // pred_region
        _
      $region24: #{forward.7} parent=11 // pred_fallthru
        _
      // Predicated region
      $region25: #{forward.7} parent=11 // pred_check
        %p413 = pneg %p132
      $region26: #{forward.7} parent=11 // pred_check_branch
        %415 = sbr.rel (%p413) target = $region28
      $region27: #{forward.7} parent=11 // pred_region
        _
      $region28: #{forward.7} parent=11 // pred_fallthru
        _
      // Predicated region
      $region29: #{forward.7} parent=11 // pred_check
        %p416 = pneg %p153
      $region30: #{forward.7} parent=11 // pred_check_branch
        %418 = sbr.rel (%p416) target = $region32
      $region31: #{forward.7} parent=11 // pred_region
        _
      $region32: #{forward.7} parent=11 // pred_fallthru
        _
      // Predicated region
      $region33: #{forward.7} parent=11 // pred_check
        %p419 = pneg %p174
      $region34: #{forward.7} parent=11 // pred_check_branch
        %421 = sbr.rel (%p419) target = $region36
      $region35: #{forward.7} parent=11 // pred_region
        _
      $region36: #{forward.7} parent=11 // pred_fallthru
        _
      // Predicated region
      $region37: #{forward.7} parent=11 // pred_check
        %p422 = pneg %p195
      $region38: #{forward.7} parent=11 // pred_check_branch
        %424 = sbr.rel (%p422) target = $region40
      $region39: #{forward.7} parent=11 // pred_region
        _
      $region40: #{forward.7} parent=11 // pred_fallthru
        _
      // Predicated region
      $region41: #{forward.7} parent=11 // pred_check
        %p425 = pneg %p216
      $region42: #{forward.7} parent=11 // pred_check_branch
        %427 = sbr.rel (%p425) target = $region44
      $region43: #{forward.7} parent=11 // pred_region
        _
      $region44: #{forward.7} parent=11 // pred_fallthru
        _
      // Predicated region
      $region45: #{forward.7} parent=11 // pred_check
        %p428 = pneg %p237
      $region46: #{forward.7} parent=11 // pred_check_branch
        %430 = sbr.rel (%p428) target = $region48
      $region47: #{forward.7} parent=11 // pred_region
        _
      $region48: #{forward.7} parent=11 // pred_fallthru
        _
      // Predicated region
      $region49: #{forward.7} parent=11 // pred_check
        %p431 = pneg %p258
      $region50: #{forward.7} parent=11 // pred_check_branch
        %433 = sbr.rel (%p431) target = $region52
      $region51: #{forward.7} parent=11 // pred_region
        _
      $region52: #{forward.7} parent=11 // pred_fallthru
        _
      // Predicated region
      $region53: #{forward.7} parent=11 // pred_check
        %p434 = pneg %p279
      $region54: #{forward.7} parent=11 // pred_check_branch
        %436 = sbr.rel (%p434) target = $region56
      $region55: #{forward.7} parent=11 // pred_region
        _
      $region56: #{forward.7} parent=11 // pred_fallthru
        _
      // Predicated region
      $region57: #{forward.7} parent=11 // pred_check
        %p437 = pneg %p300
      $region58: #{forward.7} parent=11 // pred_check_branch
        %439 = sbr.rel (%p437) target = $region60
      $region59: #{forward.7} parent=11 // pred_region
        _
      $region60: #{forward.7} parent=11 // pred_fallthru
        _
      // Predicated region
      $region61: #{forward.7} parent=11 // pred_check
        %p440 = pneg %p321
      $region62: #{forward.7} parent=11 // pred_check_branch
        %442 = sbr.rel (%p440) target = $region64
      $region63: #{forward.7} parent=11 // pred_region
        _
      $region64: #{forward.7} parent=11 // pred_fallthru
        _
      // Predicated region
      $region65: #{forward.7} parent=11 // pred_check
        %p443 = pneg %p342
      $region66: #{forward.7} parent=11 // pred_check_branch
        %445 = sbr.rel (%p443) target = $region68
      $region67: #{forward.7} parent=11 // pred_region
        _
      $region68: #{forward.7} parent=11 // pred_fallthru
        _
      // Predicated region
      $region69: #{forward.7} parent=11 // pred_check
        %p446 = pneg %p363
      $region70: #{forward.7} parent=11 // pred_check_branch
        %448 = sbr.rel (%p446) target = $region72
      $region71: #{forward.7} parent=11 // pred_region
        _
      $region72: #{forward.7} parent=11 // pred_fallthru
        _
    $region12: #{forward.7} parent=5 // pred_fallthru
      _
    %p449 = scmp.lt.s32.totalorder %s22, 2
    // Predicated region
    $region73: #{forward.7} parent=5 // pred_check
      %p450 = pneg %p449
    $region74: #{forward.7} parent=5 // pred_check_branch
      %452 = sbr.rel (%p450) target = $region76
    $region75: #{forward.7} parent=5 // pred_region
      // Predicated region
      $region77: #{forward.7} parent=75 // pred_check
        %p453 = pneg %p42
      $region78: #{forward.7} parent=75 // pred_check_branch
        %455 = sbr.rel (%p453) target = $region80
      $region79: #{forward.7} parent=75 // pred_region
        %p456 = scmp.lt.s32.totalorder %s22, 1
        %s457 = scalar_select %p456, %s22, 1
        %s458 = smul.addr %s457, 2
        %s459 = smul.addr %s458, 8
        %s460 = scalar_lea.vmem %s0, %s459
      $region80: #{forward.7} parent=75 // pred_fallthru
        _
    $region76: #{forward.7} parent=5 // pred_fallthru
      _
    %p461 = scmp.le.s32.totalorder 1, %s22
    %p462 = scmp.lt.s32.totalorder %s22, 3
    %p463 = pnand %p461, %p462
    %p464 = pneg %p463
    // Predicated region
    $region81: #{forward.7} parent=5 // pred_check
      _
    $region82: #{forward.7} parent=5 // pred_check_branch
      %466 = sbr.rel (%p463) target = $region84
    $region83: #{forward.7} parent=5 // pred_region
      %s467 = ssub.s32 %s22, 1
      %p468 = scmp.lt.s32.totalorder %s27, 1
      %s469 = scalar_select %p468, %s27, 1
      %s470 = smul.addr %s469, 2
      %s471 = smul.addr %s470, 8
      %s472 = scalar_lea.vmem %s0, %s471
      %p473 = pneg %p48
      %p474 = pneg %p45
      %p475 = pneg %p69
      %p476 = pneg %p66
      %p477 = pneg %p90
      %p478 = pneg %p87
      %p479 = pneg %p111
      %p480 = pneg %p108
      %p481 = pneg %p132
      %p482 = pneg %p129
      %p483 = pneg %p153
      %p484 = pneg %p150
      %p485 = pneg %p174
      %p486 = pneg %p171
      %p487 = pneg %p195
      %p488 = pneg %p192
      %p489 = pneg %p216
      %p490 = pneg %p213
      %p491 = pneg %p237
      %p492 = pneg %p234
      %p493 = pneg %p258
      %p494 = pneg %p255
      %p495 = pneg %p279
      %p496 = pneg %p276
      %p497 = pneg %p300
      %p498 = pneg %p297
      %p499 = pneg %p321
      %p500 = pneg %p318
      %p501 = pneg %p342
      %p502 = pneg %p339
      %p503 = pneg %p363
      %p504 = pneg %p360
      %p505 = pneg %p389
      %p506 = pneg %p386
      %p507 = scmp.lt.s32.totalorder %s27, 1
      %s508 = scalar_select %p507, %s27, 1
      %s509 = smul.addr %s508, 8
      %s510 = smul.addr %s509, 2
      %s511 = scalar_lea.vmem %s16, %s510
      %p512 = scmp.lt.s32.totalorder %s27, 1
      %s513 = scalar_select %p512, %s27, 1
      %s514 = smul.addr %s513, 2
      %s515 = smul.addr %s514, 8
      %s516 = scalar_lea.vmem %s0, %s515
      %p517 = scmp.lt.s32.totalorder %s27, 1
      %s518 = scalar_select %p517, %s27, 1
      %s519 = smul.addr %s518, 8
      %s520 = smul.addr %s519, 2
      %s521 = scalar_lea.vmem %s16, %s520
      %v523 = vld [vmem:[%s516] sm:$0xff]
      %v524 = vld [vmem:[%s516 + $0x8] sm:$0xff]
      %v525 = vld [vmem:[%s1] sm:$0x1]
      %v526 = vld [vmem:[%s2] sm:$0x1]
      %vm527 = vcmask 523264
      %v528 = vsel %vm527, %v523, 0.0
      %529 = vadd.xlane.f32.xlu0 %v528
      %v530 = vpop.xlane.xlu0 %529
      %v531 = vsel %vm527, %v524, 0.0
      %532 = vadd.xlane.f32.xlu0 %v531
      %v533 = vpop.xlane.xlu0 %532
      %v534 = vrcp.pop 64.0
      %v535 = vmul.f32 %v530, %v534
      %v536 = vmul.f32 %v533, %v534
      %v537 = vsub.f32 %v523, %v535
      %v538 = vsub.f32 %v524, %v536
      %v539 = vmul.f32 %v537, %v537
      %v540 = vmul.f32 %v538, %v538
      %v541 = vsel %vm527, %v539, 0.0
      %542 = vadd.xlane.f32.xlu0 %v541
      %v543 = vpop.xlane.xlu0 %542
      %v544 = vsel %vm527, %v540, 0.0
      %545 = vadd.xlane.f32.xlu0 %v544
      %v546 = vpop.xlane.xlu0 %545
      %v547 = vmul.f32 %v543, %v534
      %v548 = vmul.f32 %v546, %v534
      %v549 = vadd.f32 %v547, 1e-06
      %v550 = vadd.f32 %v548, 1e-06
      %v551 = vrsqrt.pop %v549
      %v552 = vrsqrt.pop %v550
      %v553 = vmul.f32 %v537, %v551
      %v554 = vmul.f32 %v538, %v552
      %v556 = vlaneseq
      %v557 = vshrl.u32 %v556, 7
      %v558 = vsub.s32 0, %v557
      %v559 = vrot.slane %v525, %v558
      %v561 = vmul.f32 %v553, %v559
      %v562 = vmul.f32 %v554, %v559
      %v564 = vlaneseq
      %v565 = vshrl.u32 %v564, 7
      %v566 = vsub.s32 0, %v565
      %v567 = vrot.slane %v526, %v566
      %v569 = vadd.f32 %v561, %v567
      %v570 = vadd.f32 %v562, %v567
      %v571 = vld [vmem:[%s3] sm:$0xff]
      %v572 = vld [vmem:[%s3 + $0x8] sm:$0xff]
      %vm573 = vcmask 130048
      %v575 = vsel %vm573, %v571, 0
      %v578 = vsel %vm573, %v572, 0
      %580 = vmatprep.subr.mxu0 0.0
      %581 = vmatpush1.msra.mxu0 %v569
      %582 = vmatprep.subr.mxu0 0.0
      %583 = vmatpush1.msra.mxu0 %v570
      %584 = vmatprep.subr.mxu0 0.0
      %585 = vmatpush1.msra.mxu0 0.0
      %586 = vmatprep.subr.mxu0 0.0
      %587 = vmatpush1.msra.mxu0 0.0
      %588 = vmatprep.subr.mxu0 0.0
      %589 = vmatpush1.msra.mxu0 0.0
      %590 = vmatprep.subr.mxu0 0.0
      %591 = vmatpush1.msra.mxu0 0.0
      %592 = vmatprep.subr.mxu0 0.0
      %593 = vmatpush1.msra.mxu0 0.0
      %594 = vmatprep.subr.mxu0 0.0
      %595 = vmatpush1.msra.mxu0 0.0
      %596 = vmatprep.subr.mxu0 0.0
      %597 = vmatpush1.msra.mxu0 0.0
      %598 = vmatprep.subr.mxu0 0.0
      %599 = vmatpush1.msra.mxu0 0.0
      %600 = vmatprep.subr.mxu0 0.0
      %601 = vmatpush1.msra.mxu0 0.0
      %602 = vmatprep.subr.mxu0 0.0
      %603 = vmatpush1.msra.mxu0 0.0
      %604 = vmatprep.subr.mxu0 0.0
      %605 = vmatpush1.msra.mxu0 0.0
      %606 = vmatprep.subr.mxu0 0.0
      %607 = vmatpush1.msra.mxu0 0.0
      %608 = vmatprep.subr.mxu0 0.0
      %609 = vmatpush1.msra.mxu0 0.0
      %610 = vmatprep.subr.mxu0 0.0
      %611 = vmatpush1.msra.mxu0 0.0
      %612 = vmatprep.subr.mxu0 0.0
      %613 = vmatpush1.msra.mxu0 0.0
      %614 = vmatprep.subr.mxu0 0.0
      %615 = vmatpush1.msra.mxu0 0.0
      %616 = vmatprep.subr.mxu0 0.0
      %617 = vmatpush1.msra.mxu0 0.0
      %618 = vmatprep.subr.mxu0 0.0
      %619 = vmatpush1.msra.mxu0 0.0
      %620 = vmatprep.subr.mxu0 0.0
      %621 = vmatpush1.msra.mxu0 0.0
      %622 = vmatprep.subr.mxu0 0.0
      %623 = vmatpush1.msra.mxu0 0.0
      %624 = vmatprep.subr.mxu0 0.0
      %625 = vmatpush1.msra.mxu0 0.0
      %626 = vmatprep.subr.mxu0 0.0
      %627 = vmatpush1.msra.mxu0 0.0
      %628 = vmatprep.subr.mxu0 0.0
      %629 = vmatpush1.msra.mxu0 0.0
      %630 = vmatprep.subr.mxu0 0.0
      %631 = vmatpush1.msra.mxu0 0.0
      %632 = vmatprep.subr.mxu0 0.0
      %633 = vmatpush1.msra.mxu0 0.0
      %634 = vmatprep.subr.mxu0 0.0
      %635 = vmatpush1.msra.mxu0 0.0
      %636 = vmatprep.subr.mxu0 0.0
      %637 = vmatpush1.msra.mxu0 0.0
      %638 = vmatprep.subr.mxu0 0.0
      %639 = vmatpush1.msra.mxu0 0.0
      %640 = vmatprep.subr.mxu0 0.0
      %641 = vmatpush1.msra.mxu0 0.0
      %642 = vmatprep.subr.mxu0 0.0
      %643 = vmatpush1.msra.mxu0 0.0
      %644 = vmatprep.mubr.f32.mxu0 0.0
      %645 = vmatmul.mubr.f32.gmra.mrb[0].mxu0 %v575
      %v646 = vpop.f32.mrb[0].mxu0
      %v647 = vadd.f32 0.0, %v646
      %v648 = vpop.f32.mrb[0].mxu0
      %649 = vmatprep.mubr.f32.mxu0 0.0
      %650 = vmatmul.mubr.f32.gmra.mrb[0].mxu0 %v578
      %v651 = vpop.f32.mrb[0].mxu0
      %v652 = vadd.f32 0.0, %v651
      %v653 = vpop.f32.mrb[0].mxu0
      %654 = vdwg.mxu0
      %v655 = vpack.c.bf16 %v652, %v647
      %v656 = vld [vmem:[%s4] sm:$0xff]
      %v657 = vld [vmem:[%s4 + $0x8] sm:$0xff]
      %v658 = vld [vmem:[%s4 + $0x10] sm:$0xff]
      %v659 = vld [vmem:[%s4 + $0x18] sm:$0xff]
      %v660 = vld [vmem:[%s4 + $0x20] sm:$0xff]
      %v661 = vld [vmem:[%s4 + $0x28] sm:$0xff]
      %v662 = vld [vmem:[%s4 + $0x30] sm:$0xff]
      %v663 = vld [vmem:[%s4 + $0x38] sm:$0xff]
      %s664 = scalar_lea.vmem %s3, 16
      %v665 = vld [vmem:[%s664] sm:$0xff]
      %v666 = vld [vmem:[%s664 + $0x8] sm:$0xff]
      %v668 = vsel %vm573, %v665, 0
      %v671 = vsel %vm573, %v666, 0
      %673 = vmatprep.subr.mxu0 0.0
      %674 = vmatpush1.msra.mxu0 %v569
      %675 = vmatprep.subr.mxu0 0.0
      %676 = vmatpush1.msra.mxu0 %v570
      %677 = vmatprep.subr.mxu0 0.0
      %678 = vmatpush1.msra.mxu0 0.0
      %679 = vmatprep.subr.mxu0 0.0
      %680 = vmatpush1.msra.mxu0 0.0
      %681 = vmatprep.subr.mxu0 0.0
      %682 = vmatpush1.msra.mxu0 0.0
      %683 = vmatprep.subr.mxu0 0.0
      %684 = vmatpush1.msra.mxu0 0.0
      %685 = vmatprep.subr.mxu0 0.0
      %686 = vmatpush1.msra.mxu0 0.0
      %687 = vmatprep.subr.mxu0 0.0
      %688 = vmatpush1.msra.mxu0 0.0
      %689 = vmatprep.subr.mxu0 0.0
      %690 = vmatpush1.msra.mxu0 0.0
      %691 = vmatprep.subr.mxu0 0.0
      %692 = vmatpush1.msra.mxu0 0.0
      %693 = vmatprep.subr.mxu0 0.0
      %694 = vmatpush1.msra.mxu0 0.0
      %695 = vmatprep.subr.mxu0 0.0
      %696 = vmatpush1.msra.mxu0 0.0
      %697 = vmatprep.subr.mxu0 0.0
      %698 = vmatpush1.msra.mxu0 0.0
      %699 = vmatprep.subr.mxu0 0.0
      %700 = vmatpush1.msra.mxu0 0.0
      %701 = vmatprep.subr.mxu0 0.0
      %702 = vmatpush1.msra.mxu0 0.0
      %703 = vmatprep.subr.mxu0 0.0
      %704 = vmatpush1.msra.mxu0 0.0
      %705 = vmatprep.subr.mxu0 0.0
      %706 = vmatpush1.msra.mxu0 0.0
      %707 = vmatprep.subr.mxu0 0.0
      %708 = vmatpush1.msra.mxu0 0.0
      %709 = vmatprep.subr.mxu0 0.0
      %710 = vmatpush1.msra.mxu0 0.0
      %711 = vmatprep.subr.mxu0 0.0
      %712 = vmatpush1.msra.mxu0 0.0
      %713 = vmatprep.subr.mxu0 0.0
      %714 = vmatpush1.msra.mxu0 0.0
      %715 = vmatprep.subr.mxu0 0.0
      %716 = vmatpush1.msra.mxu0 0.0
      %717 = vmatprep.subr.mxu0 0.0
      %718 = vmatpush1.msra.mxu0 0.0
      %719 = vmatprep.subr.mxu0 0.0
      %720 = vmatpush1.msra.mxu0 0.0
      %721 = vmatprep.subr.mxu0 0.0
      %722 = vmatpush1.msra.mxu0 0.0
      %723 = vmatprep.subr.mxu0 0.0
      %724 = vmatpush1.msra.mxu0 0.0
      %725 = vmatprep.subr.mxu0 0.0
      %726 = vmatpush1.msra.mxu0 0.0
      %727 = vmatprep.subr.mxu0 0.0
      %728 = vmatpush1.msra.mxu0 0.0
      %729 = vmatprep.subr.mxu0 0.0
      %730 = vmatpush1.msra.mxu0 0.0
      %731 = vmatprep.subr.mxu0 0.0
      %732 = vmatpush1.msra.mxu0 0.0
      %733 = vmatprep.subr.mxu0 0.0
      %734 = vmatpush1.msra.mxu0 0.0
      %735 = vmatprep.subr.mxu0 0.0
      %736 = vmatpush1.msra.mxu0 0.0
      %737 = vmatprep.mubr.f32.mxu0 0.0
      %738 = vmatmul.mubr.f32.gmra.mrb[0].mxu0 %v668
      %v739 = vpop.f32.mrb[0].mxu0
      %v740 = vadd.f32 0.0, %v739
      %v741 = vpop.f32.mrb[0].mxu0
      %742 = vmatprep.mubr.f32.mxu0 0.0
      %743 = vmatmul.mubr.f32.gmra.mrb[0].mxu0 %v671
      %v744 = vpop.f32.mrb[0].mxu0
      %v745 = vadd.f32 0.0, %v744
      %v746 = vpop.f32.mrb[0].mxu0
      %747 = vdwg.mxu0
      %v748 = vpack.c.bf16 %v745, %v740
      %v749 = vld [vmem:[%s4 + $0x40] sm:$0xff]
      %v750 = vld [vmem:[%s4 + $0x48] sm:$0xff]
      %v751 = vld [vmem:[%s4 + $0x50] sm:$0xff]
      %v752 = vld [vmem:[%s4 + $0x58] sm:$0xff]
      %v753 = vld [vmem:[%s4 + $0x60] sm:$0xff]
      %v754 = vld [vmem:[%s4 + $0x68] sm:$0xff]
      %v755 = vld [vmem:[%s4 + $0x70] sm:$0xff]
      %v756 = vld [vmem:[%s4 + $0x78] sm:$0xff]
      %v765 = vunpack.c.l.b16 %v749
      %v766 = vunpack.c.h.b16 %v749
      %v767 = vunpack.c.l.b16 %v750
      %v768 = vunpack.c.h.b16 %v750
      %v769 = vunpack.c.l.b16 %v751
      %v770 = vunpack.c.h.b16 %v751
      %v771 = vunpack.c.l.b16 %v752
      %v772 = vunpack.c.h.b16 %v752
      %v773 = vunpack.c.l.b16 %v753
      %v774 = vunpack.c.h.b16 %v753
      %v775 = vunpack.c.l.b16 %v754
      %v776 = vunpack.c.h.b16 %v754
      %v777 = vunpack.c.l.b16 %v755
      %v778 = vunpack.c.h.b16 %v755
      %v779 = vunpack.c.l.b16 %v756
      %v780 = vunpack.c.h.b16 %v756
      %v781 = vpack.c.b16 %v767, %v765
      %v782 = vpack.c.b16 %v768, %v766
      %v783 = vpack.c.b16 %v771, %v769
      %v784 = vpack.c.b16 %v772, %v770
      %v785 = vpack.c.b16 %v775, %v773
      %v786 = vpack.c.b16 %v776, %v774
      %v787 = vpack.c.b16 %v779, %v777
      %v788 = vpack.c.b16 %v780, %v778
      %v798 = vsel %vm527, %v748, 0
      %800 = vmatprep.subr.bf16.mxu0 %v782
      %801 = vmatpush1.bf16.msra.mxu0 %v781
      %802 = vmatprep.subr.bf16.mxu0 %v784
      %803 = vmatpush1.bf16.msra.mxu0 %v783
      %804 = vmatprep.subr.bf16.mxu0 %v786
      %805 = vmatpush1.bf16.msra.mxu0 %v785
      %806 = vmatprep.subr.bf16.mxu0 %v788
      %807 = vmatpush1.bf16.msra.mxu0 %v787
      %808 = vmatprep.subr.bf16.mxu0 0
      %809 = vmatpush1.bf16.msra.mxu0 0
      %810 = vmatprep.subr.bf16.mxu0 0
      %811 = vmatpush1.bf16.msra.mxu0 0
      %812 = vmatprep.subr.bf16.mxu0 0
      %813 = vmatpush1.bf16.msra.mxu0 0
      %814 = vmatprep.subr.bf16.mxu0 0
      %815 = vmatpush1.bf16.msra.mxu0 0
      %816 = vmatprep.subr.bf16.mxu0 0
      %817 = vmatpush1.bf16.msra.mxu0 0
      %818 = vmatprep.subr.bf16.mxu0 0
      %819 = vmatpush1.bf16.msra.mxu0 0
      %820 = vmatprep.subr.bf16.mxu0 0
      %821 = vmatpush1.bf16.msra.mxu0 0
      %822 = vmatprep.subr.bf16.mxu0 0
      %823 = vmatpush1.bf16.msra.mxu0 0
      %824 = vmatprep.subr.bf16.mxu0 0
      %825 = vmatpush1.bf16.msra.mxu0 0
      %826 = vmatprep.subr.bf16.mxu0 0
      %827 = vmatpush1.bf16.msra.mxu0 0
      %828 = vmatprep.subr.bf16.mxu0 0
      %829 = vmatpush1.bf16.msra.mxu0 0
      %830 = vmatprep.subr.bf16.mxu0 0
      %831 = vmatpush1.bf16.msra.mxu0 0
      %832 = vmatprep.mubr.bf16.mxu0 0
      %833 = vmatmul.mubr.bf16.gmra.mrb[0].mxu0 %v798
      %v834 = vpop.f32.mrb[0].mxu0
      %v835 = vadd.f32 0.0, %v834
      %v836 = vpop.f32.mrb[0].mxu0
      %v837 = vadd.f32 0.0, %v836
      %v838 = vpop.f32.mrb[0].mxu0
      %v839 = vadd.f32 0.0, %v838
      %v840 = vpop.f32.mrb[0].mxu0
      %v841 = vadd.f32 0.0, %v840
      %842 = vdwg.mxu0
      %v851 = vunpack.c.l.b16 %v656
      %v852 = vunpack.c.h.b16 %v656
      %v853 = vunpack.c.l.b16 %v657
      %v854 = vunpack.c.h.b16 %v657
      %v855 = vunpack.c.l.b16 %v658
      %v856 = vunpack.c.h.b16 %v658
      %v857 = vunpack.c.l.b16 %v659
      %v858 = vunpack.c.h.b16 %v659
      %v859 = vunpack.c.l.b16 %v660
      %v860 = vunpack.c.h.b16 %v660
      %v861 = vunpack.c.l.b16 %v661
      %v862 = vunpack.c.h.b16 %v661
      %v863 = vunpack.c.l.b16 %v662
      %v864 = vunpack.c.h.b16 %v662
      %v865 = vunpack.c.l.b16 %v663
      %v866 = vunpack.c.h.b16 %v663
      %v867 = vpack.c.b16 %v853, %v851
      %v868 = vpack.c.b16 %v854, %v852
      %v869 = vpack.c.b16 %v857, %v855
      %v870 = vpack.c.b16 %v858, %v856
      %v871 = vpack.c.b16 %v861, %v859
      %v872 = vpack.c.b16 %v862, %v860
      %v873 = vpack.c.b16 %v865, %v863
      %v874 = vpack.c.b16 %v866, %v864
      %v884 = vsel %vm527, %v655, 0
      %886 = vmatprep.subr.bf16.mxu0 %v868
      %887 = vmatpush1.bf16.msra.mxu0 %v867
      %888 = vmatprep.subr.bf16.mxu0 %v870
      %889 = vmatpush1.bf16.msra.mxu0 %v869
      %890 = vmatprep.subr.bf16.mxu0 %v872
      %891 = vmatpush1.bf16.msra.mxu0 %v871
      %892 = vmatprep.subr.bf16.mxu0 %v874
      %893 = vmatpush1.bf16.msra.mxu0 %v873
      %894 = vmatprep.subr.bf16.mxu0 0
      %895 = vmatpush1.bf16.msra.mxu0 0
      %896 = vmatprep.subr.bf16.mxu0 0
      %897 = vmatpush1.bf16.msra.mxu0 0
      %898 = vmatprep.subr.bf16.mxu0 0
      %899 = vmatpush1.bf16.msra.mxu0 0
      %900 = vmatprep.subr.bf16.mxu0 0
      %901 = vmatpush1.bf16.msra.mxu0 0
      %902 = vmatprep.subr.bf16.mxu0 0
      %903 = vmatpush1.bf16.msra.mxu0 0
      %904 = vmatprep.subr.bf16.mxu0 0
      %905 = vmatpush1.bf16.msra.mxu0 0
      %906 = vmatprep.subr.bf16.mxu0 0
      %907 = vmatpush1.bf16.msra.mxu0 0
      %908 = vmatprep.subr.bf16.mxu0 0
      %909 = vmatpush1.bf16.msra.mxu0 0
      %910 = vmatprep.subr.bf16.mxu0 0
      %911 = vmatpush1.bf16.msra.mxu0 0
      %912 = vmatprep.subr.bf16.mxu0 0
      %913 = vmatpush1.bf16.msra.mxu0 0
      %914 = vmatprep.subr.bf16.mxu0 0
      %915 = vmatpush1.bf16.msra.mxu0 0
      %916 = vmatprep.subr.bf16.mxu0 0
      %917 = vmatpush1.bf16.msra.mxu0 0
      %918 = vmatprep.mubr.bf16.mxu0 0
      %919 = vmatmul.mubr.bf16.gmra.mrb[0].mxu0 %v884
      %v920 = vpop.f32.mrb[0].mxu0
      %v921 = vadd.f32 %v835, %v920
      %v922 = vpop.f32.mrb[0].mxu0
      %v923 = vadd.f32 %v837, %v922
      %v924 = vpop.f32.mrb[0].mxu0
      %v925 = vadd.f32 %v839, %v924
      %v926 = vpop.f32.mrb[0].mxu0
      %v927 = vadd.f32 %v841, %v926
      %928 = vdwg.mxu0
      %s929 = scalar_lea.vmem %s3, 32
      %v930 = vld [vmem:[%s929] sm:$0xff]
      %v931 = vld [vmem:[%s929 + $0x8] sm:$0xff]
      %v933 = vsel %vm573, %v930, 0
      %v936 = vsel %vm573, %v931, 0
      %938 = vmatprep.subr.mxu0 0.0
      %939 = vmatpush1.msra.mxu0 %v569
      %940 = vmatprep.subr.mxu0 0.0
      %941 = vmatpush1.msra.mxu0 %v570
      %942 = vmatprep.subr.mxu0 0.0
      %943 = vmatpush1.msra.mxu0 0.0
      %944 = vmatprep.subr.mxu0 0.0
      %945 = vmatpush1.msra.mxu0 0.0
      %946 = vmatprep.subr.mxu0 0.0
      %947 = vmatpush1.msra.mxu0 0.0
      %948 = vmatprep.subr.mxu0 0.0
      %949 = vmatpush1.msra.mxu0 0.0
      %950 = vmatprep.subr.mxu0 0.0
      %951 = vmatpush1.msra.mxu0 0.0
      %952 = vmatprep.subr.mxu0 0.0
      %953 = vmatpush1.msra.mxu0 0.0
      %954 = vmatprep.subr.mxu0 0.0
      %955 = vmatpush1.msra.mxu0 0.0
      %956 = vmatprep.subr.mxu0 0.0
      %957 = vmatpush1.msra.mxu0 0.0
      %958 = vmatprep.subr.mxu0 0.0
      %959 = vmatpush1.msra.mxu0 0.0
      %960 = vmatprep.subr.mxu0 0.0
      %961 = vmatpush1.msra.mxu0 0.0
      %962 = vmatprep.subr.mxu0 0.0
      %963 = vmatpush1.msra.mxu0 0.0
      %964 = vmatprep.subr.mxu0 0.0
      %965 = vmatpush1.msra.mxu0 0.0
      %966 = vmatprep.subr.mxu0 0.0
      %967 = vmatpush1.msra.mxu0 0.0
      %968 = vmatprep.subr.mxu0 0.0
      %969 = vmatpush1.msra.mxu0 0.0
      %970 = vmatprep.subr.mxu0 0.0
      %971 = vmatpush1.msra.mxu0 0.0
      %972 = vmatprep.subr.mxu0 0.0
      %973 = vmatpush1.msra.mxu0 0.0
      %974 = vmatprep.subr.mxu0 0.0
      %975 = vmatpush1.msra.mxu0 0.0
      %976 = vmatprep.subr.mxu0 0.0
      %977 = vmatpush1.msra.mxu0 0.0
      %978 = vmatprep.subr.mxu0 0.0
      %979 = vmatpush1.msra.mxu0 0.0
      %980 = vmatprep.subr.mxu0 0.0
      %981 = vmatpush1.msra.mxu0 0.0
      %982 = vmatprep.subr.mxu0 0.0
      %983 = vmatpush1.msra.mxu0 0.0
      %984 = vmatprep.subr.mxu0 0.0
      %985 = vmatpush1.msra.mxu0 0.0
      %986 = vmatprep.subr.mxu0 0.0
      %987 = vmatpush1.msra.mxu0 0.0
      %988 = vmatprep.subr.mxu0 0.0
      %989 = vmatpush1.msra.mxu0 0.0
      %990 = vmatprep.subr.mxu0 0.0
      %991 = vmatpush1.msra.mxu0 0.0
      %992 = vmatprep.subr.mxu0 0.0
      %993 = vmatpush1.msra.mxu0 0.0
      %994 = vmatprep.subr.mxu0 0.0
      %995 = vmatpush1.msra.mxu0 0.0
      %996 = vmatprep.subr.mxu0 0.0
      %997 = vmatpush1.msra.mxu0 0.0
      %998 = vmatprep.subr.mxu0 0.0
      %999 = vmatpush1.msra.mxu0 0.0
      %1000 = vmatprep.subr.mxu0 0.0
      %1001 = vmatpush1.msra.mxu0 0.0
      %1002 = vmatprep.mubr.f32.mxu0 0.0
      %1003 = vmatmul.mubr.f32.gmra.mrb[0].mxu0 %v933
      %v1004 = vpop.f32.mrb[0].mxu0
      %v1005 = vadd.f32 0.0, %v1004
      %v1006 = vpop.f32.mrb[0].mxu0
      %1007 = vmatprep.mubr.f32.mxu0 0.0
      %1008 = vmatmul.mubr.f32.gmra.mrb[0].mxu0 %v936
      %v1009 = vpop.f32.mrb[0].mxu0
      %v1010 = vadd.f32 0.0, %v1009
      %v1011 = vpop.f32.mrb[0].mxu0
      %1012 = vdwg.mxu0
      %v1013 = vpack.c.bf16 %v1010, %v1005
      %v1014 = vld [vmem:[%s4 + $0x80] sm:$0xff]
      %v1015 = vld [vmem:[%s4 + $0x88] sm:$0xff]
      %v1016 = vld [vmem:[%s4 + $0x90] sm:$0xff]
      %v1017 = vld [vmem:[%s4 + $0x98] sm:$0xff]
      %v1018 = vld [vmem:[%s4 + $0xa0] sm:$0xff]
      %v1019 = vld [vmem:[%s4 + $0xa8] sm:$0xff]
      %v1020 = vld [vmem:[%s4 + $0xb0] sm:$0xff]
      %v1021 = vld [vmem:[%s4 + $0xb8] sm:$0xff]
      %v1030 = vunpack.c.l.b16 %v1014
      %v1031 = vunpack.c.h.b16 %v1014
      %v1032 = vunpack.c.l.b16 %v1015
      %v1033 = vunpack.c.h.b16 %v1015
      %v1034 = vunpack.c.l.b16 %v1016
      %v1035 = vunpack.c.h.b16 %v1016
      %v1036 = vunpack.c.l.b16 %v1017
      %v1037 = vunpack.c.h.b16 %v1017
      %v1038 = vunpack.c.l.b16 %v1018
      %v1039 = vunpack.c.h.b16 %v1018
      %v1040 = vunpack.c.l.b16 %v1019
      %v1041 = vunpack.c.h.b16 %v1019
      %v1042 = vunpack.c.l.b16 %v1020
      %v1043 = vunpack.c.h.b16 %v1020
      %v1044 = vunpack.c.l.b16 %v1021
      %v1045 = vunpack.c.h.b16 %v1021
      %v1046 = vpack.c.b16 %v1032, %v1030
      %v1047 = vpack.c.b16 %v1033, %v1031
      %v1048 = vpack.c.b16 %v1036, %v1034
      %v1049 = vpack.c.b16 %v1037, %v1035
      %v1050 = vpack.c.b16 %v1040, %v1038
      %v1051 = vpack.c.b16 %v1041, %v1039
      %v1052 = vpack.c.b16 %v1044, %v1042
      %v1053 = vpack.c.b16 %v1045, %v1043
      %v1063 = vsel %vm527, %v1013, 0
      %1065 = vmatprep.subr.bf16.mxu0 %v1047
      %1066 = vmatpush1.bf16.msra.mxu0 %v1046
      %1067 = vmatprep.subr.bf16.mxu0 %v1049
      %1068 = vmatpush1.bf16.msra.mxu0 %v1048
      %1069 = vmatprep.subr.bf16.mxu0 %v1051
      %1070 = vmatpush1.bf16.msra.mxu0 %v1050
      %1071 = vmatprep.subr.bf16.mxu0 %v1053
      %1072 = vmatpush1.bf16.msra.mxu0 %v1052
      %1073 = vmatprep.subr.bf16.mxu0 0
      %1074 = vmatpush1.bf16.msra.mxu0 0
      %1075 = vmatprep.subr.bf16.mxu0 0
      %1076 = vmatpush1.bf16.msra.mxu0 0
      %1077 = vmatprep.subr.bf16.mxu0 0
      %1078 = vmatpush1.bf16.msra.mxu0 0
      %1079 = vmatprep.subr.bf16.mxu0 0
      %1080 = vmatpush1.bf16.msra.mxu0 0
      %1081 = vmatprep.subr.bf16.mxu0 0
      %1082 = vmatpush1.bf16.msra.mxu0 0
      %1083 = vmatprep.subr.bf16.mxu0 0
      %1084 = vmatpush1.bf16.msra.mxu0 0
      %1085 = vmatprep.subr.bf16.mxu0 0
      %1086 = vmatpush1.bf16.msra.mxu0 0
      %1087 = vmatprep.subr.bf16.mxu0 0
      %1088 = vmatpush1.bf16.msra.mxu0 0
      %1089 = vmatprep.subr.bf16.mxu0 0
      %1090 = vmatpush1.bf16.msra.mxu0 0
      %1091 = vmatprep.subr.bf16.mxu0 0
      %1092 = vmatpush1.bf16.msra.mxu0 0
      %1093 = vmatprep.subr.bf16.mxu0 0
      %1094 = vmatpush1.bf16.msra.mxu0 0
      %1095 = vmatprep.subr.bf16.mxu0 0
      %1096 = vmatpush1.bf16.msra.mxu0 0
      %1097 = vmatprep.mubr.bf16.mxu0 0
      %1098 = vmatmul.mubr.bf16.gmra.mrb[0].mxu0 %v1063
      %v1099 = vpop.f32.mrb[0].mxu0
      %v1100 = vadd.f32 0.0, %v1099
      %v1101 = vpop.f32.mrb[0].mxu0
      %v1102 = vadd.f32 0.0, %v1101
      %v1103 = vpop.f32.mrb[0].mxu0
      %v1104 = vadd.f32 0.0, %v1103
      %v1105 = vpop.f32.mrb[0].mxu0
      %v1106 = vadd.f32 0.0, %v1105
      %1107 = vdwg.mxu0
      %v1108 = vadd.f32 %v921, %v1100
      %v1109 = vadd.f32 %v923, %v1102
      %v1110 = vadd.f32 %v925, %v1104
      %v1111 = vadd.f32 %v927, %v1106
      %s1112 = scalar_lea.vmem %s3, 48
      %v1113 = vld [vmem:[%s1112] sm:$0xff]
      %v1114 = vld [vmem:[%s1112 + $0x8] sm:$0xff]
      %v1116 = vsel %vm573, %v1113, 0
      %v1119 = vsel %vm573, %v1114, 0
      %1121 = vmatprep.subr.mxu0 0.0
      %1122 = vmatpush1.msra.mxu0 %v569
      %1123 = vmatprep.subr.mxu0 0.0
      %1124 = vmatpush1.msra.mxu0 %v570
      %1125 = vmatprep.subr.mxu0 0.0
      %1126 = vmatpush1.msra.mxu0 0.0
      %1127 = vmatprep.subr.mxu0 0.0
      %1128 = vmatpush1.msra.mxu0 0.0
      %1129 = vmatprep.subr.mxu0 0.0
      %1130 = vmatpush1.msra.mxu0 0.0
      %1131 = vmatprep.subr.mxu0 0.0
      %1132 = vmatpush1.msra.mxu0 0.0
      %1133 = vmatprep.subr.mxu0 0.0
      %1134 = vmatpush1.msra.mxu0 0.0
      %1135 = vmatprep.subr.mxu0 0.0
      %1136 = vmatpush1.msra.mxu0 0.0
      %1137 = vmatprep.subr.mxu0 0.0
      %1138 = vmatpush1.msra.mxu0 0.0
      %1139 = vmatprep.subr.mxu0 0.0
      %1140 = vmatpush1.msra.mxu0 0.0
      %1141 = vmatprep.subr.mxu0 0.0
      %1142 = vmatpush1.msra.mxu0 0.0
      %1143 = vmatprep.subr.mxu0 0.0
      %1144 = vmatpush1.msra.mxu0 0.0
      %1145 = vmatprep.subr.mxu0 0.0
      %1146 = vmatpush1.msra.mxu0 0.0
      %1147 = vmatprep.subr.mxu0 0.0
      %1148 = vmatpush1.msra.mxu0 0.0
      %1149 = vmatprep.subr.mxu0 0.0
      %1150 = vmatpush1.msra.mxu0 0.0
      %1151 = vmatprep.subr.mxu0 0.0
      %1152 = vmatpush1.msra.mxu0 0.0
      %1153 = vmatprep.subr.mxu0 0.0
      %1154 = vmatpush1.msra.mxu0 0.0
      %1155 = vmatprep.subr.mxu0 0.0
      %1156 = vmatpush1.msra.mxu0 0.0
      %1157 = vmatprep.subr.mxu0 0.0
      %1158 = vmatpush1.msra.mxu0 0.0
      %1159 = vmatprep.subr.mxu0 0.0
      %1160 = vmatpush1.msra.mxu0 0.0
      %1161 = vmatprep.subr.mxu0 0.0
      %1162 = vmatpush1.msra.mxu0 0.0
      %1163 = vmatprep.subr.mxu0 0.0
      %1164 = vmatpush1.msra.mxu0 0.0
      %1165 = vmatprep.subr.mxu0 0.0
      %1166 = vmatpush1.msra.mxu0 0.0
      %1167 = vmatprep.subr.mxu0 0.0
      %1168 = vmatpush1.msra.mxu0 0.0
      %1169 = vmatprep.subr.mxu0 0.0
      %1170 = vmatpush1.msra.mxu0 0.0
      %1171 = vmatprep.subr.mxu0 0.0
      %1172 = vmatpush1.msra.mxu0 0.0
      %1173 = vmatprep.subr.mxu0 0.0
      %1174 = vmatpush1.msra.mxu0 0.0
      %1175 = vmatprep.subr.mxu0 0.0
      %1176 = vmatpush1.msra.mxu0 0.0
      %1177 = vmatprep.subr.mxu0 0.0
      %1178 = vmatpush1.msra.mxu0 0.0
      %1179 = vmatprep.subr.mxu0 0.0
      %1180 = vmatpush1.msra.mxu0 0.0
      %1181 = vmatprep.subr.mxu0 0.0
      %1182 = vmatpush1.msra.mxu0 0.0
      %1183 = vmatprep.subr.mxu0 0.0
      %1184 = vmatpush1.msra.mxu0 0.0
      %1185 = vmatprep.mubr.f32.mxu0 0.0
      %1186 = vmatmul.mubr.f32.gmra.mrb[0].mxu0 %v1116
      %v1187 = vpop.f32.mrb[0].mxu0
      %v1188 = vadd.f32 0.0, %v1187
      %v1189 = vpop.f32.mrb[0].mxu0
      %1190 = vmatprep.mubr.f32.mxu0 0.0
      %1191 = vmatmul.mubr.f32.gmra.mrb[0].mxu0 %v1119
      %v1192 = vpop.f32.mrb[0].mxu0
      %v1193 = vadd.f32 0.0, %v1192
      %v1194 = vpop.f32.mrb[0].mxu0
      %1195 = vdwg.mxu0
      %v1196 = vpack.c.bf16 %v1193, %v1188
      %v1197 = vld [vmem:[%s4 + $0xc0] sm:$0xff]
      %v1198 = vld [vmem:[%s4 + $0xc8] sm:$0xff]
      %v1199 = vld [vmem:[%s4 + $0xd0] sm:$0xff]
      %v1200 = vld [vmem:[%s4 + $0xd8] sm:$0xff]
      %v1201 = vld [vmem:[%s4 + $0xe0] sm:$0xff]
      %v1202 = vld [vmem:[%s4 + $0xe8] sm:$0xff]
      %v1203 = vld [vmem:[%s4 + $0xf0] sm:$0xff]
      %v1204 = vld [vmem:[%s4 + $0xf8] sm:$0xff]
      %v1213 = vunpack.c.l.b16 %v1197
      %v1214 = vunpack.c.h.b16 %v1197
      %v1215 = vunpack.c.l.b16 %v1198
      %v1216 = vunpack.c.h.b16 %v1198
      %v1217 = vunpack.c.l.b16 %v1199
      %v1218 = vunpack.c.h.b16 %v1199
      %v1219 = vunpack.c.l.b16 %v1200
      %v1220 = vunpack.c.h.b16 %v1200
      %v1221 = vunpack.c.l.b16 %v1201
      %v1222 = vunpack.c.h.b16 %v1201
      %v1223 = vunpack.c.l.b16 %v1202
      %v1224 = vunpack.c.h.b16 %v1202
      %v1225 = vunpack.c.l.b16 %v1203
      %v1226 = vunpack.c.h.b16 %v1203
      %v1227 = vunpack.c.l.b16 %v1204
      %v1228 = vunpack.c.h.b16 %v1204
      %v1229 = vpack.c.b16 %v1215, %v1213
      %v1230 = vpack.c.b16 %v1216, %v1214
      %v1231 = vpack.c.b16 %v1219, %v1217
      %v1232 = vpack.c.b16 %v1220, %v1218
      %v1233 = vpack.c.b16 %v1223, %v1221
      %v1234 = vpack.c.b16 %v1224, %v1222
      %v1235 = vpack.c.b16 %v1227, %v1225
      %v1236 = vpack.c.b16 %v1228, %v1226
      %v1246 = vsel %vm527, %v1196, 0
      %1248 = vmatprep.subr.bf16.mxu0 %v1230
      %1249 = vmatpush1.bf16.msra.mxu0 %v1229
      %1250 = vmatprep.subr.bf16.mxu0 %v1232
      %1251 = vmatpush1.bf16.msra.mxu0 %v1231
      %1252 = vmatprep.subr.bf16.mxu0 %v1234
      %1253 = vmatpush1.bf16.msra.mxu0 %v1233
      %1254 = vmatprep.subr.bf16.mxu0 %v1236
      %1255 = vmatpush1.bf16.msra.mxu0 %v1235
      %1256 = vmatprep.subr.bf16.mxu0 0
      %1257 = vmatpush1.bf16.msra.mxu0 0
      %1258 = vmatprep.subr.bf16.mxu0 0
      %1259 = vmatpush1.bf16.msra.mxu0 0
      %1260 = vmatprep.subr.bf16.mxu0 0
      %1261 = vmatpush1.bf16.msra.mxu0 0
      %1262 = vmatprep.subr.bf16.mxu0 0
      %1263 = vmatpush1.bf16.msra.mxu0 0
      %1264 = vmatprep.subr.bf16.mxu0 0
      %1265 = vmatpush1.bf16.msra.mxu0 0
      %1266 = vmatprep.subr.bf16.mxu0 0
      %1267 = vmatpush1.bf16.msra.mxu0 0
      %1268 = vmatprep.subr.bf16.mxu0 0
      %1269 = vmatpush1.bf16.msra.mxu0 0
      %1270 = vmatprep.subr.bf16.mxu0 0
      %1271 = vmatpush1.bf16.msra.mxu0 0
      %1272 = vmatprep.subr.bf16.mxu0 0
      %1273 = vmatpush1.bf16.msra.mxu0 0
      %1274 = vmatprep.subr.bf16.mxu0 0
      %1275 = vmatpush1.bf16.msra.mxu0 0
      %1276 = vmatprep.subr.bf16.mxu0 0
      %1277 = vmatpush1.bf16.msra.mxu0 0
      %1278 = vmatprep.subr.bf16.mxu0 0
      %1279 = vmatpush1.bf16.msra.mxu0 0
      %1280 = vmatprep.mubr.bf16.mxu0 0
      %1281 = vmatmul.mubr.bf16.gmra.mrb[0].mxu0 %v1246
      %v1282 = vpop.f32.mrb[0].mxu0
      %v1283 = vadd.f32 0.0, %v1282
      %v1284 = vpop.f32.mrb[0].mxu0
      %v1285 = vadd.f32 0.0, %v1284
      %v1286 = vpop.f32.mrb[0].mxu0
      %v1287 = vadd.f32 0.0, %v1286
      %v1288 = vpop.f32.mrb[0].mxu0
      %v1289 = vadd.f32 0.0, %v1288
      %1290 = vdwg.mxu0
      %v1291 = vadd.f32 %v1108, %v1283
      %v1292 = vadd.f32 %v1109, %v1285
      %v1293 = vadd.f32 %v1110, %v1287
      %v1294 = vadd.f32 %v1111, %v1289
      %s1295 = scalar_lea.vmem %s3, 64
      %v1296 = vld [vmem:[%s1295] sm:$0xff]
      %v1297 = vld [vmem:[%s1295 + $0x8] sm:$0xff]
      %v1299 = vsel %vm573, %v1296, 0
      %v1302 = vsel %vm573, %v1297, 0
      %1304 = vmatprep.subr.mxu0 0.0
      %1305 = vmatpush1.msra.mxu0 %v569
      %1306 = vmatprep.subr.mxu0 0.0
      %1307 = vmatpush1.msra.mxu0 %v570
      %1308 = vmatprep.subr.mxu0 0.0
      %1309 = vmatpush1.msra.mxu0 0.0
      %1310 = vmatprep.subr.mxu0 0.0
      %1311 = vmatpush1.msra.mxu0 0.0
      %1312 = vmatprep.subr.mxu0 0.0
      %1313 = vmatpush1.msra.mxu0 0.0
      %1314 = vmatprep.subr.mxu0 0.0
      %1315 = vmatpush1.msra.mxu0 0.0
      %1316 = vmatprep.subr.mxu0 0.0
      %1317 = vmatpush1.msra.mxu0 0.0
      %1318 = vmatprep.subr.mxu0 0.0
      %1319 = vmatpush1.msra.mxu0 0.0
      %1320 = vmatprep.subr.mxu0 0.0
      %1321 = vmatpush1.msra.mxu0 0.0
      %1322 = vmatprep.subr.mxu0 0.0
      %1323 = vmatpush1.msra.mxu0 0.0
      %1324 = vmatprep.subr.mxu0 0.0
      %1325 = vmatpush1.msra.mxu0 0.0
      %1326 = vmatprep.subr.mxu0 0.0
      %1327 = vmatpush1.msra.mxu0 0.0
      %1328 = vmatprep.subr.mxu0 0.0
      %1329 = vmatpush1.msra.mxu0 0.0
      %1330 = vmatprep.subr.mxu0 0.0
      %1331 = vmatpush1.msra.mxu0 0.0
      %1332 = vmatprep.subr.mxu0 0.0
      %1333 = vmatpush1.msra.mxu0 0.0
      %1334 = vmatprep.subr.mxu0 0.0
      %1335 = vmatpush1.msra.mxu0 0.0
      %1336 = vmatprep.subr.mxu0 0.0
      %1337 = vmatpush1.msra.mxu0 0.0
      %1338 = vmatprep.subr.mxu0 0.0
      %1339 = vmatpush1.msra.mxu0 0.0
      %1340 = vmatprep.subr.mxu0 0.0
      %1341 = vmatpush1.msra.mxu0 0.0
      %1342 = vmatprep.subr.mxu0 0.0
      %1343 = vmatpush1.msra.mxu0 0.0
      %1344 = vmatprep.subr.mxu0 0.0
      %1345 = vmatpush1.msra.mxu0 0.0
      %1346 = vmatprep.subr.mxu0 0.0
      %1347 = vmatpush1.msra.mxu0 0.0
      %1348 = vmatprep.subr.mxu0 0.0
      %1349 = vmatpush1.msra.mxu0 0.0
      %1350 = vmatprep.subr.mxu0 0.0
      %1351 = vmatpush1.msra.mxu0 0.0
      %1352 = vmatprep.subr.mxu0 0.0
      %1353 = vmatpush1.msra.mxu0 0.0
      %1354 = vmatprep.subr.mxu0 0.0
      %1355 = vmatpush1.msra.mxu0 0.0
      %1356 = vmatprep.subr.mxu0 0.0
      %1357 = vmatpush1.msra.mxu0 0.0
      %1358 = vmatprep.subr.mxu0 0.0
      %1359 = vmatpush1.msra.mxu0 0.0
      %1360 = vmatprep.subr.mxu0 0.0
      %1361 = vmatpush1.msra.mxu0 0.0
      %1362 = vmatprep.subr.mxu0 0.0
      %1363 = vmatpush1.msra.mxu0 0.0
      %1364 = vmatprep.subr.mxu0 0.0
      %1365 = vmatpush1.msra.mxu0 0.0
      %1366 = vmatprep.subr.mxu0 0.0
      %1367 = vmatpush1.msra.mxu0 0.0
      %1368 = vmatprep.mubr.f32.mxu0 0.0
      %1369 = vmatmul.mubr.f32.gmra.mrb[0].mxu0 %v1299
      %v1370 = vpop.f32.mrb[0].mxu0
      %v1371 = vadd.f32 0.0, %v1370
      %v1372 = vpop.f32.mrb[0].mxu0
      %1373 = vmatprep.mubr.f32.mxu0 0.0
      %1374 = vmatmul.mubr.f32.gmra.mrb[0].mxu0 %v1302
      %v1375 = vpop.f32.mrb[0].mxu0
      %v1376 = vadd.f32 0.0, %v1375
      %v1377 = vpop.f32.mrb[0].mxu0
      %1378 = vdwg.mxu0
      %v1379 = vpack.c.bf16 %v1376, %v1371
      %v1380 = vld [vmem:[%s4 + $0x100] sm:$0xff]
      %v1381 = vld [vmem:[%s4 + $0x108] sm:$0xff]
      %v1382 = vld [vmem:[%s4 + $0x110] sm:$0xff]
      %v1383 = vld [vmem:[%s4 + $0x118] sm:$0xff]
      %v1384 = vld [vmem:[%s4 + $0x120] sm:$0xff]
      %v1385 = vld [vmem:[%s4 + $0x128] sm:$0xff]
      %v1386 = vld [vmem:[%s4 + $0x130] sm:$0xff]
      %v1387 = vld [vmem:[%s4 + $0x138] sm:$0xff]
      %v1396 = vunpack.c.l.b16 %v1380
      %v1397 = vunpack.c.h.b16 %v1380
      %v1398 = vunpack.c.l.b16 %v1381
      %v1399 = vunpack.c.h.b16 %v1381
      %v1400 = vunpack.c.l.b16 %v1382
      %v1401 = vunpack.c.h.b16 %v1382
      %v1402 = vunpack.c.l.b16 %v1383
      %v1403 = vunpack.c.h.b16 %v1383
      %v1404 = vunpack.c.l.b16 %v1384
      %v1405 = vunpack.c.h.b16 %v1384
      %v1406 = vunpack.c.l.b16 %v1385
      %v1407 = vunpack.c.h.b16 %v1385
      %v1408 = vunpack.c.l.b16 %v1386
      %v1409 = vunpack.c.h.b16 %v1386
      %v1410 = vunpack.c.l.b16 %v1387
      %v1411 = vunpack.c.h.b16 %v1387
      %v1412 = vpack.c.b16 %v1398, %v1396
      %v1413 = vpack.c.b16 %v1399, %v1397
      %v1414 = vpack.c.b16 %v1402, %v1400
      %v1415 = vpack.c.b16 %v1403, %v1401
      %v1416 = vpack.c.b16 %v1406, %v1404
      %v1417 = vpack.c.b16 %v1407, %v1405
      %v1418 = vpack.c.b16 %v1410, %v1408
      %v1419 = vpack.c.b16 %v1411, %v1409
      %v1429 = vsel %vm527, %v1379, 0
      %1431 = vmatprep.subr.bf16.mxu0 %v1413
      %1432 = vmatpush1.bf16.msra.mxu0 %v1412
      %1433 = vmatprep.subr.bf16.mxu0 %v1415
      %1434 = vmatpush1.bf16.msra.mxu0 %v1414
      %1435 = vmatprep.subr.bf16.mxu0 %v1417
      %1436 = vmatpush1.bf16.msra.mxu0 %v1416
      %1437 = vmatprep.subr.bf16.mxu0 %v1419
      %1438 = vmatpush1.bf16.msra.mxu0 %v1418
      %1439 = vmatprep.subr.bf16.mxu0 0
      %1440 = vmatpush1.bf16.msra.mxu0 0
      %1441 = vmatprep.subr.bf16.mxu0 0
      %1442 = vmatpush1.bf16.msra.mxu0 0
      %1443 = vmatprep.subr.bf16.mxu0 0
      %1444 = vmatpush1.bf16.msra.mxu0 0
      %1445 = vmatprep.subr.bf16.mxu0 0
      %1446 = vmatpush1.bf16.msra.mxu0 0
      %1447 = vmatprep.subr.bf16.mxu0 0
      %1448 = vmatpush1.bf16.msra.mxu0 0
      %1449 = vmatprep.subr.bf16.mxu0 0
      %1450 = vmatpush1.bf16.msra.mxu0 0
      %1451 = vmatprep.subr.bf16.mxu0 0
      %1452 = vmatpush1.bf16.msra.mxu0 0
      %1453 = vmatprep.subr.bf16.mxu0 0
      %1454 = vmatpush1.bf16.msra.mxu0 0
      %1455 = vmatprep.subr.bf16.mxu0 0
      %1456 = vmatpush1.bf16.msra.mxu0 0
      %1457 = vmatprep.subr.bf16.mxu0 0
      %1458 = vmatpush1.bf16.msra.mxu0 0
      %1459 = vmatprep.subr.bf16.mxu0 0
      %1460 = vmatpush1.bf16.msra.mxu0 0
      %1461 = vmatprep.subr.bf16.mxu0 0
      %1462 = vmatpush1.bf16.msra.mxu0 0
      %1463 = vmatprep.mubr.bf16.mxu0 0
      %1464 = vmatmul.mubr.bf16.gmra.mrb[0].mxu0 %v1429
      %v1465 = vpop.f32.mrb[0].mxu0
      %v1466 = vadd.f32 0.0, %v1465
      %v1467 = vpop.f32.mrb[0].mxu0
      %v1468 = vadd.f32 0.0, %v1467
      %v1469 = vpop.f32.mrb[0].mxu0
      %v1470 = vadd.f32 0.0, %v1469
      %v1471 = vpop.f32.mrb[0].mxu0
      %v1472 = vadd.f32 0.0, %v1471
      %1473 = vdwg.mxu0
      %v1474 = vadd.f32 %v1291, %v1466
      %v1475 = vadd.f32 %v1292, %v1468
      %v1476 = vadd.f32 %v1293, %v1470
      %v1477 = vadd.f32 %v1294, %v1472
      %s1478 = scalar_lea.vmem %s3, 80
      %v1479 = vld [vmem:[%s1478] sm:$0xff]
      %v1480 = vld [vmem:[%s1478 + $0x8] sm:$0xff]
      %v1482 = vsel %vm573, %v1479, 0
      %v1485 = vsel %vm573, %v1480, 0
      %1487 = vmatprep.subr.mxu0 0.0
      %1488 = vmatpush1.msra.mxu0 %v569
      %1489 = vmatprep.subr.mxu0 0.0
      %1490 = vmatpush1.msra.mxu0 %v570
      %1491 = vmatprep.subr.mxu0 0.0
      %1492 = vmatpush1.msra.mxu0 0.0
      %1493 = vmatprep.subr.mxu0 0.0
      %1494 = vmatpush1.msra.mxu0 0.0
      %1495 = vmatprep.subr.mxu0 0.0
      %1496 = vmatpush1.msra.mxu0 0.0
      %1497 = vmatprep.subr.mxu0 0.0
      %1498 = vmatpush1.msra.mxu0 0.0
      %1499 = vmatprep.subr.mxu0 0.0
      %1500 = vmatpush1.msra.mxu0 0.0
      %1501 = vmatprep.subr.mxu0 0.0
      %1502 = vmatpush1.msra.mxu0 0.0
      %1503 = vmatprep.subr.mxu0 0.0
      %1504 = vmatpush1.msra.mxu0 0.0
      %1505 = vmatprep.subr.mxu0 0.0
      %1506 = vmatpush1.msra.mxu0 0.0
      %1507 = vmatprep.subr.mxu0 0.0
      %1508 = vmatpush1.msra.mxu0 0.0
      %1509 = vmatprep.subr.mxu0 0.0
      %1510 = vmatpush1.msra.mxu0 0.0
      %1511 = vmatprep.subr.mxu0 0.0
      %1512 = vmatpush1.msra.mxu0 0.0
      %1513 = vmatprep.subr.mxu0 0.0
      %1514 = vmatpush1.msra.mxu0 0.0
      %1515 = vmatprep.subr.mxu0 0.0
      %1516 = vmatpush1.msra.mxu0 0.0
      %1517 = vmatprep.subr.mxu0 0.0
      %1518 = vmatpush1.msra.mxu0 0.0
      %1519 = vmatprep.subr.mxu0 0.0
      %1520 = vmatpush1.msra.mxu0 0.0
      %1521 = vmatprep.subr.mxu0 0.0
      %1522 = vmatpush1.msra.mxu0 0.0
      %1523 = vmatprep.subr.mxu0 0.0
      %1524 = vmatpush1.msra.mxu0 0.0
      %1525 = vmatprep.subr.mxu0 0.0
      %1526 = vmatpush1.msra.mxu0 0.0
      %1527 = vmatprep.subr.mxu0 0.0
      %1528 = vmatpush1.msra.mxu0 0.0
      %1529 = vmatprep.subr.mxu0 0.0
      %1530 = vmatpush1.msra.mxu0 0.0
      %1531 = vmatprep.subr.mxu0 0.0
      %1532 = vmatpush1.msra.mxu0 0.0
      %1533 = vmatprep.subr.mxu0 0.0
      %1534 = vmatpush1.msra.mxu0 0.0
      %1535 = vmatprep.subr.mxu0 0.0
      %1536 = vmatpush1.msra.mxu0 0.0
      %1537 = vmatprep.subr.mxu0 0.0
      %1538 = vmatpush1.msra.mxu0 0.0
      %1539 = vmatprep.subr.mxu0 0.0
      %1540 = vmatpush1.msra.mxu0 0.0
      %1541 = vmatprep.subr.mxu0 0.0
      %1542 = vmatpush1.msra.mxu0 0.0
      %1543 = vmatprep.subr.mxu0 0.0
      %1544 = vmatpush1.msra.mxu0 0.0
      %1545 = vmatprep.subr.mxu0 0.0
      %1546 = vmatpush1.msra.mxu0 0.0
      %1547 = vmatprep.subr.mxu0 0.0
      %1548 = vmatpush1.msra.mxu0 0.0
      %1549 = vmatprep.subr.mxu0 0.0
      %1550 = vmatpush1.msra.mxu0 0.0
      %1551 = vmatprep.mubr.f32.mxu0 0.0
      %1552 = vmatmul.mubr.f32.gmra.mrb[0].mxu0 %v1482
      %v1553 = vpop.f32.mrb[0].mxu0
      %v1554 = vadd.f32 0.0, %v1553
      %v1555 = vpop.f32.mrb[0].mxu0
      %1556 = vmatprep.mubr.f32.mxu0 0.0
      %1557 = vmatmul.mubr.f32.gmra.mrb[0].mxu0 %v1485
      %v1558 = vpop.f32.mrb[0].mxu0
      %v1559 = vadd.f32 0.0, %v1558
      %v1560 = vpop.f32.mrb[0].mxu0
      %1561 = vdwg.mxu0
      %v1562 = vpack.c.bf16 %v1559, %v1554
      %v1563 = vld [vmem:[%s4 + $0x140] sm:$0xff]
      %v1564 = vld [vmem:[%s4 + $0x148] sm:$0xff]
      %v1565 = vld [vmem:[%s4 + $0x150] sm:$0xff]
      %v1566 = vld [vmem:[%s4 + $0x158] sm:$0xff]
      %v1567 = vld [vmem:[%s4 + $0x160] sm:$0xff]
      %v1568 = vld [vmem:[%s4 + $0x168] sm:$0xff]
      %v1569 = vld [vmem:[%s4 + $0x170] sm:$0xff]
      %v1570 = vld [vmem:[%s4 + $0x178] sm:$0xff]
      %v1579 = vunpack.c.l.b16 %v1563
      %v1580 = vunpack.c.h.b16 %v1563
      %v1581 = vunpack.c.l.b16 %v1564
      %v1582 = vunpack.c.h.b16 %v1564
      %v1583 = vunpack.c.l.b16 %v1565
      %v1584 = vunpack.c.h.b16 %v1565
      %v1585 = vunpack.c.l.b16 %v1566
      %v1586 = vunpack.c.h.b16 %v1566
      %v1587 = vunpack.c.l.b16 %v1567
      %v1588 = vunpack.c.h.b16 %v1567
      %v1589 = vunpack.c.l.b16 %v1568
      %v1590 = vunpack.c.h.b16 %v1568
      %v1591 = vunpack.c.l.b16 %v1569
      %v1592 = vunpack.c.h.b16 %v1569
      %v1593 = vunpack.c.l.b16 %v1570
      %v1594 = vunpack.c.h.b16 %v1570
      %v1595 = vpack.c.b16 %v1581, %v1579
      %v1596 = vpack.c.b16 %v1582, %v1580
      %v1597 = vpack.c.b16 %v1585, %v1583
      %v1598 = vpack.c.b16 %v1586, %v1584
      %v1599 = vpack.c.b16 %v1589, %v1587
      %v1600 = vpack.c.b16 %v1590, %v1588
      %v1601 = vpack.c.b16 %v1593, %v1591
      %v1602 = vpack.c.b16 %v1594, %v1592
      %v1612 = vsel %vm527, %v1562, 0
      %1614 = vmatprep.subr.bf16.mxu0 %v1596
      %1615 = vmatpush1.bf16.msra.mxu0 %v1595
      %1616 = vmatprep.subr.bf16.mxu0 %v1598
      %1617 = vmatpush1.bf16.msra.mxu0 %v1597
      %1618 = vmatprep.subr.bf16.mxu0 %v1600
      %1619 = vmatpush1.bf16.msra.mxu0 %v1599
      %1620 = vmatprep.subr.bf16.mxu0 %v1602
      %1621 = vmatpush1.bf16.msra.mxu0 %v1601
      %1622 = vmatprep.subr.bf16.mxu0 0
      %1623 = vmatpush1.bf16.msra.mxu0 0
      %1624 = vmatprep.subr.bf16.mxu0 0
      %1625 = vmatpush1.bf16.msra.mxu0 0
      %1626 = vmatprep.subr.bf16.mxu0 0
      %1627 = vmatpush1.bf16.msra.mxu0 0
      %1628 = vmatprep.subr.bf16.mxu0 0
      %1629 = vmatpush1.bf16.msra.mxu0 0
      %1630 = vmatprep.subr.bf16.mxu0 0
      %1631 = vmatpush1.bf16.msra.mxu0 0
      %1632 = vmatprep.subr.bf16.mxu0 0
      %1633 = vmatpush1.bf16.msra.mxu0 0
      %1634 = vmatprep.subr.bf16.mxu0 0
      %1635 = vmatpush1.bf16.msra.mxu0 0
      %1636 = vmatprep.subr.bf16.mxu0 0
      %1637 = vmatpush1.bf16.msra.mxu0 0
      %1638 = vmatprep.subr.bf16.mxu0 0
      %1639 = vmatpush1.bf16.msra.mxu0 0
      %1640 = vmatprep.subr.bf16.mxu0 0
      %1641 = vmatpush1.bf16.msra.mxu0 0
      %1642 = vmatprep.subr.bf16.mxu0 0
      %1643 = vmatpush1.bf16.msra.mxu0 0
      %1644 = vmatprep.subr.bf16.mxu0 0
      %1645 = vmatpush1.bf16.msra.mxu0 0
      %1646 = vmatprep.mubr.bf16.mxu0 0
      %1647 = vmatmul.mubr.bf16.gmra.mrb[0].mxu0 %v1612
      %v1648 = vpop.f32.mrb[0].mxu0
      %v1649 = vadd.f32 0.0, %v1648
      %v1650 = vpop.f32.mrb[0].mxu0
      %v1651 = vadd.f32 0.0, %v1650
      %v1652 = vpop.f32.mrb[0].mxu0
      %v1653 = vadd.f32 0.0, %v1652
      %v1654 = vpop.f32.mrb[0].mxu0
      %v1655 = vadd.f32 0.0, %v1654
      %1656 = vdwg.mxu0
      %v1657 = vadd.f32 %v1474, %v1649
      %v1658 = vadd.f32 %v1475, %v1651
      %v1659 = vadd.f32 %v1476, %v1653
      %v1660 = vadd.f32 %v1477, %v1655
      %s1661 = scalar_lea.vmem %s3, 96
      %v1662 = vld [vmem:[%s1661] sm:$0xff]
      %v1663 = vld [vmem:[%s1661 + $0x8] sm:$0xff]
      %v1665 = vsel %vm573, %v1662, 0
      %v1668 = vsel %vm573, %v1663, 0
      %1670 = vmatprep.subr.mxu0 0.0
      %1671 = vmatpush1.msra.mxu0 %v569
      %1672 = vmatprep.subr.mxu0 0.0
      %1673 = vmatpush1.msra.mxu0 %v570
      %1674 = vmatprep.subr.mxu0 0.0
      %1675 = vmatpush1.msra.mxu0 0.0
      %1676 = vmatprep.subr.mxu0 0.0
      %1677 = vmatpush1.msra.mxu0 0.0
      %1678 = vmatprep.subr.mxu0 0.0
      %1679 = vmatpush1.msra.mxu0 0.0
      %1680 = vmatprep.subr.mxu0 0.0
      %1681 = vmatpush1.msra.mxu0 0.0
      %1682 = vmatprep.subr.mxu0 0.0
      %1683 = vmatpush1.msra.mxu0 0.0
      %1684 = vmatprep.subr.mxu0 0.0
      %1685 = vmatpush1.msra.mxu0 0.0
      %1686 = vmatprep.subr.mxu0 0.0
      %1687 = vmatpush1.msra.mxu0 0.0
      %1688 = vmatprep.subr.mxu0 0.0
      %1689 = vmatpush1.msra.mxu0 0.0
      %1690 = vmatprep.subr.mxu0 0.0
      %1691 = vmatpush1.msra.mxu0 0.0
      %1692 = vmatprep.subr.mxu0 0.0
      %1693 = vmatpush1.msra.mxu0 0.0
      %1694 = vmatprep.subr.mxu0 0.0
      %1695 = vmatpush1.msra.mxu0 0.0
      %1696 = vmatprep.subr.mxu0 0.0
      %1697 = vmatpush1.msra.mxu0 0.0
      %1698 = vmatprep.subr.mxu0 0.0
      %1699 = vmatpush1.msra.mxu0 0.0
      %1700 = vmatprep.subr.mxu0 0.0
      %1701 = vmatpush1.msra.mxu0 0.0
      %1702 = vmatprep.subr.mxu0 0.0
      %1703 = vmatpush1.msra.mxu0 0.0
      %1704 = vmatprep.subr.mxu0 0.0
      %1705 = vmatpush1.msra.mxu0 0.0
      %1706 = vmatprep.subr.mxu0 0.0
      %1707 = vmatpush1.msra.mxu0 0.0
      %1708 = vmatprep.subr.mxu0 0.0
      %1709 = vmatpush1.msra.mxu0 0.0
      %1710 = vmatprep.subr.mxu0 0.0
      %1711 = vmatpush1.msra.mxu0 0.0
      %1712 = vmatprep.subr.mxu0 0.0
      %1713 = vmatpush1.msra.mxu0 0.0
      %1714 = vmatprep.subr.mxu0 0.0
      %1715 = vmatpush1.msra.mxu0 0.0
      %1716 = vmatprep.subr.mxu0 0.0
      %1717 = vmatpush1.msra.mxu0 0.0
      %1718 = vmatprep.subr.mxu0 0.0
      %1719 = vmatpush1.msra.mxu0 0.0
      %1720 = vmatprep.subr.mxu0 0.0
      %1721 = vmatpush1.msra.mxu0 0.0
      %1722 = vmatprep.subr.mxu0 0.0
      %1723 = vmatpush1.msra.mxu0 0.0
      %1724 = vmatprep.subr.mxu0 0.0
      %1725 = vmatpush1.msra.mxu0 0.0
      %1726 = vmatprep.subr.mxu0 0.0
      %1727 = vmatpush1.msra.mxu0 0.0
      %1728 = vmatprep.subr.mxu0 0.0
      %1729 = vmatpush1.msra.mxu0 0.0
      %1730 = vmatprep.subr.mxu0 0.0
      %1731 = vmatpush1.msra.mxu0 0.0
      %1732 = vmatprep.subr.mxu0 0.0
      %1733 = vmatpush1.msra.mxu0 0.0
      %1734 = vmatprep.mubr.f32.mxu0 0.0
      %1735 = vmatmul.mubr.f32.gmra.mrb[0].mxu0 %v1665
      %v1736 = vpop.f32.mrb[0].mxu0
      %v1737 = vadd.f32 0.0, %v1736
      %v1738 = vpop.f32.mrb[0].mxu0
      %1739 = vmatprep.mubr.f32.mxu0 0.0
      %1740 = vmatmul.mubr.f32.gmra.mrb[0].mxu0 %v1668
      %v1741 = vpop.f32.mrb[0].mxu0
      %v1742 = vadd.f32 0.0, %v1741
      %v1743 = vpop.f32.mrb[0].mxu0
      %1744 = vdwg.mxu0
      %v1745 = vpack.c.bf16 %v1742, %v1737
      %v1746 = vld [vmem:[%s4 + $0x180] sm:$0xff]
      %v1747 = vld [vmem:[%s4 + $0x188] sm:$0xff]
      %v1748 = vld [vmem:[%s4 + $0x190] sm:$0xff]
      %v1749 = vld [vmem:[%s4 + $0x198] sm:$0xff]
      %v1750 = vld [vmem:[%s4 + $0x1a0] sm:$0xff]
      %v1751 = vld [vmem:[%s4 + $0x1a8] sm:$0xff]
      %v1752 = vld [vmem:[%s4 + $0x1b0] sm:$0xff]
      %v1753 = vld [vmem:[%s4 + $0x1b8] sm:$0xff]
      %v1762 = vunpack.c.l.b16 %v1746
      %v1763 = vunpack.c.h.b16 %v1746
      %v1764 = vunpack.c.l.b16 %v1747
      %v1765 = vunpack.c.h.b16 %v1747
      %v1766 = vunpack.c.l.b16 %v1748
      %v1767 = vunpack.c.h.b16 %v1748
      %v1768 = vunpack.c.l.b16 %v1749
      %v1769 = vunpack.c.h.b16 %v1749
      %v1770 = vunpack.c.l.b16 %v1750
      %v1771 = vunpack.c.h.b16 %v1750
      %v1772 = vunpack.c.l.b16 %v1751
      %v1773 = vunpack.c.h.b16 %v1751
      %v1774 = vunpack.c.l.b16 %v1752
      %v1775 = vunpack.c.h.b16 %v1752
      %v1776 = vunpack.c.l.b16 %v1753
      %v1777 = vunpack.c.h.b16 %v1753
      %v1778 = vpack.c.b16 %v1764, %v1762
      %v1779 = vpack.c.b16 %v1765, %v1763
      %v1780 = vpack.c.b16 %v1768, %v1766
      %v1781 = vpack.c.b16 %v1769, %v1767
      %v1782 = vpack.c.b16 %v1772, %v1770
      %v1783 = vpack.c.b16 %v1773, %v1771
      %v1784 = vpack.c.b16 %v1776, %v1774
      %v1785 = vpack.c.b16 %v1777, %v1775
      %v1795 = vsel %vm527, %v1745, 0
      %1797 = vmatprep.subr.bf16.mxu0 %v1779
      %1798 = vmatpush1.bf16.msra.mxu0 %v1778
      %1799 = vmatprep.subr.bf16.mxu0 %v1781
      %1800 = vmatpush1.bf16.msra.mxu0 %v1780
      %1801 = vmatprep.subr.bf16.mxu0 %v1783
      %1802 = vmatpush1.bf16.msra.mxu0 %v1782
      %1803 = vmatprep.subr.bf16.mxu0 %v1785
      %1804 = vmatpush1.bf16.msra.mxu0 %v1784
      %1805 = vmatprep.subr.bf16.mxu0 0
      %1806 = vmatpush1.bf16.msra.mxu0 0
      %1807 = vmatprep.subr.bf16.mxu0 0
      %1808 = vmatpush1.bf16.msra.mxu0 0
      %1809 = vmatprep.subr.bf16.mxu0 0
      %1810 = vmatpush1.bf16.msra.mxu0 0
      %1811 = vmatprep.subr.bf16.mxu0 0
      %1812 = vmatpush1.bf16.msra.mxu0 0
      %1813 = vmatprep.subr.bf16.mxu0 0
      %1814 = vmatpush1.bf16.msra.mxu0 0
      %1815 = vmatprep.subr.bf16.mxu0 0
      %1816 = vmatpush1.bf16.msra.mxu0 0
      %1817 = vmatprep.subr.bf16.mxu0 0
      %1818 = vmatpush1.bf16.msra.mxu0 0
      %1819 = vmatprep.subr.bf16.mxu0 0
      %1820 = vmatpush1.bf16.msra.mxu0 0
      %1821 = vmatprep.subr.bf16.mxu0 0
      %1822 = vmatpush1.bf16.msra.mxu0 0
      %1823 = vmatprep.subr.bf16.mxu0 0
      %1824 = vmatpush1.bf16.msra.mxu0 0
      %1825 = vmatprep.subr.bf16.mxu0 0
      %1826 = vmatpush1.bf16.msra.mxu0 0
      %1827 = vmatprep.subr.bf16.mxu0 0
      %1828 = vmatpush1.bf16.msra.mxu0 0
      %1829 = vmatprep.mubr.bf16.mxu0 0
      %1830 = vmatmul.mubr.bf16.gmra.mrb[0].mxu0 %v1795
      %v1831 = vpop.f32.mrb[0].mxu0
      %v1832 = vadd.f32 0.0, %v1831
      %v1833 = vpop.f32.mrb[0].mxu0
      %v1834 = vadd.f32 0.0, %v1833
      %v1835 = vpop.f32.mrb[0].mxu0
      %v1836 = vadd.f32 0.0, %v1835
      %v1837 = vpop.f32.mrb[0].mxu0
      %v1838 = vadd.f32 0.0, %v1837
      %1839 = vdwg.mxu0
      %v1840 = vadd.f32 %v1657, %v1832
      %v1841 = vadd.f32 %v1658, %v1834
      %v1842 = vadd.f32 %v1659, %v1836
      %v1843 = vadd.f32 %v1660, %v1838
      %s1844 = scalar_lea.vmem %s3, 112
      %v1845 = vld [vmem:[%s1844] sm:$0xff]
      %v1846 = vld [vmem:[%s1844 + $0x8] sm:$0xff]
      %v1848 = vsel %vm573, %v1845, 0
      %v1851 = vsel %vm573, %v1846, 0
      %1853 = vmatprep.subr.mxu0 0.0
      %1854 = vmatpush1.msra.mxu0 %v569
      %1855 = vmatprep.subr.mxu0 0.0
      %1856 = vmatpush1.msra.mxu0 %v570
      %1857 = vmatprep.subr.mxu0 0.0
      %1858 = vmatpush1.msra.mxu0 0.0
      %1859 = vmatprep.subr.mxu0 0.0
      %1860 = vmatpush1.msra.mxu0 0.0
      %1861 = vmatprep.subr.mxu0 0.0
      %1862 = vmatpush1.msra.mxu0 0.0
      %1863 = vmatprep.subr.mxu0 0.0
      %1864 = vmatpush1.msra.mxu0 0.0
      %1865 = vmatprep.subr.mxu0 0.0
      %1866 = vmatpush1.msra.mxu0 0.0
      %1867 = vmatprep.subr.mxu0 0.0
      %1868 = vmatpush1.msra.mxu0 0.0
      %1869 = vmatprep.subr.mxu0 0.0
      %1870 = vmatpush1.msra.mxu0 0.0
      %1871 = vmatprep.subr.mxu0 0.0
      %1872 = vmatpush1.msra.mxu0 0.0
      %1873 = vmatprep.subr.mxu0 0.0
      %1874 = vmatpush1.msra.mxu0 0.0
      %1875 = vmatprep.subr.mxu0 0.0
      %1876 = vmatpush1.msra.mxu0 0.0
      %1877 = vmatprep.subr.mxu0 0.0
      %1878 = vmatpush1.msra.mxu0 0.0
      %1879 = vmatprep.subr.mxu0 0.0
      %1880 = vmatpush1.msra.mxu0 0.0
      %1881 = vmatprep.subr.mxu0 0.0
      %1882 = vmatpush1.msra.mxu0 0.0
      %1883 = vmatprep.subr.mxu0 0.0
      %1884 = vmatpush1.msra.mxu0 0.0
      %1885 = vmatprep.subr.mxu0 0.0
      %1886 = vmatpush1.msra.mxu0 0.0
      %1887 = vmatprep.subr.mxu0 0.0
      %1888 = vmatpush1.msra.mxu0 0.0
      %1889 = vmatprep.subr.mxu0 0.0
      %1890 = vmatpush1.msra.mxu0 0.0
      %1891 = vmatprep.subr.mxu0 0.0
      %1892 = vmatpush1.msra.mxu0 0.0
      %1893 = vmatprep.subr.mxu0 0.0
      %1894 = vmatpush1.msra.mxu0 0.0
      %1895 = vmatprep.subr.mxu0 0.0
      %1896 = vmatpush1.msra.mxu0 0.0
      %1897 = vmatprep.subr.mxu0 0.0
      %1898 = vmatpush1.msra.mxu0 0.0
      %1899 = vmatprep.subr.mxu0 0.0
      %1900 = vmatpush1.msra.mxu0 0.0
      %1901 = vmatprep.subr.mxu0 0.0
      %1902 = vmatpush1.msra.mxu0 0.0
      %1903 = vmatprep.subr.mxu0 0.0
      %1904 = vmatpush1.msra.mxu0 0.0
      %1905 = vmatprep.subr.mxu0 0.0
      %1906 = vmatpush1.msra.mxu0 0.0
      %1907 = vmatprep.subr.mxu0 0.0
      %1908 = vmatpush1.msra.mxu0 0.0
      %1909 = vmatprep.subr.mxu0 0.0
      %1910 = vmatpush1.msra.mxu0 0.0
      %1911 = vmatprep.subr.mxu0 0.0
      %1912 = vmatpush1.msra.mxu0 0.0
      %1913 = vmatprep.subr.mxu0 0.0
      %1914 = vmatpush1.msra.mxu0 0.0
      %1915 = vmatprep.subr.mxu0 0.0
      %1916 = vmatpush1.msra.mxu0 0.0
      %1917 = vmatprep.mubr.f32.mxu0 0.0
      %1918 = vmatmul.mubr.f32.gmra.mrb[0].mxu0 %v1848
      %v1919 = vpop.f32.mrb[0].mxu0
      %v1920 = vadd.f32 0.0, %v1919
      %v1921 = vpop.f32.mrb[0].mxu0
      %1922 = vmatprep.mubr.f32.mxu0 0.0
      %1923 = vmatmul.mubr.f32.gmra.mrb[0].mxu0 %v1851
      %v1924 = vpop.f32.mrb[0].mxu0
      %v1925 = vadd.f32 0.0, %v1924
      %v1926 = vpop.f32.mrb[0].mxu0
      %1927 = vdwg.mxu0
      %v1928 = vpack.c.bf16 %v1925, %v1920
      %v1929 = vld [vmem:[%s4 + $0x1c0] sm:$0xff]
      %v1930 = vld [vmem:[%s4 + $0x1c8] sm:$0xff]
      %v1931 = vld [vmem:[%s4 + $0x1d0] sm:$0xff]
      %v1932 = vld [vmem:[%s4 + $0x1d8] sm:$0xff]
      %v1933 = vld [vmem:[%s4 + $0x1e0] sm:$0xff]
      %v1934 = vld [vmem:[%s4 + $0x1e8] sm:$0xff]
      %v1935 = vld [vmem:[%s4 + $0x1f0] sm:$0xff]
      %v1936 = vld [vmem:[%s4 + $0x1f8] sm:$0xff]
      %v1945 = vunpack.c.l.b16 %v1929
      %v1946 = vunpack.c.h.b16 %v1929
      %v1947 = vunpack.c.l.b16 %v1930
      %v1948 = vunpack.c.h.b16 %v1930
      %v1949 = vunpack.c.l.b16 %v1931
      %v1950 = vunpack.c.h.b16 %v1931
      %v1951 = vunpack.c.l.b16 %v1932
      %v1952 = vunpack.c.h.b16 %v1932
      %v1953 = vunpack.c.l.b16 %v1933
      %v1954 = vunpack.c.h.b16 %v1933
      %v1955 = vunpack.c.l.b16 %v1934
      %v1956 = vunpack.c.h.b16 %v1934
      %v1957 = vunpack.c.l.b16 %v1935
      %v1958 = vunpack.c.h.b16 %v1935
      %v1959 = vunpack.c.l.b16 %v1936
      %v1960 = vunpack.c.h.b16 %v1936
      %v1961 = vpack.c.b16 %v1947, %v1945
      %v1962 = vpack.c.b16 %v1948, %v1946
      %v1963 = vpack.c.b16 %v1951, %v1949
      %v1964 = vpack.c.b16 %v1952, %v1950
      %v1965 = vpack.c.b16 %v1955, %v1953
      %v1966 = vpack.c.b16 %v1956, %v1954
      %v1967 = vpack.c.b16 %v1959, %v1957
      %v1968 = vpack.c.b16 %v1960, %v1958
      %v1978 = vsel %vm527, %v1928, 0
      %1980 = vmatprep.subr.bf16.mxu0 %v1962
      %1981 = vmatpush1.bf16.msra.mxu0 %v1961
      %1982 = vmatprep.subr.bf16.mxu0 %v1964
      %1983 = vmatpush1.bf16.msra.mxu0 %v1963
      %1984 = vmatprep.subr.bf16.mxu0 %v1966
      %1985 = vmatpush1.bf16.msra.mxu0 %v1965
      %1986 = vmatprep.subr.bf16.mxu0 %v1968
      %1987 = vmatpush1.bf16.msra.mxu0 %v1967
      %1988 = vmatprep.subr.bf16.mxu0 0
      %1989 = vmatpush1.bf16.msra.mxu0 0
      %1990 = vmatprep.subr.bf16.mxu0 0
      %1991 = vmatpush1.bf16.msra.mxu0 0
      %1992 = vmatprep.subr.bf16.mxu0 0
      %1993 = vmatpush1.bf16.msra.mxu0 0
      %1994 = vmatprep.subr.bf16.mxu0 0
      %1995 = vmatpush1.bf16.msra.mxu0 0
      %1996 = vmatprep.subr.bf16.mxu0 0
      %1997 = vmatpush1.bf16.msra.mxu0 0
      %1998 = vmatprep.subr.bf16.mxu0 0
      %1999 = vmatpush1.bf16.msra.mxu0 0
      %2000 = vmatprep.subr.bf16.mxu0 0
      %2001 = vmatpush1.bf16.msra.mxu0 0
      %2002 = vmatprep.subr.bf16.mxu0 0
      %2003 = vmatpush1.bf16.msra.mxu0 0
      %2004 = vmatprep.subr.bf16.mxu0 0
      %2005 = vmatpush1.bf16.msra.mxu0 0
      %2006 = vmatprep.subr.bf16.mxu0 0
      %2007 = vmatpush1.bf16.msra.mxu0 0
      %2008 = vmatprep.subr.bf16.mxu0 0
      %2009 = vmatpush1.bf16.msra.mxu0 0
      %2010 = vmatprep.subr.bf16.mxu0 0
      %2011 = vmatpush1.bf16.msra.mxu0 0
      %2012 = vmatprep.mubr.bf16.mxu0 0
      %2013 = vmatmul.mubr.bf16.gmra.mrb[0].mxu0 %v1978
      %v2014 = vpop.f32.mrb[0].mxu0
      %v2015 = vadd.f32 0.0, %v2014
      %v2016 = vpop.f32.mrb[0].mxu0
      %v2017 = vadd.f32 0.0, %v2016
      %v2018 = vpop.f32.mrb[0].mxu0
      %v2019 = vadd.f32 0.0, %v2018
      %v2020 = vpop.f32.mrb[0].mxu0
      %v2021 = vadd.f32 0.0, %v2020
      %2022 = vdwg.mxu0
      %v2023 = vadd.f32 %v1840, %v2015
      %v2024 = vadd.f32 %v1841, %v2017
      %v2025 = vadd.f32 %v1842, %v2019
      %v2026 = vadd.f32 %v1843, %v2021
      %s2027 = scalar_lea.vmem %s3, 128
      %v2028 = vld [vmem:[%s2027] sm:$0xff]
      %v2029 = vld [vmem:[%s2027 + $0x8] sm:$0xff]
      %v2031 = vsel %vm573, %v2028, 0
      %v2034 = vsel %vm573, %v2029, 0
      %2036 = vmatprep.subr.mxu0 0.0
      %2037 = vmatpush1.msra.mxu0 %v569
      %2038 = vmatprep.subr.mxu0 0.0
      %2039 = vmatpush1.msra.mxu0 %v570
      %2040 = vmatprep.subr.mxu0 0.0
      %2041 = vmatpush1.msra.mxu0 0.0
      %2042 = vmatprep.subr.mxu0 0.0
      %2043 = vmatpush1.msra.mxu0 0.0
      %2044 = vmatprep.subr.mxu0 0.0
      %2045 = vmatpush1.msra.mxu0 0.0
      %2046 = vmatprep.subr.mxu0 0.0
      %2047 = vmatpush1.msra.mxu0 0.0
      %2048 = vmatprep.subr.mxu0 0.0
      %2049 = vmatpush1.msra.mxu0 0.0
      %2050 = vmatprep.subr.mxu0 0.0
      %2051 = vmatpush1.msra.mxu0 0.0
      %2052 = vmatprep.subr.mxu0 0.0
      %2053 = vmatpush1.msra.mxu0 0.0
      %2054 = vmatprep.subr.mxu0 0.0
      %2055 = vmatpush1.msra.mxu0 0.0
      %2056 = vmatprep.subr.mxu0 0.0
      %2057 = vmatpush1.msra.mxu0 0.0
      %2058 = vmatprep.subr.mxu0 0.0
      %2059 = vmatpush1.msra.mxu0 0.0
      %2060 = vmatprep.subr.mxu0 0.0
      %2061 = vmatpush1.msra.mxu0 0.0
      %2062 = vmatprep.subr.mxu0 0.0
      %2063 = vmatpush1.msra.mxu0 0.0
      %2064 = vmatprep.subr.mxu0 0.0
      %2065 = vmatpush1.msra.mxu0 0.0
      %2066 = vmatprep.subr.mxu0 0.0
      %2067 = vmatpush1.msra.mxu0 0.0
      %2068 = vmatprep.subr.mxu0 0.0
      %2069 = vmatpush1.msra.mxu0 0.0
      %2070 = vmatprep.subr.mxu0 0.0
      %2071 = vmatpush1.msra.mxu0 0.0
      %2072 = vmatprep.subr.mxu0 0.0
      %2073 = vmatpush1.msra.mxu0 0.0
      %2074 = vmatprep.subr.mxu0 0.0
      %2075 = vmatpush1.msra.mxu0 0.0
      %2076 = vmatprep.subr.mxu0 0.0
      %2077 = vmatpush1.msra.mxu0 0.0
      %2078 = vmatprep.subr.mxu0 0.0
      %2079 = vmatpush1.msra.mxu0 0.0
      %2080 = vmatprep.subr.mxu0 0.0
      %2081 = vmatpush1.msra.mxu0 0.0
      %2082 = vmatprep.subr.mxu0 0.0
      %2083 = vmatpush1.msra.mxu0 0.0
      %2084 = vmatprep.subr.mxu0 0.0
      %2085 = vmatpush1.msra.mxu0 0.0
      %2086 = vmatprep.subr.mxu0 0.0
      %2087 = vmatpush1.msra.mxu0 0.0
      %2088 = vmatprep.subr.mxu0 0.0
      %2089 = vmatpush1.msra.mxu0 0.0
      %2090 = vmatprep.subr.mxu0 0.0
      %2091 = vmatpush1.msra.mxu0 0.0
      %2092 = vmatprep.subr.mxu0 0.0
      %2093 = vmatpush1.msra.mxu0 0.0
      %2094 = vmatprep.subr.mxu0 0.0
      %2095 = vmatpush1.msra.mxu0 0.0
      %2096 = vmatprep.subr.mxu0 0.0
      %2097 = vmatpush1.msra.mxu0 0.0
      %2098 = vmatprep.subr.mxu0 0.0
      %2099 = vmatpush1.msra.mxu0 0.0
      %2100 = vmatprep.mubr.f32.mxu0 0.0
      %2101 = vmatmul.mubr.f32.gmra.mrb[0].mxu0 %v2031
      %v2102 = vpop.f32.mrb[0].mxu0
      %v2103 = vadd.f32 0.0, %v2102
      %v2104 = vpop.f32.mrb[0].mxu0
      %2105 = vmatprep.mubr.f32.mxu0 0.0
      %2106 = vmatmul.mubr.f32.gmra.mrb[0].mxu0 %v2034
      %v2107 = vpop.f32.mrb[0].mxu0
      %v2108 = vadd.f32 0.0, %v2107
      %v2109 = vpop.f32.mrb[0].mxu0
      %2110 = vdwg.mxu0
      %v2111 = vpack.c.bf16 %v2108, %v2103
      %v2112 = vld [vmem:[%s4 + $0x200] sm:$0xff]
      %v2113 = vld [vmem:[%s4 + $0x208] sm:$0xff]
      %v2114 = vld [vmem:[%s4 + $0x210] sm:$0xff]
      %v2115 = vld [vmem:[%s4 + $0x218] sm:$0xff]
      %v2116 = vld [vmem:[%s4 + $0x220] sm:$0xff]
      %v2117 = vld [vmem:[%s4 + $0x228] sm:$0xff]
      %v2118 = vld [vmem:[%s4 + $0x230] sm:$0xff]
      %v2119 = vld [vmem:[%s4 + $0x238] sm:$0xff]
      %v2128 = vunpack.c.l.b16 %v2112
      %v2129 = vunpack.c.h.b16 %v2112
      %v2130 = vunpack.c.l.b16 %v2113
      %v2131 = vunpack.c.h.b16 %v2113
      %v2132 = vunpack.c.l.b16 %v2114
      %v2133 = vunpack.c.h.b16 %v2114
      %v2134 = vunpack.c.l.b16 %v2115
      %v2135 = vunpack.c.h.b16 %v2115
      %v2136 = vunpack.c.l.b16 %v2116
      %v2137 = vunpack.c.h.b16 %v2116
      %v2138 = vunpack.c.l.b16 %v2117
      %v2139 = vunpack.c.h.b16 %v2117
      %v2140 = vunpack.c.l.b16 %v2118
      %v2141 = vunpack.c.h.b16 %v2118
      %v2142 = vunpack.c.l.b16 %v2119
      %v2143 = vunpack.c.h.b16 %v2119
      %v2144 = vpack.c.b16 %v2130, %v2128
      %v2145 = vpack.c.b16 %v2131, %v2129
      %v2146 = vpack.c.b16 %v2134, %v2132
      %v2147 = vpack.c.b16 %v2135, %v2133
      %v2148 = vpack.c.b16 %v2138, %v2136
      %v2149 = vpack.c.b16 %v2139, %v2137
      %v2150 = vpack.c.b16 %v2142, %v2140
      %v2151 = vpack.c.b16 %v2143, %v2141
      %v2161 = vsel %vm527, %v2111, 0
      %2163 = vmatprep.subr.bf16.mxu0 %v2145
      %2164 = vmatpush1.bf16.msra.mxu0 %v2144
      %2165 = vmatprep.subr.bf16.mxu0 %v2147
      %2166 = vmatpush1.bf16.msra.mxu0 %v2146
      %2167 = vmatprep.subr.bf16.mxu0 %v2149
      %2168 = vmatpush1.bf16.msra.mxu0 %v2148
      %2169 = vmatprep.subr.bf16.mxu0 %v2151
      %2170 = vmatpush1.bf16.msra.mxu0 %v2150
      %2171 = vmatprep.subr.bf16.mxu0 0
      %2172 = vmatpush1.bf16.msra.mxu0 0
      %2173 = vmatprep.subr.bf16.mxu0 0
      %2174 = vmatpush1.bf16.msra.mxu0 0
      %2175 = vmatprep.subr.bf16.mxu0 0
      %2176 = vmatpush1.bf16.msra.mxu0 0
      %2177 = vmatprep.subr.bf16.mxu0 0
      %2178 = vmatpush1.bf16.msra.mxu0 0
      %2179 = vmatprep.subr.bf16.mxu0 0
      %2180 = vmatpush1.bf16.msra.mxu0 0
      %2181 = vmatprep.subr.bf16.mxu0 0
      %2182 = vmatpush1.bf16.msra.mxu0 0
      %2183 = vmatprep.subr.bf16.mxu0 0
      %2184 = vmatpush1.bf16.msra.mxu0 0
      %2185 = vmatprep.subr.bf16.mxu0 0
      %2186 = vmatpush1.bf16.msra.mxu0 0
      %2187 = vmatprep.subr.bf16.mxu0 0
      %2188 = vmatpush1.bf16.msra.mxu0 0
      %2189 = vmatprep.subr.bf16.mxu0 0
      %2190 = vmatpush1.bf16.msra.mxu0 0
      %2191 = vmatprep.subr.bf16.mxu0 0
      %2192 = vmatpush1.bf16.msra.mxu0 0
      %2193 = vmatprep.subr.bf16.mxu0 0
      %2194 = vmatpush1.bf16.msra.mxu0 0
      %2195 = vmatprep.mubr.bf16.mxu0 0
      %2196 = vmatmul.mubr.bf16.gmra.mrb[0].mxu0 %v2161
      %v2197 = vpop.f32.mrb[0].mxu0
      %v2198 = vadd.f32 0.0, %v2197
      %v2199 = vpop.f32.mrb[0].mxu0
      %v2200 = vadd.f32 0.0, %v2199
      %v2201 = vpop.f32.mrb[0].mxu0
      %v2202 = vadd.f32 0.0, %v2201
      %v2203 = vpop.f32.mrb[0].mxu0
      %v2204 = vadd.f32 0.0, %v2203
      %2205 = vdwg.mxu0
      %v2206 = vadd.f32 %v2023, %v2198
      %v2207 = vadd.f32 %v2024, %v2200
      %v2208 = vadd.f32 %v2025, %v2202
      %v2209 = vadd.f32 %v2026, %v2204
      %v2210 = vld [vmem:[%s5] sm:$0x3]
      %v2212 = vlaneseq
      %v2213 = vshrl.u32 %v2212, 7
      %v2214 = vsub.s32 0, %v2213
      %v2215 = vrot.slane %v2210, %v2214
      %v2216 = vlaneseq
      %v2217 = vshrl.u32 %v2216, 7
      %v2218 = vsub.s32 1, %v2217
      %v2219 = vrot.slane %v2210, %v2218
      %v2222 = vmul.f32 %v2206, %v2215
      %v2223 = vmul.f32 %v2207, %v2219
      %v2224 = vmul.f32 %v2208, %v2215
      %v2225 = vmul.f32 %v2209, %v2219
      %v2226 = vld [vmem:[%s6] sm:$0x3]
      %v2228 = vlaneseq
      %v2229 = vshrl.u32 %v2228, 7
      %v2230 = vsub.s32 0, %v2229
      %v2231 = vrot.slane %v2226, %v2230
      %v2232 = vlaneseq
      %v2233 = vshrl.u32 %v2232, 7
      %v2234 = vsub.s32 1, %v2233
      %v2235 = vrot.slane %v2226, %v2234
      %v2238 = vadd.f32 %v2222, %v2231
      %v2239 = vadd.f32 %v2223, %v2235
      %v2240 = vadd.f32 %v2224, %v2231
      %v2241 = vadd.f32 %v2225, %v2235
      %v2242 = vmax.f32 %v2238, 0.0
      %v2243 = vmax.f32 %v2239, 0.0
      %v2244 = vmax.f32 %v2240, 0.0
      %v2245 = vmax.f32 %v2241, 0.0
      %2246 = vmatprep.subr.mxu0 %v2243
      %2247 = vmatpush1.msra.mxu0 %v2242
      %2248 = vmatprep.subr.mxu0 %v2245
      %2249 = vmatpush1.msra.mxu0 %v2244
      %2250 = vmatprep.subr.mxu0 0.0
      %2251 = vmatpush1.msra.mxu0 0.0
      %2252 = vmatprep.subr.mxu0 0.0
      %2253 = vmatpush1.msra.mxu0 0.0
      %2254 = vmatprep.subr.mxu0 0.0
      %2255 = vmatpush1.msra.mxu0 0.0
      %2256 = vmatprep.subr.mxu0 0.0
      %2257 = vmatpush1.msra.mxu0 0.0
      %2258 = vmatprep.subr.mxu0 0.0
      %2259 = vmatpush1.msra.mxu0 0.0
      %2260 = vmatprep.subr.mxu0 0.0
      %2261 = vmatpush1.msra.mxu0 0.0
      %2262 = vmatprep.subr.mxu0 0.0
      %2263 = vmatpush1.msra.mxu0 0.0
      %2264 = vmatprep.subr.mxu0 0.0
      %2265 = vmatpush1.msra.mxu0 0.0
      %2266 = vmatprep.subr.mxu0 0.0
      %2267 = vmatpush1.msra.mxu0 0.0
      %2268 = vmatprep.subr.mxu0 0.0
      %2269 = vmatpush1.msra.mxu0 0.0
      %2270 = vmatprep.subr.mxu0 0.0
      %2271 = vmatpush1.msra.mxu0 0.0
      %2272 = vmatprep.subr.mxu0 0.0
      %2273 = vmatpush1.msra.mxu0 0.0
      %2274 = vmatprep.subr.mxu0 0.0
      %2275 = vmatpush1.msra.mxu0 0.0
      %2276 = vmatprep.subr.mxu0 0.0
      %2277 = vmatpush1.msra.mxu0 0.0
      %2278 = vmatprep.subr.mxu0 0.0
      %2279 = vmatpush1.msra.mxu0 0.0
      %2280 = vmatprep.subr.mxu0 0.0
      %2281 = vmatpush1.msra.mxu0 0.0
      %2282 = vmatprep.subr.mxu0 0.0
      %2283 = vmatpush1.msra.mxu0 0.0
      %2284 = vmatprep.subr.mxu0 0.0
      %2285 = vmatpush1.msra.mxu0 0.0
      %2286 = vmatprep.subr.mxu0 0.0
      %2287 = vmatpush1.msra.mxu0 0.0
      %2288 = vmatprep.subr.mxu0 0.0
      %2289 = vmatpush1.msra.mxu0 0.0
      %2290 = vmatprep.subr.mxu0 0.0
      %2291 = vmatpush1.msra.mxu0 0.0
      %2292 = vmatprep.subr.mxu0 0.0
      %2293 = vmatpush1.msra.mxu0 0.0
      %2294 = vmatprep.subr.mxu0 0.0
      %2295 = vmatpush1.msra.mxu0 0.0
      %2296 = vmatprep.subr.mxu0 0.0
      %2297 = vmatpush1.msra.mxu0 0.0
      %2298 = vmatprep.subr.mxu0 0.0
      %2299 = vmatpush1.msra.mxu0 0.0
      %2300 = vmatprep.subr.mxu0 0.0
      %2301 = vmatpush1.msra.mxu0 0.0
      %2302 = vmatprep.subr.mxu0 0.0
      %2303 = vmatpush1.msra.mxu0 0.0
      %2304 = vmatprep.subr.mxu0 0.0
      %2305 = vmatpush1.msra.mxu0 0.0
      %2306 = vmatprep.subr.mxu0 0.0
      %2307 = vmatpush1.msra.mxu0 0.0
      %2308 = vmatprep.subr.mxu0 0.0
      %2309 = vmatpush1.msra.mxu0 0.0
      %2310 = vmatprep.mubr.f32.mxu0 0.0
      %2311 = vmatmul.mubr.f32.gmra.mrb[0].mxu0 %v575
      %v2312 = vpop.f32.mrb[0].mxu0
      %v2313 = vadd.f32 0.0, %v2312
      %v2314 = vpop.f32.mrb[0].mxu0
      %v2315 = vadd.f32 0.0, %v2314
      %2316 = vmatprep.mubr.f32.mxu0 0.0
      %2317 = vmatmul.mubr.f32.gmra.mrb[0].mxu0 %v578
      %v2318 = vpop.f32.mrb[0].mxu0
      %v2319 = vadd.f32 0.0, %v2318
      %v2320 = vpop.f32.mrb[0].mxu0
      %v2321 = vadd.f32 0.0, %v2320
      %2322 = vdwg.mxu0
      %v2323 = vpack.c.bf16 %v2319, %v2313
      %v2324 = vpack.c.bf16 %v2321, %v2315
      %v2325 = vld [vmem:[%s7] sm:$0xf]
      %v2326 = vld [vmem:[%s7 + $0x4] sm:$0xf]
      %v2327 = vld [vmem:[%s7 + $0x8] sm:$0xf]
      %v2328 = vld [vmem:[%s7 + $0xc] sm:$0xf]
      %v2329 = vld [vmem:[%s7 + $0x10] sm:$0xf]
      %v2330 = vld [vmem:[%s7 + $0x14] sm:$0xf]
      %v2331 = vld [vmem:[%s7 + $0x18] sm:$0xf]
      %v2332 = vld [vmem:[%s7 + $0x1c] sm:$0xf]
      %v2333 = vld [vmem:[%s7 + $0x20] sm:$0xf]
      %v2334 = vld [vmem:[%s7 + $0x24] sm:$0xf]
      %v2335 = vld [vmem:[%s7 + $0x28] sm:$0xf]
      %v2336 = vld [vmem:[%s7 + $0x2c] sm:$0xf]
      %v2337 = vld [vmem:[%s7 + $0x30] sm:$0xf]
      %v2338 = vld [vmem:[%s7 + $0x34] sm:$0xf]
      %v2339 = vld [vmem:[%s7 + $0x38] sm:$0xf]
      %v2340 = vld [vmem:[%s7 + $0x3c] sm:$0xf]
      %v2341 = vld [vmem:[%s7 + $0x40] sm:$0xf]
      %v2342 = vld [vmem:[%s7 + $0x44] sm:$0xf]
      %v2343 = vld [vmem:[%s7 + $0x48] sm:$0xf]
      %v2344 = vld [vmem:[%s7 + $0x4c] sm:$0xf]
      %v2345 = vld [vmem:[%s7 + $0x50] sm:$0xf]
      %v2346 = vld [vmem:[%s7 + $0x54] sm:$0xf]
      %v2347 = vld [vmem:[%s7 + $0x58] sm:$0xf]
      %v2348 = vld [vmem:[%s7 + $0x5c] sm:$0xf]
      %v2349 = vld [vmem:[%s7 + $0x60] sm:$0xf]
      %v2350 = vld [vmem:[%s7 + $0x64] sm:$0xf]
      %v2351 = vld [vmem:[%s7 + $0x68] sm:$0xf]
      %v2352 = vld [vmem:[%s7 + $0x6c] sm:$0xf]
      %v2353 = vld [vmem:[%s7 + $0x70] sm:$0xf]
      %v2354 = vld [vmem:[%s7 + $0x74] sm:$0xf]
      %v2355 = vld [vmem:[%s7 + $0x78] sm:$0xf]
      %v2356 = vld [vmem:[%s7 + $0x7c] sm:$0xf]
      %2357 = vmatprep.subr.mxu0 %v2243
      %2358 = vmatpush1.msra.mxu0 %v2242
      %2359 = vmatprep.subr.mxu0 %v2245
      %2360 = vmatpush1.msra.mxu0 %v2244
      %2361 = vmatprep.subr.mxu0 0.0
      %2362 = vmatpush1.msra.mxu0 0.0
      %2363 = vmatprep.subr.mxu0 0.0
      %2364 = vmatpush1.msra.mxu0 0.0
      %2365 = vmatprep.subr.mxu0 0.0
      %2366 = vmatpush1.msra.mxu0 0.0
      %2367 = vmatprep.subr.mxu0 0.0
      %2368 = vmatpush1.msra.mxu0 0.0
      %2369 = vmatprep.subr.mxu0 0.0
      %2370 = vmatpush1.msra.mxu0 0.0
      %2371 = vmatprep.subr.mxu0 0.0
      %2372 = vmatpush1.msra.mxu0 0.0
      %2373 = vmatprep.subr.mxu0 0.0
      %2374 = vmatpush1.msra.mxu0 0.0
      %2375 = vmatprep.subr.mxu0 0.0
      %2376 = vmatpush1.msra.mxu0 0.0
      %2377 = vmatprep.subr.mxu0 0.0
      %2378 = vmatpush1.msra.mxu0 0.0
      %2379 = vmatprep.subr.mxu0 0.0
      %2380 = vmatpush1.msra.mxu0 0.0
      %2381 = vmatprep.subr.mxu0 0.0
      %2382 = vmatpush1.msra.mxu0 0.0
      %2383 = vmatprep.subr.mxu0 0.0
      %2384 = vmatpush1.msra.mxu0 0.0
      %2385 = vmatprep.subr.mxu0 0.0
      %2386 = vmatpush1.msra.mxu0 0.0
      %2387 = vmatprep.subr.mxu0 0.0
      %2388 = vmatpush1.msra.mxu0 0.0
      %2389 = vmatprep.subr.mxu0 0.0
      %2390 = vmatpush1.msra.mxu0 0.0
      %2391 = vmatprep.subr.mxu0 0.0
      %2392 = vmatpush1.msra.mxu0 0.0
      %2393 = vmatprep.subr.mxu0 0.0
      %2394 = vmatpush1.msra.mxu0 0.0
      %2395 = vmatprep.subr.mxu0 0.0
      %2396 = vmatpush1.msra.mxu0 0.0
      %2397 = vmatprep.subr.mxu0 0.0
      %2398 = vmatpush1.msra.mxu0 0.0
      %2399 = vmatprep.subr.mxu0 0.0
      %2400 = vmatpush1.msra.mxu0 0.0
      %2401 = vmatprep.subr.mxu0 0.0
      %2402 = vmatpush1.msra.mxu0 0.0
      %2403 = vmatprep.subr.mxu0 0.0
      %2404 = vmatpush1.msra.mxu0 0.0
      %2405 = vmatprep.subr.mxu0 0.0
      %2406 = vmatpush1.msra.mxu0 0.0
      %2407 = vmatprep.subr.mxu0 0.0
      %2408 = vmatpush1.msra.mxu0 0.0
      %2409 = vmatprep.subr.mxu0 0.0
      %2410 = vmatpush1.msra.mxu0 0.0
      %2411 = vmatprep.subr.mxu0 0.0
      %2412 = vmatpush1.msra.mxu0 0.0
      %2413 = vmatprep.subr.mxu0 0.0
      %2414 = vmatpush1.msra.mxu0 0.0
      %2415 = vmatprep.subr.mxu0 0.0
      %2416 = vmatpush1.msra.mxu0 0.0
      %2417 = vmatprep.subr.mxu0 0.0
      %2418 = vmatpush1.msra.mxu0 0.0
      %2419 = vmatprep.subr.mxu0 0.0
      %2420 = vmatpush1.msra.mxu0 0.0
      %2421 = vmatprep.mubr.f32.mxu0 0.0
      %2422 = vmatmul.mubr.f32.gmra.mrb[0].mxu0 %v668
      %v2423 = vpop.f32.mrb[0].mxu0
      %v2424 = vadd.f32 0.0, %v2423
      %v2425 = vpop.f32.mrb[0].mxu0
      %v2426 = vadd.f32 0.0, %v2425
      %2427 = vmatprep.mubr.f32.mxu0 0.0
      %2428 = vmatmul.mubr.f32.gmra.mrb[0].mxu0 %v671
      %v2429 = vpop.f32.mrb[0].mxu0
      %v2430 = vadd.f32 0.0, %v2429
      %v2431 = vpop.f32.mrb[0].mxu0
      %v2432 = vadd.f32 0.0, %v2431
      %2433 = vdwg.mxu0
      %v2434 = vpack.c.bf16 %v2430, %v2424
      %v2435 = vpack.c.bf16 %v2432, %v2426
      %v2436 = vld [vmem:[%s7 + $0x80] sm:$0xf]
      %v2437 = vld [vmem:[%s7 + $0x84] sm:$0xf]
      %v2438 = vld [vmem:[%s7 + $0x88] sm:$0xf]
      %v2439 = vld [vmem:[%s7 + $0x8c] sm:$0xf]
      %v2440 = vld [vmem:[%s7 + $0x90] sm:$0xf]
      %v2441 = vld [vmem:[%s7 + $0x94] sm:$0xf]
      %v2442 = vld [vmem:[%s7 + $0x98] sm:$0xf]
      %v2443 = vld [vmem:[%s7 + $0x9c] sm:$0xf]
      %v2444 = vld [vmem:[%s7 + $0xa0] sm:$0xf]
      %v2445 = vld [vmem:[%s7 + $0xa4] sm:$0xf]
      %v2446 = vld [vmem:[%s7 + $0xa8] sm:$0xf]
      %v2447 = vld [vmem:[%s7 + $0xac] sm:$0xf]
      %v2448 = vld [vmem:[%s7 + $0xb0] sm:$0xf]
      %v2449 = vld [vmem:[%s7 + $0xb4] sm:$0xf]
      %v2450 = vld [vmem:[%s7 + $0xb8] sm:$0xf]
      %v2451 = vld [vmem:[%s7 + $0xbc] sm:$0xf]
      %v2452 = vld [vmem:[%s7 + $0xc0] sm:$0xf]
      %v2453 = vld [vmem:[%s7 + $0xc4] sm:$0xf]
      %v2454 = vld [vmem:[%s7 + $0xc8] sm:$0xf]
      %v2455 = vld [vmem:[%s7 + $0xcc] sm:$0xf]
      %v2456 = vld [vmem:[%s7 + $0xd0] sm:$0xf]
      %v2457 = vld [vmem:[%s7 + $0xd4] sm:$0xf]
      %v2458 = vld [vmem:[%s7 + $0xd8] sm:$0xf]
      %v2459 = vld [vmem:[%s7 + $0xdc] sm:$0xf]
      %v2460 = vld [vmem:[%s7 + $0xe0] sm:$0xf]
      %v2461 = vld [vmem:[%s7 + $0xe4] sm:$0xf]
      %v2462 = vld [vmem:[%s7 + $0xe8] sm:$0xf]
      %v2463 = vld [vmem:[%s7 + $0xec] sm:$0xf]
      %v2464 = vld [vmem:[%s7 + $0xf0] sm:$0xf]
      %v2465 = vld [vmem:[%s7 + $0xf4] sm:$0xf]
      %v2466 = vld [vmem:[%s7 + $0xf8] sm:$0xf]
      %v2467 = vld [vmem:[%s7 + $0xfc] sm:$0xf]
      %v2500 = vunpack.c.l.b16 %v2436
      %v2501 = vunpack.c.l.b16 %v2437
      %v2502 = vunpack.c.l.b16 %v2438
      %v2503 = vunpack.c.l.b16 %v2439
      %v2504 = vunpack.c.l.b16 %v2440
      %v2505 = vunpack.c.l.b16 %v2441
      %v2506 = vunpack.c.l.b16 %v2442
      %v2507 = vunpack.c.l.b16 %v2443
      %v2508 = vunpack.c.l.b16 %v2444
      %v2509 = vunpack.c.l.b16 %v2445
      %v2510 = vunpack.c.l.b16 %v2446
      %v2511 = vunpack.c.l.b16 %v2447
      %v2512 = vunpack.c.l.b16 %v2448
      %v2513 = vunpack.c.l.b16 %v2449
      %v2514 = vunpack.c.l.b16 %v2450
      %v2515 = vunpack.c.l.b16 %v2451
      %v2516 = vunpack.c.l.b16 %v2452
      %v2517 = vunpack.c.l.b16 %v2453
      %v2518 = vunpack.c.l.b16 %v2454
      %v2519 = vunpack.c.l.b16 %v2455
      %v2520 = vunpack.c.l.b16 %v2456
      %v2521 = vunpack.c.l.b16 %v2457
      %v2522 = vunpack.c.l.b16 %v2458
      %v2523 = vunpack.c.l.b16 %v2459
      %v2524 = vunpack.c.l.b16 %v2460
      %v2525 = vunpack.c.l.b16 %v2461
      %v2526 = vunpack.c.l.b16 %v2462
      %v2527 = vunpack.c.l.b16 %v2463
      %v2528 = vunpack.c.l.b16 %v2464
      %v2529 = vunpack.c.l.b16 %v2465
      %v2530 = vunpack.c.l.b16 %v2466
      %v2531 = vunpack.c.l.b16 %v2467
      %v2532 = vpack.c.b16 %v2501, %v2500
      %v2533 = vpack.c.b16 %v2503, %v2502
      %v2534 = vpack.c.b16 %v2505, %v2504
      %v2535 = vpack.c.b16 %v2507, %v2506
      %v2536 = vpack.c.b16 %v2509, %v2508
      %v2537 = vpack.c.b16 %v2511, %v2510
      %v2538 = vpack.c.b16 %v2513, %v2512
      %v2539 = vpack.c.b16 %v2515, %v2514
      %v2540 = vpack.c.b16 %v2517, %v2516
      %v2541 = vpack.c.b16 %v2519, %v2518
      %v2542 = vpack.c.b16 %v2521, %v2520
      %v2543 = vpack.c.b16 %v2523, %v2522
      %v2544 = vpack.c.b16 %v2525, %v2524
      %v2545 = vpack.c.b16 %v2527, %v2526
      %v2546 = vpack.c.b16 %v2529, %v2528
      %v2547 = vpack.c.b16 %v2531, %v2530
      %2564 = vmatprep.subr.bf16.mxu0 0
      %2565 = vmatpush1.bf16.msra.mxu0 %v2532
      %2566 = vmatprep.subr.bf16.mxu0 0
      %2567 = vmatpush1.bf16.msra.mxu0 %v2533
      %2568 = vmatprep.subr.bf16.mxu0 0
      %2569 = vmatpush1.bf16.msra.mxu0 %v2534
      %2570 = vmatprep.subr.bf16.mxu0 0
      %2571 = vmatpush1.bf16.msra.mxu0 %v2535
      %2572 = vmatprep.subr.bf16.mxu0 0
      %2573 = vmatpush1.bf16.msra.mxu0 %v2536
      %2574 = vmatprep.subr.bf16.mxu0 0
      %2575 = vmatpush1.bf16.msra.mxu0 %v2537
      %2576 = vmatprep.subr.bf16.mxu0 0
      %2577 = vmatpush1.bf16.msra.mxu0 %v2538
      %2578 = vmatprep.subr.bf16.mxu0 0
      %2579 = vmatpush1.bf16.msra.mxu0 %v2539
      %2580 = vmatprep.subr.bf16.mxu0 0
      %2581 = vmatpush1.bf16.msra.mxu0 %v2540
      %2582 = vmatprep.subr.bf16.mxu0 0
      %2583 = vmatpush1.bf16.msra.mxu0 %v2541
      %2584 = vmatprep.subr.bf16.mxu0 0
      %2585 = vmatpush1.bf16.msra.mxu0 %v2542
      %2586 = vmatprep.subr.bf16.mxu0 0
      %2587 = vmatpush1.bf16.msra.mxu0 %v2543
      %2588 = vmatprep.subr.bf16.mxu0 0
      %2589 = vmatpush1.bf16.msra.mxu0 %v2544
      %2590 = vmatprep.subr.bf16.mxu0 0
      %2591 = vmatpush1.bf16.msra.mxu0 %v2545
      %2592 = vmatprep.subr.bf16.mxu0 0
      %2593 = vmatpush1.bf16.msra.mxu0 %v2546
      %2594 = vmatprep.subr.bf16.mxu0 0
      %2595 = vmatpush1.bf16.msra.mxu0 %v2547
      %2596 = vmatprep.mubr.bf16.mxu0 %v2435
      %2597 = vmatmul.mubr.bf16.gmra.mrb[0].mxu0 %v2434
      %v2598 = vpop.f32.mrb[0].mxu0
      %v2599 = vadd.f32 0.0, %v2598
      %v2600 = vpop.f32.mrb[0].mxu0
      %v2601 = vpop.f32.mrb[0].mxu0
      %v2602 = vadd.f32 0.0, %v2601
      %v2603 = vpop.f32.mrb[0].mxu0
      %2604 = vdwg.mxu0
      %v2637 = vunpack.c.l.b16 %v2325
      %v2638 = vunpack.c.l.b16 %v2326
      %v2639 = vunpack.c.l.b16 %v2327
      %v2640 = vunpack.c.l.b16 %v2328
      %v2641 = vunpack.c.l.b16 %v2329
      %v2642 = vunpack.c.l.b16 %v2330
      %v2643 = vunpack.c.l.b16 %v2331
      %v2644 = vunpack.c.l.b16 %v2332
      %v2645 = vunpack.c.l.b16 %v2333
      %v2646 = vunpack.c.l.b16 %v2334
      %v2647 = vunpack.c.l.b16 %v2335
      %v2648 = vunpack.c.l.b16 %v2336
      %v2649 = vunpack.c.l.b16 %v2337
      %v2650 = vunpack.c.l.b16 %v2338
      %v2651 = vunpack.c.l.b16 %v2339
      %v2652 = vunpack.c.l.b16 %v2340
      %v2653 = vunpack.c.l.b16 %v2341
      %v2654 = vunpack.c.l.b16 %v2342
      %v2655 = vunpack.c.l.b16 %v2343
      %v2656 = vunpack.c.l.b16 %v2344
      %v2657 = vunpack.c.l.b16 %v2345
      %v2658 = vunpack.c.l.b16 %v2346
      %v2659 = vunpack.c.l.b16 %v2347
      %v2660 = vunpack.c.l.b16 %v2348
      %v2661 = vunpack.c.l.b16 %v2349
      %v2662 = vunpack.c.l.b16 %v2350
      %v2663 = vunpack.c.l.b16 %v2351
      %v2664 = vunpack.c.l.b16 %v2352
      %v2665 = vunpack.c.l.b16 %v2353
      %v2666 = vunpack.c.l.b16 %v2354
      %v2667 = vunpack.c.l.b16 %v2355
      %v2668 = vunpack.c.l.b16 %v2356
      %v2669 = vpack.c.b16 %v2638, %v2637
      %v2670 = vpack.c.b16 %v2640, %v2639
      %v2671 = vpack.c.b16 %v2642, %v2641
      %v2672 = vpack.c.b16 %v2644, %v2643
      %v2673 = vpack.c.b16 %v2646, %v2645
      %v2674 = vpack.c.b16 %v2648, %v2647
      %v2675 = vpack.c.b16 %v2650, %v2649
      %v2676 = vpack.c.b16 %v2652, %v2651
      %v2677 = vpack.c.b16 %v2654, %v2653
      %v2678 = vpack.c.b16 %v2656, %v2655
      %v2679 = vpack.c.b16 %v2658, %v2657
      %v2680 = vpack.c.b16 %v2660, %v2659
      %v2681 = vpack.c.b16 %v2662, %v2661
      %v2682 = vpack.c.b16 %v2664, %v2663
      %v2683 = vpack.c.b16 %v2666, %v2665
      %v2684 = vpack.c.b16 %v2668, %v2667
      %2701 = vmatprep.subr.bf16.mxu0 0
      %2702 = vmatpush1.bf16.msra.mxu0 %v2669
      %2703 = vmatprep.subr.bf16.mxu0 0
      %2704 = vmatpush1.bf16.msra.mxu0 %v2670
      %2705 = vmatprep.subr.bf16.mxu0 0
      %2706 = vmatpush1.bf16.msra.mxu0 %v2671
      %2707 = vmatprep.subr.bf16.mxu0 0
      %2708 = vmatpush1.bf16.msra.mxu0 %v2672
      %2709 = vmatprep.subr.bf16.mxu0 0
      %2710 = vmatpush1.bf16.msra.mxu0 %v2673
      %2711 = vmatprep.subr.bf16.mxu0 0
      %2712 = vmatpush1.bf16.msra.mxu0 %v2674
      %2713 = vmatprep.subr.bf16.mxu0 0
      %2714 = vmatpush1.bf16.msra.mxu0 %v2675
      %2715 = vmatprep.subr.bf16.mxu0 0
      %2716 = vmatpush1.bf16.msra.mxu0 %v2676
      %2717 = vmatprep.subr.bf16.mxu0 0
      %2718 = vmatpush1.bf16.msra.mxu0 %v2677
      %2719 = vmatprep.subr.bf16.mxu0 0
      %2720 = vmatpush1.bf16.msra.mxu0 %v2678
      %2721 = vmatprep.subr.bf16.mxu0 0
      %2722 = vmatpush1.bf16.msra.mxu0 %v2679
      %2723 = vmatprep.subr.bf16.mxu0 0
      %2724 = vmatpush1.bf16.msra.mxu0 %v2680
      %2725 = vmatprep.subr.bf16.mxu0 0
      %2726 = vmatpush1.bf16.msra.mxu0 %v2681
      %2727 = vmatprep.subr.bf16.mxu0 0
      %2728 = vmatpush1.bf16.msra.mxu0 %v2682
      %2729 = vmatprep.subr.bf16.mxu0 0
      %2730 = vmatpush1.bf16.msra.mxu0 %v2683
      %2731 = vmatprep.subr.bf16.mxu0 0
      %2732 = vmatpush1.bf16.msra.mxu0 %v2684
      %2733 = vmatprep.mubr.bf16.mxu0 %v2324
      %2734 = vmatmul.mubr.bf16.gmra.mrb[0].mxu0 %v2323
      %v2735 = vpop.f32.mrb[0].mxu0
      %v2736 = vadd.f32 %v2599, %v2735
      %v2737 = vpop.f32.mrb[0].mxu0
      %v2738 = vpop.f32.mrb[0].mxu0
      %v2739 = vadd.f32 %v2602, %v2738
      %v2740 = vpop.f32.mrb[0].mxu0
      %2741 = vdwg.mxu0
      %2742 = vmatprep.subr.mxu0 %v2243
      %2743 = vmatpush1.msra.mxu0 %v2242
      %2744 = vmatprep.subr.mxu0 %v2245
      %2745 = vmatpush1.msra.mxu0 %v2244
      %2746 = vmatprep.subr.mxu0 0.0
      %2747 = vmatpush1.msra.mxu0 0.0
      %2748 = vmatprep.subr.mxu0 0.0
      %2749 = vmatpush1.msra.mxu0 0.0
      %2750 = vmatprep.subr.mxu0 0.0
      %2751 = vmatpush1.msra.mxu0 0.0
      %2752 = vmatprep.subr.mxu0 0.0
      %2753 = vmatpush1.msra.mxu0 0.0
      %2754 = vmatprep.subr.mxu0 0.0
      %2755 = vmatpush1.msra.mxu0 0.0
      %2756 = vmatprep.subr.mxu0 0.0
      %2757 = vmatpush1.msra.mxu0 0.0
      %2758 = vmatprep.subr.mxu0 0.0
      %2759 = vmatpush1.msra.mxu0 0.0
      %2760 = vmatprep.subr.mxu0 0.0
      %2761 = vmatpush1.msra.mxu0 0.0
      %2762 = vmatprep.subr.mxu0 0.0
      %2763 = vmatpush1.msra.mxu0 0.0
      %2764 = vmatprep.subr.mxu0 0.0
      %2765 = vmatpush1.msra.mxu0 0.0
      %2766 = vmatprep.subr.mxu0 0.0
      %2767 = vmatpush1.msra.mxu0 0.0
      %2768 = vmatprep.subr.mxu0 0.0
      %2769 = vmatpush1.msra.mxu0 0.0
      %2770 = vmatprep.subr.mxu0 0.0
      %2771 = vmatpush1.msra.mxu0 0.0
      %2772 = vmatprep.subr.mxu0 0.0
      %2773 = vmatpush1.msra.mxu0 0.0
      %2774 = vmatprep.subr.mxu0 0.0
      %2775 = vmatpush1.msra.mxu0 0.0
      %2776 = vmatprep.subr.mxu0 0.0
      %2777 = vmatpush1.msra.mxu0 0.0
      %2778 = vmatprep.subr.mxu0 0.0
      %2779 = vmatpush1.msra.mxu0 0.0
      %2780 = vmatprep.subr.mxu0 0.0
      %2781 = vmatpush1.msra.mxu0 0.0
      %2782 = vmatprep.subr.mxu0 0.0
      %2783 = vmatpush1.msra.mxu0 0.0
      %2784 = vmatprep.subr.mxu0 0.0
      %2785 = vmatpush1.msra.mxu0 0.0
      %2786 = vmatprep.subr.mxu0 0.0
      %2787 = vmatpush1.msra.mxu0 0.0
      %2788 = vmatprep.subr.mxu0 0.0
      %2789 = vmatpush1.msra.mxu0 0.0
      %2790 = vmatprep.subr.mxu0 0.0
      %2791 = vmatpush1.msra.mxu0 0.0
      %2792 = vmatprep.subr.mxu0 0.0
      %2793 = vmatpush1.msra.mxu0 0.0
      %2794 = vmatprep.subr.mxu0 0.0
      %2795 = vmatpush1.msra.mxu0 0.0
      %2796 = vmatprep.subr.mxu0 0.0
      %2797 = vmatpush1.msra.mxu0 0.0
      %2798 = vmatprep.subr.mxu0 0.0
      %2799 = vmatpush1.msra.mxu0 0.0
      %2800 = vmatprep.subr.mxu0 0.0
      %2801 = vmatpush1.msra.mxu0 0.0
      %2802 = vmatprep.subr.mxu0 0.0
      %2803 = vmatpush1.msra.mxu0 0.0
      %2804 = vmatprep.subr.mxu0 0.0
      %2805 = vmatpush1.msra.mxu0 0.0
      %2806 = vmatprep.mubr.f32.mxu0 0.0
      %2807 = vmatmul.mubr.f32.gmra.mrb[0].mxu0 %v933
      %v2808 = vpop.f32.mrb[0].mxu0
      %v2809 = vadd.f32 0.0, %v2808
      %v2810 = vpop.f32.mrb[0].mxu0
      %v2811 = vadd.f32 0.0, %v2810
      %2812 = vmatprep.mubr.f32.mxu0 0.0
      %2813 = vmatmul.mubr.f32.gmra.mrb[0].mxu0 %v936
      %v2814 = vpop.f32.mrb[0].mxu0
      %v2815 = vadd.f32 0.0, %v2814
      %v2816 = vpop.f32.mrb[0].mxu0
      %v2817 = vadd.f32 0.0, %v2816
      %2818 = vdwg.mxu0
      %v2819 = vpack.c.bf16 %v2815, %v2809
      %v2820 = vpack.c.bf16 %v2817, %v2811
      %v2821 = vld [vmem:[%s7 + $0x100] sm:$0xf]
      %v2822 = vld [vmem:[%s7 + $0x104] sm:$0xf]
      %v2823 = vld [vmem:[%s7 + $0x108] sm:$0xf]
      %v2824 = vld [vmem:[%s7 + $0x10c] sm:$0xf]
      %v2825 = vld [vmem:[%s7 + $0x110] sm:$0xf]
      %v2826 = vld [vmem:[%s7 + $0x114] sm:$0xf]
      %v2827 = vld [vmem:[%s7 + $0x118] sm:$0xf]
      %v2828 = vld [vmem:[%s7 + $0x11c] sm:$0xf]
      %v2829 = vld [vmem:[%s7 + $0x120] sm:$0xf]
      %v2830 = vld [vmem:[%s7 + $0x124] sm:$0xf]
      %v2831 = vld [vmem:[%s7 + $0x128] sm:$0xf]
      %v2832 = vld [vmem:[%s7 + $0x12c] sm:$0xf]
      %v2833 = vld [vmem:[%s7 + $0x130] sm:$0xf]
      %v2834 = vld [vmem:[%s7 + $0x134] sm:$0xf]
      %v2835 = vld [vmem:[%s7 + $0x138] sm:$0xf]
      %v2836 = vld [vmem:[%s7 + $0x13c] sm:$0xf]
      %v2837 = vld [vmem:[%s7 + $0x140] sm:$0xf]
      %v2838 = vld [vmem:[%s7 + $0x144] sm:$0xf]
      %v2839 = vld [vmem:[%s7 + $0x148] sm:$0xf]
      %v2840 = vld [vmem:[%s7 + $0x14c] sm:$0xf]
      %v2841 = vld [vmem:[%s7 + $0x150] sm:$0xf]
      %v2842 = vld [vmem:[%s7 + $0x154] sm:$0xf]
      %v2843 = vld [vmem:[%s7 + $0x158] sm:$0xf]
      %v2844 = vld [vmem:[%s7 + $0x15c] sm:$0xf]
      %v2845 = vld [vmem:[%s7 + $0x160] sm:$0xf]
      %v2846 = vld [vmem:[%s7 + $0x164] sm:$0xf]
      %v2847 = vld [vmem:[%s7 + $0x168] sm:$0xf]
      %v2848 = vld [vmem:[%s7 + $0x16c] sm:$0xf]
      %v2849 = vld [vmem:[%s7 + $0x170] sm:$0xf]
      %v2850 = vld [vmem:[%s7 + $0x174] sm:$0xf]
      %v2851 = vld [vmem:[%s7 + $0x178] sm:$0xf]
      %v2852 = vld [vmem:[%s7 + $0x17c] sm:$0xf]
      %v2885 = vunpack.c.l.b16 %v2821
      %v2886 = vunpack.c.l.b16 %v2822
      %v2887 = vunpack.c.l.b16 %v2823
      %v2888 = vunpack.c.l.b16 %v2824
      %v2889 = vunpack.c.l.b16 %v2825
      %v2890 = vunpack.c.l.b16 %v2826
      %v2891 = vunpack.c.l.b16 %v2827
      %v2892 = vunpack.c.l.b16 %v2828
      %v2893 = vunpack.c.l.b16 %v2829
      %v2894 = vunpack.c.l.b16 %v2830
      %v2895 = vunpack.c.l.b16 %v2831
      %v2896 = vunpack.c.l.b16 %v2832
      %v2897 = vunpack.c.l.b16 %v2833
      %v2898 = vunpack.c.l.b16 %v2834
      %v2899 = vunpack.c.l.b16 %v2835
      %v2900 = vunpack.c.l.b16 %v2836
      %v2901 = vunpack.c.l.b16 %v2837
      %v2902 = vunpack.c.l.b16 %v2838
      %v2903 = vunpack.c.l.b16 %v2839
      %v2904 = vunpack.c.l.b16 %v2840
      %v2905 = vunpack.c.l.b16 %v2841
      %v2906 = vunpack.c.l.b16 %v2842
      %v2907 = vunpack.c.l.b16 %v2843
      %v2908 = vunpack.c.l.b16 %v2844
      %v2909 = vunpack.c.l.b16 %v2845
      %v2910 = vunpack.c.l.b16 %v2846
      %v2911 = vunpack.c.l.b16 %v2847
      %v2912 = vunpack.c.l.b16 %v2848
      %v2913 = vunpack.c.l.b16 %v2849
      %v2914 = vunpack.c.l.b16 %v2850
      %v2915 = vunpack.c.l.b16 %v2851
      %v2916 = vunpack.c.l.b16 %v2852
      %v2917 = vpack.c.b16 %v2886, %v2885
      %v2918 = vpack.c.b16 %v2888, %v2887
      %v2919 = vpack.c.b16 %v2890, %v2889
      %v2920 = vpack.c.b16 %v2892, %v2891
      %v2921 = vpack.c.b16 %v2894, %v2893
      %v2922 = vpack.c.b16 %v2896, %v2895
      %v2923 = vpack.c.b16 %v2898, %v2897
      %v2924 = vpack.c.b16 %v2900, %v2899
      %v2925 = vpack.c.b16 %v2902, %v2901
      %v2926 = vpack.c.b16 %v2904, %v2903
      %v2927 = vpack.c.b16 %v2906, %v2905
      %v2928 = vpack.c.b16 %v2908, %v2907
      %v2929 = vpack.c.b16 %v2910, %v2909
      %v2930 = vpack.c.b16 %v2912, %v2911
      %v2931 = vpack.c.b16 %v2914, %v2913
      %v2932 = vpack.c.b16 %v2916, %v2915
      %2949 = vmatprep.subr.bf16.mxu0 0
      %2950 = vmatpush1.bf16.msra.mxu0 %v2917
      %2951 = vmatprep.subr.bf16.mxu0 0
      %2952 = vmatpush1.bf16.msra.mxu0 %v2918
      %2953 = vmatprep.subr.bf16.mxu0 0
      %2954 = vmatpush1.bf16.msra.mxu0 %v2919
      %2955 = vmatprep.subr.bf16.mxu0 0
      %2956 = vmatpush1.bf16.msra.mxu0 %v2920
      %2957 = vmatprep.subr.bf16.mxu0 0
      %2958 = vmatpush1.bf16.msra.mxu0 %v2921
      %2959 = vmatprep.subr.bf16.mxu0 0
      %2960 = vmatpush1.bf16.msra.mxu0 %v2922
      %2961 = vmatprep.subr.bf16.mxu0 0
      %2962 = vmatpush1.bf16.msra.mxu0 %v2923
      %2963 = vmatprep.subr.bf16.mxu0 0
      %2964 = vmatpush1.bf16.msra.mxu0 %v2924
      %2965 = vmatprep.subr.bf16.mxu0 0
      %2966 = vmatpush1.bf16.msra.mxu0 %v2925
      %2967 = vmatprep.subr.bf16.mxu0 0
      %2968 = vmatpush1.bf16.msra.mxu0 %v2926
      %2969 = vmatprep.subr.bf16.mxu0 0
      %2970 = vmatpush1.bf16.msra.mxu0 %v2927
      %2971 = vmatprep.subr.bf16.mxu0 0
      %2972 = vmatpush1.bf16.msra.mxu0 %v2928
      %2973 = vmatprep.subr.bf16.mxu0 0
      %2974 = vmatpush1.bf16.msra.mxu0 %v2929
      %2975 = vmatprep.subr.bf16.mxu0 0
      %2976 = vmatpush1.bf16.msra.mxu0 %v2930
      %2977 = vmatprep.subr.bf16.mxu0 0
      %2978 = vmatpush1.bf16.msra.mxu0 %v2931
      %2979 = vmatprep.subr.bf16.mxu0 0
      %2980 = vmatpush1.bf16.msra.mxu0 %v2932
      %2981 = vmatprep.mubr.bf16.mxu0 %v2820
      %2982 = vmatmul.mubr.bf16.gmra.mrb[0].mxu0 %v2819
      %v2983 = vpop.f32.mrb[0].mxu0
      %v2984 = vadd.f32 0.0, %v2983
      %v2985 = vpop.f32.mrb[0].mxu0
      %v2986 = vpop.f32.mrb[0].mxu0
      %v2987 = vadd.f32 0.0, %v2986
      %v2988 = vpop.f32.mrb[0].mxu0
      %2989 = vdwg.mxu0
      %v2990 = vadd.f32 %v2736, %v2984
      %v2991 = vadd.f32 %v2739, %v2987
      %2992 = vmatprep.subr.mxu0 %v2243
      %2993 = vmatpush1.msra.mxu0 %v2242
      %2994 = vmatprep.subr.mxu0 %v2245
      %2995 = vmatpush1.msra.mxu0 %v2244
      %2996 = vmatprep.subr.mxu0 0.0
      %2997 = vmatpush1.msra.mxu0 0.0
      %2998 = vmatprep.subr.mxu0 0.0
      %2999 = vmatpush1.msra.mxu0 0.0
      %3000 = vmatprep.subr.mxu0 0.0
      %3001 = vmatpush1.msra.mxu0 0.0
      %3002 = vmatprep.subr.mxu0 0.0
      %3003 = vmatpush1.msra.mxu0 0.0
      %3004 = vmatprep.subr.mxu0 0.0
      %3005 = vmatpush1.msra.mxu0 0.0
      %3006 = vmatprep.subr.mxu0 0.0
      %3007 = vmatpush1.msra.mxu0 0.0
      %3008 = vmatprep.subr.mxu0 0.0
      %3009 = vmatpush1.msra.mxu0 0.0
      %3010 = vmatprep.subr.mxu0 0.0
      %3011 = vmatpush1.msra.mxu0 0.0
      %3012 = vmatprep.subr.mxu0 0.0
      %3013 = vmatpush1.msra.mxu0 0.0
      %3014 = vmatprep.subr.mxu0 0.0
      %3015 = vmatpush1.msra.mxu0 0.0
      %3016 = vmatprep.subr.mxu0 0.0
      %3017 = vmatpush1.msra.mxu0 0.0
      %3018 = vmatprep.subr.mxu0 0.0
      %3019 = vmatpush1.msra.mxu0 0.0
      %3020 = vmatprep.subr.mxu0 0.0
      %3021 = vmatpush1.msra.mxu0 0.0
      %3022 = vmatprep.subr.mxu0 0.0
      %3023 = vmatpush1.msra.mxu0 0.0
      %3024 = vmatprep.subr.mxu0 0.0
      %3025 = vmatpush1.msra.mxu0 0.0
      %3026 = vmatprep.subr.mxu0 0.0
      %3027 = vmatpush1.msra.mxu0 0.0
      %3028 = vmatprep.subr.mxu0 0.0
      %3029 = vmatpush1.msra.mxu0 0.0
      %3030 = vmatprep.subr.mxu0 0.0
      %3031 = vmatpush1.msra.mxu0 0.0
      %3032 = vmatprep.subr.mxu0 0.0
      %3033 = vmatpush1.msra.mxu0 0.0
      %3034 = vmatprep.subr.mxu0 0.0
      %3035 = vmatpush1.msra.mxu0 0.0
      %3036 = vmatprep.subr.mxu0 0.0
      %3037 = vmatpush1.msra.mxu0 0.0
      %3038 = vmatprep.subr.mxu0 0.0
      %3039 = vmatpush1.msra.mxu0 0.0
      %3040 = vmatprep.subr.mxu0 0.0
      %3041 = vmatpush1.msra.mxu0 0.0
      %3042 = vmatprep.subr.mxu0 0.0
      %3043 = vmatpush1.msra.mxu0 0.0
      %3044 = vmatprep.subr.mxu0 0.0
      %3045 = vmatpush1.msra.mxu0 0.0
      %3046 = vmatprep.subr.mxu0 0.0
      %3047 = vmatpush1.msra.mxu0 0.0
      %3048 = vmatprep.subr.mxu0 0.0
      %3049 = vmatpush1.msra.mxu0 0.0
      %3050 = vmatprep.subr.mxu0 0.0
      %3051 = vmatpush1.msra.mxu0 0.0
      %3052 = vmatprep.subr.mxu0 0.0
      %3053 = vmatpush1.msra.mxu0 0.0
      %3054 = vmatprep.subr.mxu0 0.0
      %3055 = vmatpush1.msra.mxu0 0.0
      %3056 = vmatprep.mubr.f32.mxu0 0.0
      %3057 = vmatmul.mubr.f32.gmra.mrb[0].mxu0 %v1116
      %v3058 = vpop.f32.mrb[0].mxu0
      %v3059 = vadd.f32 0.0, %v3058
      %v3060 = vpop.f32.mrb[0].mxu0
      %v3061 = vadd.f32 0.0, %v3060
      %3062 = vmatprep.mubr.f32.mxu0 0.0
      %3063 = vmatmul.mubr.f32.gmra.mrb[0].mxu0 %v1119
      %v3064 = vpop.f32.mrb[0].mxu0
      %v3065 = vadd.f32 0.0, %v3064
      %v3066 = vpop.f32.mrb[0].mxu0
      %v3067 = vadd.f32 0.0, %v3066
      %3068 = vdwg.mxu0
      %v3069 = vpack.c.bf16 %v3065, %v3059
      %v3070 = vpack.c.bf16 %v3067, %v3061
      %v3071 = vld [vmem:[%s7 + $0x180] sm:$0xf]
      %v3072 = vld [vmem:[%s7 + $0x184] sm:$0xf]
      %v3073 = vld [vmem:[%s7 + $0x188] sm:$0xf]
      %v3074 = vld [vmem:[%s7 + $0x18c] sm:$0xf]
      %v3075 = vld [vmem:[%s7 + $0x190] sm:$0xf]
      %v3076 = vld [vmem:[%s7 + $0x194] sm:$0xf]
      %v3077 = vld [vmem:[%s7 + $0x198] sm:$0xf]
      %v3078 = vld [vmem:[%s7 + $0x19c] sm:$0xf]
      %v3079 = vld [vmem:[%s7 + $0x1a0] sm:$0xf]
      %v3080 = vld [vmem:[%s7 + $0x1a4] sm:$0xf]
      %v3081 = vld [vmem:[%s7 + $0x1a8] sm:$0xf]
      %v3082 = vld [vmem:[%s7 + $0x1ac] sm:$0xf]
      %v3083 = vld [vmem:[%s7 + $0x1b0] sm:$0xf]
      %v3084 = vld [vmem:[%s7 + $0x1b4] sm:$0xf]
      %v3085 = vld [vmem:[%s7 + $0x1b8] sm:$0xf]
      %v3086 = vld [vmem:[%s7 + $0x1bc] sm:$0xf]
      %v3087 = vld [vmem:[%s7 + $0x1c0] sm:$0xf]
      %v3088 = vld [vmem:[%s7 + $0x1c4] sm:$0xf]
      %v3089 = vld [vmem:[%s7 + $0x1c8] sm:$0xf]
      %v3090 = vld [vmem:[%s7 + $0x1cc] sm:$0xf]
      %v3091 = vld [vmem:[%s7 + $0x1d0] sm:$0xf]
      %v3092 = vld [vmem:[%s7 + $0x1d4] sm:$0xf]
      %v3093 = vld [vmem:[%s7 + $0x1d8] sm:$0xf]
      %v3094 = vld [vmem:[%s7 + $0x1dc] sm:$0xf]
      %v3095 = vld [vmem:[%s7 + $0x1e0] sm:$0xf]
      %v3096 = vld [vmem:[%s7 + $0x1e4] sm:$0xf]
      %v3097 = vld [vmem:[%s7 + $0x1e8] sm:$0xf]
      %v3098 = vld [vmem:[%s7 + $0x1ec] sm:$0xf]
      %v3099 = vld [vmem:[%s7 + $0x1f0] sm:$0xf]
      %v3100 = vld [vmem:[%s7 + $0x1f4] sm:$0xf]
      %v3101 = vld [vmem:[%s7 + $0x1f8] sm:$0xf]
      %v3102 = vld [vmem:[%s7 + $0x1fc] sm:$0xf]
      %v3135 = vunpack.c.l.b16 %v3071
      %v3136 = vunpack.c.l.b16 %v3072
      %v3137 = vunpack.c.l.b16 %v3073
      %v3138 = vunpack.c.l.b16 %v3074
      %v3139 = vunpack.c.l.b16 %v3075
      %v3140 = vunpack.c.l.b16 %v3076
      %v3141 = vunpack.c.l.b16 %v3077
      %v3142 = vunpack.c.l.b16 %v3078
      %v3143 = vunpack.c.l.b16 %v3079
      %v3144 = vunpack.c.l.b16 %v3080
      %v3145 = vunpack.c.l.b16 %v3081
      %v3146 = vunpack.c.l.b16 %v3082
      %v3147 = vunpack.c.l.b16 %v3083
      %v3148 = vunpack.c.l.b16 %v3084
      %v3149 = vunpack.c.l.b16 %v3085
      %v3150 = vunpack.c.l.b16 %v3086
      %v3151 = vunpack.c.l.b16 %v3087
      %v3152 = vunpack.c.l.b16 %v3088
      %v3153 = vunpack.c.l.b16 %v3089
      %v3154 = vunpack.c.l.b16 %v3090
      %v3155 = vunpack.c.l.b16 %v3091
      %v3156 = vunpack.c.l.b16 %v3092
      %v3157 = vunpack.c.l.b16 %v3093
      %v3158 = vunpack.c.l.b16 %v3094
      %v3159 = vunpack.c.l.b16 %v3095
      %v3160 = vunpack.c.l.b16 %v3096
      %v3161 = vunpack.c.l.b16 %v3097
      %v3162 = vunpack.c.l.b16 %v3098
      %v3163 = vunpack.c.l.b16 %v3099
      %v3164 = vunpack.c.l.b16 %v3100
      %v3165 = vunpack.c.l.b16 %v3101
      %v3166 = vunpack.c.l.b16 %v3102
      %v3167 = vpack.c.b16 %v3136, %v3135
      %v3168 = vpack.c.b16 %v3138, %v3137
      %v3169 = vpack.c.b16 %v3140, %v3139
      %v3170 = vpack.c.b16 %v3142, %v3141
      %v3171 = vpack.c.b16 %v3144, %v3143
      %v3172 = vpack.c.b16 %v3146, %v3145
      %v3173 = vpack.c.b16 %v3148, %v3147
      %v3174 = vpack.c.b16 %v3150, %v3149
      %v3175 = vpack.c.b16 %v3152, %v3151
      %v3176 = vpack.c.b16 %v3154, %v3153
      %v3177 = vpack.c.b16 %v3156, %v3155
      %v3178 = vpack.c.b16 %v3158, %v3157
      %v3179 = vpack.c.b16 %v3160, %v3159
      %v3180 = vpack.c.b16 %v3162, %v3161
      %v3181 = vpack.c.b16 %v3164, %v3163
      %v3182 = vpack.c.b16 %v3166, %v3165
      %3199 = vmatprep.subr.bf16.mxu0 0
      %3200 = vmatpush1.bf16.msra.mxu0 %v3167
      %3201 = vmatprep.subr.bf16.mxu0 0
      %3202 = vmatpush1.bf16.msra.mxu0 %v3168
      %3203 = vmatprep.subr.bf16.mxu0 0
      %3204 = vmatpush1.bf16.msra.mxu0 %v3169
      %3205 = vmatprep.subr.bf16.mxu0 0
      %3206 = vmatpush1.bf16.msra.mxu0 %v3170
      %3207 = vmatprep.subr.bf16.mxu0 0
      %3208 = vmatpush1.bf16.msra.mxu0 %v3171
      %3209 = vmatprep.subr.bf16.mxu0 0
      %3210 = vmatpush1.bf16.msra.mxu0 %v3172
      %3211 = vmatprep.subr.bf16.mxu0 0
      %3212 = vmatpush1.bf16.msra.mxu0 %v3173
      %3213 = vmatprep.subr.bf16.mxu0 0
      %3214 = vmatpush1.bf16.msra.mxu0 %v3174
      %3215 = vmatprep.subr.bf16.mxu0 0
      %3216 = vmatpush1.bf16.msra.mxu0 %v3175
      %3217 = vmatprep.subr.bf16.mxu0 0
      %3218 = vmatpush1.bf16.msra.mxu0 %v3176
      %3219 = vmatprep.subr.bf16.mxu0 0
      %3220 = vmatpush1.bf16.msra.mxu0 %v3177
      %3221 = vmatprep.subr.bf16.mxu0 0
      %3222 = vmatpush1.bf16.msra.mxu0 %v3178
      %3223 = vmatprep.subr.bf16.mxu0 0
      %3224 = vmatpush1.bf16.msra.mxu0 %v3179
      %3225 = vmatprep.subr.bf16.mxu0 0
      %3226 = vmatpush1.bf16.msra.mxu0 %v3180
      %3227 = vmatprep.subr.bf16.mxu0 0
      %3228 = vmatpush1.bf16.msra.mxu0 %v3181
      %3229 = vmatprep.subr.bf16.mxu0 0
      %3230 = vmatpush1.bf16.msra.mxu0 %v3182
      %3231 = vmatprep.mubr.bf16.mxu0 %v3070
      %3232 = vmatmul.mubr.bf16.gmra.mrb[0].mxu0 %v3069
      %v3233 = vpop.f32.mrb[0].mxu0
      %v3234 = vadd.f32 0.0, %v3233
      %v3235 = vpop.f32.mrb[0].mxu0
      %v3236 = vpop.f32.mrb[0].mxu0
      %v3237 = vadd.f32 0.0, %v3236
      %v3238 = vpop.f32.mrb[0].mxu0
      %3239 = vdwg.mxu0
      %v3240 = vadd.f32 %v2990, %v3234
      %v3241 = vadd.f32 %v2991, %v3237
      %3242 = vmatprep.subr.mxu0 %v2243
      %3243 = vmatpush1.msra.mxu0 %v2242
      %3244 = vmatprep.subr.mxu0 %v2245
      %3245 = vmatpush1.msra.mxu0 %v2244
      %3246 = vmatprep.subr.mxu0 0.0
      %3247 = vmatpush1.msra.mxu0 0.0
      %3248 = vmatprep.subr.mxu0 0.0
      %3249 = vmatpush1.msra.mxu0 0.0
      %3250 = vmatprep.subr.mxu0 0.0
      %3251 = vmatpush1.msra.mxu0 0.0
      %3252 = vmatprep.subr.mxu0 0.0
      %3253 = vmatpush1.msra.mxu0 0.0
      %3254 = vmatprep.subr.mxu0 0.0
      %3255 = vmatpush1.msra.mxu0 0.0
      %3256 = vmatprep.subr.mxu0 0.0
      %3257 = vmatpush1.msra.mxu0 0.0
      %3258 = vmatprep.subr.mxu0 0.0
      %3259 = vmatpush1.msra.mxu0 0.0
      %3260 = vmatprep.subr.mxu0 0.0
      %3261 = vmatpush1.msra.mxu0 0.0
      %3262 = vmatprep.subr.mxu0 0.0
      %3263 = vmatpush1.msra.mxu0 0.0
      %3264 = vmatprep.subr.mxu0 0.0
      %3265 = vmatpush1.msra.mxu0 0.0
      %3266 = vmatprep.subr.mxu0 0.0
      %3267 = vmatpush1.msra.mxu0 0.0
      %3268 = vmatprep.subr.mxu0 0.0
      %3269 = vmatpush1.msra.mxu0 0.0
      %3270 = vmatprep.subr.mxu0 0.0
      %3271 = vmatpush1.msra.mxu0 0.0
      %3272 = vmatprep.subr.mxu0 0.0
      %3273 = vmatpush1.msra.mxu0 0.0
      %3274 = vmatprep.subr.mxu0 0.0
      %3275 = vmatpush1.msra.mxu0 0.0
      %3276 = vmatprep.subr.mxu0 0.0
      %3277 = vmatpush1.msra.mxu0 0.0
      %3278 = vmatprep.subr.mxu0 0.0
      %3279 = vmatpush1.msra.mxu0 0.0
      %3280 = vmatprep.subr.mxu0 0.0
      %3281 = vmatpush1.msra.mxu0 0.0
      %3282 = vmatprep.subr.mxu0 0.0
      %3283 = vmatpush1.msra.mxu0 0.0
      %3284 = vmatprep.subr.mxu0 0.0
      %3285 = vmatpush1.msra.mxu0 0.0
      %3286 = vmatprep.subr.mxu0 0.0
      %3287 = vmatpush1.msra.mxu0 0.0
      %3288 = vmatprep.subr.mxu0 0.0
      %3289 = vmatpush1.msra.mxu0 0.0
      %3290 = vmatprep.subr.mxu0 0.0
      %3291 = vmatpush1.msra.mxu0 0.0
      %3292 = vmatprep.subr.mxu0 0.0
      %3293 = vmatpush1.msra.mxu0 0.0
      %3294 = vmatprep.subr.mxu0 0.0
      %3295 = vmatpush1.msra.mxu0 0.0
      %3296 = vmatprep.subr.mxu0 0.0
      %3297 = vmatpush1.msra.mxu0 0.0
      %3298 = vmatprep.subr.mxu0 0.0
      %3299 = vmatpush1.msra.mxu0 0.0
      %3300 = vmatprep.subr.mxu0 0.0
      %3301 = vmatpush1.msra.mxu0 0.0
      %3302 = vmatprep.subr.mxu0 0.0
      %3303 = vmatpush1.msra.mxu0 0.0
      %3304 = vmatprep.subr.mxu0 0.0
      %3305 = vmatpush1.msra.mxu0 0.0
      %3306 = vmatprep.mubr.f32.mxu0 0.0
      %3307 = vmatmul.mubr.f32.gmra.mrb[0].mxu0 %v1299
      %v3308 = vpop.f32.mrb[0].mxu0
      %v3309 = vadd.f32 0.0, %v3308
      %v3310 = vpop.f32.mrb[0].mxu0
      %v3311 = vadd.f32 0.0, %v3310
      %3312 = vmatprep.mubr.f32.mxu0 0.0
      %3313 = vmatmul.mubr.f32.gmra.mrb[0].mxu0 %v1302
      %v3314 = vpop.f32.mrb[0].mxu0
      %v3315 = vadd.f32 0.0, %v3314
      %v3316 = vpop.f32.mrb[0].mxu0
      %v3317 = vadd.f32 0.0, %v3316
      %3318 = vdwg.mxu0
      %v3319 = vpack.c.bf16 %v3315, %v3309
      %v3320 = vpack.c.bf16 %v3317, %v3311
      %v3321 = vld [vmem:[%s7 + $0x200] sm:$0xf]
      %v3322 = vld [vmem:[%s7 + $0x204] sm:$0xf]
      %v3323 = vld [vmem:[%s7 + $0x208] sm:$0xf]
      %v3324 = vld [vmem:[%s7 + $0x20c] sm:$0xf]
      %v3325 = vld [vmem:[%s7 + $0x210] sm:$0xf]
      %v3326 = vld [vmem:[%s7 + $0x214] sm:$0xf]
      %v3327 = vld [vmem:[%s7 + $0x218] sm:$0xf]
      %v3328 = vld [vmem:[%s7 + $0x21c] sm:$0xf]
      %v3329 = vld [vmem:[%s7 + $0x220] sm:$0xf]
      %v3330 = vld [vmem:[%s7 + $0x224] sm:$0xf]
      %v3331 = vld [vmem:[%s7 + $0x228] sm:$0xf]
      %v3332 = vld [vmem:[%s7 + $0x22c] sm:$0xf]
      %v3333 = vld [vmem:[%s7 + $0x230] sm:$0xf]
      %v3334 = vld [vmem:[%s7 + $0x234] sm:$0xf]
      %v3335 = vld [vmem:[%s7 + $0x238] sm:$0xf]
      %v3336 = vld [vmem:[%s7 + $0x23c] sm:$0xf]
      %v3337 = vld [vmem:[%s7 + $0x240] sm:$0xf]
      %v3338 = vld [vmem:[%s7 + $0x244] sm:$0xf]
      %v3339 = vld [vmem:[%s7 + $0x248] sm:$0xf]
      %v3340 = vld [vmem:[%s7 + $0x24c] sm:$0xf]
      %v3341 = vld [vmem:[%s7 + $0x250] sm:$0xf]
      %v3342 = vld [vmem:[%s7 + $0x254] sm:$0xf]
      %v3343 = vld [vmem:[%s7 + $0x258] sm:$0xf]
      %v3344 = vld [vmem:[%s7 + $0x25c] sm:$0xf]
      %v3345 = vld [vmem:[%s7 + $0x260] sm:$0xf]
      %v3346 = vld [vmem:[%s7 + $0x264] sm:$0xf]
      %v3347 = vld [vmem:[%s7 + $0x268] sm:$0xf]
      %v3348 = vld [vmem:[%s7 + $0x26c] sm:$0xf]
      %v3349 = vld [vmem:[%s7 + $0x270] sm:$0xf]
      %v3350 = vld [vmem:[%s7 + $0x274] sm:$0xf]
      %v3351 = vld [vmem:[%s7 + $0x278] sm:$0xf]
      %v3352 = vld [vmem:[%s7 + $0x27c] sm:$0xf]
      %v3385 = vunpack.c.l.b16 %v3321
      %v3386 = vunpack.c.l.b16 %v3322
      %v3387 = vunpack.c.l.b16 %v3323
      %v3388 = vunpack.c.l.b16 %v3324
      %v3389 = vunpack.c.l.b16 %v3325
      %v3390 = vunpack.c.l.b16 %v3326
      %v3391 = vunpack.c.l.b16 %v3327
      %v3392 = vunpack.c.l.b16 %v3328
      %v3393 = vunpack.c.l.b16 %v3329
      %v3394 = vunpack.c.l.b16 %v3330
      %v3395 = vunpack.c.l.b16 %v3331
      %v3396 = vunpack.c.l.b16 %v3332
      %v3397 = vunpack.c.l.b16 %v3333
      %v3398 = vunpack.c.l.b16 %v3334
      %v3399 = vunpack.c.l.b16 %v3335
      %v3400 = vunpack.c.l.b16 %v3336
      %v3401 = vunpack.c.l.b16 %v3337
      %v3402 = vunpack.c.l.b16 %v3338
      %v3403 = vunpack.c.l.b16 %v3339
      %v3404 = vunpack.c.l.b16 %v3340
      %v3405 = vunpack.c.l.b16 %v3341
      %v3406 = vunpack.c.l.b16 %v3342
      %v3407 = vunpack.c.l.b16 %v3343
      %v3408 = vunpack.c.l.b16 %v3344
      %v3409 = vunpack.c.l.b16 %v3345
      %v3410 = vunpack.c.l.b16 %v3346
      %v3411 = vunpack.c.l.b16 %v3347
      %v3412 = vunpack.c.l.b16 %v3348
      %v3413 = vunpack.c.l.b16 %v3349
      %v3414 = vunpack.c.l.b16 %v3350
      %v3415 = vunpack.c.l.b16 %v3351
      %v3416 = vunpack.c.l.b16 %v3352
      %v3417 = vpack.c.b16 %v3386, %v3385
      %v3418 = vpack.c.b16 %v3388, %v3387
      %v3419 = vpack.c.b16 %v3390, %v3389
      %v3420 = vpack.c.b16 %v3392, %v3391
      %v3421 = vpack.c.b16 %v3394, %v3393
      %v3422 = vpack.c.b16 %v3396, %v3395
      %v3423 = vpack.c.b16 %v3398, %v3397
      %v3424 = vpack.c.b16 %v3400, %v3399
      %v3425 = vpack.c.b16 %v3402, %v3401
      %v3426 = vpack.c.b16 %v3404, %v3403
      %v3427 = vpack.c.b16 %v3406, %v3405
      %v3428 = vpack.c.b16 %v3408, %v3407
      %v3429 = vpack.c.b16 %v3410, %v3409
      %v3430 = vpack.c.b16 %v3412, %v3411
      %v3431 = vpack.c.b16 %v3414, %v3413
      %v3432 = vpack.c.b16 %v3416, %v3415
      %3449 = vmatprep.subr.bf16.mxu0 0
      %3450 = vmatpush1.bf16.msra.mxu0 %v3417
      %3451 = vmatprep.subr.bf16.mxu0 0
      %3452 = vmatpush1.bf16.msra.mxu0 %v3418
      %3453 = vmatprep.subr.bf16.mxu0 0
      %3454 = vmatpush1.bf16.msra.mxu0 %v3419
      %3455 = vmatprep.subr.bf16.mxu0 0
      %3456 = vmatpush1.bf16.msra.mxu0 %v3420
      %3457 = vmatprep.subr.bf16.mxu0 0
      %3458 = vmatpush1.bf16.msra.mxu0 %v3421
      %3459 = vmatprep.subr.bf16.mxu0 0
      %3460 = vmatpush1.bf16.msra.mxu0 %v3422
      %3461 = vmatprep.subr.bf16.mxu0 0
      %3462 = vmatpush1.bf16.msra.mxu0 %v3423
      %3463 = vmatprep.subr.bf16.mxu0 0
      %3464 = vmatpush1.bf16.msra.mxu0 %v3424
      %3465 = vmatprep.subr.bf16.mxu0 0
      %3466 = vmatpush1.bf16.msra.mxu0 %v3425
      %3467 = vmatprep.subr.bf16.mxu0 0
      %3468 = vmatpush1.bf16.msra.mxu0 %v3426
      %3469 = vmatprep.subr.bf16.mxu0 0
      %3470 = vmatpush1.bf16.msra.mxu0 %v3427
      %3471 = vmatprep.subr.bf16.mxu0 0
      %3472 = vmatpush1.bf16.msra.mxu0 %v3428
      %3473 = vmatprep.subr.bf16.mxu0 0
      %3474 = vmatpush1.bf16.msra.mxu0 %v3429
      %3475 = vmatprep.subr.bf16.mxu0 0
      %3476 = vmatpush1.bf16.msra.mxu0 %v3430
      %3477 = vmatprep.subr.bf16.mxu0 0
      %3478 = vmatpush1.bf16.msra.mxu0 %v3431
      %3479 = vmatprep.subr.bf16.mxu0 0
      %3480 = vmatpush1.bf16.msra.mxu0 %v3432
      %3481 = vmatprep.mubr.bf16.mxu0 %v3320
      %3482 = vmatmul.mubr.bf16.gmra.mrb[0].mxu0 %v3319
      %v3483 = vpop.f32.mrb[0].mxu0
      %v3484 = vadd.f32 0.0, %v3483
      %v3485 = vpop.f32.mrb[0].mxu0
      %v3486 = vpop.f32.mrb[0].mxu0
      %v3487 = vadd.f32 0.0, %v3486
      %v3488 = vpop.f32.mrb[0].mxu0
      %3489 = vdwg.mxu0
      %v3490 = vadd.f32 %v3240, %v3484
      %v3491 = vadd.f32 %v3241, %v3487
      %3492 = vmatprep.subr.mxu0 %v2243
      %3493 = vmatpush1.msra.mxu0 %v2242
      %3494 = vmatprep.subr.mxu0 %v2245
      %3495 = vmatpush1.msra.mxu0 %v2244
      %3496 = vmatprep.subr.mxu0 0.0
      %3497 = vmatpush1.msra.mxu0 0.0
      %3498 = vmatprep.subr.mxu0 0.0
      %3499 = vmatpush1.msra.mxu0 0.0
      %3500 = vmatprep.subr.mxu0 0.0
      %3501 = vmatpush1.msra.mxu0 0.0
      %3502 = vmatprep.subr.mxu0 0.0
      %3503 = vmatpush1.msra.mxu0 0.0
      %3504 = vmatprep.subr.mxu0 0.0
      %3505 = vmatpush1.msra.mxu0 0.0
      %3506 = vmatprep.subr.mxu0 0.0
      %3507 = vmatpush1.msra.mxu0 0.0
      %3508 = vmatprep.subr.mxu0 0.0
      %3509 = vmatpush1.msra.mxu0 0.0
      %3510 = vmatprep.subr.mxu0 0.0
      %3511 = vmatpush1.msra.mxu0 0.0
      %3512 = vmatprep.subr.mxu0 0.0
      %3513 = vmatpush1.msra.mxu0 0.0
      %3514 = vmatprep.subr.mxu0 0.0
      %3515 = vmatpush1.msra.mxu0 0.0
      %3516 = vmatprep.subr.mxu0 0.0
      %3517 = vmatpush1.msra.mxu0 0.0
      %3518 = vmatprep.subr.mxu0 0.0
      %3519 = vmatpush1.msra.mxu0 0.0
      %3520 = vmatprep.subr.mxu0 0.0
      %3521 = vmatpush1.msra.mxu0 0.0
      %3522 = vmatprep.subr.mxu0 0.0
      %3523 = vmatpush1.msra.mxu0 0.0
      %3524 = vmatprep.subr.mxu0 0.0
      %3525 = vmatpush1.msra.mxu0 0.0
      %3526 = vmatprep.subr.mxu0 0.0
      %3527 = vmatpush1.msra.mxu0 0.0
      %3528 = vmatprep.subr.mxu0 0.0
      %3529 = vmatpush1.msra.mxu0 0.0
      %3530 = vmatprep.subr.mxu0 0.0
      %3531 = vmatpush1.msra.mxu0 0.0
      %3532 = vmatprep.subr.mxu0 0.0
      %3533 = vmatpush1.msra.mxu0 0.0
      %3534 = vmatprep.subr.mxu0 0.0
      %3535 = vmatpush1.msra.mxu0 0.0
      %3536 = vmatprep.subr.mxu0 0.0
      %3537 = vmatpush1.msra.mxu0 0.0
      %3538 = vmatprep.subr.mxu0 0.0
      %3539 = vmatpush1.msra.mxu0 0.0
      %3540 = vmatprep.subr.mxu0 0.0
      %3541 = vmatpush1.msra.mxu0 0.0
      %3542 = vmatprep.subr.mxu0 0.0
      %3543 = vmatpush1.msra.mxu0 0.0
      %3544 = vmatprep.subr.mxu0 0.0
      %3545 = vmatpush1.msra.mxu0 0.0
      %3546 = vmatprep.subr.mxu0 0.0
      %3547 = vmatpush1.msra.mxu0 0.0
      %3548 = vmatprep.subr.mxu0 0.0
      %3549 = vmatpush1.msra.mxu0 0.0
      %3550 = vmatprep.subr.mxu0 0.0
      %3551 = vmatpush1.msra.mxu0 0.0
      %3552 = vmatprep.subr.mxu0 0.0
      %3553 = vmatpush1.msra.mxu0 0.0
      %3554 = vmatprep.subr.mxu0 0.0
      %3555 = vmatpush1.msra.mxu0 0.0
      %3556 = vmatprep.mubr.f32.mxu0 0.0
      %3557 = vmatmul.mubr.f32.gmra.mrb[0].mxu0 %v1482
      %v3558 = vpop.f32.mrb[0].mxu0
      %v3559 = vadd.f32 0.0, %v3558
      %v3560 = vpop.f32.mrb[0].mxu0
      %v3561 = vadd.f32 0.0, %v3560
      %3562 = vmatprep.mubr.f32.mxu0 0.0
      %3563 = vmatmul.mubr.f32.gmra.mrb[0].mxu0 %v1485
      %v3564 = vpop.f32.mrb[0].mxu0
      %v3565 = vadd.f32 0.0, %v3564
      %v3566 = vpop.f32.mrb[0].mxu0
      %v3567 = vadd.f32 0.0, %v3566
      %3568 = vdwg.mxu0
      %v3569 = vpack.c.bf16 %v3565, %v3559
      %v3570 = vpack.c.bf16 %v3567, %v3561
      %v3571 = vld [vmem:[%s7 + $0x280] sm:$0xf]
      %v3572 = vld [vmem:[%s7 + $0x284] sm:$0xf]
      %v3573 = vld [vmem:[%s7 + $0x288] sm:$0xf]
      %v3574 = vld [vmem:[%s7 + $0x28c] sm:$0xf]
      %v3575 = vld [vmem:[%s7 + $0x290] sm:$0xf]
      %v3576 = vld [vmem:[%s7 + $0x294] sm:$0xf]
      %v3577 = vld [vmem:[%s7 + $0x298] sm:$0xf]
      %v3578 = vld [vmem:[%s7 + $0x29c] sm:$0xf]
      %v3579 = vld [vmem:[%s7 + $0x2a0] sm:$0xf]
      %v3580 = vld [vmem:[%s7 + $0x2a4] sm:$0xf]
      %v3581 = vld [vmem:[%s7 + $0x2a8] sm:$0xf]
      %v3582 = vld [vmem:[%s7 + $0x2ac] sm:$0xf]
      %v3583 = vld [vmem:[%s7 + $0x2b0] sm:$0xf]
      %v3584 = vld [vmem:[%s7 + $0x2b4] sm:$0xf]
      %v3585 = vld [vmem:[%s7 + $0x2b8] sm:$0xf]
      %v3586 = vld [vmem:[%s7 + $0x2bc] sm:$0xf]
      %v3587 = vld [vmem:[%s7 + $0x2c0] sm:$0xf]
      %v3588 = vld [vmem:[%s7 + $0x2c4] sm:$0xf]
      %v3589 = vld [vmem:[%s7 + $0x2c8] sm:$0xf]
      %v3590 = vld [vmem:[%s7 + $0x2cc] sm:$0xf]
      %v3591 = vld [vmem:[%s7 + $0x2d0] sm:$0xf]
      %v3592 = vld [vmem:[%s7 + $0x2d4] sm:$0xf]
      %v3593 = vld [vmem:[%s7 + $0x2d8] sm:$0xf]
      %v3594 = vld [vmem:[%s7 + $0x2dc] sm:$0xf]
      %v3595 = vld [vmem:[%s7 + $0x2e0] sm:$0xf]
      %v3596 = vld [vmem:[%s7 + $0x2e4] sm:$0xf]
      %v3597 = vld [vmem:[%s7 + $0x2e8] sm:$0xf]
      %v3598 = vld [vmem:[%s7 + $0x2ec] sm:$0xf]
      %v3599 = vld [vmem:[%s7 + $0x2f0] sm:$0xf]
      %v3600 = vld [vmem:[%s7 + $0x2f4] sm:$0xf]
      %v3601 = vld [vmem:[%s7 + $0x2f8] sm:$0xf]
      %v3602 = vld [vmem:[%s7 + $0x2fc] sm:$0xf]
      %v3635 = vunpack.c.l.b16 %v3571
      %v3636 = vunpack.c.l.b16 %v3572
      %v3637 = vunpack.c.l.b16 %v3573
      %v3638 = vunpack.c.l.b16 %v3574
      %v3639 = vunpack.c.l.b16 %v3575
      %v3640 = vunpack.c.l.b16 %v3576
      %v3641 = vunpack.c.l.b16 %v3577
      %v3642 = vunpack.c.l.b16 %v3578
      %v3643 = vunpack.c.l.b16 %v3579
      %v3644 = vunpack.c.l.b16 %v3580
      %v3645 = vunpack.c.l.b16 %v3581
      %v3646 = vunpack.c.l.b16 %v3582
      %v3647 = vunpack.c.l.b16 %v3583
      %v3648 = vunpack.c.l.b16 %v3584
      %v3649 = vunpack.c.l.b16 %v3585
      %v3650 = vunpack.c.l.b16 %v3586
      %v3651 = vunpack.c.l.b16 %v3587
      %v3652 = vunpack.c.l.b16 %v3588
      %v3653 = vunpack.c.l.b16 %v3589
      %v3654 = vunpack.c.l.b16 %v3590
      %v3655 = vunpack.c.l.b16 %v3591
      %v3656 = vunpack.c.l.b16 %v3592
      %v3657 = vunpack.c.l.b16 %v3593
      %v3658 = vunpack.c.l.b16 %v3594
      %v3659 = vunpack.c.l.b16 %v3595
      %v3660 = vunpack.c.l.b16 %v3596
      %v3661 = vunpack.c.l.b16 %v3597
      %v3662 = vunpack.c.l.b16 %v3598
      %v3663 = vunpack.c.l.b16 %v3599
      %v3664 = vunpack.c.l.b16 %v3600
      %v3665 = vunpack.c.l.b16 %v3601
      %v3666 = vunpack.c.l.b16 %v3602
      %v3667 = vpack.c.b16 %v3636, %v3635
      %v3668 = vpack.c.b16 %v3638, %v3637
      %v3669 = vpack.c.b16 %v3640, %v3639
      %v3670 = vpack.c.b16 %v3642, %v3641
      %v3671 = vpack.c.b16 %v3644, %v3643
      %v3672 = vpack.c.b16 %v3646, %v3645
      %v3673 = vpack.c.b16 %v3648, %v3647
      %v3674 = vpack.c.b16 %v3650, %v3649
      %v3675 = vpack.c.b16 %v3652, %v3651
      %v3676 = vpack.c.b16 %v3654, %v3653
      %v3677 = vpack.c.b16 %v3656, %v3655
      %v3678 = vpack.c.b16 %v3658, %v3657
      %v3679 = vpack.c.b16 %v3660, %v3659
      %v3680 = vpack.c.b16 %v3662, %v3661
      %v3681 = vpack.c.b16 %v3664, %v3663
      %v3682 = vpack.c.b16 %v3666, %v3665
      %3699 = vmatprep.subr.bf16.mxu0 0
      %3700 = vmatpush1.bf16.msra.mxu0 %v3667
      %3701 = vmatprep.subr.bf16.mxu0 0
      %3702 = vmatpush1.bf16.msra.mxu0 %v3668
      %3703 = vmatprep.subr.bf16.mxu0 0
      %3704 = vmatpush1.bf16.msra.mxu0 %v3669
      %3705 = vmatprep.subr.bf16.mxu0 0
      %3706 = vmatpush1.bf16.msra.mxu0 %v3670
      %3707 = vmatprep.subr.bf16.mxu0 0
      %3708 = vmatpush1.bf16.msra.mxu0 %v3671
      %3709 = vmatprep.subr.bf16.mxu0 0
      %3710 = vmatpush1.bf16.msra.mxu0 %v3672
      %3711 = vmatprep.subr.bf16.mxu0 0
      %3712 = vmatpush1.bf16.msra.mxu0 %v3673
      %3713 = vmatprep.subr.bf16.mxu0 0
      %3714 = vmatpush1.bf16.msra.mxu0 %v3674
      %3715 = vmatprep.subr.bf16.mxu0 0
      %3716 = vmatpush1.bf16.msra.mxu0 %v3675
      %3717 = vmatprep.subr.bf16.mxu0 0
      %3718 = vmatpush1.bf16.msra.mxu0 %v3676
      %3719 = vmatprep.subr.bf16.mxu0 0
      %3720 = vmatpush1.bf16.msra.mxu0 %v3677
      %3721 = vmatprep.subr.bf16.mxu0 0
      %3722 = vmatpush1.bf16.msra.mxu0 %v3678
      %3723 = vmatprep.subr.bf16.mxu0 0
      %3724 = vmatpush1.bf16.msra.mxu0 %v3679
      %3725 = vmatprep.subr.bf16.mxu0 0
      %3726 = vmatpush1.bf16.msra.mxu0 %v3680
      %3727 = vmatprep.subr.bf16.mxu0 0
      %3728 = vmatpush1.bf16.msra.mxu0 %v3681
      %3729 = vmatprep.subr.bf16.mxu0 0
      %3730 = vmatpush1.bf16.msra.mxu0 %v3682
      %3731 = vmatprep.mubr.bf16.mxu0 %v3570
      %3732 = vmatmul.mubr.bf16.gmra.mrb[0].mxu0 %v3569
      %v3733 = vpop.f32.mrb[0].mxu0
      %v3734 = vadd.f32 0.0, %v3733
      %v3735 = vpop.f32.mrb[0].mxu0
      %v3736 = vpop.f32.mrb[0].mxu0
      %v3737 = vadd.f32 0.0, %v3736
      %v3738 = vpop.f32.mrb[0].mxu0
      %3739 = vdwg.mxu0
      %v3740 = vadd.f32 %v3490, %v3734
      %v3741 = vadd.f32 %v3491, %v3737
      %3742 = vmatprep.subr.mxu0 %v2243
      %3743 = vmatpush1.msra.mxu0 %v2242
      %3744 = vmatprep.subr.mxu0 %v2245
      %3745 = vmatpush1.msra.mxu0 %v2244
      %3746 = vmatprep.subr.mxu0 0.0
      %3747 = vmatpush1.msra.mxu0 0.0
      %3748 = vmatprep.subr.mxu0 0.0
      %3749 = vmatpush1.msra.mxu0 0.0
      %3750 = vmatprep.subr.mxu0 0.0
      %3751 = vmatpush1.msra.mxu0 0.0
      %3752 = vmatprep.subr.mxu0 0.0
      %3753 = vmatpush1.msra.mxu0 0.0
      %3754 = vmatprep.subr.mxu0 0.0
      %3755 = vmatpush1.msra.mxu0 0.0
      %3756 = vmatprep.subr.mxu0 0.0
      %3757 = vmatpush1.msra.mxu0 0.0
      %3758 = vmatprep.subr.mxu0 0.0
      %3759 = vmatpush1.msra.mxu0 0.0
      %3760 = vmatprep.subr.mxu0 0.0
      %3761 = vmatpush1.msra.mxu0 0.0
      %3762 = vmatprep.subr.mxu0 0.0
      %3763 = vmatpush1.msra.mxu0 0.0
      %3764 = vmatprep.subr.mxu0 0.0
      %3765 = vmatpush1.msra.mxu0 0.0
      %3766 = vmatprep.subr.mxu0 0.0
      %3767 = vmatpush1.msra.mxu0 0.0
      %3768 = vmatprep.subr.mxu0 0.0
      %3769 = vmatpush1.msra.mxu0 0.0
      %3770 = vmatprep.subr.mxu0 0.0
      %3771 = vmatpush1.msra.mxu0 0.0
      %3772 = vmatprep.subr.mxu0 0.0
      %3773 = vmatpush1.msra.mxu0 0.0
      %3774 = vmatprep.subr.mxu0 0.0
      %3775 = vmatpush1.msra.mxu0 0.0
      %3776 = vmatprep.subr.mxu0 0.0
      %3777 = vmatpush1.msra.mxu0 0.0
      %3778 = vmatprep.subr.mxu0 0.0
      %3779 = vmatpush1.msra.mxu0 0.0
      %3780 = vmatprep.subr.mxu0 0.0
      %3781 = vmatpush1.msra.mxu0 0.0
      %3782 = vmatprep.subr.mxu0 0.0
      %3783 = vmatpush1.msra.mxu0 0.0
      %3784 = vmatprep.subr.mxu0 0.0
      %3785 = vmatpush1.msra.mxu0 0.0
      %3786 = vmatprep.subr.mxu0 0.0
      %3787 = vmatpush1.msra.mxu0 0.0
      %3788 = vmatprep.subr.mxu0 0.0
      %3789 = vmatpush1.msra.mxu0 0.0
      %3790 = vmatprep.subr.mxu0 0.0
      %3791 = vmatpush1.msra.mxu0 0.0
      %3792 = vmatprep.subr.mxu0 0.0
      %3793 = vmatpush1.msra.mxu0 0.0
      %3794 = vmatprep.subr.mxu0 0.0
      %3795 = vmatpush1.msra.mxu0 0.0
      %3796 = vmatprep.subr.mxu0 0.0
      %3797 = vmatpush1.msra.mxu0 0.0
      %3798 = vmatprep.subr.mxu0 0.0
      %3799 = vmatpush1.msra.mxu0 0.0
      %3800 = vmatprep.subr.mxu0 0.0
      %3801 = vmatpush1.msra.mxu0 0.0
      %3802 = vmatprep.subr.mxu0 0.0
      %3803 = vmatpush1.msra.mxu0 0.0
      %3804 = vmatprep.subr.mxu0 0.0
      %3805 = vmatpush1.msra.mxu0 0.0
      %3806 = vmatprep.mubr.f32.mxu0 0.0
      %3807 = vmatmul.mubr.f32.gmra.mrb[0].mxu0 %v1665
      %v3808 = vpop.f32.mrb[0].mxu0
      %v3809 = vadd.f32 0.0, %v3808
      %v3810 = vpop.f32.mrb[0].mxu0
      %v3811 = vadd.f32 0.0, %v3810
      %3812 = vmatprep.mubr.f32.mxu0 0.0
      %3813 = vmatmul.mubr.f32.gmra.mrb[0].mxu0 %v1668
      %v3814 = vpop.f32.mrb[0].mxu0
      %v3815 = vadd.f32 0.0, %v3814
      %v3816 = vpop.f32.mrb[0].mxu0
      %v3817 = vadd.f32 0.0, %v3816
      %3818 = vdwg.mxu0
      %v3819 = vpack.c.bf16 %v3815, %v3809
      %v3820 = vpack.c.bf16 %v3817, %v3811
      %v3821 = vld [vmem:[%s7 + $0x300] sm:$0xf]
      %v3822 = vld [vmem:[%s7 + $0x304] sm:$0xf]
      %v3823 = vld [vmem:[%s7 + $0x308] sm:$0xf]
      %v3824 = vld [vmem:[%s7 + $0x30c] sm:$0xf]
      %v3825 = vld [vmem:[%s7 + $0x310] sm:$0xf]
      %v3826 = vld [vmem:[%s7 + $0x314] sm:$0xf]
      %v3827 = vld [vmem:[%s7 + $0x318] sm:$0xf]
      %v3828 = vld [vmem:[%s7 + $0x31c] sm:$0xf]
      %v3829 = vld [vmem:[%s7 + $0x320] sm:$0xf]
      %v3830 = vld [vmem:[%s7 + $0x324] sm:$0xf]
      %v3831 = vld [vmem:[%s7 + $0x328] sm:$0xf]
      %v3832 = vld [vmem:[%s7 + $0x32c] sm:$0xf]
      %v3833 = vld [vmem:[%s7 + $0x330] sm:$0xf]
      %v3834 = vld [vmem:[%s7 + $0x334] sm:$0xf]
      %v3835 = vld [vmem:[%s7 + $0x338] sm:$0xf]
      %v3836 = vld [vmem:[%s7 + $0x33c] sm:$0xf]
      %v3837 = vld [vmem:[%s7 + $0x340] sm:$0xf]
      %v3838 = vld [vmem:[%s7 + $0x344] sm:$0xf]
      %v3839 = vld [vmem:[%s7 + $0x348] sm:$0xf]
      %v3840 = vld [vmem:[%s7 + $0x34c] sm:$0xf]
      %v3841 = vld [vmem:[%s7 + $0x350] sm:$0xf]
      %v3842 = vld [vmem:[%s7 + $0x354] sm:$0xf]
      %v3843 = vld [vmem:[%s7 + $0x358] sm:$0xf]
      %v3844 = vld [vmem:[%s7 + $0x35c] sm:$0xf]
      %v3845 = vld [vmem:[%s7 + $0x360] sm:$0xf]
      %v3846 = vld [vmem:[%s7 + $0x364] sm:$0xf]
      %v3847 = vld [vmem:[%s7 + $0x368] sm:$0xf]
      %v3848 = vld [vmem:[%s7 + $0x36c] sm:$0xf]
      %v3849 = vld [vmem:[%s7 + $0x370] sm:$0xf]
      %v3850 = vld [vmem:[%s7 + $0x374] sm:$0xf]
      %v3851 = vld [vmem:[%s7 + $0x378] sm:$0xf]
      %v3852 = vld [vmem:[%s7 + $0x37c] sm:$0xf]
      %v3885 = vunpack.c.l.b16 %v3821
      %v3886 = vunpack.c.l.b16 %v3822
      %v3887 = vunpack.c.l.b16 %v3823
      %v3888 = vunpack.c.l.b16 %v3824
      %v3889 = vunpack.c.l.b16 %v3825
      %v3890 = vunpack.c.l.b16 %v3826
      %v3891 = vunpack.c.l.b16 %v3827
      %v3892 = vunpack.c.l.b16 %v3828
      %v3893 = vunpack.c.l.b16 %v3829
      %v3894 = vunpack.c.l.b16 %v3830
      %v3895 = vunpack.c.l.b16 %v3831
      %v3896 = vunpack.c.l.b16 %v3832
      %v3897 = vunpack.c.l.b16 %v3833
      %v3898 = vunpack.c.l.b16 %v3834
      %v3899 = vunpack.c.l.b16 %v3835
      %v3900 = vunpack.c.l.b16 %v3836
      %v3901 = vunpack.c.l.b16 %v3837
      %v3902 = vunpack.c.l.b16 %v3838
      %v3903 = vunpack.c.l.b16 %v3839
      %v3904 = vunpack.c.l.b16 %v3840
      %v3905 = vunpack.c.l.b16 %v3841
      %v3906 = vunpack.c.l.b16 %v3842
      %v3907 = vunpack.c.l.b16 %v3843
      %v3908 = vunpack.c.l.b16 %v3844
      %v3909 = vunpack.c.l.b16 %v3845
      %v3910 = vunpack.c.l.b16 %v3846
      %v3911 = vunpack.c.l.b16 %v3847
      %v3912 = vunpack.c.l.b16 %v3848
      %v3913 = vunpack.c.l.b16 %v3849
      %v3914 = vunpack.c.l.b16 %v3850
      %v3915 = vunpack.c.l.b16 %v3851
      %v3916 = vunpack.c.l.b16 %v3852
      %v3917 = vpack.c.b16 %v3886, %v3885
      %v3918 = vpack.c.b16 %v3888, %v3887
      %v3919 = vpack.c.b16 %v3890, %v3889
      %v3920 = vpack.c.b16 %v3892, %v3891
      %v3921 = vpack.c.b16 %v3894, %v3893
      %v3922 = vpack.c.b16 %v3896, %v3895
      %v3923 = vpack.c.b16 %v3898, %v3897
      %v3924 = vpack.c.b16 %v3900, %v3899
      %v3925 = vpack.c.b16 %v3902, %v3901
      %v3926 = vpack.c.b16 %v3904, %v3903
      %v3927 = vpack.c.b16 %v3906, %v3905
      %v3928 = vpack.c.b16 %v3908, %v3907
      %v3929 = vpack.c.b16 %v3910, %v3909
      %v3930 = vpack.c.b16 %v3912, %v3911
      %v3931 = vpack.c.b16 %v3914, %v3913
      %v3932 = vpack.c.b16 %v3916, %v3915
      %3949 = vmatprep.subr.bf16.mxu0 0
      %3950 = vmatpush1.bf16.msra.mxu0 %v3917
      %3951 = vmatprep.subr.bf16.mxu0 0
      %3952 = vmatpush1.bf16.msra.mxu0 %v3918
      %3953 = vmatprep.subr.bf16.mxu0 0
      %3954 = vmatpush1.bf16.msra.mxu0 %v3919
      %3955 = vmatprep.subr.bf16.mxu0 0
      %3956 = vmatpush1.bf16.msra.mxu0 %v3920
      %3957 = vmatprep.subr.bf16.mxu0 0
      %3958 = vmatpush1.bf16.msra.mxu0 %v3921
      %3959 = vmatprep.subr.bf16.mxu0 0
      %3960 = vmatpush1.bf16.msra.mxu0 %v3922
      %3961 = vmatprep.subr.bf16.mxu0 0
      %3962 = vmatpush1.bf16.msra.mxu0 %v3923
      %3963 = vmatprep.subr.bf16.mxu0 0
      %3964 = vmatpush1.bf16.msra.mxu0 %v3924
      %3965 = vmatprep.subr.bf16.mxu0 0
      %3966 = vmatpush1.bf16.msra.mxu0 %v3925
      %3967 = vmatprep.subr.bf16.mxu0 0
      %3968 = vmatpush1.bf16.msra.mxu0 %v3926
      %3969 = vmatprep.subr.bf16.mxu0 0
      %3970 = vmatpush1.bf16.msra.mxu0 %v3927
      %3971 = vmatprep.subr.bf16.mxu0 0
      %3972 = vmatpush1.bf16.msra.mxu0 %v3928
      %3973 = vmatprep.subr.bf16.mxu0 0
      %3974 = vmatpush1.bf16.msra.mxu0 %v3929
      %3975 = vmatprep.subr.bf16.mxu0 0
      %3976 = vmatpush1.bf16.msra.mxu0 %v3930
      %3977 = vmatprep.subr.bf16.mxu0 0
      %3978 = vmatpush1.bf16.msra.mxu0 %v3931
      %3979 = vmatprep.subr.bf16.mxu0 0
      %3980 = vmatpush1.bf16.msra.mxu0 %v3932
      %3981 = vmatprep.mubr.bf16.mxu0 %v3820
      %3982 = vmatmul.mubr.bf16.gmra.mrb[0].mxu0 %v3819
      %v3983 = vpop.f32.mrb[0].mxu0
      %v3984 = vadd.f32 0.0, %v3983
      %v3985 = vpop.f32.mrb[0].mxu0
      %v3986 = vpop.f32.mrb[0].mxu0
      %v3987 = vadd.f32 0.0, %v3986
      %v3988 = vpop.f32.mrb[0].mxu0
      %3989 = vdwg.mxu0
      %v3990 = vadd.f32 %v3740, %v3984
      %v3991 = vadd.f32 %v3741, %v3987
      %3992 = vmatprep.subr.mxu0 %v2243
      %3993 = vmatpush1.msra.mxu0 %v2242
      %3994 = vmatprep.subr.mxu0 %v2245
      %3995 = vmatpush1.msra.mxu0 %v2244
      %3996 = vmatprep.subr.mxu0 0.0
      %3997 = vmatpush1.msra.mxu0 0.0
      %3998 = vmatprep.subr.mxu0 0.0
      %3999 = vmatpush1.msra.mxu0 0.0
      %4000 = vmatprep.subr.mxu0 0.0
      %4001 = vmatpush1.msra.mxu0 0.0
      %4002 = vmatprep.subr.mxu0 0.0
      %4003 = vmatpush1.msra.mxu0 0.0
      %4004 = vmatprep.subr.mxu0 0.0
      %4005 = vmatpush1.msra.mxu0 0.0
      %4006 = vmatprep.subr.mxu0 0.0
      %4007 = vmatpush1.msra.mxu0 0.0
      %4008 = vmatprep.subr.mxu0 0.0
      %4009 = vmatpush1.msra.mxu0 0.0
      %4010 = vmatprep.subr.mxu0 0.0
      %4011 = vmatpush1.msra.mxu0 0.0
      %4012 = vmatprep.subr.mxu0 0.0
      %4013 = vmatpush1.msra.mxu0 0.0
      %4014 = vmatprep.subr.mxu0 0.0
      %4015 = vmatpush1.msra.mxu0 0.0
      %4016 = vmatprep.subr.mxu0 0.0
      %4017 = vmatpush1.msra.mxu0 0.0
      %4018 = vmatprep.subr.mxu0 0.0
      %4019 = vmatpush1.msra.mxu0 0.0
      %4020 = vmatprep.subr.mxu0 0.0
      %4021 = vmatpush1.msra.mxu0 0.0
      %4022 = vmatprep.subr.mxu0 0.0
      %4023 = vmatpush1.msra.mxu0 0.0
      %4024 = vmatprep.subr.mxu0 0.0
      %4025 = vmatpush1.msra.mxu0 0.0
      %4026 = vmatprep.subr.mxu0 0.0
      %4027 = vmatpush1.msra.mxu0 0.0
      %4028 = vmatprep.subr.mxu0 0.0
      %4029 = vmatpush1.msra.mxu0 0.0
      %4030 = vmatprep.subr.mxu0 0.0
      %4031 = vmatpush1.msra.mxu0 0.0
      %4032 = vmatprep.subr.mxu0 0.0
      %4033 = vmatpush1.msra.mxu0 0.0
      %4034 = vmatprep.subr.mxu0 0.0
      %4035 = vmatpush1.msra.mxu0 0.0
      %4036 = vmatprep.subr.mxu0 0.0
      %4037 = vmatpush1.msra.mxu0 0.0
      %4038 = vmatprep.subr.mxu0 0.0
      %4039 = vmatpush1.msra.mxu0 0.0
      %4040 = vmatprep.subr.mxu0 0.0
      %4041 = vmatpush1.msra.mxu0 0.0
      %4042 = vmatprep.subr.mxu0 0.0
      %4043 = vmatpush1.msra.mxu0 0.0
      %4044 = vmatprep.subr.mxu0 0.0
      %4045 = vmatpush1.msra.mxu0 0.0
      %4046 = vmatprep.subr.mxu0 0.0
      %4047 = vmatpush1.msra.mxu0 0.0
      %4048 = vmatprep.subr.mxu0 0.0
      %4049 = vmatpush1.msra.mxu0 0.0
      %4050 = vmatprep.subr.mxu0 0.0
      %4051 = vmatpush1.msra.mxu0 0.0
      %4052 = vmatprep.subr.mxu0 0.0
      %4053 = vmatpush1.msra.mxu0 0.0
      %4054 = vmatprep.subr.mxu0 0.0
      %4055 = vmatpush1.msra.mxu0 0.0
      %4056 = vmatprep.mubr.f32.mxu0 0.0
      %4057 = vmatmul.mubr.f32.gmra.mrb[0].mxu0 %v1848
      %v4058 = vpop.f32.mrb[0].mxu0
      %v4059 = vadd.f32 0.0, %v4058
      %v4060 = vpop.f32.mrb[0].mxu0
      %v4061 = vadd.f32 0.0, %v4060
      %4062 = vmatprep.mubr.f32.mxu0 0.0
      %4063 = vmatmul.mubr.f32.gmra.mrb[0].mxu0 %v1851
      %v4064 = vpop.f32.mrb[0].mxu0
      %v4065 = vadd.f32 0.0, %v4064
      %v4066 = vpop.f32.mrb[0].mxu0
      %v4067 = vadd.f32 0.0, %v4066
      %4068 = vdwg.mxu0
      %v4069 = vpack.c.bf16 %v4065, %v4059
      %v4070 = vpack.c.bf16 %v4067, %v4061
      %v4071 = vld [vmem:[%s7 + $0x380] sm:$0xf]
      %v4072 = vld [vmem:[%s7 + $0x384] sm:$0xf]
      %v4073 = vld [vmem:[%s7 + $0x388] sm:$0xf]
      %v4074 = vld [vmem:[%s7 + $0x38c] sm:$0xf]
      %v4075 = vld [vmem:[%s7 + $0x390] sm:$0xf]
      %v4076 = vld [vmem:[%s7 + $0x394] sm:$0xf]
      %v4077 = vld [vmem:[%s7 + $0x398] sm:$0xf]
      %v4078 = vld [vmem:[%s7 + $0x39c] sm:$0xf]
      %v4079 = vld [vmem:[%s7 + $0x3a0] sm:$0xf]
      %v4080 = vld [vmem:[%s7 + $0x3a4] sm:$0xf]
      %v4081 = vld [vmem:[%s7 + $0x3a8] sm:$0xf]
      %v4082 = vld [vmem:[%s7 + $0x3ac] sm:$0xf]
      %v4083 = vld [vmem:[%s7 + $0x3b0] sm:$0xf]
      %v4084 = vld [vmem:[%s7 + $0x3b4] sm:$0xf]
      %v4085 = vld [vmem:[%s7 + $0x3b8] sm:$0xf]
      %v4086 = vld [vmem:[%s7 + $0x3bc] sm:$0xf]
      %v4087 = vld [vmem:[%s7 + $0x3c0] sm:$0xf]
      %v4088 = vld [vmem:[%s7 + $0x3c4] sm:$0xf]
      %v4089 = vld [vmem:[%s7 + $0x3c8] sm:$0xf]
      %v4090 = vld [vmem:[%s7 + $0x3cc] sm:$0xf]
      %v4091 = vld [vmem:[%s7 + $0x3d0] sm:$0xf]
      %v4092 = vld [vmem:[%s7 + $0x3d4] sm:$0xf]
      %v4093 = vld [vmem:[%s7 + $0x3d8] sm:$0xf]
      %v4094 = vld [vmem:[%s7 + $0x3dc] sm:$0xf]
      %v4095 = vld [vmem:[%s7 + $0x3e0] sm:$0xf]
      %v4096 = vld [vmem:[%s7 + $0x3e4] sm:$0xf]
      %v4097 = vld [vmem:[%s7 + $0x3e8] sm:$0xf]
      %v4098 = vld [vmem:[%s7 + $0x3ec] sm:$0xf]
      %v4099 = vld [vmem:[%s7 + $0x3f0] sm:$0xf]
      %v4100 = vld [vmem:[%s7 + $0x3f4] sm:$0xf]
      %v4101 = vld [vmem:[%s7 + $0x3f8] sm:$0xf]
      %v4102 = vld [vmem:[%s7 + $0x3fc] sm:$0xf]
      %v4135 = vunpack.c.l.b16 %v4071
      %v4136 = vunpack.c.l.b16 %v4072
      %v4137 = vunpack.c.l.b16 %v4073
      %v4138 = vunpack.c.l.b16 %v4074
      %v4139 = vunpack.c.l.b16 %v4075
      %v4140 = vunpack.c.l.b16 %v4076
      %v4141 = vunpack.c.l.b16 %v4077
      %v4142 = vunpack.c.l.b16 %v4078
      %v4143 = vunpack.c.l.b16 %v4079
      %v4144 = vunpack.c.l.b16 %v4080
      %v4145 = vunpack.c.l.b16 %v4081
      %v4146 = vunpack.c.l.b16 %v4082
      %v4147 = vunpack.c.l.b16 %v4083
      %v4148 = vunpack.c.l.b16 %v4084
      %v4149 = vunpack.c.l.b16 %v4085
      %v4150 = vunpack.c.l.b16 %v4086
      %v4151 = vunpack.c.l.b16 %v4087
      %v4152 = vunpack.c.l.b16 %v4088
      %v4153 = vunpack.c.l.b16 %v4089
      %v4154 = vunpack.c.l.b16 %v4090
      %v4155 = vunpack.c.l.b16 %v4091
      %v4156 = vunpack.c.l.b16 %v4092
      %v4157 = vunpack.c.l.b16 %v4093
      %v4158 = vunpack.c.l.b16 %v4094
      %v4159 = vunpack.c.l.b16 %v4095
      %v4160 = vunpack.c.l.b16 %v4096
      %v4161 = vunpack.c.l.b16 %v4097
      %v4162 = vunpack.c.l.b16 %v4098
      %v4163 = vunpack.c.l.b16 %v4099
      %v4164 = vunpack.c.l.b16 %v4100
      %v4165 = vunpack.c.l.b16 %v4101
      %v4166 = vunpack.c.l.b16 %v4102
      %v4167 = vpack.c.b16 %v4136, %v4135
      %v4168 = vpack.c.b16 %v4138, %v4137
      %v4169 = vpack.c.b16 %v4140, %v4139
      %v4170 = vpack.c.b16 %v4142, %v4141
      %v4171 = vpack.c.b16 %v4144, %v4143
      %v4172 = vpack.c.b16 %v4146, %v4145
      %v4173 = vpack.c.b16 %v4148, %v4147
      %v4174 = vpack.c.b16 %v4150, %v4149
      %v4175 = vpack.c.b16 %v4152, %v4151
      %v4176 = vpack.c.b16 %v4154, %v4153
      %v4177 = vpack.c.b16 %v4156, %v4155
      %v4178 = vpack.c.b16 %v4158, %v4157
      %v4179 = vpack.c.b16 %v4160, %v4159
      %v4180 = vpack.c.b16 %v4162, %v4161
      %v4181 = vpack.c.b16 %v4164, %v4163
      %v4182 = vpack.c.b16 %v4166, %v4165
      %4199 = vmatprep.subr.bf16.mxu0 0
      %4200 = vmatpush1.bf16.msra.mxu0 %v4167
      %4201 = vmatprep.subr.bf16.mxu0 0
      %4202 = vmatpush1.bf16.msra.mxu0 %v4168
      %4203 = vmatprep.subr.bf16.mxu0 0
      %4204 = vmatpush1.bf16.msra.mxu0 %v4169
      %4205 = vmatprep.subr.bf16.mxu0 0
      %4206 = vmatpush1.bf16.msra.mxu0 %v4170
      %4207 = vmatprep.subr.bf16.mxu0 0
      %4208 = vmatpush1.bf16.msra.mxu0 %v4171
      %4209 = vmatprep.subr.bf16.mxu0 0
      %4210 = vmatpush1.bf16.msra.mxu0 %v4172
      %4211 = vmatprep.subr.bf16.mxu0 0
      %4212 = vmatpush1.bf16.msra.mxu0 %v4173
      %4213 = vmatprep.subr.bf16.mxu0 0
      %4214 = vmatpush1.bf16.msra.mxu0 %v4174
      %4215 = vmatprep.subr.bf16.mxu0 0
      %4216 = vmatpush1.bf16.msra.mxu0 %v4175
      %4217 = vmatprep.subr.bf16.mxu0 0
      %4218 = vmatpush1.bf16.msra.mxu0 %v4176
      %4219 = vmatprep.subr.bf16.mxu0 0
      %4220 = vmatpush1.bf16.msra.mxu0 %v4177
      %4221 = vmatprep.subr.bf16.mxu0 0
      %4222 = vmatpush1.bf16.msra.mxu0 %v4178
      %4223 = vmatprep.subr.bf16.mxu0 0
      %4224 = vmatpush1.bf16.msra.mxu0 %v4179
      %4225 = vmatprep.subr.bf16.mxu0 0
      %4226 = vmatpush1.bf16.msra.mxu0 %v4180
      %4227 = vmatprep.subr.bf16.mxu0 0
      %4228 = vmatpush1.bf16.msra.mxu0 %v4181
      %4229 = vmatprep.subr.bf16.mxu0 0
      %4230 = vmatpush1.bf16.msra.mxu0 %v4182
      %4231 = vmatprep.mubr.bf16.mxu0 %v4070
      %4232 = vmatmul.mubr.bf16.gmra.mrb[0].mxu0 %v4069
      %v4233 = vpop.f32.mrb[0].mxu0
      %v4234 = vadd.f32 0.0, %v4233
      %v4235 = vpop.f32.mrb[0].mxu0
      %v4236 = vpop.f32.mrb[0].mxu0
      %v4237 = vadd.f32 0.0, %v4236
      %v4238 = vpop.f32.mrb[0].mxu0
      %4239 = vdwg.mxu0
      %v4240 = vadd.f32 %v3990, %v4234
      %v4241 = vadd.f32 %v3991, %v4237
      %4242 = vmatprep.subr.mxu0 %v2243
      %4243 = vmatpush1.msra.mxu0 %v2242
      %4244 = vmatprep.subr.mxu0 %v2245
      %4245 = vmatpush1.msra.mxu0 %v2244
      %4246 = vmatprep.subr.mxu0 0.0
      %4247 = vmatpush1.msra.mxu0 0.0
      %4248 = vmatprep.subr.mxu0 0.0
      %4249 = vmatpush1.msra.mxu0 0.0
      %4250 = vmatprep.subr.mxu0 0.0
      %4251 = vmatpush1.msra.mxu0 0.0
      %4252 = vmatprep.subr.mxu0 0.0
      %4253 = vmatpush1.msra.mxu0 0.0
      %4254 = vmatprep.subr.mxu0 0.0
      %4255 = vmatpush1.msra.mxu0 0.0
      %4256 = vmatprep.subr.mxu0 0.0
      %4257 = vmatpush1.msra.mxu0 0.0
      %4258 = vmatprep.subr.mxu0 0.0
      %4259 = vmatpush1.msra.mxu0 0.0
      %4260 = vmatprep.subr.mxu0 0.0
      %4261 = vmatpush1.msra.mxu0 0.0
      %4262 = vmatprep.subr.mxu0 0.0
      %4263 = vmatpush1.msra.mxu0 0.0
      %4264 = vmatprep.subr.mxu0 0.0
      %4265 = vmatpush1.msra.mxu0 0.0
      %4266 = vmatprep.subr.mxu0 0.0
      %4267 = vmatpush1.msra.mxu0 0.0
      %4268 = vmatprep.subr.mxu0 0.0
      %4269 = vmatpush1.msra.mxu0 0.0
      %4270 = vmatprep.subr.mxu0 0.0
      %4271 = vmatpush1.msra.mxu0 0.0
      %4272 = vmatprep.subr.mxu0 0.0
      %4273 = vmatpush1.msra.mxu0 0.0
      %4274 = vmatprep.subr.mxu0 0.0
      %4275 = vmatpush1.msra.mxu0 0.0
      %4276 = vmatprep.subr.mxu0 0.0
      %4277 = vmatpush1.msra.mxu0 0.0
      %4278 = vmatprep.subr.mxu0 0.0
      %4279 = vmatpush1.msra.mxu0 0.0
      %4280 = vmatprep.subr.mxu0 0.0
      %4281 = vmatpush1.msra.mxu0 0.0
      %4282 = vmatprep.subr.mxu0 0.0
      %4283 = vmatpush1.msra.mxu0 0.0
      %4284 = vmatprep.subr.mxu0 0.0
      %4285 = vmatpush1.msra.mxu0 0.0
      %4286 = vmatprep.subr.mxu0 0.0
      %4287 = vmatpush1.msra.mxu0 0.0
      %4288 = vmatprep.subr.mxu0 0.0
      %4289 = vmatpush1.msra.mxu0 0.0
      %4290 = vmatprep.subr.mxu0 0.0
      %4291 = vmatpush1.msra.mxu0 0.0
      %4292 = vmatprep.subr.mxu0 0.0
      %4293 = vmatpush1.msra.mxu0 0.0
      %4294 = vmatprep.subr.mxu0 0.0
      %4295 = vmatpush1.msra.mxu0 0.0
      %4296 = vmatprep.subr.mxu0 0.0
      %4297 = vmatpush1.msra.mxu0 0.0
      %4298 = vmatprep.subr.mxu0 0.0
      %4299 = vmatpush1.msra.mxu0 0.0
      %4300 = vmatprep.subr.mxu0 0.0
      %4301 = vmatpush1.msra.mxu0 0.0
      %4302 = vmatprep.subr.mxu0 0.0
      %4303 = vmatpush1.msra.mxu0 0.0
      %4304 = vmatprep.subr.mxu0 0.0
      %4305 = vmatpush1.msra.mxu0 0.0
      %4306 = vmatprep.mubr.f32.mxu0 0.0
      %4307 = vmatmul.mubr.f32.gmra.mrb[0].mxu0 %v2031
      %v4308 = vpop.f32.mrb[0].mxu0
      %v4309 = vadd.f32 0.0, %v4308
      %v4310 = vpop.f32.mrb[0].mxu0
      %v4311 = vadd.f32 0.0, %v4310
      %4312 = vmatprep.mubr.f32.mxu0 0.0
      %4313 = vmatmul.mubr.f32.gmra.mrb[0].mxu0 %v2034
      %v4314 = vpop.f32.mrb[0].mxu0
      %v4315 = vadd.f32 0.0, %v4314
      %v4316 = vpop.f32.mrb[0].mxu0
      %v4317 = vadd.f32 0.0, %v4316
      %4318 = vdwg.mxu0
      %v4319 = vpack.c.bf16 %v4315, %v4309
      %v4320 = vpack.c.bf16 %v4317, %v4311
      %v4321 = vld [vmem:[%s7 + $0x400] sm:$0xf]
      %v4322 = vld [vmem:[%s7 + $0x404] sm:$0xf]
      %v4323 = vld [vmem:[%s7 + $0x408] sm:$0xf]
      %v4324 = vld [vmem:[%s7 + $0x40c] sm:$0xf]
      %v4325 = vld [vmem:[%s7 + $0x410] sm:$0xf]
      %v4326 = vld [vmem:[%s7 + $0x414] sm:$0xf]
      %v4327 = vld [vmem:[%s7 + $0x418] sm:$0xf]
      %v4328 = vld [vmem:[%s7 + $0x41c] sm:$0xf]
      %v4329 = vld [vmem:[%s7 + $0x420] sm:$0xf]
      %v4330 = vld [vmem:[%s7 + $0x424] sm:$0xf]
      %v4331 = vld [vmem:[%s7 + $0x428] sm:$0xf]
      %v4332 = vld [vmem:[%s7 + $0x42c] sm:$0xf]
      %v4333 = vld [vmem:[%s7 + $0x430] sm:$0xf]
      %v4334 = vld [vmem:[%s7 + $0x434] sm:$0xf]
      %v4335 = vld [vmem:[%s7 + $0x438] sm:$0xf]
      %v4336 = vld [vmem:[%s7 + $0x43c] sm:$0xf]
      %v4337 = vld [vmem:[%s7 + $0x440] sm:$0xf]
      %v4338 = vld [vmem:[%s7 + $0x444] sm:$0xf]
      %v4339 = vld [vmem:[%s7 + $0x448] sm:$0xf]
      %v4340 = vld [vmem:[%s7 + $0x44c] sm:$0xf]
      %v4341 = vld [vmem:[%s7 + $0x450] sm:$0xf]
      %v4342 = vld [vmem:[%s7 + $0x454] sm:$0xf]
      %v4343 = vld [vmem:[%s7 + $0x458] sm:$0xf]
      %v4344 = vld [vmem:[%s7 + $0x45c] sm:$0xf]
      %v4345 = vld [vmem:[%s7 + $0x460] sm:$0xf]
      %v4346 = vld [vmem:[%s7 + $0x464] sm:$0xf]
      %v4347 = vld [vmem:[%s7 + $0x468] sm:$0xf]
      %v4348 = vld [vmem:[%s7 + $0x46c] sm:$0xf]
      %v4349 = vld [vmem:[%s7 + $0x470] sm:$0xf]
      %v4350 = vld [vmem:[%s7 + $0x474] sm:$0xf]
      %v4351 = vld [vmem:[%s7 + $0x478] sm:$0xf]
      %v4352 = vld [vmem:[%s7 + $0x47c] sm:$0xf]
      %v4385 = vunpack.c.l.b16 %v4321
      %v4386 = vunpack.c.l.b16 %v4322
      %v4387 = vunpack.c.l.b16 %v4323
      %v4388 = vunpack.c.l.b16 %v4324
      %v4389 = vunpack.c.l.b16 %v4325
      %v4390 = vunpack.c.l.b16 %v4326
      %v4391 = vunpack.c.l.b16 %v4327
      %v4392 = vunpack.c.l.b16 %v4328
      %v4393 = vunpack.c.l.b16 %v4329
      %v4394 = vunpack.c.l.b16 %v4330
      %v4395 = vunpack.c.l.b16 %v4331
      %v4396 = vunpack.c.l.b16 %v4332
      %v4397 = vunpack.c.l.b16 %v4333
      %v4398 = vunpack.c.l.b16 %v4334
      %v4399 = vunpack.c.l.b16 %v4335
      %v4400 = vunpack.c.l.b16 %v4336
      %v4401 = vunpack.c.l.b16 %v4337
      %v4402 = vunpack.c.l.b16 %v4338
      %v4403 = vunpack.c.l.b16 %v4339
      %v4404 = vunpack.c.l.b16 %v4340
      %v4405 = vunpack.c.l.b16 %v4341
      %v4406 = vunpack.c.l.b16 %v4342
      %v4407 = vunpack.c.l.b16 %v4343
      %v4408 = vunpack.c.l.b16 %v4344
      %v4409 = vunpack.c.l.b16 %v4345
      %v4410 = vunpack.c.l.b16 %v4346
      %v4411 = vunpack.c.l.b16 %v4347
      %v4412 = vunpack.c.l.b16 %v4348
      %v4413 = vunpack.c.l.b16 %v4349
      %v4414 = vunpack.c.l.b16 %v4350
      %v4415 = vunpack.c.l.b16 %v4351
      %v4416 = vunpack.c.l.b16 %v4352
      %v4417 = vpack.c.b16 %v4386, %v4385
      %v4418 = vpack.c.b16 %v4388, %v4387
      %v4419 = vpack.c.b16 %v4390, %v4389
      %v4420 = vpack.c.b16 %v4392, %v4391
      %v4421 = vpack.c.b16 %v4394, %v4393
      %v4422 = vpack.c.b16 %v4396, %v4395
      %v4423 = vpack.c.b16 %v4398, %v4397
      %v4424 = vpack.c.b16 %v4400, %v4399
      %v4425 = vpack.c.b16 %v4402, %v4401
      %v4426 = vpack.c.b16 %v4404, %v4403
      %v4427 = vpack.c.b16 %v4406, %v4405
      %v4428 = vpack.c.b16 %v4408, %v4407
      %v4429 = vpack.c.b16 %v4410, %v4409
      %v4430 = vpack.c.b16 %v4412, %v4411
      %v4431 = vpack.c.b16 %v4414, %v4413
      %v4432 = vpack.c.b16 %v4416, %v4415
      %4449 = vmatprep.subr.bf16.mxu0 0
      %4450 = vmatpush1.bf16.msra.mxu0 %v4417
      %4451 = vmatprep.subr.bf16.mxu0 0
      %4452 = vmatpush1.bf16.msra.mxu0 %v4418
      %4453 = vmatprep.subr.bf16.mxu0 0
      %4454 = vmatpush1.bf16.msra.mxu0 %v4419
      %4455 = vmatprep.subr.bf16.mxu0 0
      %4456 = vmatpush1.bf16.msra.mxu0 %v4420
      %4457 = vmatprep.subr.bf16.mxu0 0
      %4458 = vmatpush1.bf16.msra.mxu0 %v4421
      %4459 = vmatprep.subr.bf16.mxu0 0
      %4460 = vmatpush1.bf16.msra.mxu0 %v4422
      %4461 = vmatprep.subr.bf16.mxu0 0
      %4462 = vmatpush1.bf16.msra.mxu0 %v4423
      %4463 = vmatprep.subr.bf16.mxu0 0
      %4464 = vmatpush1.bf16.msra.mxu0 %v4424
      %4465 = vmatprep.subr.bf16.mxu0 0
      %4466 = vmatpush1.bf16.msra.mxu0 %v4425
      %4467 = vmatprep.subr.bf16.mxu0 0
      %4468 = vmatpush1.bf16.msra.mxu0 %v4426
      %4469 = vmatprep.subr.bf16.mxu0 0
      %4470 = vmatpush1.bf16.msra.mxu0 %v4427
      %4471 = vmatprep.subr.bf16.mxu0 0
      %4472 = vmatpush1.bf16.msra.mxu0 %v4428
      %4473 = vmatprep.subr.bf16.mxu0 0
      %4474 = vmatpush1.bf16.msra.mxu0 %v4429
      %4475 = vmatprep.subr.bf16.mxu0 0
      %4476 = vmatpush1.bf16.msra.mxu0 %v4430
      %4477 = vmatprep.subr.bf16.mxu0 0
      %4478 = vmatpush1.bf16.msra.mxu0 %v4431
      %4479 = vmatprep.subr.bf16.mxu0 0
      %4480 = vmatpush1.bf16.msra.mxu0 %v4432
      %4481 = vmatprep.mubr.bf16.mxu0 %v4320
      %4482 = vmatmul.mubr.bf16.gmra.mrb[0].mxu0 %v4319
      %v4483 = vpop.f32.mrb[0].mxu0
      %v4484 = vadd.f32 0.0, %v4483
      %v4485 = vpop.f32.mrb[0].mxu0
      %v4486 = vpop.f32.mrb[0].mxu0
      %v4487 = vadd.f32 0.0, %v4486
      %v4488 = vpop.f32.mrb[0].mxu0
      %4489 = vdwg.mxu0
      %v4490 = vadd.f32 %v4240, %v4484
      %v4491 = vadd.f32 %v4241, %v4487
      %v4492 = vld [vmem:[%s8] sm:$0x1]
      %v4494 = vlaneseq
      %v4495 = vshrl.u32 %v4494, 7
      %v4496 = vsub.s32 0, %v4495
      %v4497 = vrot.slane %v4492, %v4496
      %v4499 = vmul.f32 %v4490, %v4497
      %v4500 = vmul.f32 %v4491, %v4497
      %v4501 = vld [vmem:[%s9] sm:$0x1]
      %v4503 = vlaneseq
      %v4504 = vshrl.u32 %v4503, 7
      %v4505 = vsub.s32 0, %v4504
      %v4506 = vrot.slane %v4501, %v4505
      %v4508 = vadd.f32 %v4499, %v4506
      %v4509 = vadd.f32 %v4500, %v4506
      %v4510 = vmax.f32 %v4508, 0.0
      %v4511 = vmax.f32 %v4509, 0.0
      %4512 = vmatprep.subr.mxu0 0.0
      %4513 = vmatpush1.msra.mxu0 %v4510
      %4514 = vmatprep.subr.mxu0 0.0
      %4515 = vmatpush1.msra.mxu0 %v4511
      %4516 = vmatprep.subr.mxu0 0.0
      %4517 = vmatpush1.msra.mxu0 0.0
      %4518 = vmatprep.subr.mxu0 0.0
      %4519 = vmatpush1.msra.mxu0 0.0
      %4520 = vmatprep.subr.mxu0 0.0
      %4521 = vmatpush1.msra.mxu0 0.0
      %4522 = vmatprep.subr.mxu0 0.0
      %4523 = vmatpush1.msra.mxu0 0.0
      %4524 = vmatprep.subr.mxu0 0.0
      %4525 = vmatpush1.msra.mxu0 0.0
      %4526 = vmatprep.subr.mxu0 0.0
      %4527 = vmatpush1.msra.mxu0 0.0
      %4528 = vmatprep.subr.mxu0 0.0
      %4529 = vmatpush1.msra.mxu0 0.0
      %4530 = vmatprep.subr.mxu0 0.0
      %4531 = vmatpush1.msra.mxu0 0.0
      %4532 = vmatprep.subr.mxu0 0.0
      %4533 = vmatpush1.msra.mxu0 0.0
      %4534 = vmatprep.subr.mxu0 0.0
      %4535 = vmatpush1.msra.mxu0 0.0
      %4536 = vmatprep.subr.mxu0 0.0
      %4537 = vmatpush1.msra.mxu0 0.0
      %4538 = vmatprep.subr.mxu0 0.0
      %4539 = vmatpush1.msra.mxu0 0.0
      %4540 = vmatprep.subr.mxu0 0.0
      %4541 = vmatpush1.msra.mxu0 0.0
      %4542 = vmatprep.subr.mxu0 0.0
      %4543 = vmatpush1.msra.mxu0 0.0
      %4544 = vmatprep.subr.mxu0 0.0
      %4545 = vmatpush1.msra.mxu0 0.0
      %4546 = vmatprep.subr.mxu0 0.0
      %4547 = vmatpush1.msra.mxu0 0.0
      %4548 = vmatprep.subr.mxu0 0.0
      %4549 = vmatpush1.msra.mxu0 0.0
      %4550 = vmatprep.subr.mxu0 0.0
      %4551 = vmatpush1.msra.mxu0 0.0
      %4552 = vmatprep.subr.mxu0 0.0
      %4553 = vmatpush1.msra.mxu0 0.0
      %4554 = vmatprep.subr.mxu0 0.0
      %4555 = vmatpush1.msra.mxu0 0.0
      %4556 = vmatprep.subr.mxu0 0.0
      %4557 = vmatpush1.msra.mxu0 0.0
      %4558 = vmatprep.subr.mxu0 0.0
      %4559 = vmatpush1.msra.mxu0 0.0
      %4560 = vmatprep.subr.mxu0 0.0
      %4561 = vmatpush1.msra.mxu0 0.0
      %4562 = vmatprep.subr.mxu0 0.0
      %4563 = vmatpush1.msra.mxu0 0.0
      %4564 = vmatprep.subr.mxu0 0.0
      %4565 = vmatpush1.msra.mxu0 0.0
      %4566 = vmatprep.subr.mxu0 0.0
      %4567 = vmatpush1.msra.mxu0 0.0
      %4568 = vmatprep.subr.mxu0 0.0
      %4569 = vmatpush1.msra.mxu0 0.0
      %4570 = vmatprep.subr.mxu0 0.0
      %4571 = vmatpush1.msra.mxu0 0.0
      %4572 = vmatprep.subr.mxu0 0.0
      %4573 = vmatpush1.msra.mxu0 0.0
      %4574 = vmatprep.subr.mxu0 0.0
      %4575 = vmatpush1.msra.mxu0 0.0
      %4576 = vmatprep.mubr.f32.mxu0 0.0
      %4577 = vmatmul.mubr.f32.gmra.mrb[0].mxu0 %v575
      %v4578 = vpop.f32.mrb[0].mxu0
      %v4579 = vadd.f32 0.0, %v4578
      %v4580 = vpop.f32.mrb[0].mxu0
      %4581 = vmatprep.mubr.f32.mxu0 0.0
      %4582 = vmatmul.mubr.f32.gmra.mrb[0].mxu0 %v578
      %v4583 = vpop.f32.mrb[0].mxu0
      %v4584 = vadd.f32 0.0, %v4583
      %v4585 = vpop.f32.mrb[0].mxu0
      %4586 = vdwg.mxu0
      %v4587 = vpack.c.bf16 %v4584, %v4579
      %v4588 = vld [vmem:[%s10] sm:$0xf]
      %v4589 = vld [vmem:[%s10 + $0x4] sm:$0xf]
      %v4590 = vld [vmem:[%s10 + $0x8] sm:$0xf]
      %v4591 = vld [vmem:[%s10 + $0xc] sm:$0xf]
      %v4592 = vld [vmem:[%s10 + $0x10] sm:$0xf]
      %v4593 = vld [vmem:[%s10 + $0x14] sm:$0xf]
      %v4594 = vld [vmem:[%s10 + $0x18] sm:$0xf]
      %v4595 = vld [vmem:[%s10 + $0x1c] sm:$0xf]
      %v4596 = vld [vmem:[%s10 + $0x20] sm:$0xf]
      %v4597 = vld [vmem:[%s10 + $0x24] sm:$0xf]
      %v4598 = vld [vmem:[%s10 + $0x28] sm:$0xf]
      %v4599 = vld [vmem:[%s10 + $0x2c] sm:$0xf]
      %v4600 = vld [vmem:[%s10 + $0x30] sm:$0xf]
      %v4601 = vld [vmem:[%s10 + $0x34] sm:$0xf]
      %v4602 = vld [vmem:[%s10 + $0x38] sm:$0xf]
      %v4603 = vld [vmem:[%s10 + $0x3c] sm:$0xf]
      %4604 = vmatprep.subr.mxu0 0.0
      %4605 = vmatpush1.msra.mxu0 %v4510
      %4606 = vmatprep.subr.mxu0 0.0
      %4607 = vmatpush1.msra.mxu0 %v4511
      %4608 = vmatprep.subr.mxu0 0.0
      %4609 = vmatpush1.msra.mxu0 0.0
      %4610 = vmatprep.subr.mxu0 0.0
      %4611 = vmatpush1.msra.mxu0 0.0
      %4612 = vmatprep.subr.mxu0 0.0
      %4613 = vmatpush1.msra.mxu0 0.0
      %4614 = vmatprep.subr.mxu0 0.0
      %4615 = vmatpush1.msra.mxu0 0.0
      %4616 = vmatprep.subr.mxu0 0.0
      %4617 = vmatpush1.msra.mxu0 0.0
      %4618 = vmatprep.subr.mxu0 0.0
      %4619 = vmatpush1.msra.mxu0 0.0
      %4620 = vmatprep.subr.mxu0 0.0
      %4621 = vmatpush1.msra.mxu0 0.0
      %4622 = vmatprep.subr.mxu0 0.0
      %4623 = vmatpush1.msra.mxu0 0.0
      %4624 = vmatprep.subr.mxu0 0.0
      %4625 = vmatpush1.msra.mxu0 0.0
      %4626 = vmatprep.subr.mxu0 0.0
      %4627 = vmatpush1.msra.mxu0 0.0
      %4628 = vmatprep.subr.mxu0 0.0
      %4629 = vmatpush1.msra.mxu0 0.0
      %4630 = vmatprep.subr.mxu0 0.0
      %4631 = vmatpush1.msra.mxu0 0.0
      %4632 = vmatprep.subr.mxu0 0.0
      %4633 = vmatpush1.msra.mxu0 0.0
      %4634 = vmatprep.subr.mxu0 0.0
      %4635 = vmatpush1.msra.mxu0 0.0
      %4636 = vmatprep.subr.mxu0 0.0
      %4637 = vmatpush1.msra.mxu0 0.0
      %4638 = vmatprep.subr.mxu0 0.0
      %4639 = vmatpush1.msra.mxu0 0.0
      %4640 = vmatprep.subr.mxu0 0.0
      %4641 = vmatpush1.msra.mxu0 0.0
      %4642 = vmatprep.subr.mxu0 0.0
      %4643 = vmatpush1.msra.mxu0 0.0
      %4644 = vmatprep.subr.mxu0 0.0
      %4645 = vmatpush1.msra.mxu0 0.0
      %4646 = vmatprep.subr.mxu0 0.0
      %4647 = vmatpush1.msra.mxu0 0.0
      %4648 = vmatprep.subr.mxu0 0.0
      %4649 = vmatpush1.msra.mxu0 0.0
      %4650 = vmatprep.subr.mxu0 0.0
      %4651 = vmatpush1.msra.mxu0 0.0
      %4652 = vmatprep.subr.mxu0 0.0
      %4653 = vmatpush1.msra.mxu0 0.0
      %4654 = vmatprep.subr.mxu0 0.0
      %4655 = vmatpush1.msra.mxu0 0.0
      %4656 = vmatprep.subr.mxu0 0.0
      %4657 = vmatpush1.msra.mxu0 0.0
      %4658 = vmatprep.subr.mxu0 0.0
      %4659 = vmatpush1.msra.mxu0 0.0
      %4660 = vmatprep.subr.mxu0 0.0
      %4661 = vmatpush1.msra.mxu0 0.0
      %4662 = vmatprep.subr.mxu0 0.0
      %4663 = vmatpush1.msra.mxu0 0.0
      %4664 = vmatprep.subr.mxu0 0.0
      %4665 = vmatpush1.msra.mxu0 0.0
      %4666 = vmatprep.subr.mxu0 0.0
      %4667 = vmatpush1.msra.mxu0 0.0
      %4668 = vmatprep.mubr.f32.mxu0 0.0
      %4669 = vmatmul.mubr.f32.gmra.mrb[0].mxu0 %v668
      %v4670 = vpop.f32.mrb[0].mxu0
      %v4671 = vadd.f32 0.0, %v4670
      %v4672 = vpop.f32.mrb[0].mxu0
      %4673 = vmatprep.mubr.f32.mxu0 0.0
      %4674 = vmatmul.mubr.f32.gmra.mrb[0].mxu0 %v671
      %v4675 = vpop.f32.mrb[0].mxu0
      %v4676 = vadd.f32 0.0, %v4675
      %v4677 = vpop.f32.mrb[0].mxu0
      %4678 = vdwg.mxu0
      %v4679 = vpack.c.bf16 %v4676, %v4671
      %v4680 = vld [vmem:[%s10 + $0x40] sm:$0xf]
      %v4681 = vld [vmem:[%s10 + $0x44] sm:$0xf]
      %v4682 = vld [vmem:[%s10 + $0x48] sm:$0xf]
      %v4683 = vld [vmem:[%s10 + $0x4c] sm:$0xf]
      %v4684 = vld [vmem:[%s10 + $0x50] sm:$0xf]
      %v4685 = vld [vmem:[%s10 + $0x54] sm:$0xf]
      %v4686 = vld [vmem:[%s10 + $0x58] sm:$0xf]
      %v4687 = vld [vmem:[%s10 + $0x5c] sm:$0xf]
      %v4688 = vld [vmem:[%s10 + $0x60] sm:$0xf]
      %v4689 = vld [vmem:[%s10 + $0x64] sm:$0xf]
      %v4690 = vld [vmem:[%s10 + $0x68] sm:$0xf]
      %v4691 = vld [vmem:[%s10 + $0x6c] sm:$0xf]
      %v4692 = vld [vmem:[%s10 + $0x70] sm:$0xf]
      %v4693 = vld [vmem:[%s10 + $0x74] sm:$0xf]
      %v4694 = vld [vmem:[%s10 + $0x78] sm:$0xf]
      %v4695 = vld [vmem:[%s10 + $0x7c] sm:$0xf]
      %v4712 = vunpack.c.l.b16 %v4680
      %v4713 = vunpack.c.l.b16 %v4681
      %v4714 = vunpack.c.l.b16 %v4682
      %v4715 = vunpack.c.l.b16 %v4683
      %v4716 = vunpack.c.l.b16 %v4684
      %v4717 = vunpack.c.l.b16 %v4685
      %v4718 = vunpack.c.l.b16 %v4686
      %v4719 = vunpack.c.l.b16 %v4687
      %v4720 = vunpack.c.l.b16 %v4688
      %v4721 = vunpack.c.l.b16 %v4689
      %v4722 = vunpack.c.l.b16 %v4690
      %v4723 = vunpack.c.l.b16 %v4691
      %v4724 = vunpack.c.l.b16 %v4692
      %v4725 = vunpack.c.l.b16 %v4693
      %v4726 = vunpack.c.l.b16 %v4694
      %v4727 = vunpack.c.l.b16 %v4695
      %v4728 = vpack.c.b16 %v4713, %v4712
      %v4729 = vpack.c.b16 %v4715, %v4714
      %v4730 = vpack.c.b16 %v4717, %v4716
      %v4731 = vpack.c.b16 %v4719, %v4718
      %v4732 = vpack.c.b16 %v4721, %v4720
      %v4733 = vpack.c.b16 %v4723, %v4722
      %v4734 = vpack.c.b16 %v4725, %v4724
      %v4735 = vpack.c.b16 %v4727, %v4726
      %4744 = vmatprep.subr.bf16.mxu0 0
      %4745 = vmatpush1.bf16.msra.mxu0 %v4728
      %4746 = vmatprep.subr.bf16.mxu0 0
      %4747 = vmatpush1.bf16.msra.mxu0 %v4729
      %4748 = vmatprep.subr.bf16.mxu0 0
      %4749 = vmatpush1.bf16.msra.mxu0 %v4730
      %4750 = vmatprep.subr.bf16.mxu0 0
      %4751 = vmatpush1.bf16.msra.mxu0 %v4731
      %4752 = vmatprep.subr.bf16.mxu0 0
      %4753 = vmatpush1.bf16.msra.mxu0 %v4732
      %4754 = vmatprep.subr.bf16.mxu0 0
      %4755 = vmatpush1.bf16.msra.mxu0 %v4733
      %4756 = vmatprep.subr.bf16.mxu0 0
      %4757 = vmatpush1.bf16.msra.mxu0 %v4734
      %4758 = vmatprep.subr.bf16.mxu0 0
      %4759 = vmatpush1.bf16.msra.mxu0 %v4735
      %4760 = vmatprep.subr.bf16.mxu0 0
      %4761 = vmatpush1.bf16.msra.mxu0 0
      %4762 = vmatprep.subr.bf16.mxu0 0
      %4763 = vmatpush1.bf16.msra.mxu0 0
      %4764 = vmatprep.subr.bf16.mxu0 0
      %4765 = vmatpush1.bf16.msra.mxu0 0
      %4766 = vmatprep.subr.bf16.mxu0 0
      %4767 = vmatpush1.bf16.msra.mxu0 0
      %4768 = vmatprep.subr.bf16.mxu0 0
      %4769 = vmatpush1.bf16.msra.mxu0 0
      %4770 = vmatprep.subr.bf16.mxu0 0
      %4771 = vmatpush1.bf16.msra.mxu0 0
      %4772 = vmatprep.subr.bf16.mxu0 0
      %4773 = vmatpush1.bf16.msra.mxu0 0
      %4774 = vmatprep.subr.bf16.mxu0 0
      %4775 = vmatpush1.bf16.msra.mxu0 0
      %4776 = vmatprep.mubr.bf16.mxu0 0
      %4777 = vmatmul.mubr.bf16.gmra.mrb[0].mxu0 %v4679
      %v4778 = vpop.f32.mrb[0].mxu0
      %v4779 = vadd.f32 0.0, %v4778
      %v4780 = vpop.f32.mrb[0].mxu0
      %v4781 = vpop.f32.mrb[0].mxu0
      %v4782 = vadd.f32 0.0, %v4781
      %v4783 = vpop.f32.mrb[0].mxu0
      %4784 = vdwg.mxu0
      %v4801 = vunpack.c.l.b16 %v4588
      %v4802 = vunpack.c.l.b16 %v4589
      %v4803 = vunpack.c.l.b16 %v4590
      %v4804 = vunpack.c.l.b16 %v4591
      %v4805 = vunpack.c.l.b16 %v4592
      %v4806 = vunpack.c.l.b16 %v4593
      %v4807 = vunpack.c.l.b16 %v4594
      %v4808 = vunpack.c.l.b16 %v4595
      %v4809 = vunpack.c.l.b16 %v4596
      %v4810 = vunpack.c.l.b16 %v4597
      %v4811 = vunpack.c.l.b16 %v4598
      %v4812 = vunpack.c.l.b16 %v4599
      %v4813 = vunpack.c.l.b16 %v4600
      %v4814 = vunpack.c.l.b16 %v4601
      %v4815 = vunpack.c.l.b16 %v4602
      %v4816 = vunpack.c.l.b16 %v4603
      %v4817 = vpack.c.b16 %v4802, %v4801
      %v4818 = vpack.c.b16 %v4804, %v4803
      %v4819 = vpack.c.b16 %v4806, %v4805
      %v4820 = vpack.c.b16 %v4808, %v4807
      %v4821 = vpack.c.b16 %v4810, %v4809
      %v4822 = vpack.c.b16 %v4812, %v4811
      %v4823 = vpack.c.b16 %v4814, %v4813
      %v4824 = vpack.c.b16 %v4816, %v4815
      %4833 = vmatprep.subr.bf16.mxu0 0
      %4834 = vmatpush1.bf16.msra.mxu0 %v4817
      %4835 = vmatprep.subr.bf16.mxu0 0
      %4836 = vmatpush1.bf16.msra.mxu0 %v4818
      %4837 = vmatprep.subr.bf16.mxu0 0
      %4838 = vmatpush1.bf16.msra.mxu0 %v4819
      %4839 = vmatprep.subr.bf16.mxu0 0
      %4840 = vmatpush1.bf16.msra.mxu0 %v4820
      %4841 = vmatprep.subr.bf16.mxu0 0
      %4842 = vmatpush1.bf16.msra.mxu0 %v4821
      %4843 = vmatprep.subr.bf16.mxu0 0
      %4844 = vmatpush1.bf16.msra.mxu0 %v4822
      %4845 = vmatprep.subr.bf16.mxu0 0
      %4846 = vmatpush1.bf16.msra.mxu0 %v4823
      %4847 = vmatprep.subr.bf16.mxu0 0
      %4848 = vmatpush1.bf16.msra.mxu0 %v4824
      %4849 = vmatprep.subr.bf16.mxu0 0
      %4850 = vmatpush1.bf16.msra.mxu0 0
      %4851 = vmatprep.subr.bf16.mxu0 0
      %4852 = vmatpush1.bf16.msra.mxu0 0
      %4853 = vmatprep.subr.bf16.mxu0 0
      %4854 = vmatpush1.bf16.msra.mxu0 0
      %4855 = vmatprep.subr.bf16.mxu0 0
      %4856 = vmatpush1.bf16.msra.mxu0 0
      %4857 = vmatprep.subr.bf16.mxu0 0
      %4858 = vmatpush1.bf16.msra.mxu0 0
      %4859 = vmatprep.subr.bf16.mxu0 0
      %4860 = vmatpush1.bf16.msra.mxu0 0
      %4861 = vmatprep.subr.bf16.mxu0 0
      %4862 = vmatpush1.bf16.msra.mxu0 0
      %4863 = vmatprep.subr.bf16.mxu0 0
      %4864 = vmatpush1.bf16.msra.mxu0 0
      %4865 = vmatprep.mubr.bf16.mxu0 0
      %4866 = vmatmul.mubr.bf16.gmra.mrb[0].mxu0 %v4587
      %v4867 = vpop.f32.mrb[0].mxu0
      %v4868 = vadd.f32 %v4779, %v4867
      %v4869 = vpop.f32.mrb[0].mxu0
      %v4870 = vpop.f32.mrb[0].mxu0
      %v4871 = vadd.f32 %v4782, %v4870
      %v4872 = vpop.f32.mrb[0].mxu0
      %4873 = vdwg.mxu0
      %4874 = vmatprep.subr.mxu0 0.0
      %4875 = vmatpush1.msra.mxu0 %v4510
      %4876 = vmatprep.subr.mxu0 0.0
      %4877 = vmatpush1.msra.mxu0 %v4511
      %4878 = vmatprep.subr.mxu0 0.0
      %4879 = vmatpush1.msra.mxu0 0.0
      %4880 = vmatprep.subr.mxu0 0.0
      %4881 = vmatpush1.msra.mxu0 0.0
      %4882 = vmatprep.subr.mxu0 0.0
      %4883 = vmatpush1.msra.mxu0 0.0
      %4884 = vmatprep.subr.mxu0 0.0
      %4885 = vmatpush1.msra.mxu0 0.0
      %4886 = vmatprep.subr.mxu0 0.0
      %4887 = vmatpush1.msra.mxu0 0.0
      %4888 = vmatprep.subr.mxu0 0.0
      %4889 = vmatpush1.msra.mxu0 0.0
      %4890 = vmatprep.subr.mxu0 0.0
      %4891 = vmatpush1.msra.mxu0 0.0
      %4892 = vmatprep.subr.mxu0 0.0
      %4893 = vmatpush1.msra.mxu0 0.0
      %4894 = vmatprep.subr.mxu0 0.0
      %4895 = vmatpush1.msra.mxu0 0.0
      %4896 = vmatprep.subr.mxu0 0.0
      %4897 = vmatpush1.msra.mxu0 0.0
      %4898 = vmatprep.subr.mxu0 0.0
      %4899 = vmatpush1.msra.mxu0 0.0
      %4900 = vmatprep.subr.mxu0 0.0
      %4901 = vmatpush1.msra.mxu0 0.0
      %4902 = vmatprep.subr.mxu0 0.0
      %4903 = vmatpush1.msra.mxu0 0.0
      %4904 = vmatprep.subr.mxu0 0.0
      %4905 = vmatpush1.msra.mxu0 0.0
      %4906 = vmatprep.subr.mxu0 0.0
      %4907 = vmatpush1.msra.mxu0 0.0
      %4908 = vmatprep.subr.mxu0 0.0
      %4909 = vmatpush1.msra.mxu0 0.0
      %4910 = vmatprep.subr.mxu0 0.0
      %4911 = vmatpush1.msra.mxu0 0.0
      %4912 = vmatprep.subr.mxu0 0.0
      %4913 = vmatpush1.msra.mxu0 0.0
      %4914 = vmatprep.subr.mxu0 0.0
      %4915 = vmatpush1.msra.mxu0 0.0
      %4916 = vmatprep.subr.mxu0 0.0
      %4917 = vmatpush1.msra.mxu0 0.0
      %4918 = vmatprep.subr.mxu0 0.0
      %4919 = vmatpush1.msra.mxu0 0.0
      %4920 = vmatprep.subr.mxu0 0.0
      %4921 = vmatpush1.msra.mxu0 0.0
      %4922 = vmatprep.subr.mxu0 0.0
      %4923 = vmatpush1.msra.mxu0 0.0
      %4924 = vmatprep.subr.mxu0 0.0
      %4925 = vmatpush1.msra.mxu0 0.0
      %4926 = vmatprep.subr.mxu0 0.0
      %4927 = vmatpush1.msra.mxu0 0.0
      %4928 = vmatprep.subr.mxu0 0.0
      %4929 = vmatpush1.msra.mxu0 0.0
      %4930 = vmatprep.subr.mxu0 0.0
      %4931 = vmatpush1.msra.mxu0 0.0
      %4932 = vmatprep.subr.mxu0 0.0
      %4933 = vmatpush1.msra.mxu0 0.0
      %4934 = vmatprep.subr.mxu0 0.0
      %4935 = vmatpush1.msra.mxu0 0.0
      %4936 = vmatprep.subr.mxu0 0.0
      %4937 = vmatpush1.msra.mxu0 0.0
      %4938 = vmatprep.mubr.f32.mxu0 0.0
      %4939 = vmatmul.mubr.f32.gmra.mrb[0].mxu0 %v933
      %v4940 = vpop.f32.mrb[0].mxu0
      %v4941 = vadd.f32 0.0, %v4940
      %v4942 = vpop.f32.mrb[0].mxu0
      %4943 = vmatprep.mubr.f32.mxu0 0.0
      %4944 = vmatmul.mubr.f32.gmra.mrb[0].mxu0 %v936
      %v4945 = vpop.f32.mrb[0].mxu0
      %v4946 = vadd.f32 0.0, %v4945
      %v4947 = vpop.f32.mrb[0].mxu0
      %4948 = vdwg.mxu0
      %v4949 = vpack.c.bf16 %v4946, %v4941
      %v4950 = vld [vmem:[%s10 + $0x80] sm:$0xf]
      %v4951 = vld [vmem:[%s10 + $0x84] sm:$0xf]
      %v4952 = vld [vmem:[%s10 + $0x88] sm:$0xf]
      %v4953 = vld [vmem:[%s10 + $0x8c] sm:$0xf]
      %v4954 = vld [vmem:[%s10 + $0x90] sm:$0xf]
      %v4955 = vld [vmem:[%s10 + $0x94] sm:$0xf]
      %v4956 = vld [vmem:[%s10 + $0x98] sm:$0xf]
      %v4957 = vld [vmem:[%s10 + $0x9c] sm:$0xf]
      %v4958 = vld [vmem:[%s10 + $0xa0] sm:$0xf]
      %v4959 = vld [vmem:[%s10 + $0xa4] sm:$0xf]
      %v4960 = vld [vmem:[%s10 + $0xa8] sm:$0xf]
      %v4961 = vld [vmem:[%s10 + $0xac] sm:$0xf]
      %v4962 = vld [vmem:[%s10 + $0xb0] sm:$0xf]
      %v4963 = vld [vmem:[%s10 + $0xb4] sm:$0xf]
      %v4964 = vld [vmem:[%s10 + $0xb8] sm:$0xf]
      %v4965 = vld [vmem:[%s10 + $0xbc] sm:$0xf]
      %v4982 = vunpack.c.l.b16 %v4950
      %v4983 = vunpack.c.l.b16 %v4951
      %v4984 = vunpack.c.l.b16 %v4952
      %v4985 = vunpack.c.l.b16 %v4953
      %v4986 = vunpack.c.l.b16 %v4954
      %v4987 = vunpack.c.l.b16 %v4955
      %v4988 = vunpack.c.l.b16 %v4956
      %v4989 = vunpack.c.l.b16 %v4957
      %v4990 = vunpack.c.l.b16 %v4958
      %v4991 = vunpack.c.l.b16 %v4959
      %v4992 = vunpack.c.l.b16 %v4960
      %v4993 = vunpack.c.l.b16 %v4961
      %v4994 = vunpack.c.l.b16 %v4962
      %v4995 = vunpack.c.l.b16 %v4963
      %v4996 = vunpack.c.l.b16 %v4964
      %v4997 = vunpack.c.l.b16 %v4965
      %v4998 = vpack.c.b16 %v4983, %v4982
      %v4999 = vpack.c.b16 %v4985, %v4984
      %v5000 = vpack.c.b16 %v4987, %v4986
      %v5001 = vpack.c.b16 %v4989, %v4988
      %v5002 = vpack.c.b16 %v4991, %v4990
      %v5003 = vpack.c.b16 %v4993, %v4992
      %v5004 = vpack.c.b16 %v4995, %v4994
      %v5005 = vpack.c.b16 %v4997, %v4996
      %5014 = vmatprep.subr.bf16.mxu0 0
      %5015 = vmatpush1.bf16.msra.mxu0 %v4998
      %5016 = vmatprep.subr.bf16.mxu0 0
      %5017 = vmatpush1.bf16.msra.mxu0 %v4999
      %5018 = vmatprep.subr.bf16.mxu0 0
      %5019 = vmatpush1.bf16.msra.mxu0 %v5000
      %5020 = vmatprep.subr.bf16.mxu0 0
      %5021 = vmatpush1.bf16.msra.mxu0 %v5001
      %5022 = vmatprep.subr.bf16.mxu0 0
      %5023 = vmatpush1.bf16.msra.mxu0 %v5002
      %5024 = vmatprep.subr.bf16.mxu0 0
      %5025 = vmatpush1.bf16.msra.mxu0 %v5003
      %5026 = vmatprep.subr.bf16.mxu0 0
      %5027 = vmatpush1.bf16.msra.mxu0 %v5004
      %5028 = vmatprep.subr.bf16.mxu0 0
      %5029 = vmatpush1.bf16.msra.mxu0 %v5005
      %5030 = vmatprep.subr.bf16.mxu0 0
      %5031 = vmatpush1.bf16.msra.mxu0 0
      %5032 = vmatprep.subr.bf16.mxu0 0
      %5033 = vmatpush1.bf16.msra.mxu0 0
      %5034 = vmatprep.subr.bf16.mxu0 0
      %5035 = vmatpush1.bf16.msra.mxu0 0
      %5036 = vmatprep.subr.bf16.mxu0 0
      %5037 = vmatpush1.bf16.msra.mxu0 0
      %5038 = vmatprep.subr.bf16.mxu0 0
      %5039 = vmatpush1.bf16.msra.mxu0 0
      %5040 = vmatprep.subr.bf16.mxu0 0
      %5041 = vmatpush1.bf16.msra.mxu0 0
      %5042 = vmatprep.subr.bf16.mxu0 0
      %5043 = vmatpush1.bf16.msra.mxu0 0
      %5044 = vmatprep.subr.bf16.mxu0 0
      %5045 = vmatpush1.bf16.msra.mxu0 0
      %5046 = vmatprep.mubr.bf16.mxu0 0
      %5047 = vmatmul.mubr.bf16.gmra.mrb[0].mxu0 %v4949
      %v5048 = vpop.f32.mrb[0].mxu0
      %v5049 = vadd.f32 0.0, %v5048
      %v5050 = vpop.f32.mrb[0].mxu0
      %v5051 = vpop.f32.mrb[0].mxu0
      %v5052 = vadd.f32 0.0, %v5051
      %v5053 = vpop.f32.mrb[0].mxu0
      %5054 = vdwg.mxu0
      %v5055 = vadd.f32 %v4868, %v5049
      %v5056 = vadd.f32 %v4871, %v5052
      %5057 = vmatprep.subr.mxu0 0.0
      %5058 = vmatpush1.msra.mxu0 %v4510
      %5059 = vmatprep.subr.mxu0 0.0
      %5060 = vmatpush1.msra.mxu0 %v4511
      %5061 = vmatprep.subr.mxu0 0.0
      %5062 = vmatpush1.msra.mxu0 0.0
      %5063 = vmatprep.subr.mxu0 0.0
      %5064 = vmatpush1.msra.mxu0 0.0
      %5065 = vmatprep.subr.mxu0 0.0
      %5066 = vmatpush1.msra.mxu0 0.0
      %5067 = vmatprep.subr.mxu0 0.0
      %5068 = vmatpush1.msra.mxu0 0.0
      %5069 = vmatprep.subr.mxu0 0.0
      %5070 = vmatpush1.msra.mxu0 0.0
      %5071 = vmatprep.subr.mxu0 0.0
      %5072 = vmatpush1.msra.mxu0 0.0
      %5073 = vmatprep.subr.mxu0 0.0
      %5074 = vmatpush1.msra.mxu0 0.0
      %5075 = vmatprep.subr.mxu0 0.0
      %5076 = vmatpush1.msra.mxu0 0.0
      %5077 = vmatprep.subr.mxu0 0.0
      %5078 = vmatpush1.msra.mxu0 0.0
      %5079 = vmatprep.subr.mxu0 0.0
      %5080 = vmatpush1.msra.mxu0 0.0
      %5081 = vmatprep.subr.mxu0 0.0
      %5082 = vmatpush1.msra.mxu0 0.0
      %5083 = vmatprep.subr.mxu0 0.0
      %5084 = vmatpush1.msra.mxu0 0.0
      %5085 = vmatprep.subr.mxu0 0.0
      %5086 = vmatpush1.msra.mxu0 0.0
      %5087 = vmatprep.subr.mxu0 0.0
      %5088 = vmatpush1.msra.mxu0 0.0
      %5089 = vmatprep.subr.mxu0 0.0
      %5090 = vmatpush1.msra.mxu0 0.0
      %5091 = vmatprep.subr.mxu0 0.0
      %5092 = vmatpush1.msra.mxu0 0.0
      %5093 = vmatprep.subr.mxu0 0.0
      %5094 = vmatpush1.msra.mxu0 0.0
      %5095 = vmatprep.subr.mxu0 0.0
      %5096 = vmatpush1.msra.mxu0 0.0
      %5097 = vmatprep.subr.mxu0 0.0
      %5098 = vmatpush1.msra.mxu0 0.0
      %5099 = vmatprep.subr.mxu0 0.0
      %5100 = vmatpush1.msra.mxu0 0.0
      %5101 = vmatprep.subr.mxu0 0.0
      %5102 = vmatpush1.msra.mxu0 0.0
      %5103 = vmatprep.subr.mxu0 0.0
      %5104 = vmatpush1.msra.mxu0 0.0
      %5105 = vmatprep.subr.mxu0 0.0
      %5106 = vmatpush1.msra.mxu0 0.0
      %5107 = vmatprep.subr.mxu0 0.0
      %5108 = vmatpush1.msra.mxu0 0.0
      %5109 = vmatprep.subr.mxu0 0.0
      %5110 = vmatpush1.msra.mxu0 0.0
      %5111 = vmatprep.subr.mxu0 0.0
      %5112 = vmatpush1.msra.mxu0 0.0
      %5113 = vmatprep.subr.mxu0 0.0
      %5114 = vmatpush1.msra.mxu0 0.0
      %5115 = vmatprep.subr.mxu0 0.0
      %5116 = vmatpush1.msra.mxu0 0.0
      %5117 = vmatprep.subr.mxu0 0.0
      %5118 = vmatpush1.msra.mxu0 0.0
      %5119 = vmatprep.subr.mxu0 0.0
      %5120 = vmatpush1.msra.mxu0 0.0
      %5121 = vmatprep.mubr.f32.mxu0 0.0
      %5122 = vmatmul.mubr.f32.gmra.mrb[0].mxu0 %v1116
      %v5123 = vpop.f32.mrb[0].mxu0
      %v5124 = vadd.f32 0.0, %v5123
      %v5125 = vpop.f32.mrb[0].mxu0
      %5126 = vmatprep.mubr.f32.mxu0 0.0
      %5127 = vmatmul.mubr.f32.gmra.mrb[0].mxu0 %v1119
      %v5128 = vpop.f32.mrb[0].mxu0
      %v5129 = vadd.f32 0.0, %v5128
      %v5130 = vpop.f32.mrb[0].mxu0
      %5131 = vdwg.mxu0
      %v5132 = vpack.c.bf16 %v5129, %v5124
      %v5133 = vld [vmem:[%s10 + $0xc0] sm:$0xf]
      %v5134 = vld [vmem:[%s10 + $0xc4] sm:$0xf]
      %v5135 = vld [vmem:[%s10 + $0xc8] sm:$0xf]
      %v5136 = vld [vmem:[%s10 + $0xcc] sm:$0xf]
      %v5137 = vld [vmem:[%s10 + $0xd0] sm:$0xf]
      %v5138 = vld [vmem:[%s10 + $0xd4] sm:$0xf]
      %v5139 = vld [vmem:[%s10 + $0xd8] sm:$0xf]
      %v5140 = vld [vmem:[%s10 + $0xdc] sm:$0xf]
      %v5141 = vld [vmem:[%s10 + $0xe0] sm:$0xf]
      %v5142 = vld [vmem:[%s10 + $0xe4] sm:$0xf]
      %v5143 = vld [vmem:[%s10 + $0xe8] sm:$0xf]
      %v5144 = vld [vmem:[%s10 + $0xec] sm:$0xf]
      %v5145 = vld [vmem:[%s10 + $0xf0] sm:$0xf]
      %v5146 = vld [vmem:[%s10 + $0xf4] sm:$0xf]
      %v5147 = vld [vmem:[%s10 + $0xf8] sm:$0xf]
      %v5148 = vld [vmem:[%s10 + $0xfc] sm:$0xf]
      %v5165 = vunpack.c.l.b16 %v5133
      %v5166 = vunpack.c.l.b16 %v5134
      %v5167 = vunpack.c.l.b16 %v5135
      %v5168 = vunpack.c.l.b16 %v5136
      %v5169 = vunpack.c.l.b16 %v5137
      %v5170 = vunpack.c.l.b16 %v5138
      %v5171 = vunpack.c.l.b16 %v5139
      %v5172 = vunpack.c.l.b16 %v5140
      %v5173 = vunpack.c.l.b16 %v5141
      %v5174 = vunpack.c.l.b16 %v5142
      %v5175 = vunpack.c.l.b16 %v5143
      %v5176 = vunpack.c.l.b16 %v5144
      %v5177 = vunpack.c.l.b16 %v5145
      %v5178 = vunpack.c.l.b16 %v5146
      %v5179 = vunpack.c.l.b16 %v5147
      %v5180 = vunpack.c.l.b16 %v5148
      %v5181 = vpack.c.b16 %v5166, %v5165
      %v5182 = vpack.c.b16 %v5168, %v5167
      %v5183 = vpack.c.b16 %v5170, %v5169
      %v5184 = vpack.c.b16 %v5172, %v5171
      %v5185 = vpack.c.b16 %v5174, %v5173
      %v5186 = vpack.c.b16 %v5176, %v5175
      %v5187 = vpack.c.b16 %v5178, %v5177
      %v5188 = vpack.c.b16 %v5180, %v5179
      %5197 = vmatprep.subr.bf16.mxu0 0
      %5198 = vmatpush1.bf16.msra.mxu0 %v5181
      %5199 = vmatprep.subr.bf16.mxu0 0
      %5200 = vmatpush1.bf16.msra.mxu0 %v5182
      %5201 = vmatprep.subr.bf16.mxu0 0
      %5202 = vmatpush1.bf16.msra.mxu0 %v5183
      %5203 = vmatprep.subr.bf16.mxu0 0
      %5204 = vmatpush1.bf16.msra.mxu0 %v5184
      %5205 = vmatprep.subr.bf16.mxu0 0
      %5206 = vmatpush1.bf16.msra.mxu0 %v5185
      %5207 = vmatprep.subr.bf16.mxu0 0
      %5208 = vmatpush1.bf16.msra.mxu0 %v5186
      %5209 = vmatprep.subr.bf16.mxu0 0
      %5210 = vmatpush1.bf16.msra.mxu0 %v5187
      %5211 = vmatprep.subr.bf16.mxu0 0
      %5212 = vmatpush1.bf16.msra.mxu0 %v5188
      %5213 = vmatprep.subr.bf16.mxu0 0
      %5214 = vmatpush1.bf16.msra.mxu0 0
      %5215 = vmatprep.subr.bf16.mxu0 0
      %5216 = vmatpush1.bf16.msra.mxu0 0
      %5217 = vmatprep.subr.bf16.mxu0 0
      %5218 = vmatpush1.bf16.msra.mxu0 0
      %5219 = vmatprep.subr.bf16.mxu0 0
      %5220 = vmatpush1.bf16.msra.mxu0 0
      %5221 = vmatprep.subr.bf16.mxu0 0
      %5222 = vmatpush1.bf16.msra.mxu0 0
      %5223 = vmatprep.subr.bf16.mxu0 0
      %5224 = vmatpush1.bf16.msra.mxu0 0
      %5225 = vmatprep.subr.bf16.mxu0 0
      %5226 = vmatpush1.bf16.msra.mxu0 0
      %5227 = vmatprep.subr.bf16.mxu0 0
      %5228 = vmatpush1.bf16.msra.mxu0 0
      %5229 = vmatprep.mubr.bf16.mxu0 0
      %5230 = vmatmul.mubr.bf16.gmra.mrb[0].mxu0 %v5132
      %v5231 = vpop.f32.mrb[0].mxu0
      %v5232 = vadd.f32 0.0, %v5231
      %v5233 = vpop.f32.mrb[0].mxu0
      %v5234 = vpop.f32.mrb[0].mxu0
      %v5235 = vadd.f32 0.0, %v5234
      %v5236 = vpop.f32.mrb[0].mxu0
      %5237 = vdwg.mxu0
      %v5238 = vadd.f32 %v5055, %v5232
      %v5239 = vadd.f32 %v5056, %v5235
      %5240 = vmatprep.subr.mxu0 0.0
      %5241 = vmatpush1.msra.mxu0 %v4510
      %5242 = vmatprep.subr.mxu0 0.0
      %5243 = vmatpush1.msra.mxu0 %v4511
      %5244 = vmatprep.subr.mxu0 0.0
      %5245 = vmatpush1.msra.mxu0 0.0
      %5246 = vmatprep.subr.mxu0 0.0
      %5247 = vmatpush1.msra.mxu0 0.0
      %5248 = vmatprep.subr.mxu0 0.0
      %5249 = vmatpush1.msra.mxu0 0.0
      %5250 = vmatprep.subr.mxu0 0.0
      %5251 = vmatpush1.msra.mxu0 0.0
      %5252 = vmatprep.subr.mxu0 0.0
      %5253 = vmatpush1.msra.mxu0 0.0
      %5254 = vmatprep.subr.mxu0 0.0
      %5255 = vmatpush1.msra.mxu0 0.0
      %5256 = vmatprep.subr.mxu0 0.0
      %5257 = vmatpush1.msra.mxu0 0.0
      %5258 = vmatprep.subr.mxu0 0.0
      %5259 = vmatpush1.msra.mxu0 0.0
      %5260 = vmatprep.subr.mxu0 0.0
      %5261 = vmatpush1.msra.mxu0 0.0
      %5262 = vmatprep.subr.mxu0 0.0
      %5263 = vmatpush1.msra.mxu0 0.0
      %5264 = vmatprep.subr.mxu0 0.0
      %5265 = vmatpush1.msra.mxu0 0.0
      %5266 = vmatprep.subr.mxu0 0.0
      %5267 = vmatpush1.msra.mxu0 0.0
      %5268 = vmatprep.subr.mxu0 0.0
      %5269 = vmatpush1.msra.mxu0 0.0
      %5270 = vmatprep.subr.mxu0 0.0
      %5271 = vmatpush1.msra.mxu0 0.0
      %5272 = vmatprep.subr.mxu0 0.0
      %5273 = vmatpush1.msra.mxu0 0.0
      %5274 = vmatprep.subr.mxu0 0.0
      %5275 = vmatpush1.msra.mxu0 0.0
      %5276 = vmatprep.subr.mxu0 0.0
      %5277 = vmatpush1.msra.mxu0 0.0
      %5278 = vmatprep.subr.mxu0 0.0
      %5279 = vmatpush1.msra.mxu0 0.0
      %5280 = vmatprep.subr.mxu0 0.0
      %5281 = vmatpush1.msra.mxu0 0.0
      %5282 = vmatprep.subr.mxu0 0.0
      %5283 = vmatpush1.msra.mxu0 0.0
      %5284 = vmatprep.subr.mxu0 0.0
      %5285 = vmatpush1.msra.mxu0 0.0
      %5286 = vmatprep.subr.mxu0 0.0
      %5287 = vmatpush1.msra.mxu0 0.0
      %5288 = vmatprep.subr.mxu0 0.0
      %5289 = vmatpush1.msra.mxu0 0.0
      %5290 = vmatprep.subr.mxu0 0.0
      %5291 = vmatpush1.msra.mxu0 0.0
      %5292 = vmatprep.subr.mxu0 0.0
      %5293 = vmatpush1.msra.mxu0 0.0
      %5294 = vmatprep.subr.mxu0 0.0
      %5295 = vmatpush1.msra.mxu0 0.0
      %5296 = vmatprep.subr.mxu0 0.0
      %5297 = vmatpush1.msra.mxu0 0.0
      %5298 = vmatprep.subr.mxu0 0.0
      %5299 = vmatpush1.msra.mxu0 0.0
      %5300 = vmatprep.subr.mxu0 0.0
      %5301 = vmatpush1.msra.mxu0 0.0
      %5302 = vmatprep.subr.mxu0 0.0
      %5303 = vmatpush1.msra.mxu0 0.0
      %5304 = vmatprep.mubr.f32.mxu0 0.0
      %5305 = vmatmul.mubr.f32.gmra.mrb[0].mxu0 %v1299
      %v5306 = vpop.f32.mrb[0].mxu0
      %v5307 = vadd.f32 0.0, %v5306
      %v5308 = vpop.f32.mrb[0].mxu0
      %5309 = vmatprep.mubr.f32.mxu0 0.0
      %5310 = vmatmul.mubr.f32.gmra.mrb[0].mxu0 %v1302
      %v5311 = vpop.f32.mrb[0].mxu0
      %v5312 = vadd.f32 0.0, %v5311
      %v5313 = vpop.f32.mrb[0].mxu0
      %5314 = vdwg.mxu0
      %v5315 = vpack.c.bf16 %v5312, %v5307
      %v5316 = vld [vmem:[%s10 + $0x100] sm:$0xf]
      %v5317 = vld [vmem:[%s10 + $0x104] sm:$0xf]
      %v5318 = vld [vmem:[%s10 + $0x108] sm:$0xf]
      %v5319 = vld [vmem:[%s10 + $0x10c] sm:$0xf]
      %v5320 = vld [vmem:[%s10 + $0x110] sm:$0xf]
      %v5321 = vld [vmem:[%s10 + $0x114] sm:$0xf]
      %v5322 = vld [vmem:[%s10 + $0x118] sm:$0xf]
      %v5323 = vld [vmem:[%s10 + $0x11c] sm:$0xf]
      %v5324 = vld [vmem:[%s10 + $0x120] sm:$0xf]
      %v5325 = vld [vmem:[%s10 + $0x124] sm:$0xf]
      %v5326 = vld [vmem:[%s10 + $0x128] sm:$0xf]
      %v5327 = vld [vmem:[%s10 + $0x12c] sm:$0xf]
      %v5328 = vld [vmem:[%s10 + $0x130] sm:$0xf]
      %v5329 = vld [vmem:[%s10 + $0x134] sm:$0xf]
      %v5330 = vld [vmem:[%s10 + $0x138] sm:$0xf]
      %v5331 = vld [vmem:[%s10 + $0x13c] sm:$0xf]
      %v5348 = vunpack.c.l.b16 %v5316
      %v5349 = vunpack.c.l.b16 %v5317
      %v5350 = vunpack.c.l.b16 %v5318
      %v5351 = vunpack.c.l.b16 %v5319
      %v5352 = vunpack.c.l.b16 %v5320
      %v5353 = vunpack.c.l.b16 %v5321
      %v5354 = vunpack.c.l.b16 %v5322
      %v5355 = vunpack.c.l.b16 %v5323
      %v5356 = vunpack.c.l.b16 %v5324
      %v5357 = vunpack.c.l.b16 %v5325
      %v5358 = vunpack.c.l.b16 %v5326
      %v5359 = vunpack.c.l.b16 %v5327
      %v5360 = vunpack.c.l.b16 %v5328
      %v5361 = vunpack.c.l.b16 %v5329
      %v5362 = vunpack.c.l.b16 %v5330
      %v5363 = vunpack.c.l.b16 %v5331
      %v5364 = vpack.c.b16 %v5349, %v5348
      %v5365 = vpack.c.b16 %v5351, %v5350
      %v5366 = vpack.c.b16 %v5353, %v5352
      %v5367 = vpack.c.b16 %v5355, %v5354
      %v5368 = vpack.c.b16 %v5357, %v5356
      %v5369 = vpack.c.b16 %v5359, %v5358
      %v5370 = vpack.c.b16 %v5361, %v5360
      %v5371 = vpack.c.b16 %v5363, %v5362
      %5380 = vmatprep.subr.bf16.mxu0 0
      %5381 = vmatpush1.bf16.msra.mxu0 %v5364
      %5382 = vmatprep.subr.bf16.mxu0 0
      %5383 = vmatpush1.bf16.msra.mxu0 %v5365
      %5384 = vmatprep.subr.bf16.mxu0 0
      %5385 = vmatpush1.bf16.msra.mxu0 %v5366
      %5386 = vmatprep.subr.bf16.mxu0 0
      %5387 = vmatpush1.bf16.msra.mxu0 %v5367
      %5388 = vmatprep.subr.bf16.mxu0 0
      %5389 = vmatpush1.bf16.msra.mxu0 %v5368
      %5390 = vmatprep.subr.bf16.mxu0 0
      %5391 = vmatpush1.bf16.msra.mxu0 %v5369
      %5392 = vmatprep.subr.bf16.mxu0 0
      %5393 = vmatpush1.bf16.msra.mxu0 %v5370
      %5394 = vmatprep.subr.bf16.mxu0 0
      %5395 = vmatpush1.bf16.msra.mxu0 %v5371
      %5396 = vmatprep.subr.bf16.mxu0 0
      %5397 = vmatpush1.bf16.msra.mxu0 0
      %5398 = vmatprep.subr.bf16.mxu0 0
      %5399 = vmatpush1.bf16.msra.mxu0 0
      %5400 = vmatprep.subr.bf16.mxu0 0
      %5401 = vmatpush1.bf16.msra.mxu0 0
      %5402 = vmatprep.subr.bf16.mxu0 0
      %5403 = vmatpush1.bf16.msra.mxu0 0
      %5404 = vmatprep.subr.bf16.mxu0 0
      %5405 = vmatpush1.bf16.msra.mxu0 0
      %5406 = vmatprep.subr.bf16.mxu0 0
      %5407 = vmatpush1.bf16.msra.mxu0 0
      %5408 = vmatprep.subr.bf16.mxu0 0
      %5409 = vmatpush1.bf16.msra.mxu0 0
      %5410 = vmatprep.subr.bf16.mxu0 0
      %5411 = vmatpush1.bf16.msra.mxu0 0
      %5412 = vmatprep.mubr.bf16.mxu0 0
      %5413 = vmatmul.mubr.bf16.gmra.mrb[0].mxu0 %v5315
      %v5414 = vpop.f32.mrb[0].mxu0
      %v5415 = vadd.f32 0.0, %v5414
      %v5416 = vpop.f32.mrb[0].mxu0
      %v5417 = vpop.f32.mrb[0].mxu0
      %v5418 = vadd.f32 0.0, %v5417
      %v5419 = vpop.f32.mrb[0].mxu0
      %5420 = vdwg.mxu0
      %v5421 = vadd.f32 %v5238, %v5415
      %v5422 = vadd.f32 %v5239, %v5418
      %5423 = vmatprep.subr.mxu0 0.0
      %5424 = vmatpush1.msra.mxu0 %v4510
      %5425 = vmatprep.subr.mxu0 0.0
      %5426 = vmatpush1.msra.mxu0 %v4511
      %5427 = vmatprep.subr.mxu0 0.0
      %5428 = vmatpush1.msra.mxu0 0.0
      %5429 = vmatprep.subr.mxu0 0.0
      %5430 = vmatpush1.msra.mxu0 0.0
      %5431 = vmatprep.subr.mxu0 0.0
      %5432 = vmatpush1.msra.mxu0 0.0
      %5433 = vmatprep.subr.mxu0 0.0
      %5434 = vmatpush1.msra.mxu0 0.0
      %5435 = vmatprep.subr.mxu0 0.0
      %5436 = vmatpush1.msra.mxu0 0.0
      %5437 = vmatprep.subr.mxu0 0.0
      %5438 = vmatpush1.msra.mxu0 0.0
      %5439 = vmatprep.subr.mxu0 0.0
      %5440 = vmatpush1.msra.mxu0 0.0
      %5441 = vmatprep.subr.mxu0 0.0
      %5442 = vmatpush1.msra.mxu0 0.0
      %5443 = vmatprep.subr.mxu0 0.0
      %5444 = vmatpush1.msra.mxu0 0.0
      %5445 = vmatprep.subr.mxu0 0.0
      %5446 = vmatpush1.msra.mxu0 0.0
      %5447 = vmatprep.subr.mxu0 0.0
      %5448 = vmatpush1.msra.mxu0 0.0
      %5449 = vmatprep.subr.mxu0 0.0
      %5450 = vmatpush1.msra.mxu0 0.0
      %5451 = vmatprep.subr.mxu0 0.0
      %5452 = vmatpush1.msra.mxu0 0.0
      %5453 = vmatprep.subr.mxu0 0.0
      %5454 = vmatpush1.msra.mxu0 0.0
      %5455 = vmatprep.subr.mxu0 0.0
      %5456 = vmatpush1.msra.mxu0 0.0
      %5457 = vmatprep.subr.mxu0 0.0
      %5458 = vmatpush1.msra.mxu0 0.0
      %5459 = vmatprep.subr.mxu0 0.0
      %5460 = vmatpush1.msra.mxu0 0.0
      %5461 = vmatprep.subr.mxu0 0.0
      %5462 = vmatpush1.msra.mxu0 0.0
      %5463 = vmatprep.subr.mxu0 0.0
      %5464 = vmatpush1.msra.mxu0 0.0
      %5465 = vmatprep.subr.mxu0 0.0
      %5466 = vmatpush1.msra.mxu0 0.0
      %5467 = vmatprep.subr.mxu0 0.0
      %5468 = vmatpush1.msra.mxu0 0.0
      %5469 = vmatprep.subr.mxu0 0.0
      %5470 = vmatpush1.msra.mxu0 0.0
      %5471 = vmatprep.subr.mxu0 0.0
      %5472 = vmatpush1.msra.mxu0 0.0
      %5473 = vmatprep.subr.mxu0 0.0
      %5474 = vmatpush1.msra.mxu0 0.0
      %5475 = vmatprep.subr.mxu0 0.0
      %5476 = vmatpush1.msra.mxu0 0.0
      %5477 = vmatprep.subr.mxu0 0.0
      %5478 = vmatpush1.msra.mxu0 0.0
      %5479 = vmatprep.subr.mxu0 0.0
      %5480 = vmatpush1.msra.mxu0 0.0
      %5481 = vmatprep.subr.mxu0 0.0
      %5482 = vmatpush1.msra.mxu0 0.0
      %5483 = vmatprep.subr.mxu0 0.0
      %5484 = vmatpush1.msra.mxu0 0.0
      %5485 = vmatprep.subr.mxu0 0.0
      %5486 = vmatpush1.msra.mxu0 0.0
      %5487 = vmatprep.mubr.f32.mxu0 0.0
      %5488 = vmatmul.mubr.f32.gmra.mrb[0].mxu0 %v1482
      %v5489 = vpop.f32.mrb[0].mxu0
      %v5490 = vadd.f32 0.0, %v5489
      %v5491 = vpop.f32.mrb[0].mxu0
      %5492 = vmatprep.mubr.f32.mxu0 0.0
      %5493 = vmatmul.mubr.f32.gmra.mrb[0].mxu0 %v1485
      %v5494 = vpop.f32.mrb[0].mxu0
      %v5495 = vadd.f32 0.0, %v5494
      %v5496 = vpop.f32.mrb[0].mxu0
      %5497 = vdwg.mxu0
      %v5498 = vpack.c.bf16 %v5495, %v5490
      %v5499 = vld [vmem:[%s10 + $0x140] sm:$0xf]
      %v5500 = vld [vmem:[%s10 + $0x144] sm:$0xf]
      %v5501 = vld [vmem:[%s10 + $0x148] sm:$0xf]
      %v5502 = vld [vmem:[%s10 + $0x14c] sm:$0xf]
      %v5503 = vld [vmem:[%s10 + $0x150] sm:$0xf]
      %v5504 = vld [vmem:[%s10 + $0x154] sm:$0xf]
      %v5505 = vld [vmem:[%s10 + $0x158] sm:$0xf]
      %v5506 = vld [vmem:[%s10 + $0x15c] sm:$0xf]
      %v5507 = vld [vmem:[%s10 + $0x160] sm:$0xf]
      %v5508 = vld [vmem:[%s10 + $0x164] sm:$0xf]
      %v5509 = vld [vmem:[%s10 + $0x168] sm:$0xf]
      %v5510 = vld [vmem:[%s10 + $0x16c] sm:$0xf]
      %v5511 = vld [vmem:[%s10 + $0x170] sm:$0xf]
      %v5512 = vld [vmem:[%s10 + $0x174] sm:$0xf]
      %v5513 = vld [vmem:[%s10 + $0x178] sm:$0xf]
      %v5514 = vld [vmem:[%s10 + $0x17c] sm:$0xf]
      %v5531 = vunpack.c.l.b16 %v5499
      %v5532 = vunpack.c.l.b16 %v5500
      %v5533 = vunpack.c.l.b16 %v5501
      %v5534 = vunpack.c.l.b16 %v5502
      %v5535 = vunpack.c.l.b16 %v5503
      %v5536 = vunpack.c.l.b16 %v5504
      %v5537 = vunpack.c.l.b16 %v5505
      %v5538 = vunpack.c.l.b16 %v5506
      %v5539 = vunpack.c.l.b16 %v5507
      %v5540 = vunpack.c.l.b16 %v5508
      %v5541 = vunpack.c.l.b16 %v5509
      %v5542 = vunpack.c.l.b16 %v5510
      %v5543 = vunpack.c.l.b16 %v5511
      %v5544 = vunpack.c.l.b16 %v5512
      %v5545 = vunpack.c.l.b16 %v5513
      %v5546 = vunpack.c.l.b16 %v5514
      %v5547 = vpack.c.b16 %v5532, %v5531
      %v5548 = vpack.c.b16 %v5534, %v5533
      %v5549 = vpack.c.b16 %v5536, %v5535
      %v5550 = vpack.c.b16 %v5538, %v5537
      %v5551 = vpack.c.b16 %v5540, %v5539
      %v5552 = vpack.c.b16 %v5542, %v5541
      %v5553 = vpack.c.b16 %v5544, %v5543
      %v5554 = vpack.c.b16 %v5546, %v5545
      %5563 = vmatprep.subr.bf16.mxu0 0
      %5564 = vmatpush1.bf16.msra.mxu0 %v5547
      %5565 = vmatprep.subr.bf16.mxu0 0
      %5566 = vmatpush1.bf16.msra.mxu0 %v5548
      %5567 = vmatprep.subr.bf16.mxu0 0
      %5568 = vmatpush1.bf16.msra.mxu0 %v5549
      %5569 = vmatprep.subr.bf16.mxu0 0
      %5570 = vmatpush1.bf16.msra.mxu0 %v5550
      %5571 = vmatprep.subr.bf16.mxu0 0
      %5572 = vmatpush1.bf16.msra.mxu0 %v5551
      %5573 = vmatprep.subr.bf16.mxu0 0
      %5574 = vmatpush1.bf16.msra.mxu0 %v5552
      %5575 = vmatprep.subr.bf16.mxu0 0
      %5576 = vmatpush1.bf16.msra.mxu0 %v5553
      %5577 = vmatprep.subr.bf16.mxu0 0
      %5578 = vmatpush1.bf16.msra.mxu0 %v5554
      %5579 = vmatprep.subr.bf16.mxu0 0
      %5580 = vmatpush1.bf16.msra.mxu0 0
      %5581 = vmatprep.subr.bf16.mxu0 0
      %5582 = vmatpush1.bf16.msra.mxu0 0
      %5583 = vmatprep.subr.bf16.mxu0 0
      %5584 = vmatpush1.bf16.msra.mxu0 0
      %5585 = vmatprep.subr.bf16.mxu0 0
      %5586 = vmatpush1.bf16.msra.mxu0 0
      %5587 = vmatprep.subr.bf16.mxu0 0
      %5588 = vmatpush1.bf16.msra.mxu0 0
      %5589 = vmatprep.subr.bf16.mxu0 0
      %5590 = vmatpush1.bf16.msra.mxu0 0
      %5591 = vmatprep.subr.bf16.mxu0 0
      %5592 = vmatpush1.bf16.msra.mxu0 0
      %5593 = vmatprep.subr.bf16.mxu0 0
      %5594 = vmatpush1.bf16.msra.mxu0 0
      %5595 = vmatprep.mubr.bf16.mxu0 0
      %5596 = vmatmul.mubr.bf16.gmra.mrb[0].mxu0 %v5498
      %v5597 = vpop.f32.mrb[0].mxu0
      %v5598 = vadd.f32 0.0, %v5597
      %v5599 = vpop.f32.mrb[0].mxu0
      %v5600 = vpop.f32.mrb[0].mxu0
      %v5601 = vadd.f32 0.0, %v5600
      %v5602 = vpop.f32.mrb[0].mxu0
      %5603 = vdwg.mxu0
      %v5604 = vadd.f32 %v5421, %v5598
      %v5605 = vadd.f32 %v5422, %v5601
      %5606 = vmatprep.subr.mxu0 0.0
      %5607 = vmatpush1.msra.mxu0 %v4510
      %5608 = vmatprep.subr.mxu0 0.0
      %5609 = vmatpush1.msra.mxu0 %v4511
      %5610 = vmatprep.subr.mxu0 0.0
      %5611 = vmatpush1.msra.mxu0 0.0
      %5612 = vmatprep.subr.mxu0 0.0
      %5613 = vmatpush1.msra.mxu0 0.0
      %5614 = vmatprep.subr.mxu0 0.0
      %5615 = vmatpush1.msra.mxu0 0.0
      %5616 = vmatprep.subr.mxu0 0.0
      %5617 = vmatpush1.msra.mxu0 0.0
      %5618 = vmatprep.subr.mxu0 0.0
      %5619 = vmatpush1.msra.mxu0 0.0
      %5620 = vmatprep.subr.mxu0 0.0
      %5621 = vmatpush1.msra.mxu0 0.0
      %5622 = vmatprep.subr.mxu0 0.0
      %5623 = vmatpush1.msra.mxu0 0.0
      %5624 = vmatprep.subr.mxu0 0.0
      %5625 = vmatpush1.msra.mxu0 0.0
      %5626 = vmatprep.subr.mxu0 0.0
      %5627 = vmatpush1.msra.mxu0 0.0
      %5628 = vmatprep.subr.mxu0 0.0
      %5629 = vmatpush1.msra.mxu0 0.0
      %5630 = vmatprep.subr.mxu0 0.0
      %5631 = vmatpush1.msra.mxu0 0.0
      %5632 = vmatprep.subr.mxu0 0.0
      %5633 = vmatpush1.msra.mxu0 0.0
      %5634 = vmatprep.subr.mxu0 0.0
      %5635 = vmatpush1.msra.mxu0 0.0
      %5636 = vmatprep.subr.mxu0 0.0
      %5637 = vmatpush1.msra.mxu0 0.0
      %5638 = vmatprep.subr.mxu0 0.0
      %5639 = vmatpush1.msra.mxu0 0.0
      %5640 = vmatprep.subr.mxu0 0.0
      %5641 = vmatpush1.msra.mxu0 0.0
      %5642 = vmatprep.subr.mxu0 0.0
      %5643 = vmatpush1.msra.mxu0 0.0
      %5644 = vmatprep.subr.mxu0 0.0
      %5645 = vmatpush1.msra.mxu0 0.0
      %5646 = vmatprep.subr.mxu0 0.0
      %5647 = vmatpush1.msra.mxu0 0.0
      %5648 = vmatprep.subr.mxu0 0.0
      %5649 = vmatpush1.msra.mxu0 0.0
      %5650 = vmatprep.subr.mxu0 0.0
      %5651 = vmatpush1.msra.mxu0 0.0
      %5652 = vmatprep.subr.mxu0 0.0
      %5653 = vmatpush1.msra.mxu0 0.0
      %5654 = vmatprep.subr.mxu0 0.0
      %5655 = vmatpush1.msra.mxu0 0.0
      %5656 = vmatprep.subr.mxu0 0.0
      %5657 = vmatpush1.msra.mxu0 0.0
      %5658 = vmatprep.subr.mxu0 0.0
      %5659 = vmatpush1.msra.mxu0 0.0
      %5660 = vmatprep.subr.mxu0 0.0
      %5661 = vmatpush1.msra.mxu0 0.0
      %5662 = vmatprep.subr.mxu0 0.0
      %5663 = vmatpush1.msra.mxu0 0.0
      %5664 = vmatprep.subr.mxu0 0.0
      %5665 = vmatpush1.msra.mxu0 0.0
      %5666 = vmatprep.subr.mxu0 0.0
      %5667 = vmatpush1.msra.mxu0 0.0
      %5668 = vmatprep.subr.mxu0 0.0
      %5669 = vmatpush1.msra.mxu0 0.0
      %5670 = vmatprep.mubr.f32.mxu0 0.0
      %5671 = vmatmul.mubr.f32.gmra.mrb[0].mxu0 %v1665
      %v5672 = vpop.f32.mrb[0].mxu0
      %v5673 = vadd.f32 0.0, %v5672
      %v5674 = vpop.f32.mrb[0].mxu0
      %5675 = vmatprep.mubr.f32.mxu0 0.0
      %5676 = vmatmul.mubr.f32.gmra.mrb[0].mxu0 %v1668
      %v5677 = vpop.f32.mrb[0].mxu0
      %v5678 = vadd.f32 0.0, %v5677
      %v5679 = vpop.f32.mrb[0].mxu0
      %5680 = vdwg.mxu0
      %v5681 = vpack.c.bf16 %v5678, %v5673
      %v5682 = vld [vmem:[%s10 + $0x180] sm:$0xf]
      %v5683 = vld [vmem:[%s10 + $0x184] sm:$0xf]
      %v5684 = vld [vmem:[%s10 + $0x188] sm:$0xf]
      %v5685 = vld [vmem:[%s10 + $0x18c] sm:$0xf]
      %v5686 = vld [vmem:[%s10 + $0x190] sm:$0xf]
      %v5687 = vld [vmem:[%s10 + $0x194] sm:$0xf]
      %v5688 = vld [vmem:[%s10 + $0x198] sm:$0xf]
      %v5689 = vld [vmem:[%s10 + $0x19c] sm:$0xf]
      %v5690 = vld [vmem:[%s10 + $0x1a0] sm:$0xf]
      %v5691 = vld [vmem:[%s10 + $0x1a4] sm:$0xf]
      %v5692 = vld [vmem:[%s10 + $0x1a8] sm:$0xf]
      %v5693 = vld [vmem:[%s10 + $0x1ac] sm:$0xf]
      %v5694 = vld [vmem:[%s10 + $0x1b0] sm:$0xf]
      %v5695 = vld [vmem:[%s10 + $0x1b4] sm:$0xf]
      %v5696 = vld [vmem:[%s10 + $0x1b8] sm:$0xf]
      %v5697 = vld [vmem:[%s10 + $0x1bc] sm:$0xf]
      %v5714 = vunpack.c.l.b16 %v5682
      %v5715 = vunpack.c.l.b16 %v5683
      %v5716 = vunpack.c.l.b16 %v5684
      %v5717 = vunpack.c.l.b16 %v5685
      %v5718 = vunpack.c.l.b16 %v5686
      %v5719 = vunpack.c.l.b16 %v5687
      %v5720 = vunpack.c.l.b16 %v5688
      %v5721 = vunpack.c.l.b16 %v5689
      %v5722 = vunpack.c.l.b16 %v5690
      %v5723 = vunpack.c.l.b16 %v5691
      %v5724 = vunpack.c.l.b16 %v5692
      %v5725 = vunpack.c.l.b16 %v5693
      %v5726 = vunpack.c.l.b16 %v5694
      %v5727 = vunpack.c.l.b16 %v5695
      %v5728 = vunpack.c.l.b16 %v5696
      %v5729 = vunpack.c.l.b16 %v5697
      %v5730 = vpack.c.b16 %v5715, %v5714
      %v5731 = vpack.c.b16 %v5717, %v5716
      %v5732 = vpack.c.b16 %v5719, %v5718
      %v5733 = vpack.c.b16 %v5721, %v5720
      %v5734 = vpack.c.b16 %v5723, %v5722
      %v5735 = vpack.c.b16 %v5725, %v5724
      %v5736 = vpack.c.b16 %v5727, %v5726
      %v5737 = vpack.c.b16 %v5729, %v5728
      %5746 = vmatprep.subr.bf16.mxu0 0
      %5747 = vmatpush1.bf16.msra.mxu0 %v5730
      %5748 = vmatprep.subr.bf16.mxu0 0
      %5749 = vmatpush1.bf16.msra.mxu0 %v5731
      %5750 = vmatprep.subr.bf16.mxu0 0
      %5751 = vmatpush1.bf16.msra.mxu0 %v5732
      %5752 = vmatprep.subr.bf16.mxu0 0
      %5753 = vmatpush1.bf16.msra.mxu0 %v5733
      %5754 = vmatprep.subr.bf16.mxu0 0
      %5755 = vmatpush1.bf16.msra.mxu0 %v5734
      %5756 = vmatprep.subr.bf16.mxu0 0
      %5757 = vmatpush1.bf16.msra.mxu0 %v5735
      %5758 = vmatprep.subr.bf16.mxu0 0
      %5759 = vmatpush1.bf16.msra.mxu0 %v5736
      %5760 = vmatprep.subr.bf16.mxu0 0
      %5761 = vmatpush1.bf16.msra.mxu0 %v5737
      %5762 = vmatprep.subr.bf16.mxu0 0
      %5763 = vmatpush1.bf16.msra.mxu0 0
      %5764 = vmatprep.subr.bf16.mxu0 0
      %5765 = vmatpush1.bf16.msra.mxu0 0
      %5766 = vmatprep.subr.bf16.mxu0 0
      %5767 = vmatpush1.bf16.msra.mxu0 0
      %5768 = vmatprep.subr.bf16.mxu0 0
      %5769 = vmatpush1.bf16.msra.mxu0 0
      %5770 = vmatprep.subr.bf16.mxu0 0
      %5771 = vmatpush1.bf16.msra.mxu0 0
      %5772 = vmatprep.subr.bf16.mxu0 0
      %5773 = vmatpush1.bf16.msra.mxu0 0
      %5774 = vmatprep.subr.bf16.mxu0 0
      %5775 = vmatpush1.bf16.msra.mxu0 0
      %5776 = vmatprep.subr.bf16.mxu0 0
      %5777 = vmatpush1.bf16.msra.mxu0 0
      %5778 = vmatprep.mubr.bf16.mxu0 0
      %5779 = vmatmul.mubr.bf16.gmra.mrb[0].mxu0 %v5681
      %v5780 = vpop.f32.mrb[0].mxu0
      %v5781 = vadd.f32 0.0, %v5780
      %v5782 = vpop.f32.mrb[0].mxu0
      %v5783 = vpop.f32.mrb[0].mxu0
      %v5784 = vadd.f32 0.0, %v5783
      %v5785 = vpop.f32.mrb[0].mxu0
      %5786 = vdwg.mxu0
      %v5787 = vadd.f32 %v5604, %v5781
      %v5788 = vadd.f32 %v5605, %v5784
      %5789 = vmatprep.subr.mxu0 0.0
      %5790 = vmatpush1.msra.mxu0 %v4510
      %5791 = vmatprep.subr.mxu0 0.0
      %5792 = vmatpush1.msra.mxu0 %v4511
      %5793 = vmatprep.subr.mxu0 0.0
      %5794 = vmatpush1.msra.mxu0 0.0
      %5795 = vmatprep.subr.mxu0 0.0
      %5796 = vmatpush1.msra.mxu0 0.0
      %5797 = vmatprep.subr.mxu0 0.0
      %5798 = vmatpush1.msra.mxu0 0.0
      %5799 = vmatprep.subr.mxu0 0.0
      %5800 = vmatpush1.msra.mxu0 0.0
      %5801 = vmatprep.subr.mxu0 0.0
      %5802 = vmatpush1.msra.mxu0 0.0
      %5803 = vmatprep.subr.mxu0 0.0
      %5804 = vmatpush1.msra.mxu0 0.0
      %5805 = vmatprep.subr.mxu0 0.0
      %5806 = vmatpush1.msra.mxu0 0.0
      %5807 = vmatprep.subr.mxu0 0.0
      %5808 = vmatpush1.msra.mxu0 0.0
      %5809 = vmatprep.subr.mxu0 0.0
      %5810 = vmatpush1.msra.mxu0 0.0
      %5811 = vmatprep.subr.mxu0 0.0
      %5812 = vmatpush1.msra.mxu0 0.0
      %5813 = vmatprep.subr.mxu0 0.0
      %5814 = vmatpush1.msra.mxu0 0.0
      %5815 = vmatprep.subr.mxu0 0.0
      %5816 = vmatpush1.msra.mxu0 0.0
      %5817 = vmatprep.subr.mxu0 0.0
      %5818 = vmatpush1.msra.mxu0 0.0
      %5819 = vmatprep.subr.mxu0 0.0
      %5820 = vmatpush1.msra.mxu0 0.0
      %5821 = vmatprep.subr.mxu0 0.0
      %5822 = vmatpush1.msra.mxu0 0.0
      %5823 = vmatprep.subr.mxu0 0.0
      %5824 = vmatpush1.msra.mxu0 0.0
      %5825 = vmatprep.subr.mxu0 0.0
      %5826 = vmatpush1.msra.mxu0 0.0
      %5827 = vmatprep.subr.mxu0 0.0
      %5828 = vmatpush1.msra.mxu0 0.0
      %5829 = vmatprep.subr.mxu0 0.0
      %5830 = vmatpush1.msra.mxu0 0.0
      %5831 = vmatprep.subr.mxu0 0.0
      %5832 = vmatpush1.msra.mxu0 0.0
      %5833 = vmatprep.subr.mxu0 0.0
      %5834 = vmatpush1.msra.mxu0 0.0
      %5835 = vmatprep.subr.mxu0 0.0
      %5836 = vmatpush1.msra.mxu0 0.0
      %5837 = vmatprep.subr.mxu0 0.0
      %5838 = vmatpush1.msra.mxu0 0.0
      %5839 = vmatprep.subr.mxu0 0.0
      %5840 = vmatpush1.msra.mxu0 0.0
      %5841 = vmatprep.subr.mxu0 0.0
      %5842 = vmatpush1.msra.mxu0 0.0
      %5843 = vmatprep.subr.mxu0 0.0
      %5844 = vmatpush1.msra.mxu0 0.0
      %5845 = vmatprep.subr.mxu0 0.0
      %5846 = vmatpush1.msra.mxu0 0.0
      %5847 = vmatprep.subr.mxu0 0.0
      %5848 = vmatpush1.msra.mxu0 0.0
      %5849 = vmatprep.subr.mxu0 0.0
      %5850 = vmatpush1.msra.mxu0 0.0
      %5851 = vmatprep.subr.mxu0 0.0
      %5852 = vmatpush1.msra.mxu0 0.0
      %5853 = vmatprep.mubr.f32.mxu0 0.0
      %5854 = vmatmul.mubr.f32.gmra.mrb[0].mxu0 %v1848
      %v5855 = vpop.f32.mrb[0].mxu0
      %v5856 = vadd.f32 0.0, %v5855
      %v5857 = vpop.f32.mrb[0].mxu0
      %5858 = vmatprep.mubr.f32.mxu0 0.0
      %5859 = vmatmul.mubr.f32.gmra.mrb[0].mxu0 %v1851
      %v5860 = vpop.f32.mrb[0].mxu0
      %v5861 = vadd.f32 0.0, %v5860
      %v5862 = vpop.f32.mrb[0].mxu0
      %5863 = vdwg.mxu0
      %v5864 = vpack.c.bf16 %v5861, %v5856
      %v5865 = vld [vmem:[%s10 + $0x1c0] sm:$0xf]
      %v5866 = vld [vmem:[%s10 + $0x1c4] sm:$0xf]
      %v5867 = vld [vmem:[%s10 + $0x1c8] sm:$0xf]
      %v5868 = vld [vmem:[%s10 + $0x1cc] sm:$0xf]
      %v5869 = vld [vmem:[%s10 + $0x1d0] sm:$0xf]
      %v5870 = vld [vmem:[%s10 + $0x1d4] sm:$0xf]
      %v5871 = vld [vmem:[%s10 + $0x1d8] sm:$0xf]
      %v5872 = vld [vmem:[%s10 + $0x1dc] sm:$0xf]
      %v5873 = vld [vmem:[%s10 + $0x1e0] sm:$0xf]
      %v5874 = vld [vmem:[%s10 + $0x1e4] sm:$0xf]
      %v5875 = vld [vmem:[%s10 + $0x1e8] sm:$0xf]
      %v5876 = vld [vmem:[%s10 + $0x1ec] sm:$0xf]
      %v5877 = vld [vmem:[%s10 + $0x1f0] sm:$0xf]
      %v5878 = vld [vmem:[%s10 + $0x1f4] sm:$0xf]
      %v5879 = vld [vmem:[%s10 + $0x1f8] sm:$0xf]
      %v5880 = vld [vmem:[%s10 + $0x1fc] sm:$0xf]
      %v5897 = vunpack.c.l.b16 %v5865
      %v5898 = vunpack.c.l.b16 %v5866
      %v5899 = vunpack.c.l.b16 %v5867
      %v5900 = vunpack.c.l.b16 %v5868
      %v5901 = vunpack.c.l.b16 %v5869
      %v5902 = vunpack.c.l.b16 %v5870
      %v5903 = vunpack.c.l.b16 %v5871
      %v5904 = vunpack.c.l.b16 %v5872
      %v5905 = vunpack.c.l.b16 %v5873
      %v5906 = vunpack.c.l.b16 %v5874
      %v5907 = vunpack.c.l.b16 %v5875
      %v5908 = vunpack.c.l.b16 %v5876
      %v5909 = vunpack.c.l.b16 %v5877
      %v5910 = vunpack.c.l.b16 %v5878
      %v5911 = vunpack.c.l.b16 %v5879
      %v5912 = vunpack.c.l.b16 %v5880
      %v5913 = vpack.c.b16 %v5898, %v5897
      %v5914 = vpack.c.b16 %v5900, %v5899
      %v5915 = vpack.c.b16 %v5902, %v5901
      %v5916 = vpack.c.b16 %v5904, %v5903
      %v5917 = vpack.c.b16 %v5906, %v5905
      %v5918 = vpack.c.b16 %v5908, %v5907
      %v5919 = vpack.c.b16 %v5910, %v5909
      %v5920 = vpack.c.b16 %v5912, %v5911
      %5929 = vmatprep.subr.bf16.mxu0 0
      %5930 = vmatpush1.bf16.msra.mxu0 %v5913
      %5931 = vmatprep.subr.bf16.mxu0 0
      %5932 = vmatpush1.bf16.msra.mxu0 %v5914
      %5933 = vmatprep.subr.bf16.mxu0 0
      %5934 = vmatpush1.bf16.msra.mxu0 %v5915
      %5935 = vmatprep.subr.bf16.mxu0 0
      %5936 = vmatpush1.bf16.msra.mxu0 %v5916
      %5937 = vmatprep.subr.bf16.mxu0 0
      %5938 = vmatpush1.bf16.msra.mxu0 %v5917
      %5939 = vmatprep.subr.bf16.mxu0 0
      %5940 = vmatpush1.bf16.msra.mxu0 %v5918
      %5941 = vmatprep.subr.bf16.mxu0 0
      %5942 = vmatpush1.bf16.msra.mxu0 %v5919
      %5943 = vmatprep.subr.bf16.mxu0 0
      %5944 = vmatpush1.bf16.msra.mxu0 %v5920
      %5945 = vmatprep.subr.bf16.mxu0 0
      %5946 = vmatpush1.bf16.msra.mxu0 0
      %5947 = vmatprep.subr.bf16.mxu0 0
      %5948 = vmatpush1.bf16.msra.mxu0 0
      %5949 = vmatprep.subr.bf16.mxu0 0
      %5950 = vmatpush1.bf16.msra.mxu0 0
      %5951 = vmatprep.subr.bf16.mxu0 0
      %5952 = vmatpush1.bf16.msra.mxu0 0
      %5953 = vmatprep.subr.bf16.mxu0 0
      %5954 = vmatpush1.bf16.msra.mxu0 0
      %5955 = vmatprep.subr.bf16.mxu0 0
      %5956 = vmatpush1.bf16.msra.mxu0 0
      %5957 = vmatprep.subr.bf16.mxu0 0
      %5958 = vmatpush1.bf16.msra.mxu0 0
      %5959 = vmatprep.subr.bf16.mxu0 0
      %5960 = vmatpush1.bf16.msra.mxu0 0
      %5961 = vmatprep.mubr.bf16.mxu0 0
      %5962 = vmatmul.mubr.bf16.gmra.mrb[0].mxu0 %v5864
      %v5963 = vpop.f32.mrb[0].mxu0
      %v5964 = vadd.f32 0.0, %v5963
      %v5965 = vpop.f32.mrb[0].mxu0
      %v5966 = vpop.f32.mrb[0].mxu0
      %v5967 = vadd.f32 0.0, %v5966
      %v5968 = vpop.f32.mrb[0].mxu0
      %5969 = vdwg.mxu0
      %v5970 = vadd.f32 %v5787, %v5964
      %v5971 = vadd.f32 %v5788, %v5967
      %5972 = vmatprep.subr.mxu0 0.0
      %5973 = vmatpush1.msra.mxu0 %v4510
      %5974 = vmatprep.subr.mxu0 0.0
      %5975 = vmatpush1.msra.mxu0 %v4511
      %5976 = vmatprep.subr.mxu0 0.0
      %5977 = vmatpush1.msra.mxu0 0.0
      %5978 = vmatprep.subr.mxu0 0.0
      %5979 = vmatpush1.msra.mxu0 0.0
      %5980 = vmatprep.subr.mxu0 0.0
      %5981 = vmatpush1.msra.mxu0 0.0
      %5982 = vmatprep.subr.mxu0 0.0
      %5983 = vmatpush1.msra.mxu0 0.0
      %5984 = vmatprep.subr.mxu0 0.0
      %5985 = vmatpush1.msra.mxu0 0.0
      %5986 = vmatprep.subr.mxu0 0.0
      %5987 = vmatpush1.msra.mxu0 0.0
      %5988 = vmatprep.subr.mxu0 0.0
      %5989 = vmatpush1.msra.mxu0 0.0
      %5990 = vmatprep.subr.mxu0 0.0
      %5991 = vmatpush1.msra.mxu0 0.0
      %5992 = vmatprep.subr.mxu0 0.0
      %5993 = vmatpush1.msra.mxu0 0.0
      %5994 = vmatprep.subr.mxu0 0.0
      %5995 = vmatpush1.msra.mxu0 0.0
      %5996 = vmatprep.subr.mxu0 0.0
      %5997 = vmatpush1.msra.mxu0 0.0
      %5998 = vmatprep.subr.mxu0 0.0
      %5999 = vmatpush1.msra.mxu0 0.0
      %6000 = vmatprep.subr.mxu0 0.0
      %6001 = vmatpush1.msra.mxu0 0.0
      %6002 = vmatprep.subr.mxu0 0.0
      %6003 = vmatpush1.msra.mxu0 0.0
      %6004 = vmatprep.subr.mxu0 0.0
      %6005 = vmatpush1.msra.mxu0 0.0
      %6006 = vmatprep.subr.mxu0 0.0
      %6007 = vmatpush1.msra.mxu0 0.0
      %6008 = vmatprep.subr.mxu0 0.0
      %6009 = vmatpush1.msra.mxu0 0.0
      %6010 = vmatprep.subr.mxu0 0.0
      %6011 = vmatpush1.msra.mxu0 0.0
      %6012 = vmatprep.subr.mxu0 0.0
      %6013 = vmatpush1.msra.mxu0 0.0
      %6014 = vmatprep.subr.mxu0 0.0
      %6015 = vmatpush1.msra.mxu0 0.0
      %6016 = vmatprep.subr.mxu0 0.0
      %6017 = vmatpush1.msra.mxu0 0.0
      %6018 = vmatprep.subr.mxu0 0.0
      %6019 = vmatpush1.msra.mxu0 0.0
      %6020 = vmatprep.subr.mxu0 0.0
      %6021 = vmatpush1.msra.mxu0 0.0
      %6022 = vmatprep.subr.mxu0 0.0
      %6023 = vmatpush1.msra.mxu0 0.0
      %6024 = vmatprep.subr.mxu0 0.0
      %6025 = vmatpush1.msra.mxu0 0.0
      %6026 = vmatprep.subr.mxu0 0.0
      %6027 = vmatpush1.msra.mxu0 0.0
      %6028 = vmatprep.subr.mxu0 0.0
      %6029 = vmatpush1.msra.mxu0 0.0
      %6030 = vmatprep.subr.mxu0 0.0
      %6031 = vmatpush1.msra.mxu0 0.0
      %6032 = vmatprep.subr.mxu0 0.0
      %6033 = vmatpush1.msra.mxu0 0.0
      %6034 = vmatprep.subr.mxu0 0.0
      %6035 = vmatpush1.msra.mxu0 0.0
      %6036 = vmatprep.mubr.f32.mxu0 0.0
      %6037 = vmatmul.mubr.f32.gmra.mrb[0].mxu0 %v2031
      %v6038 = vpop.f32.mrb[0].mxu0
      %v6039 = vadd.f32 0.0, %v6038
      %v6040 = vpop.f32.mrb[0].mxu0
      %6041 = vmatprep.mubr.f32.mxu0 0.0
      %6042 = vmatmul.mubr.f32.gmra.mrb[0].mxu0 %v2034
      %v6043 = vpop.f32.mrb[0].mxu0
      %v6044 = vadd.f32 0.0, %v6043
      %v6045 = vpop.f32.mrb[0].mxu0
      %6046 = vdwg.mxu0
      %v6047 = vpack.c.bf16 %v6044, %v6039
      %v6048 = vld [vmem:[%s10 + $0x200] sm:$0xf]
      %v6049 = vld [vmem:[%s10 + $0x204] sm:$0xf]
      %v6050 = vld [vmem:[%s10 + $0x208] sm:$0xf]
      %v6051 = vld [vmem:[%s10 + $0x20c] sm:$0xf]
      %v6052 = vld [vmem:[%s10 + $0x210] sm:$0xf]
      %v6053 = vld [vmem:[%s10 + $0x214] sm:$0xf]
      %v6054 = vld [vmem:[%s10 + $0x218] sm:$0xf]
      %v6055 = vld [vmem:[%s10 + $0x21c] sm:$0xf]
      %v6056 = vld [vmem:[%s10 + $0x220] sm:$0xf]
      %v6057 = vld [vmem:[%s10 + $0x224] sm:$0xf]
      %v6058 = vld [vmem:[%s10 + $0x228] sm:$0xf]
      %v6059 = vld [vmem:[%s10 + $0x22c] sm:$0xf]
      %v6060 = vld [vmem:[%s10 + $0x230] sm:$0xf]
      %v6061 = vld [vmem:[%s10 + $0x234] sm:$0xf]
      %v6062 = vld [vmem:[%s10 + $0x238] sm:$0xf]
      %v6063 = vld [vmem:[%s10 + $0x23c] sm:$0xf]
      %v6080 = vunpack.c.l.b16 %v6048
      %v6081 = vunpack.c.l.b16 %v6049
      %v6082 = vunpack.c.l.b16 %v6050
      %v6083 = vunpack.c.l.b16 %v6051
      %v6084 = vunpack.c.l.b16 %v6052
      %v6085 = vunpack.c.l.b16 %v6053
      %v6086 = vunpack.c.l.b16 %v6054
      %v6087 = vunpack.c.l.b16 %v6055
      %v6088 = vunpack.c.l.b16 %v6056
      %v6089 = vunpack.c.l.b16 %v6057
      %v6090 = vunpack.c.l.b16 %v6058
      %v6091 = vunpack.c.l.b16 %v6059
      %v6092 = vunpack.c.l.b16 %v6060
      %v6093 = vunpack.c.l.b16 %v6061
      %v6094 = vunpack.c.l.b16 %v6062
      %v6095 = vunpack.c.l.b16 %v6063
      %v6096 = vpack.c.b16 %v6081, %v6080
      %v6097 = vpack.c.b16 %v6083, %v6082
      %v6098 = vpack.c.b16 %v6085, %v6084
      %v6099 = vpack.c.b16 %v6087, %v6086
      %v6100 = vpack.c.b16 %v6089, %v6088
      %v6101 = vpack.c.b16 %v6091, %v6090
      %v6102 = vpack.c.b16 %v6093, %v6092
      %v6103 = vpack.c.b16 %v6095, %v6094
      %6112 = vmatprep.subr.bf16.mxu0 0
      %6113 = vmatpush1.bf16.msra.mxu0 %v6096
      %6114 = vmatprep.subr.bf16.mxu0 0
      %6115 = vmatpush1.bf16.msra.mxu0 %v6097
      %6116 = vmatprep.subr.bf16.mxu0 0
      %6117 = vmatpush1.bf16.msra.mxu0 %v6098
      %6118 = vmatprep.subr.bf16.mxu0 0
      %6119 = vmatpush1.bf16.msra.mxu0 %v6099
      %6120 = vmatprep.subr.bf16.mxu0 0
      %6121 = vmatpush1.bf16.msra.mxu0 %v6100
      %6122 = vmatprep.subr.bf16.mxu0 0
      %6123 = vmatpush1.bf16.msra.mxu0 %v6101
      %6124 = vmatprep.subr.bf16.mxu0 0
      %6125 = vmatpush1.bf16.msra.mxu0 %v6102
      %6126 = vmatprep.subr.bf16.mxu0 0
      %6127 = vmatpush1.bf16.msra.mxu0 %v6103
      %6128 = vmatprep.subr.bf16.mxu0 0
      %6129 = vmatpush1.bf16.msra.mxu0 0
      %6130 = vmatprep.subr.bf16.mxu0 0
      %6131 = vmatpush1.bf16.msra.mxu0 0
      %6132 = vmatprep.subr.bf16.mxu0 0
      %6133 = vmatpush1.bf16.msra.mxu0 0
      %6134 = vmatprep.subr.bf16.mxu0 0
      %6135 = vmatpush1.bf16.msra.mxu0 0
      %6136 = vmatprep.subr.bf16.mxu0 0
      %6137 = vmatpush1.bf16.msra.mxu0 0
      %6138 = vmatprep.subr.bf16.mxu0 0
      %6139 = vmatpush1.bf16.msra.mxu0 0
      %6140 = vmatprep.subr.bf16.mxu0 0
      %6141 = vmatpush1.bf16.msra.mxu0 0
      %6142 = vmatprep.subr.bf16.mxu0 0
      %6143 = vmatpush1.bf16.msra.mxu0 0
      %6144 = vmatprep.mubr.bf16.mxu0 0
      %6145 = vmatmul.mubr.bf16.gmra.mrb[0].mxu0 %v6047
      %v6146 = vpop.f32.mrb[0].mxu0
      %v6147 = vadd.f32 0.0, %v6146
      %v6148 = vpop.f32.mrb[0].mxu0
      %v6149 = vpop.f32.mrb[0].mxu0
      %v6150 = vadd.f32 0.0, %v6149
      %v6151 = vpop.f32.mrb[0].mxu0
      %6152 = vdwg.mxu0
      %v6153 = vadd.f32 %v5970, %v6147
      %v6154 = vadd.f32 %v5971, %v6150
      %v6155 = vld [vmem:[%s11] sm:$0x1]
      %v6157 = vlaneseq
      %v6158 = vshrl.u32 %v6157, 7
      %v6159 = vsub.s32 0, %v6158
      %v6160 = vrot.slane %v6155, %v6159
      %v6162 = vmul.f32 %v6153, %v6160
      %v6163 = vmul.f32 %v6154, %v6160
      %v6164 = vld [vmem:[%s12] sm:$0x1]
      %v6166 = vlaneseq
      %v6167 = vshrl.u32 %v6166, 7
      %v6168 = vsub.s32 0, %v6167
      %v6169 = vrot.slane %v6164, %v6168
      %v6171 = vadd.f32 %v6162, %v6169
      %v6172 = vadd.f32 %v6163, %v6169
      %v6173 = vmax.f32 %v6171, 0.0
      %v6174 = vmax.f32 %v6172, 0.0
      %v6175 = vld [vmem:[%s13] sm:$0x1]
      %v6176 = vpack.c.bf16 %v6174, %v6173
      %v6177 = vld [vmem:[%s14] sm:$0x3]
      %6179 = vset.pattern.permute.xlu0 0
      %6180 = vperm.xlu0 %6179, %v6177
      %v6181 = vpop.permute.xlu0 %6180
      %v6184 = vsel %vm527, %v6175, 0
      %v6187 = vsel %vm527, %v6176, 0
      %6189 = vmatprep.subr.bf16.mxu0 0
      %6190 = vmatpush1.bf16.xpose.msra.mxu0 %v6187
      %6191 = vmatprep.subr.bf16.mxu0 0
      %6192 = vmatpush1.bf16.xpose.msra.mxu0 0
      %6193 = vmatprep.subr.bf16.mxu0 0
      %6194 = vmatpush1.bf16.xpose.msra.mxu0 0
      %6195 = vmatprep.subr.bf16.mxu0 0
      %6196 = vmatpush1.bf16.xpose.msra.mxu0 0
      %6197 = vmatprep.subr.bf16.mxu0 0
      %6198 = vmatpush1.bf16.xpose.msra.mxu0 0
      %6199 = vmatprep.subr.bf16.mxu0 0
      %6200 = vmatpush1.bf16.xpose.msra.mxu0 0
      %6201 = vmatprep.subr.bf16.mxu0 0
      %6202 = vmatpush1.bf16.xpose.msra.mxu0 0
      %6203 = vmatprep.subr.bf16.mxu0 0
      %6204 = vmatpush1.bf16.xpose.msra.mxu0 0
      %6205 = vmatprep.subr.bf16.mxu0 0
      %6206 = vmatpush1.bf16.xpose.msra.mxu0 0
      %6207 = vmatprep.subr.bf16.mxu0 0
      %6208 = vmatpush1.bf16.xpose.msra.mxu0 0
      %6209 = vmatprep.subr.bf16.mxu0 0
      %6210 = vmatpush1.bf16.xpose.msra.mxu0 0
      %6211 = vmatprep.subr.bf16.mxu0 0
      %6212 = vmatpush1.bf16.xpose.msra.mxu0 0
      %6213 = vmatprep.subr.bf16.mxu0 0
      %6214 = vmatpush1.bf16.xpose.msra.mxu0 0
      %6215 = vmatprep.subr.bf16.mxu0 0
      %6216 = vmatpush1.bf16.xpose.msra.mxu0 0
      %6217 = vmatprep.subr.bf16.mxu0 0
      %6218 = vmatpush1.bf16.xpose.msra.mxu0 0
      %6219 = vmatprep.subr.bf16.mxu0 0
      %6220 = vmatpush1.bf16.xpose.msra.mxu0 0
      %6221 = vmatprep.mubr.bf16.mxu0 0
      %6222 = vmatmul.mubr.bf16.gmra.mrb[0].mxu0 %v6184
      %v6223 = vpop.f32.mrb[0].mxu0
      %v6224 = vadd.f32 %v6181, %v6223
      %v6225 = vpop.f32.mrb[0].mxu0
      %v6226 = vpop.f32.mrb[0].mxu0
      %v6227 = vpop.f32.mrb[0].mxu0
      %6228 = vdwg.mxu0
      %v6229 = vld [vmem:[%s15] sm:$0xff]
      %v6230 = vld [vmem:[%s15 + $0x8] sm:$0xff]
      %v6231 = vld [vmem:[%s15 + $0x10] sm:$0xff]
      %v6232 = vld [vmem:[%s15 + $0x18] sm:$0xff]
      %v6233 = vld [vmem:[%s15 + $0x20] sm:$0xff]
      %v6234 = vld [vmem:[%s15 + $0x28] sm:$0xff]
      %v6235 = vld [vmem:[%s15 + $0x30] sm:$0xff]
      %v6236 = vld [vmem:[%s15 + $0x38] sm:$0xff]
      %v6237 = vld [vmem:[%s15 + $0x40] sm:$0xff]
      %v6238 = vld [vmem:[%s15 + $0x48] sm:$0xff]
      %v6239 = vld [vmem:[%s15 + $0x50] sm:$0xff]
      %v6240 = vld [vmem:[%s15 + $0x58] sm:$0xff]
      %v6241 = vld [vmem:[%s15 + $0x60] sm:$0xff]
      %v6242 = vld [vmem:[%s15 + $0x68] sm:$0xff]
      %v6243 = vld [vmem:[%s15 + $0x70] sm:$0xff]
      %v6244 = vld [vmem:[%s15 + $0x78] sm:$0xff]
      %v6246 = vsel %vm573, %v6224, 0
      %6248 = vmatprep.subr.mxu0 %v6230
      %6249 = vmatpush1.msra.mxu0 %v6229
      %6250 = vmatprep.subr.mxu0 %v6238
      %6251 = vmatpush1.msra.mxu0 %v6237
      %6252 = vmatprep.subr.mxu0 0.0
      %6253 = vmatpush1.msra.mxu0 0.0
      %6254 = vmatprep.subr.mxu0 0.0
      %6255 = vmatpush1.msra.mxu0 0.0
      %6256 = vmatprep.subr.mxu0 0.0
      %6257 = vmatpush1.msra.mxu0 0.0
      %6258 = vmatprep.subr.mxu0 0.0
      %6259 = vmatpush1.msra.mxu0 0.0
      %6260 = vmatprep.subr.mxu0 0.0
      %6261 = vmatpush1.msra.mxu0 0.0
      %6262 = vmatprep.subr.mxu0 0.0
      %6263 = vmatpush1.msra.mxu0 0.0
      %6264 = vmatprep.subr.mxu0 0.0
      %6265 = vmatpush1.msra.mxu0 0.0
      %6266 = vmatprep.subr.mxu0 0.0
      %6267 = vmatpush1.msra.mxu0 0.0
      %6268 = vmatprep.subr.mxu0 0.0
      %6269 = vmatpush1.msra.mxu0 0.0
      %6270 = vmatprep.subr.mxu0 0.0
      %6271 = vmatpush1.msra.mxu0 0.0
      %6272 = vmatprep.subr.mxu0 0.0
      %6273 = vmatpush1.msra.mxu0 0.0
      %6274 = vmatprep.subr.mxu0 0.0
      %6275 = vmatpush1.msra.mxu0 0.0
      %6276 = vmatprep.subr.mxu0 0.0
      %6277 = vmatpush1.msra.mxu0 0.0
      %6278 = vmatprep.subr.mxu0 0.0
      %6279 = vmatpush1.msra.mxu0 0.0
      %6280 = vmatprep.subr.mxu0 0.0
      %6281 = vmatpush1.msra.mxu0 0.0
      %6282 = vmatprep.subr.mxu0 0.0
      %6283 = vmatpush1.msra.mxu0 0.0
      %6284 = vmatprep.subr.mxu0 0.0
      %6285 = vmatpush1.msra.mxu0 0.0
      %6286 = vmatprep.subr.mxu0 0.0
      %6287 = vmatpush1.msra.mxu0 0.0
      %6288 = vmatprep.subr.mxu0 0.0
      %6289 = vmatpush1.msra.mxu0 0.0
      %6290 = vmatprep.subr.mxu0 0.0
      %6291 = vmatpush1.msra.mxu0 0.0
      %6292 = vmatprep.subr.mxu0 0.0
      %6293 = vmatpush1.msra.mxu0 0.0
      %6294 = vmatprep.subr.mxu0 0.0
      %6295 = vmatpush1.msra.mxu0 0.0
      %6296 = vmatprep.subr.mxu0 0.0
      %6297 = vmatpush1.msra.mxu0 0.0
      %6298 = vmatprep.subr.mxu0 0.0
      %6299 = vmatpush1.msra.mxu0 0.0
      %6300 = vmatprep.subr.mxu0 0.0
      %6301 = vmatpush1.msra.mxu0 0.0
      %6302 = vmatprep.subr.mxu0 0.0
      %6303 = vmatpush1.msra.mxu0 0.0
      %6304 = vmatprep.subr.mxu0 0.0
      %6305 = vmatpush1.msra.mxu0 0.0
      %6306 = vmatprep.subr.mxu0 0.0
      %6307 = vmatpush1.msra.mxu0 0.0
      %6308 = vmatprep.subr.mxu0 0.0
      %6309 = vmatpush1.msra.mxu0 0.0
      %6310 = vmatprep.subr.mxu0 0.0
      %6311 = vmatpush1.msra.mxu0 0.0
      %6312 = vmatprep.mubr.f32.mxu0 0.0
      %6313 = vmatmul.mubr.f32.gmra.mrb[0].mxu0 %v6246
      %v6314 = vpop.f32.mrb[0].mxu0
      %v6315 = vadd.f32 0.0, %v6314
      %v6316 = vpop.f32.mrb[0].mxu0
      %v6317 = vadd.f32 0.0, %v6316
      %6318 = vdwg.mxu0
      %6319 = vmatprep.subr.mxu0 %v6232
      %6320 = vmatpush1.msra.mxu0 %v6231
      %6321 = vmatprep.subr.mxu0 %v6240
      %6322 = vmatpush1.msra.mxu0 %v6239
      %6323 = vmatprep.subr.mxu0 0.0
      %6324 = vmatpush1.msra.mxu0 0.0
      %6325 = vmatprep.subr.mxu0 0.0
      %6326 = vmatpush1.msra.mxu0 0.0
      %6327 = vmatprep.subr.mxu0 0.0
      %6328 = vmatpush1.msra.mxu0 0.0
      %6329 = vmatprep.subr.mxu0 0.0
      %6330 = vmatpush1.msra.mxu0 0.0
      %6331 = vmatprep.subr.mxu0 0.0
      %6332 = vmatpush1.msra.mxu0 0.0
      %6333 = vmatprep.subr.mxu0 0.0
      %6334 = vmatpush1.msra.mxu0 0.0
      %6335 = vmatprep.subr.mxu0 0.0
      %6336 = vmatpush1.msra.mxu0 0.0
      %6337 = vmatprep.subr.mxu0 0.0
      %6338 = vmatpush1.msra.mxu0 0.0
      %6339 = vmatprep.subr.mxu0 0.0
      %6340 = vmatpush1.msra.mxu0 0.0
      %6341 = vmatprep.subr.mxu0 0.0
      %6342 = vmatpush1.msra.mxu0 0.0
      %6343 = vmatprep.subr.mxu0 0.0
      %6344 = vmatpush1.msra.mxu0 0.0
      %6345 = vmatprep.subr.mxu0 0.0
      %6346 = vmatpush1.msra.mxu0 0.0
      %6347 = vmatprep.subr.mxu0 0.0
      %6348 = vmatpush1.msra.mxu0 0.0
      %6349 = vmatprep.subr.mxu0 0.0
      %6350 = vmatpush1.msra.mxu0 0.0
      %6351 = vmatprep.subr.mxu0 0.0
      %6352 = vmatpush1.msra.mxu0 0.0
      %6353 = vmatprep.subr.mxu0 0.0
      %6354 = vmatpush1.msra.mxu0 0.0
      %6355 = vmatprep.subr.mxu0 0.0
      %6356 = vmatpush1.msra.mxu0 0.0
      %6357 = vmatprep.subr.mxu0 0.0
      %6358 = vmatpush1.msra.mxu0 0.0
      %6359 = vmatprep.subr.mxu0 0.0
      %6360 = vmatpush1.msra.mxu0 0.0
      %6361 = vmatprep.subr.mxu0 0.0
      %6362 = vmatpush1.msra.mxu0 0.0
      %6363 = vmatprep.subr.mxu0 0.0
      %6364 = vmatpush1.msra.mxu0 0.0
      %6365 = vmatprep.subr.mxu0 0.0
      %6366 = vmatpush1.msra.mxu0 0.0
      %6367 = vmatprep.subr.mxu0 0.0
      %6368 = vmatpush1.msra.mxu0 0.0
      %6369 = vmatprep.subr.mxu0 0.0
      %6370 = vmatpush1.msra.mxu0 0.0
      %6371 = vmatprep.subr.mxu0 0.0
      %6372 = vmatpush1.msra.mxu0 0.0
      %6373 = vmatprep.subr.mxu0 0.0
      %6374 = vmatpush1.msra.mxu0 0.0
      %6375 = vmatprep.subr.mxu0 0.0
      %6376 = vmatpush1.msra.mxu0 0.0
      %6377 = vmatprep.subr.mxu0 0.0
      %6378 = vmatpush1.msra.mxu0 0.0
      %6379 = vmatprep.subr.mxu0 0.0
      %6380 = vmatpush1.msra.mxu0 0.0
      %6381 = vmatprep.subr.mxu0 0.0
      %6382 = vmatpush1.msra.mxu0 0.0
      %6383 = vmatprep.mubr.f32.mxu0 0.0
      %6384 = vmatmul.mubr.f32.gmra.mrb[0].mxu0 %v6246
      %v6385 = vpop.f32.mrb[0].mxu0
      %v6386 = vadd.f32 0.0, %v6385
      %v6387 = vpop.f32.mrb[0].mxu0
      %v6388 = vadd.f32 0.0, %v6387
      %6389 = vdwg.mxu0
      %6390 = vmatprep.subr.mxu0 %v6234
      %6391 = vmatpush1.msra.mxu0 %v6233
      %6392 = vmatprep.subr.mxu0 %v6242
      %6393 = vmatpush1.msra.mxu0 %v6241
      %6394 = vmatprep.subr.mxu0 0.0
      %6395 = vmatpush1.msra.mxu0 0.0
      %6396 = vmatprep.subr.mxu0 0.0
      %6397 = vmatpush1.msra.mxu0 0.0
      %6398 = vmatprep.subr.mxu0 0.0
      %6399 = vmatpush1.msra.mxu0 0.0
      %6400 = vmatprep.subr.mxu0 0.0
      %6401 = vmatpush1.msra.mxu0 0.0
      %6402 = vmatprep.subr.mxu0 0.0
      %6403 = vmatpush1.msra.mxu0 0.0
      %6404 = vmatprep.subr.mxu0 0.0
      %6405 = vmatpush1.msra.mxu0 0.0
      %6406 = vmatprep.subr.mxu0 0.0
      %6407 = vmatpush1.msra.mxu0 0.0
      %6408 = vmatprep.subr.mxu0 0.0
      %6409 = vmatpush1.msra.mxu0 0.0
      %6410 = vmatprep.subr.mxu0 0.0
      %6411 = vmatpush1.msra.mxu0 0.0
      %6412 = vmatprep.subr.mxu0 0.0
      %6413 = vmatpush1.msra.mxu0 0.0
      %6414 = vmatprep.subr.mxu0 0.0
      %6415 = vmatpush1.msra.mxu0 0.0
      %6416 = vmatprep.subr.mxu0 0.0
      %6417 = vmatpush1.msra.mxu0 0.0
      %6418 = vmatprep.subr.mxu0 0.0
      %6419 = vmatpush1.msra.mxu0 0.0
      %6420 = vmatprep.subr.mxu0 0.0
      %6421 = vmatpush1.msra.mxu0 0.0
      %6422 = vmatprep.subr.mxu0 0.0
      %6423 = vmatpush1.msra.mxu0 0.0
      %6424 = vmatprep.subr.mxu0 0.0
      %6425 = vmatpush1.msra.mxu0 0.0
      %6426 = vmatprep.subr.mxu0 0.0
      %6427 = vmatpush1.msra.mxu0 0.0
      %6428 = vmatprep.subr.mxu0 0.0
      %6429 = vmatpush1.msra.mxu0 0.0
      %6430 = vmatprep.subr.mxu0 0.0
      %6431 = vmatpush1.msra.mxu0 0.0
      %6432 = vmatprep.subr.mxu0 0.0
      %6433 = vmatpush1.msra.mxu0 0.0
      %6434 = vmatprep.subr.mxu0 0.0
      %6435 = vmatpush1.msra.mxu0 0.0
      %6436 = vmatprep.subr.mxu0 0.0
      %6437 = vmatpush1.msra.mxu0 0.0
      %6438 = vmatprep.subr.mxu0 0.0
      %6439 = vmatpush1.msra.mxu0 0.0
      %6440 = vmatprep.subr.mxu0 0.0
      %6441 = vmatpush1.msra.mxu0 0.0
      %6442 = vmatprep.subr.mxu0 0.0
      %6443 = vmatpush1.msra.mxu0 0.0
      %6444 = vmatprep.subr.mxu0 0.0
      %6445 = vmatpush1.msra.mxu0 0.0
      %6446 = vmatprep.subr.mxu0 0.0
      %6447 = vmatpush1.msra.mxu0 0.0
      %6448 = vmatprep.subr.mxu0 0.0
      %6449 = vmatpush1.msra.mxu0 0.0
      %6450 = vmatprep.subr.mxu0 0.0
      %6451 = vmatpush1.msra.mxu0 0.0
      %6452 = vmatprep.subr.mxu0 0.0
      %6453 = vmatpush1.msra.mxu0 0.0
      %6454 = vmatprep.mubr.f32.mxu0 0.0
      %6455 = vmatmul.mubr.f32.gmra.mrb[0].mxu0 %v6246
      %v6456 = vpop.f32.mrb[0].mxu0
      %v6457 = vadd.f32 0.0, %v6456
      %v6458 = vpop.f32.mrb[0].mxu0
      %v6459 = vadd.f32 0.0, %v6458
      %6460 = vdwg.mxu0
      %6461 = vmatprep.subr.mxu0 %v6236
      %6462 = vmatpush1.msra.mxu0 %v6235
      %6463 = vmatprep.subr.mxu0 %v6244
      %6464 = vmatpush1.msra.mxu0 %v6243
      %6465 = vmatprep.subr.mxu0 0.0
      %6466 = vmatpush1.msra.mxu0 0.0
      %6467 = vmatprep.subr.mxu0 0.0
      %6468 = vmatpush1.msra.mxu0 0.0
      %6469 = vmatprep.subr.mxu0 0.0
      %6470 = vmatpush1.msra.mxu0 0.0
      %6471 = vmatprep.subr.mxu0 0.0
      %6472 = vmatpush1.msra.mxu0 0.0
      %6473 = vmatprep.subr.mxu0 0.0
      %6474 = vmatpush1.msra.mxu0 0.0
      %6475 = vmatprep.subr.mxu0 0.0
      %6476 = vmatpush1.msra.mxu0 0.0
      %6477 = vmatprep.subr.mxu0 0.0
      %6478 = vmatpush1.msra.mxu0 0.0
      %6479 = vmatprep.subr.mxu0 0.0
      %6480 = vmatpush1.msra.mxu0 0.0
      %6481 = vmatprep.subr.mxu0 0.0
      %6482 = vmatpush1.msra.mxu0 0.0
      %6483 = vmatprep.subr.mxu0 0.0
      %6484 = vmatpush1.msra.mxu0 0.0
      %6485 = vmatprep.subr.mxu0 0.0
      %6486 = vmatpush1.msra.mxu0 0.0
      %6487 = vmatprep.subr.mxu0 0.0
      %6488 = vmatpush1.msra.mxu0 0.0
      %6489 = vmatprep.subr.mxu0 0.0
      %6490 = vmatpush1.msra.mxu0 0.0
      %6491 = vmatprep.subr.mxu0 0.0
      %6492 = vmatpush1.msra.mxu0 0.0
      %6493 = vmatprep.subr.mxu0 0.0
      %6494 = vmatpush1.msra.mxu0 0.0
      %6495 = vmatprep.subr.mxu0 0.0
      %6496 = vmatpush1.msra.mxu0 0.0
      %6497 = vmatprep.subr.mxu0 0.0
      %6498 = vmatpush1.msra.mxu0 0.0
      %6499 = vmatprep.subr.mxu0 0.0
      %6500 = vmatpush1.msra.mxu0 0.0
      %6501 = vmatprep.subr.mxu0 0.0
      %6502 = vmatpush1.msra.mxu0 0.0
      %6503 = vmatprep.subr.mxu0 0.0
      %6504 = vmatpush1.msra.mxu0 0.0
      %6505 = vmatprep.subr.mxu0 0.0
      %6506 = vmatpush1.msra.mxu0 0.0
      %6507 = vmatprep.subr.mxu0 0.0
      %6508 = vmatpush1.msra.mxu0 0.0
      %6509 = vmatprep.subr.mxu0 0.0
      %6510 = vmatpush1.msra.mxu0 0.0
      %6511 = vmatprep.subr.mxu0 0.0
      %6512 = vmatpush1.msra.mxu0 0.0
      %6513 = vmatprep.subr.mxu0 0.0
      %6514 = vmatpush1.msra.mxu0 0.0
      %6515 = vmatprep.subr.mxu0 0.0
      %6516 = vmatpush1.msra.mxu0 0.0
      %6517 = vmatprep.subr.mxu0 0.0
      %6518 = vmatpush1.msra.mxu0 0.0
      %6519 = vmatprep.subr.mxu0 0.0
      %6520 = vmatpush1.msra.mxu0 0.0
      %6521 = vmatprep.subr.mxu0 0.0
      %6522 = vmatpush1.msra.mxu0 0.0
      %6523 = vmatprep.subr.mxu0 0.0
      %6524 = vmatpush1.msra.mxu0 0.0
      %6525 = vmatprep.mubr.f32.mxu0 0.0
      %6526 = vmatmul.mubr.f32.gmra.mrb[0].mxu0 %v6246
      %v6527 = vpop.f32.mrb[0].mxu0
      %v6528 = vadd.f32 0.0, %v6527
      %v6529 = vpop.f32.mrb[0].mxu0
      %v6530 = vadd.f32 0.0, %v6529
      %6531 = vdwg.mxu0
      %v6540 = vcombine.low %v6315, %v6317
      %v6541 = vcombine.low %v6386, %v6388
      %v6543 = vunpack.c.l.s4 1983009808
      %v6544 = vunpack.c.0.s8 %v6543
      %v6545 = vlaneseq
      %v6546 = vshrl.u32 %v6545, 7
      %v6547 = vsub.s32 %v6544, %v6546
      %v6548 = vrot.slane %v6540, %v6547
      %v6550 = vunpack.c.l.s4 1983009808
      %v6551 = vunpack.c.0.s8 %v6550
      %v6552 = vlaneseq
      %v6553 = vshrl.u32 %v6552, 7
      %v6554 = vsub.s32 %v6551, %v6553
      %v6555 = vrot.slane %v6541, %v6554
      %v6556 = vcombine.low %v6548, %v6555
      %v6557 = vcombine.low %v6457, %v6459
      %v6558 = vcombine.low %v6528, %v6530
      %v6560 = vunpack.c.l.s4 1983009808
      %v6561 = vunpack.c.0.s8 %v6560
      %v6562 = vlaneseq
      %v6563 = vshrl.u32 %v6562, 7
      %v6564 = vsub.s32 %v6561, %v6563
      %v6565 = vrot.slane %v6557, %v6564
      %v6567 = vunpack.c.l.s4 1983009808
      %v6568 = vunpack.c.0.s8 %v6567
      %v6569 = vlaneseq
      %v6570 = vshrl.u32 %v6569, 7
      %v6571 = vsub.s32 %v6568, %v6570
      %v6572 = vrot.slane %v6558, %v6571
      %v6573 = vcombine.low %v6565, %v6572
      %6576 = vst [vmem:[%s521] sm:$0xff] %v6556
      %6577 = vst [vmem:[%s521 + $0x8] sm:$0xff] %v6573
      %p6578 = scmp.lt.s32.totalorder %s27, 1
      %s6579 = scalar_select %p6578, %s27, 1
      %s6580 = smul.addr %s6579, 8
      %s6581 = smul.addr %s6580, 2
      %s6582 = scalar_lea.vmem %s16, %s6581
      // Predicated region
      $region85: #{forward.7} parent=83 // pred_check
        %p6583 = pneg %p386
      $region86: #{forward.7} parent=83 // pred_check_branch
        %6585 = sbr.rel (%p6583) target = $region88
      $region87: #{forward.7} parent=83 // pred_region
        _
      $region88: #{forward.7} parent=83 // pred_fallthru
        _
    $region84: #{forward.7} parent=5 // pred_fallthru
      _
    %p6586 = scmp.le.s32.totalorder 2, %s22
    // Predicated region
    $region89: #{forward.7} parent=5 // pred_check
      %p6587 = pneg %p6586
    $region90: #{forward.7} parent=5 // pred_check_branch
      %6589 = sbr.rel (%p6587) target = $region92
    $region91: #{forward.7} parent=5 // pred_region
      %s6590 = ssub.s32 %s22, 2
      // Predicated region
      $region93: #{forward.7} parent=91 // pred_check
        %p6591 = pneg %p392
      $region94: #{forward.7} parent=91 // pred_check_branch
        %6593 = sbr.rel (%p6591) target = $region96
      $region95: #{forward.7} parent=91 // pred_region
        %p6594 = scmp.lt.s32.totalorder %s28, 1
        %s6595 = scalar_select %p6594, %s28, 1
        %s6596 = smul.addr %s6595, 8
        %s6597 = smul.addr %s6596, 2
        %s6598 = scalar_lea.vmem %s16, %s6597
      $region96: #{forward.7} parent=91 // pred_fallthru
        _
    $region92: #{forward.7} parent=5 // pred_fallthru
      _
  $region6: #{forward.7} parent=0 // loop_footer
    %s26 = sadd.s32 1, %s22
  $region7: #{forward.7} parent=0 // loop_footer_branch
    %21 = sbr.rel target = $region3
  $region8: #{forward.7} parent=0 // loop_exit
    _

</llo_original>
